<compile_context>
chip_gen: v7x
topology: tpu7x:2x2x1
jax: 0.10.0
libtpu: 0.0.40
codegen_flags: <defaults>
</compile_context>

<pallas_src>
import jax
import jax.numpy as jnp
import numpy as np
from jax.experimental import pallas as pl
from jax.experimental.pallas import tpu as pltpu

_NEG = -1e9  # bias for padded vocab columns -> exp underflows to exactly 0


# -----------------------------------------------------------------------------
# Fused forward kernel (built per static shape set).
# -----------------------------------------------------------------------------
def _make_seq2seq_kernel(B, Th, Tq, Tp, H):
    """Build the fused forward kernel; shapes are closed over as Python ints."""

    def lstm_chain(x_ref, wih_ref, whh_ref, b_ref, h0, c0, T, out_sc=None):
        """x_ref: (T*B, E) time-major rows.  Returns (h_T, c_T); optionally
        writes the per-step hidden states into out_sc (shape (T, B, H))."""
        # Hoisted input projection: one matmul for the whole sequence
        # (bias is b_ih + b_hh of the PyTorch parameterization).
        gx = jnp.dot(x_ref[...], wih_ref[...],
                     preferred_element_type=jnp.float32) + b_ref[...]
        whh = whh_ref[...]
        h, c = h0, c0
        # Statically unrolled recurrence (T is small and fixed); only the
        # h @ W_hh matmul remains on the serial critical path.
        for t in range(T):
            gates = gx[t * B:(t + 1) * B, :] + jnp.dot(
                h, whh, preferred_element_type=jnp.float32)      # (B, 4H)
            i = jax.nn.sigmoid(gates[:, 0 * H:1 * H])            # lane-aligned
            f = jax.nn.sigmoid(gates[:, 1 * H:2 * H])
            g = jnp.tanh(gates[:, 2 * H:3 * H])
            o = jax.nn.sigmoid(gates[:, 3 * H:4 * H])
            c = f * c + i * g
            h = o * jnp.tanh(c)
            if out_sc is not None:
                out_sc[t] = h                                    # (B, H) store
        return h, c

    def kernel(xh_ref, xq_ref, xp_ref,
               wih_h_ref, whh_h_ref, b_h_ref,
               wih_q_ref, whh_q_ref, b_q_ref,
               wih_d_ref, whh_d_ref, b_d_ref,
               wc_d_ref, wc_c_ref, w_out_ref, b_out_ref,
               pred_ref, hT_ref, cT_ref,
               enc_sc, dec_sc):
        zeros = jnp.zeros((B, H), jnp.float32)

        # ---- encoder: history LSTM (final state only) -> question LSTM ----
        h_h, c_h = lstm_chain(xh_ref, wih_h_ref, whh_h_ref, b_h_ref,
                              zeros, zeros, Th)
        h_q, c_q = lstm_chain(xq_ref, wih_q_ref, whh_q_ref, b_q_ref,
                              h_h, c_h, Tq, out_sc=enc_sc)

        # ---- decoder LSTM, initialized from questO ----
        h_d, c_d = lstm_chain(xp_ref, wih_d_ref, whh_d_ref, b_d_ref,
                              h_q, c_q, Tp, out_sc=dec_sc)
        hT_ref[...] = h_d
        cT_ref[...] = c_d

        # ---- Luong attention + combine + output projection + softmax ----
        enc_all = enc_sc[...]                       # (Tq, B, H)
        dec_all = dec_sc[...]                       # (Tp, B, H)
        wc_d, wc_c = wc_d_ref[...], wc_c_ref[...]
        w_out, b_out = w_out_ref[...], b_out_ref[...]
        # TODO(synk): add a question-padding mask to the attention scores if
        # real inputs are padded (the reference model likely masks).
        for b in range(B):                          # B is tiny & static
            dec_b = dec_all[:, b, :]                # (Tp, H)
            enc_b = enc_all[:, b, :]                # (Tq, H)
            # scores (Tp, Tq): contract over H without an explicit transpose.
            scores = jax.lax.dot_general(dec_b, enc_b, (((1,), (1,)), ((), ())),
                                         preferred_element_type=jnp.float32)
            scores = scores - jnp.max(scores, axis=-1, keepdims=True)
            e = jnp.exp(scores)
            attn = e * pl.reciprocal(jnp.sum(e, axis=-1, keepdims=True),
                                     approx=True)
            ctx = jnp.dot(attn, enc_b, preferred_element_type=jnp.float32)
            # tanh(concat([dec, ctx]) @ Wc) == tanh(dec @ Wc_d + ctx @ Wc_c)
            comb = jnp.tanh(
                jnp.dot(dec_b, wc_d, preferred_element_type=jnp.float32)
                + jnp.dot(ctx, wc_c, preferred_element_type=jnp.float32))
            logits = jnp.dot(comb, w_out,
                             preferred_element_type=jnp.float32) + b_out
            logits = logits - jnp.max(logits, axis=-1, keepdims=True)
            ez = jnp.exp(logits)
            pred_ref[b] = ez * pl.reciprocal(jnp.sum(ez, axis=-1, keepdims=True),
                                             approx=True)        # (Tp, Vp) store

    return kernel


# -----------------------------------------------------------------------------
# Parameters (deterministic synthetic init) and the SeqToSeqQ forward pass.
# -----------------------------------------------------------------------------
def init_params(key, *, vocab_txt, vocab_prog, emb, hidden):
    ks = jax.random.split(key, 16)
    s = 0.08
    p = {
        "emb_txt":  jax.random.normal(ks[0], (vocab_txt, emb)) * s,
        "emb_prog": jax.random.normal(ks[1], (vocab_prog, emb)) * s,
        # history LSTM   (bias = b_ih + b_hh summed)
        "wih_h": jax.random.normal(ks[2], (emb, 4 * hidden)) * s,
        "whh_h": jax.random.normal(ks[3], (hidden, 4 * hidden)) * s,
        "b_h":   jax.random.normal(ks[4], (1, 4 * hidden)) * s,
        # question LSTM
        "wih_q": jax.random.normal(ks[5], (emb, 4 * hidden)) * s,
        "whh_q": jax.random.normal(ks[6], (hidden, 4 * hidden)) * s,
        "b_q":   jax.random.normal(ks[7], (1, 4 * hidden)) * s,
        # decoder LSTM
        "wih_d": jax.random.normal(ks[8], (emb, 4 * hidden)) * s,
        "whh_d": jax.random.normal(ks[9], (hidden, 4 * hidden)) * s,
        "b_d":   jax.random.normal(ks[10], (1, 4 * hidden)) * s,
        # attention combine + output projection
        "wc_d":  jax.random.normal(ks[11], (hidden, hidden)) * s,
        "wc_c":  jax.random.normal(ks[12], (hidden, hidden)) * s,
        "w_out": jax.random.normal(ks[13], (hidden, vocab_prog)) * s,
        "b_out": jax.random.normal(ks[14], (1, vocab_prog)) * s,
    }
    return jax.tree_util.tree_map(lambda a: a.astype(jnp.float32), p)


def seq_to_seq_q_forward(p, quest, hist, prog):
    """quest, hist, prog: (B, T) int32 token ids.
    Returns (predSoftmax (B, Tp, V), progHC=(h, c) each (1, B, H))."""
    B, Tq = quest.shape
    Th = hist.shape[1]
    Tp = prog.shape[1]
    E = p["emb_txt"].shape[1]
    H = p["whh_q"].shape[0]
    V = p["w_out"].shape[1]
    Vp = pl.cdiv(V, 128) * 128            # lane-dense output width

    # Embedding lookups (gathers) stay in JAX glue; the kernel consumes
    # time-major-flattened (T*B, E) slabs so no float transposes/round-trips
    # are needed anywhere.
    # TODO(synk): in-kernel embedding gather via scalar-prefetch Element maps.
    xh = jnp.take(p["emb_txt"], hist.T, axis=0).reshape(Th * B, E)
    xq = jnp.take(p["emb_txt"], quest.T, axis=0).reshape(Tq * B, E)
    xp = jnp.take(p["emb_prog"], prog.T, axis=0).reshape(Tp * B, E)

    # Lane-dense output projection: pad V up to a multiple of 128; padded
    # columns get a -1e9 bias so their softmax probability is exactly 0.
    w_out_pad = jnp.pad(p["w_out"], ((0, 0), (0, Vp - V)))
    b_out_pad = jnp.pad(p["b_out"], ((0, 0), (0, Vp - V)), constant_values=_NEG)

    kernel = _make_seq2seq_kernel(B, Th, Tq, Tp, H)
    pred_pad, h_d, c_d = pl.pallas_call(
        kernel,
        out_shape=(jax.ShapeDtypeStruct((B, Tp, Vp), jnp.float32),
                   jax.ShapeDtypeStruct((B, H), jnp.float32),
                   jax.ShapeDtypeStruct((B, H), jnp.float32)),
        scratch_shapes=[pltpu.VMEM((Tq, B, H), jnp.float32),   # encOut states
                        pltpu.VMEM((Tp, B, H), jnp.float32)],  # decoder states
    )(xh, xq, xp,
      p["wih_h"], p["whh_h"], p["b_h"],
      p["wih_q"], p["whh_q"], p["b_q"],
      p["wih_d"], p["whh_d"], p["b_d"],
      p["wc_d"], p["wc_c"], w_out_pad, b_out_pad)

    pred_softmax = pred_pad[..., :V]                 # pad columns are exactly 0
    prog_hc = (h_d[None, ...], c_d[None, ...])       # nn.LSTM (num_layers=1, B, H)
    return pred_softmax, prog_hc


if __name__ == "__main__":
    B, Tq, Th, Tp = 2, 8, 8, 8
    E, H = 128, 128                       # lane-aligned (multiples of 128)
    VOCAB_TXT, VOCAB_PROG = 30, 24

    key = jax.random.PRNGKey(0)
    kp, kq, kh, kg = jax.random.split(key, 4)
    params = init_params(kp, vocab_txt=VOCAB_TXT, vocab_prog=VOCAB_PROG,
                         emb=E, hidden=H)

    quest = jax.random.randint(kq, (B, Tq), 0, VOCAB_TXT, dtype=jnp.int32)
    hist = jax.random.randint(kh, (B, Th), 0, VOCAB_TXT, dtype=jnp.int32)
    prog = jax.random.randint(kg, (B, Tp), 0, VOCAB_PROG, dtype=jnp.int32)

    fwd = jax.jit(seq_to_seq_q_forward)
    pred_softmax, (h_n, c_n) = fwd(params, quest, hist, prog)
    jax.block_until_ready((pred_softmax, h_n, c_n))

    # sanity: shapes, rows ~sum to 1 (approx reciprocal => relaxed tol), finite
    assert pred_softmax.shape == (B, Tp, VOCAB_PROG)
    assert h_n.shape == (1, B, H) and c_n.shape == (1, B, H)
    row_sums = np.asarray(jnp.sum(pred_softmax, axis=-1))
    np.testing.assert_allclose(row_sums, np.ones_like(row_sums), atol=1e-2)
    assert np.all(np.isfinite(np.asarray(pred_softmax)))
    assert np.all(np.asarray(pred_softmax) >= 0.0)

    print("KERNEL_OK")
</pallas_src>

<mosaic_0001>
module attributes {stable_mosaic.version = 11 : i64} {
  func.func @kernel(%arg0: memref<16x128xf32, #tpu.memory_space<vmem>>, %arg1: memref<16x128xf32, #tpu.memory_space<vmem>>, %arg2: memref<16x128xf32, #tpu.memory_space<vmem>>, %arg3: memref<128x512xf32, #tpu.memory_space<vmem>>, %arg4: memref<128x512xf32, #tpu.memory_space<vmem>>, %arg5: memref<1x512xf32, #tpu.memory_space<vmem>>, %arg6: memref<128x512xf32, #tpu.memory_space<vmem>>, %arg7: memref<128x512xf32, #tpu.memory_space<vmem>>, %arg8: memref<1x512xf32, #tpu.memory_space<vmem>>, %arg9: memref<128x512xf32, #tpu.memory_space<vmem>>, %arg10: memref<128x512xf32, #tpu.memory_space<vmem>>, %arg11: memref<1x512xf32, #tpu.memory_space<vmem>>, %arg12: memref<128x128xf32, #tpu.memory_space<vmem>>, %arg13: memref<128x128xf32, #tpu.memory_space<vmem>>, %arg14: memref<128x128xf32, #tpu.memory_space<vmem>>, %arg15: memref<1x128xf32, #tpu.memory_space<vmem>>, %arg16: memref<2x8x128xf32, #tpu.memory_space<vmem>>, %arg17: memref<2x128xf32, #tpu.memory_space<vmem>>, %arg18: memref<2x128xf32, #tpu.memory_space<vmem>>, %arg19: memref<8x2x128xf32, #tpu.memory_space<vmem>>, %arg20: memref<8x2x128xf32, #tpu.memory_space<vmem>>) attributes {dimension_semantics = [], scalar_prefetch = 0 : i64, scratch_operands = 2 : i64, tpu.core_type = #tpu.core_type<tc>} {
    %cst = arith.constant 0.000000e+00 : f32
    %0 = vector.broadcast %cst : f32 to vector<2x128xf32>
    %c0 = arith.constant 0 : index
    %c0_0 = arith.constant 0 : index
    %1 = vector.load %arg0[%c0, %c0_0] : memref<16x128xf32, #tpu.memory_space<vmem>>, vector<16x128xf32>
    %c0_1 = arith.constant 0 : index
    %c0_2 = arith.constant 0 : index
    %2 = vector.load %arg3[%c0_1, %c0_2] : memref<128x512xf32, #tpu.memory_space<vmem>>, vector<128x512xf32>
    %cst_3 = arith.constant dense<0.000000e+00> : vector<16x512xf32>
    %3 = tpu.matmul %1, %2, %cst_3 {dimension_numbers = #tpu.dot_dimension_numbers<[1], [0], [0], [1], [0, 0, 1, 1], [], []>} : vector<16x128xf32>, vector<128x512xf32>, vector<16x512xf32> -> vector<16x512xf32>
    %c0_4 = arith.constant 0 : index
    %c0_5 = arith.constant 0 : index
    %4 = vector.load %arg5[%c0_4, %c0_5] : memref<1x512xf32, #tpu.memory_space<vmem>>, vector<1x512xf32>
    %5 = vector.broadcast %4 : vector<1x512xf32> to vector<16x512xf32>
    %6 = arith.addf %3, %5 : vector<16x512xf32>
    %c0_6 = arith.constant 0 : index
    %c0_7 = arith.constant 0 : index
    %7 = vector.load %arg4[%c0_6, %c0_7] : memref<128x512xf32, #tpu.memory_space<vmem>>, vector<128x512xf32>
    %8 = vector.extract_strided_slice %6 {offsets = [0, 0], sizes = [2, 512], strides = [1, 1]} : vector<16x512xf32> to vector<2x512xf32>
    %cst_8 = arith.constant dense<0.000000e+00> : vector<2x512xf32>
    %9 = tpu.matmul %0, %7, %cst_8 {dimension_numbers = #tpu.dot_dimension_numbers<[1], [0], [0], [1], [0, 0, 1, 1], [], []>} : vector<2x128xf32>, vector<128x512xf32>, vector<2x512xf32> -> vector<2x512xf32>
    %10 = arith.addf %8, %9 : vector<2x512xf32>
    %11 = vector.extract_strided_slice %10 {offsets = [0, 0], sizes = [2, 128], strides = [1, 1]} : vector<2x512xf32> to vector<2x128xf32>
    %12 = arith.negf %11 : vector<2x128xf32>
    %13 = math.exp %12 : vector<2x128xf32>
    %cst_9 = arith.constant 1.000000e+00 : f32
    %14 = vector.broadcast %cst_9 : f32 to vector<2x128xf32>
    %15 = arith.addf %14, %13 : vector<2x128xf32>
    %16 = arith.divf %14, %15 : vector<2x128xf32>
    %17 = vector.extract_strided_slice %10 {offsets = [0, 128], sizes = [2, 128], strides = [1, 1]} : vector<2x512xf32> to vector<2x128xf32>
    %18 = arith.negf %17 : vector<2x128xf32>
    %19 = math.exp %18 : vector<2x128xf32>
    %cst_10 = arith.constant 1.000000e+00 : f32
    %20 = vector.broadcast %cst_10 : f32 to vector<2x128xf32>
    %21 = arith.addf %20, %19 : vector<2x128xf32>
    %22 = arith.divf %20, %21 : vector<2x128xf32>
    %23 = vector.extract_strided_slice %10 {offsets = [0, 256], sizes = [2, 128], strides = [1, 1]} : vector<2x512xf32> to vector<2x128xf32>
    %24 = math.tanh %23 : vector<2x128xf32>
    %25 = vector.extract_strided_slice %10 {offsets = [0, 384], sizes = [2, 128], strides = [1, 1]} : vector<2x512xf32> to vector<2x128xf32>
    %26 = arith.negf %25 : vector<2x128xf32>
    %27 = math.exp %26 : vector<2x128xf32>
    %cst_11 = arith.constant 1.000000e+00 : f32
    %28 = vector.broadcast %cst_11 : f32 to vector<2x128xf32>
    %29 = arith.addf %28, %27 : vector<2x128xf32>
    %30 = arith.divf %28, %29 : vector<2x128xf32>
    %31 = arith.mulf %22, %0 : vector<2x128xf32>
    %32 = arith.mulf %16, %24 : vector<2x128xf32>
    %33 = arith.addf %31, %32 : vector<2x128xf32>
    %34 = math.tanh %33 : vector<2x128xf32>
    %35 = arith.mulf %30, %34 : vector<2x128xf32>
    %36 = vector.extract_strided_slice %6 {offsets = [2, 0], sizes = [2, 512], strides = [1, 1]} : vector<16x512xf32> to vector<2x512xf32>
    %cst_12 = arith.constant dense<0.000000e+00> : vector<2x512xf32>
    %37 = tpu.matmul %35, %7, %cst_12 {dimension_numbers = #tpu.dot_dimension_numbers<[1], [0], [0], [1], [0, 0, 1, 1], [], []>} : vector<2x128xf32>, vector<128x512xf32>, vector<2x512xf32> -> vector<2x512xf32>
    %38 = arith.addf %36, %37 : vector<2x512xf32>
    %39 = vector.extract_strided_slice %38 {offsets = [0, 0], sizes = [2, 128], strides = [1, 1]} : vector<2x512xf32> to vector<2x128xf32>
    %40 = arith.negf %39 : vector<2x128xf32>
    %41 = math.exp %40 : vector<2x128xf32>
    %cst_13 = arith.constant 1.000000e+00 : f32
    %42 = vector.broadcast %cst_13 : f32 to vector<2x128xf32>
    %43 = arith.addf %42, %41 : vector<2x128xf32>
    %44 = arith.divf %42, %43 : vector<2x128xf32>
    %45 = vector.extract_strided_slice %38 {offsets = [0, 128], sizes = [2, 128], strides = [1, 1]} : vector<2x512xf32> to vector<2x128xf32>
    %46 = arith.negf %45 : vector<2x128xf32>
    %47 = math.exp %46 : vector<2x128xf32>
    %cst_14 = arith.constant 1.000000e+00 : f32
    %48 = vector.broadcast %cst_14 : f32 to vector<2x128xf32>
    %49 = arith.addf %48, %47 : vector<2x128xf32>
    %50 = arith.divf %48, %49 : vector<2x128xf32>
    %51 = vector.extract_strided_slice %38 {offsets = [0, 256], sizes = [2, 128], strides = [1, 1]} : vector<2x512xf32> to vector<2x128xf32>
    %52 = math.tanh %51 : vector<2x128xf32>
    %53 = vector.extract_strided_slice %38 {offsets = [0, 384], sizes = [2, 128], strides = [1, 1]} : vector<2x512xf32> to vector<2x128xf32>
    %54 = arith.negf %53 : vector<2x128xf32>
    %55 = math.exp %54 : vector<2x128xf32>
    %cst_15 = arith.constant 1.000000e+00 : f32
    %56 = vector.broadcast %cst_15 : f32 to vector<2x128xf32>
    %57 = arith.addf %56, %55 : vector<2x128xf32>
    %58 = arith.divf %56, %57 : vector<2x128xf32>
    %59 = arith.mulf %50, %33 : vector<2x128xf32>
    %60 = arith.mulf %44, %52 : vector<2x128xf32>
    %61 = arith.addf %59, %60 : vector<2x128xf32>
    %62 = math.tanh %61 : vector<2x128xf32>
    %63 = arith.mulf %58, %62 : vector<2x128xf32>
    %64 = vector.extract_strided_slice %6 {offsets = [4, 0], sizes = [2, 512], strides = [1, 1]} : vector<16x512xf32> to vector<2x512xf32>
    %cst_16 = arith.constant dense<0.000000e+00> : vector<2x512xf32>
    %65 = tpu.matmul %63, %7, %cst_16 {dimension_numbers = #tpu.dot_dimension_numbers<[1], [0], [0], [1], [0, 0, 1, 1], [], []>} : vector<2x128xf32>, vector<128x512xf32>, vector<2x512xf32> -> vector<2x512xf32>
    %66 = arith.addf %64, %65 : vector<2x512xf32>
    %67 = vector.extract_strided_slice %66 {offsets = [0, 0], sizes = [2, 128], strides = [1, 1]} : vector<2x512xf32> to vector<2x128xf32>
    %68 = arith.negf %67 : vector<2x128xf32>
    %69 = math.exp %68 : vector<2x128xf32>
    %cst_17 = arith.constant 1.000000e+00 : f32
    %70 = vector.broadcast %cst_17 : f32 to vector<2x128xf32>
    %71 = arith.addf %70, %69 : vector<2x128xf32>
    %72 = arith.divf %70, %71 : vector<2x128xf32>
    %73 = vector.extract_strided_slice %66 {offsets = [0, 128], sizes = [2, 128], strides = [1, 1]} : vector<2x512xf32> to vector<2x128xf32>
    %74 = arith.negf %73 : vector<2x128xf32>
    %75 = math.exp %74 : vector<2x128xf32>
    %cst_18 = arith.constant 1.000000e+00 : f32
    %76 = vector.broadcast %cst_18 : f32 to vector<2x128xf32>
    %77 = arith.addf %76, %75 : vector<2x128xf32>
    %78 = arith.divf %76, %77 : vector<2x128xf32>
    %79 = vector.extract_strided_slice %66 {offsets = [0, 256], sizes = [2, 128], strides = [1, 1]} : vector<2x512xf32> to vector<2x128xf32>
    %80 = math.tanh %79 : vector<2x128xf32>
    %81 = vector.extract_strided_slice %66 {offsets = [0, 384], sizes = [2, 128], strides = [1, 1]} : vector<2x512xf32> to vector<2x128xf32>
    %82 = arith.negf %81 : vector<2x128xf32>
    %83 = math.exp %82 : vector<2x128xf32>
    %cst_19 = arith.constant 1.000000e+00 : f32
    %84 = vector.broadcast %cst_19 : f32 to vector<2x128xf32>
    %85 = arith.addf %84, %83 : vector<2x128xf32>
    %86 = arith.divf %84, %85 : vector<2x128xf32>
    %87 = arith.mulf %78, %61 : vector<2x128xf32>
    %88 = arith.mulf %72, %80 : vector<2x128xf32>
    %89 = arith.addf %87, %88 : vector<2x128xf32>
    %90 = math.tanh %89 : vector<2x128xf32>
    %91 = arith.mulf %86, %90 : vector<2x128xf32>
    %92 = vector.extract_strided_slice %6 {offsets = [6, 0], sizes = [2, 512], strides = [1, 1]} : vector<16x512xf32> to vector<2x512xf32>
    %cst_20 = arith.constant dense<0.000000e+00> : vector<2x512xf32>
    %93 = tpu.matmul %91, %7, %cst_20 {dimension_numbers = #tpu.dot_dimension_numbers<[1], [0], [0], [1], [0, 0, 1, 1], [], []>} : vector<2x128xf32>, vector<128x512xf32>, vector<2x512xf32> -> vector<2x512xf32>
    %94 = arith.addf %92, %93 : vector<2x512xf32>
    %95 = vector.extract_strided_slice %94 {offsets = [0, 0], sizes = [2, 128], strides = [1, 1]} : vector<2x512xf32> to vector<2x128xf32>
    %96 = arith.negf %95 : vector<2x128xf32>
    %97 = math.exp %96 : vector<2x128xf32>
    %cst_21 = arith.constant 1.000000e+00 : f32
    %98 = vector.broadcast %cst_21 : f32 to vector<2x128xf32>
    %99 = arith.addf %98, %97 : vector<2x128xf32>
    %100 = arith.divf %98, %99 : vector<2x128xf32>
    %101 = vector.extract_strided_slice %94 {offsets = [0, 128], sizes = [2, 128], strides = [1, 1]} : vector<2x512xf32> to vector<2x128xf32>
    %102 = arith.negf %101 : vector<2x128xf32>
    %103 = math.exp %102 : vector<2x128xf32>
    %cst_22 = arith.constant 1.000000e+00 : f32
    %104 = vector.broadcast %cst_22 : f32 to vector<2x128xf32>
    %105 = arith.addf %104, %103 : vector<2x128xf32>
    %106 = arith.divf %104, %105 : vector<2x128xf32>
    %107 = vector.extract_strided_slice %94 {offsets = [0, 256], sizes = [2, 128], strides = [1, 1]} : vector<2x512xf32> to vector<2x128xf32>
    %108 = math.tanh %107 : vector<2x128xf32>
    %109 = vector.extract_strided_slice %94 {offsets = [0, 384], sizes = [2, 128], strides = [1, 1]} : vector<2x512xf32> to vector<2x128xf32>
    %110 = arith.negf %109 : vector<2x128xf32>
    %111 = math.exp %110 : vector<2x128xf32>
    %cst_23 = arith.constant 1.000000e+00 : f32
    %112 = vector.broadcast %cst_23 : f32 to vector<2x128xf32>
    %113 = arith.addf %112, %111 : vector<2x128xf32>
    %114 = arith.divf %112, %113 : vector<2x128xf32>
    %115 = arith.mulf %106, %89 : vector<2x128xf32>
    %116 = arith.mulf %100, %108 : vector<2x128xf32>
    %117 = arith.addf %115, %116 : vector<2x128xf32>
    %118 = math.tanh %117 : vector<2x128xf32>
    %119 = arith.mulf %114, %118 : vector<2x128xf32>
    %120 = vector.extract_strided_slice %6 {offsets = [8, 0], sizes = [2, 512], strides = [1, 1]} : vector<16x512xf32> to vector<2x512xf32>
    %cst_24 = arith.constant dense<0.000000e+00> : vector<2x512xf32>
    %121 = tpu.matmul %119, %7, %cst_24 {dimension_numbers = #tpu.dot_dimension_numbers<[1], [0], [0], [1], [0, 0, 1, 1], [], []>} : vector<2x128xf32>, vector<128x512xf32>, vector<2x512xf32> -> vector<2x512xf32>
    %122 = arith.addf %120, %121 : vector<2x512xf32>
    %123 = vector.extract_strided_slice %122 {offsets = [0, 0], sizes = [2, 128], strides = [1, 1]} : vector<2x512xf32> to vector<2x128xf32>
    %124 = arith.negf %123 : vector<2x128xf32>
    %125 = math.exp %124 : vector<2x128xf32>
    %cst_25 = arith.constant 1.000000e+00 : f32
    %126 = vector.broadcast %cst_25 : f32 to vector<2x128xf32>
    %127 = arith.addf %126, %125 : vector<2x128xf32>
    %128 = arith.divf %126, %127 : vector<2x128xf32>
    %129 = vector.extract_strided_slice %122 {offsets = [0, 128], sizes = [2, 128], strides = [1, 1]} : vector<2x512xf32> to vector<2x128xf32>
    %130 = arith.negf %129 : vector<2x128xf32>
    %131 = math.exp %130 : vector<2x128xf32>
    %cst_26 = arith.constant 1.000000e+00 : f32
    %132 = vector.broadcast %cst_26 : f32 to vector<2x128xf32>
    %133 = arith.addf %132, %131 : vector<2x128xf32>
    %134 = arith.divf %132, %133 : vector<2x128xf32>
    %135 = vector.extract_strided_slice %122 {offsets = [0, 256], sizes = [2, 128], strides = [1, 1]} : vector<2x512xf32> to vector<2x128xf32>
    %136 = math.tanh %135 : vector<2x128xf32>
    %137 = vector.extract_strided_slice %122 {offsets = [0, 384], sizes = [2, 128], strides = [1, 1]} : vector<2x512xf32> to vector<2x128xf32>
    %138 = arith.negf %137 : vector<2x128xf32>
    %139 = math.exp %138 : vector<2x128xf32>
    %cst_27 = arith.constant 1.000000e+00 : f32
    %140 = vector.broadcast %cst_27 : f32 to vector<2x128xf32>
    %141 = arith.addf %140, %139 : vector<2x128xf32>
    %142 = arith.divf %140, %141 : vector<2x128xf32>
    %143 = arith.mulf %134, %117 : vector<2x128xf32>
    %144 = arith.mulf %128, %136 : vector<2x128xf32>
    %145 = arith.addf %143, %144 : vector<2x128xf32>
    %146 = math.tanh %145 : vector<2x128xf32>
    %147 = arith.mulf %142, %146 : vector<2x128xf32>
    %148 = vector.extract_strided_slice %6 {offsets = [10, 0], sizes = [2, 512], strides = [1, 1]} : vector<16x512xf32> to vector<2x512xf32>
    %cst_28 = arith.constant dense<0.000000e+00> : vector<2x512xf32>
    %149 = tpu.matmul %147, %7, %cst_28 {dimension_numbers = #tpu.dot_dimension_numbers<[1], [0], [0], [1], [0, 0, 1, 1], [], []>} : vector<2x128xf32>, vector<128x512xf32>, vector<2x512xf32> -> vector<2x512xf32>
    %150 = arith.addf %148, %149 : vector<2x512xf32>
    %151 = vector.extract_strided_slice %150 {offsets = [0, 0], sizes = [2, 128], strides = [1, 1]} : vector<2x512xf32> to vector<2x128xf32>
    %152 = arith.negf %151 : vector<2x128xf32>
    %153 = math.exp %152 : vector<2x128xf32>
    %cst_29 = arith.constant 1.000000e+00 : f32
    %154 = vector.broadcast %cst_29 : f32 to vector<2x128xf32>
    %155 = arith.addf %154, %153 : vector<2x128xf32>
    %156 = arith.divf %154, %155 : vector<2x128xf32>
    %157 = vector.extract_strided_slice %150 {offsets = [0, 128], sizes = [2, 128], strides = [1, 1]} : vector<2x512xf32> to vector<2x128xf32>
    %158 = arith.negf %157 : vector<2x128xf32>
    %159 = math.exp %158 : vector<2x128xf32>
    %cst_30 = arith.constant 1.000000e+00 : f32
    %160 = vector.broadcast %cst_30 : f32 to vector<2x128xf32>
    %161 = arith.addf %160, %159 : vector<2x128xf32>
    %162 = arith.divf %160, %161 : vector<2x128xf32>
    %163 = vector.extract_strided_slice %150 {offsets = [0, 256], sizes = [2, 128], strides = [1, 1]} : vector<2x512xf32> to vector<2x128xf32>
    %164 = math.tanh %163 : vector<2x128xf32>
    %165 = vector.extract_strided_slice %150 {offsets = [0, 384], sizes = [2, 128], strides = [1, 1]} : vector<2x512xf32> to vector<2x128xf32>
    %166 = arith.negf %165 : vector<2x128xf32>
    %167 = math.exp %166 : vector<2x128xf32>
    %cst_31 = arith.constant 1.000000e+00 : f32
    %168 = vector.broadcast %cst_31 : f32 to vector<2x128xf32>
    %169 = arith.addf %168, %167 : vector<2x128xf32>
    %170 = arith.divf %168, %169 : vector<2x128xf32>
    %171 = arith.mulf %162, %145 : vector<2x128xf32>
    %172 = arith.mulf %156, %164 : vector<2x128xf32>
    %173 = arith.addf %171, %172 : vector<2x128xf32>
    %174 = math.tanh %173 : vector<2x128xf32>
    %175 = arith.mulf %170, %174 : vector<2x128xf32>
    %176 = vector.extract_strided_slice %6 {offsets = [12, 0], sizes = [2, 512], strides = [1, 1]} : vector<16x512xf32> to vector<2x512xf32>
    %cst_32 = arith.constant dense<0.000000e+00> : vector<2x512xf32>
    %177 = tpu.matmul %175, %7, %cst_32 {dimension_numbers = #tpu.dot_dimension_numbers<[1], [0], [0], [1], [0, 0, 1, 1], [], []>} : vector<2x128xf32>, vector<128x512xf32>, vector<2x512xf32> -> vector<2x512xf32>
    %178 = arith.addf %176, %177 : vector<2x512xf32>
    %179 = vector.extract_strided_slice %178 {offsets = [0, 0], sizes = [2, 128], strides = [1, 1]} : vector<2x512xf32> to vector<2x128xf32>
    %180 = arith.negf %179 : vector<2x128xf32>
    %181 = math.exp %180 : vector<2x128xf32>
    %cst_33 = arith.constant 1.000000e+00 : f32
    %182 = vector.broadcast %cst_33 : f32 to vector<2x128xf32>
    %183 = arith.addf %182, %181 : vector<2x128xf32>
    %184 = arith.divf %182, %183 : vector<2x128xf32>
    %185 = vector.extract_strided_slice %178 {offsets = [0, 128], sizes = [2, 128], strides = [1, 1]} : vector<2x512xf32> to vector<2x128xf32>
    %186 = arith.negf %185 : vector<2x128xf32>
    %187 = math.exp %186 : vector<2x128xf32>
    %cst_34 = arith.constant 1.000000e+00 : f32
    %188 = vector.broadcast %cst_34 : f32 to vector<2x128xf32>
    %189 = arith.addf %188, %187 : vector<2x128xf32>
    %190 = arith.divf %188, %189 : vector<2x128xf32>
    %191 = vector.extract_strided_slice %178 {offsets = [0, 256], sizes = [2, 128], strides = [1, 1]} : vector<2x512xf32> to vector<2x128xf32>
    %192 = math.tanh %191 : vector<2x128xf32>
    %193 = vector.extract_strided_slice %178 {offsets = [0, 384], sizes = [2, 128], strides = [1, 1]} : vector<2x512xf32> to vector<2x128xf32>
    %194 = arith.negf %193 : vector<2x128xf32>
    %195 = math.exp %194 : vector<2x128xf32>
    %cst_35 = arith.constant 1.000000e+00 : f32
    %196 = vector.broadcast %cst_35 : f32 to vector<2x128xf32>
    %197 = arith.addf %196, %195 : vector<2x128xf32>
    %198 = arith.divf %196, %197 : vector<2x128xf32>
    %199 = arith.mulf %190, %173 : vector<2x128xf32>
    %200 = arith.mulf %184, %192 : vector<2x128xf32>
    %201 = arith.addf %199, %200 : vector<2x128xf32>
    %202 = math.tanh %201 : vector<2x128xf32>
    %203 = arith.mulf %198, %202 : vector<2x128xf32>
    %204 = vector.extract_strided_slice %6 {offsets = [14, 0], sizes = [2, 512], strides = [1, 1]} : vector<16x512xf32> to vector<2x512xf32>
    %cst_36 = arith.constant dense<0.000000e+00> : vector<2x512xf32>
    %205 = tpu.matmul %203, %7, %cst_36 {dimension_numbers = #tpu.dot_dimension_numbers<[1], [0], [0], [1], [0, 0, 1, 1], [], []>} : vector<2x128xf32>, vector<128x512xf32>, vector<2x512xf32> -> vector<2x512xf32>
    %206 = arith.addf %204, %205 : vector<2x512xf32>
    %207 = vector.extract_strided_slice %206 {offsets = [0, 0], sizes = [2, 128], strides = [1, 1]} : vector<2x512xf32> to vector<2x128xf32>
    %208 = arith.negf %207 : vector<2x128xf32>
    %209 = math.exp %208 : vector<2x128xf32>
    %cst_37 = arith.constant 1.000000e+00 : f32
    %210 = vector.broadcast %cst_37 : f32 to vector<2x128xf32>
    %211 = arith.addf %210, %209 : vector<2x128xf32>
    %212 = arith.divf %210, %211 : vector<2x128xf32>
    %213 = vector.extract_strided_slice %206 {offsets = [0, 128], sizes = [2, 128], strides = [1, 1]} : vector<2x512xf32> to vector<2x128xf32>
    %214 = arith.negf %213 : vector<2x128xf32>
    %215 = math.exp %214 : vector<2x128xf32>
    %cst_38 = arith.constant 1.000000e+00 : f32
    %216 = vector.broadcast %cst_38 : f32 to vector<2x128xf32>
    %217 = arith.addf %216, %215 : vector<2x128xf32>
    %218 = arith.divf %216, %217 : vector<2x128xf32>
    %219 = vector.extract_strided_slice %206 {offsets = [0, 256], sizes = [2, 128], strides = [1, 1]} : vector<2x512xf32> to vector<2x128xf32>
    %220 = math.tanh %219 : vector<2x128xf32>
    %221 = vector.extract_strided_slice %206 {offsets = [0, 384], sizes = [2, 128], strides = [1, 1]} : vector<2x512xf32> to vector<2x128xf32>
    %222 = arith.negf %221 : vector<2x128xf32>
    %223 = math.exp %222 : vector<2x128xf32>
    %cst_39 = arith.constant 1.000000e+00 : f32
    %224 = vector.broadcast %cst_39 : f32 to vector<2x128xf32>
    %225 = arith.addf %224, %223 : vector<2x128xf32>
    %226 = arith.divf %224, %225 : vector<2x128xf32>
    %227 = arith.mulf %218, %201 : vector<2x128xf32>
    %228 = arith.mulf %212, %220 : vector<2x128xf32>
    %229 = arith.addf %227, %228 : vector<2x128xf32>
    %230 = math.tanh %229 : vector<2x128xf32>
    %231 = arith.mulf %226, %230 : vector<2x128xf32>
    %c0_40 = arith.constant 0 : index
    %c0_41 = arith.constant 0 : index
    %232 = vector.load %arg1[%c0_40, %c0_41] : memref<16x128xf32, #tpu.memory_space<vmem>>, vector<16x128xf32>
    %c0_42 = arith.constant 0 : index
    %c0_43 = arith.constant 0 : index
    %233 = vector.load %arg6[%c0_42, %c0_43] : memref<128x512xf32, #tpu.memory_space<vmem>>, vector<128x512xf32>
    %cst_44 = arith.constant dense<0.000000e+00> : vector<16x512xf32>
    %234 = tpu.matmul %232, %233, %cst_44 {dimension_numbers = #tpu.dot_dimension_numbers<[1], [0], [0], [1], [0, 0, 1, 1], [], []>} : vector<16x128xf32>, vector<128x512xf32>, vector<16x512xf32> -> vector<16x512xf32>
    %c0_45 = arith.constant 0 : index
    %c0_46 = arith.constant 0 : index
    %235 = vector.load %arg8[%c0_45, %c0_46] : memref<1x512xf32, #tpu.memory_space<vmem>>, vector<1x512xf32>
    %236 = vector.broadcast %235 : vector<1x512xf32> to vector<16x512xf32>
    %237 = arith.addf %234, %236 : vector<16x512xf32>
    %c0_47 = arith.constant 0 : index
    %c0_48 = arith.constant 0 : index
    %238 = vector.load %arg7[%c0_47, %c0_48] : memref<128x512xf32, #tpu.memory_space<vmem>>, vector<128x512xf32>
    %239 = vector.extract_strided_slice %237 {offsets = [0, 0], sizes = [2, 512], strides = [1, 1]} : vector<16x512xf32> to vector<2x512xf32>
    %cst_49 = arith.constant dense<0.000000e+00> : vector<2x512xf32>
    %240 = tpu.matmul %231, %238, %cst_49 {dimension_numbers = #tpu.dot_dimension_numbers<[1], [0], [0], [1], [0, 0, 1, 1], [], []>} : vector<2x128xf32>, vector<128x512xf32>, vector<2x512xf32> -> vector<2x512xf32>
    %241 = arith.addf %239, %240 : vector<2x512xf32>
    %242 = vector.extract_strided_slice %241 {offsets = [0, 0], sizes = [2, 128], strides = [1, 1]} : vector<2x512xf32> to vector<2x128xf32>
    %243 = arith.negf %242 : vector<2x128xf32>
    %244 = math.exp %243 : vector<2x128xf32>
    %cst_50 = arith.constant 1.000000e+00 : f32
    %245 = vector.broadcast %cst_50 : f32 to vector<2x128xf32>
    %246 = arith.addf %245, %244 : vector<2x128xf32>
    %247 = arith.divf %245, %246 : vector<2x128xf32>
    %248 = vector.extract_strided_slice %241 {offsets = [0, 128], sizes = [2, 128], strides = [1, 1]} : vector<2x512xf32> to vector<2x128xf32>
    %249 = arith.negf %248 : vector<2x128xf32>
    %250 = math.exp %249 : vector<2x128xf32>
    %cst_51 = arith.constant 1.000000e+00 : f32
    %251 = vector.broadcast %cst_51 : f32 to vector<2x128xf32>
    %252 = arith.addf %251, %250 : vector<2x128xf32>
    %253 = arith.divf %251, %252 : vector<2x128xf32>
    %254 = vector.extract_strided_slice %241 {offsets = [0, 256], sizes = [2, 128], strides = [1, 1]} : vector<2x512xf32> to vector<2x128xf32>
    %255 = math.tanh %254 : vector<2x128xf32>
    %256 = vector.extract_strided_slice %241 {offsets = [0, 384], sizes = [2, 128], strides = [1, 1]} : vector<2x512xf32> to vector<2x128xf32>
    %257 = arith.negf %256 : vector<2x128xf32>
    %258 = math.exp %257 : vector<2x128xf32>
    %cst_52 = arith.constant 1.000000e+00 : f32
    %259 = vector.broadcast %cst_52 : f32 to vector<2x128xf32>
    %260 = arith.addf %259, %258 : vector<2x128xf32>
    %261 = arith.divf %259, %260 : vector<2x128xf32>
    %262 = arith.mulf %253, %229 : vector<2x128xf32>
    %263 = arith.mulf %247, %255 : vector<2x128xf32>
    %264 = arith.addf %262, %263 : vector<2x128xf32>
    %265 = math.tanh %264 : vector<2x128xf32>
    %266 = arith.mulf %261, %265 : vector<2x128xf32>
    %c0_53 = arith.constant 0 : index
    %c0_54 = arith.constant 0 : index
    %c0_55 = arith.constant 0 : index
    %267 = vector.load %arg19[%c0_53, %c0_54, %c0_55] : memref<8x2x128xf32, #tpu.memory_space<vmem>>, vector<1x2x128xf32>
    %268 = vector.shape_cast %267 : vector<1x2x128xf32> to vector<2x128xf32>
    %269 = vector.shape_cast %266 : vector<2x128xf32> to vector<1x2x128xf32>
    tpu.vector_store %arg19[%c0_53, %c0_54, %c0_55], %269 {strides = array<i32>} : memref<8x2x128xf32, #tpu.memory_space<vmem>>, vector<1x2x128xf32>,
    %270 = vector.extract_strided_slice %237 {offsets = [2, 0], sizes = [2, 512], strides = [1, 1]} : vector<16x512xf32> to vector<2x512xf32>
    %cst_56 = arith.constant dense<0.000000e+00> : vector<2x512xf32>
    %271 = tpu.matmul %266, %238, %cst_56 {dimension_numbers = #tpu.dot_dimension_numbers<[1], [0], [0], [1], [0, 0, 1, 1], [], []>} : vector<2x128xf32>, vector<128x512xf32>, vector<2x512xf32> -> vector<2x512xf32>
    %272 = arith.addf %270, %271 : vector<2x512xf32>
    %273 = vector.extract_strided_slice %272 {offsets = [0, 0], sizes = [2, 128], strides = [1, 1]} : vector<2x512xf32> to vector<2x128xf32>
    %274 = arith.negf %273 : vector<2x128xf32>
    %275 = math.exp %274 : vector<2x128xf32>
    %cst_57 = arith.constant 1.000000e+00 : f32
    %276 = vector.broadcast %cst_57 : f32 to vector<2x128xf32>
    %277 = arith.addf %276, %275 : vector<2x128xf32>
    %278 = arith.divf %276, %277 : vector<2x128xf32>
    %279 = vector.extract_strided_slice %272 {offsets = [0, 128], sizes = [2, 128], strides = [1, 1]} : vector<2x512xf32> to vector<2x128xf32>
    %280 = arith.negf %279 : vector<2x128xf32>
    %281 = math.exp %280 : vector<2x128xf32>
    %cst_58 = arith.constant 1.000000e+00 : f32
    %282 = vector.broadcast %cst_58 : f32 to vector<2x128xf32>
    %283 = arith.addf %282, %281 : vector<2x128xf32>
    %284 = arith.divf %282, %283 : vector<2x128xf32>
    %285 = vector.extract_strided_slice %272 {offsets = [0, 256], sizes = [2, 128], strides = [1, 1]} : vector<2x512xf32> to vector<2x128xf32>
    %286 = math.tanh %285 : vector<2x128xf32>
    %287 = vector.extract_strided_slice %272 {offsets = [0, 384], sizes = [2, 128], strides = [1, 1]} : vector<2x512xf32> to vector<2x128xf32>
    %288 = arith.negf %287 : vector<2x128xf32>
    %289 = math.exp %288 : vector<2x128xf32>
    %cst_59 = arith.constant 1.000000e+00 : f32
    %290 = vector.broadcast %cst_59 : f32 to vector<2x128xf32>
    %291 = arith.addf %290, %289 : vector<2x128xf32>
    %292 = arith.divf %290, %291 : vector<2x128xf32>
    %293 = arith.mulf %284, %264 : vector<2x128xf32>
    %294 = arith.mulf %278, %286 : vector<2x128xf32>
    %295 = arith.addf %293, %294 : vector<2x128xf32>
    %296 = math.tanh %295 : vector<2x128xf32>
    %297 = arith.mulf %292, %296 : vector<2x128xf32>
    %c1 = arith.constant 1 : index
    %c0_60 = arith.constant 0 : index
    %c0_61 = arith.constant 0 : index
    %298 = vector.load %arg19[%c1, %c0_60, %c0_61] : memref<8x2x128xf32, #tpu.memory_space<vmem>>, vector<1x2x128xf32>
    %299 = vector.shape_cast %298 : vector<1x2x128xf32> to vector<2x128xf32>
    %300 = vector.shape_cast %297 : vector<2x128xf32> to vector<1x2x128xf32>
    tpu.vector_store %arg19[%c1, %c0_60, %c0_61], %300 {strides = array<i32>} : memref<8x2x128xf32, #tpu.memory_space<vmem>>, vector<1x2x128xf32>,
    %301 = vector.extract_strided_slice %237 {offsets = [4, 0], sizes = [2, 512], strides = [1, 1]} : vector<16x512xf32> to vector<2x512xf32>
    %cst_62 = arith.constant dense<0.000000e+00> : vector<2x512xf32>
    %302 = tpu.matmul %297, %238, %cst_62 {dimension_numbers = #tpu.dot_dimension_numbers<[1], [0], [0], [1], [0, 0, 1, 1], [], []>} : vector<2x128xf32>, vector<128x512xf32>, vector<2x512xf32> -> vector<2x512xf32>
    %303 = arith.addf %301, %302 : vector<2x512xf32>
    %304 = vector.extract_strided_slice %303 {offsets = [0, 0], sizes = [2, 128], strides = [1, 1]} : vector<2x512xf32> to vector<2x128xf32>
    %305 = arith.negf %304 : vector<2x128xf32>
    %306 = math.exp %305 : vector<2x128xf32>
    %cst_63 = arith.constant 1.000000e+00 : f32
    %307 = vector.broadcast %cst_63 : f32 to vector<2x128xf32>
    %308 = arith.addf %307, %306 : vector<2x128xf32>
    %309 = arith.divf %307, %308 : vector<2x128xf32>
    %310 = vector.extract_strided_slice %303 {offsets = [0, 128], sizes = [2, 128], strides = [1, 1]} : vector<2x512xf32> to vector<2x128xf32>
    %311 = arith.negf %310 : vector<2x128xf32>
    %312 = math.exp %311 : vector<2x128xf32>
    %cst_64 = arith.constant 1.000000e+00 : f32
    %313 = vector.broadcast %cst_64 : f32 to vector<2x128xf32>
    %314 = arith.addf %313, %312 : vector<2x128xf32>
    %315 = arith.divf %313, %314 : vector<2x128xf32>
    %316 = vector.extract_strided_slice %303 {offsets = [0, 256], sizes = [2, 128], strides = [1, 1]} : vector<2x512xf32> to vector<2x128xf32>
    %317 = math.tanh %316 : vector<2x128xf32>
    %318 = vector.extract_strided_slice %303 {offsets = [0, 384], sizes = [2, 128], strides = [1, 1]} : vector<2x512xf32> to vector<2x128xf32>
    %319 = arith.negf %318 : vector<2x128xf32>
    %320 = math.exp %319 : vector<2x128xf32>
    %cst_65 = arith.constant 1.000000e+00 : f32
    %321 = vector.broadcast %cst_65 : f32 to vector<2x128xf32>
    %322 = arith.addf %321, %320 : vector<2x128xf32>
    %323 = arith.divf %321, %322 : vector<2x128xf32>
    %324 = arith.mulf %315, %295 : vector<2x128xf32>
    %325 = arith.mulf %309, %317 : vector<2x128xf32>
    %326 = arith.addf %324, %325 : vector<2x128xf32>
    %327 = math.tanh %326 : vector<2x128xf32>
    %328 = arith.mulf %323, %327 : vector<2x128xf32>
    %c2 = arith.constant 2 : index
    %c0_66 = arith.constant 0 : index
    %c0_67 = arith.constant 0 : index
    %329 = vector.load %arg19[%c2, %c0_66, %c0_67] : memref<8x2x128xf32, #tpu.memory_space<vmem>>, vector<1x2x128xf32>
    %330 = vector.shape_cast %329 : vector<1x2x128xf32> to vector<2x128xf32>
    %331 = vector.shape_cast %328 : vector<2x128xf32> to vector<1x2x128xf32>
    tpu.vector_store %arg19[%c2, %c0_66, %c0_67], %331 {strides = array<i32>} : memref<8x2x128xf32, #tpu.memory_space<vmem>>, vector<1x2x128xf32>,
    %332 = vector.extract_strided_slice %237 {offsets = [6, 0], sizes = [2, 512], strides = [1, 1]} : vector<16x512xf32> to vector<2x512xf32>
    %cst_68 = arith.constant dense<0.000000e+00> : vector<2x512xf32>
    %333 = tpu.matmul %328, %238, %cst_68 {dimension_numbers = #tpu.dot_dimension_numbers<[1], [0], [0], [1], [0, 0, 1, 1], [], []>} : vector<2x128xf32>, vector<128x512xf32>, vector<2x512xf32> -> vector<2x512xf32>
    %334 = arith.addf %332, %333 : vector<2x512xf32>
    %335 = vector.extract_strided_slice %334 {offsets = [0, 0], sizes = [2, 128], strides = [1, 1]} : vector<2x512xf32> to vector<2x128xf32>
    %336 = arith.negf %335 : vector<2x128xf32>
    %337 = math.exp %336 : vector<2x128xf32>
    %cst_69 = arith.constant 1.000000e+00 : f32
    %338 = vector.broadcast %cst_69 : f32 to vector<2x128xf32>
    %339 = arith.addf %338, %337 : vector<2x128xf32>
    %340 = arith.divf %338, %339 : vector<2x128xf32>
    %341 = vector.extract_strided_slice %334 {offsets = [0, 128], sizes = [2, 128], strides = [1, 1]} : vector<2x512xf32> to vector<2x128xf32>
    %342 = arith.negf %341 : vector<2x128xf32>
    %343 = math.exp %342 : vector<2x128xf32>
    %cst_70 = arith.constant 1.000000e+00 : f32
    %344 = vector.broadcast %cst_70 : f32 to vector<2x128xf32>
    %345 = arith.addf %344, %343 : vector<2x128xf32>
    %346 = arith.divf %344, %345 : vector<2x128xf32>
    %347 = vector.extract_strided_slice %334 {offsets = [0, 256], sizes = [2, 128], strides = [1, 1]} : vector<2x512xf32> to vector<2x128xf32>
    %348 = math.tanh %347 : vector<2x128xf32>
    %349 = vector.extract_strided_slice %334 {offsets = [0, 384], sizes = [2, 128], strides = [1, 1]} : vector<2x512xf32> to vector<2x128xf32>
    %350 = arith.negf %349 : vector<2x128xf32>
    %351 = math.exp %350 : vector<2x128xf32>
    %cst_71 = arith.constant 1.000000e+00 : f32
    %352 = vector.broadcast %cst_71 : f32 to vector<2x128xf32>
    %353 = arith.addf %352, %351 : vector<2x128xf32>
    %354 = arith.divf %352, %353 : vector<2x128xf32>
    %355 = arith.mulf %346, %326 : vector<2x128xf32>
    %356 = arith.mulf %340, %348 : vector<2x128xf32>
    %357 = arith.addf %355, %356 : vector<2x128xf32>
    %358 = math.tanh %357 : vector<2x128xf32>
    %359 = arith.mulf %354, %358 : vector<2x128xf32>
    %c3 = arith.constant 3 : index
    %c0_72 = arith.constant 0 : index
    %c0_73 = arith.constant 0 : index
    %360 = vector.load %arg19[%c3, %c0_72, %c0_73] : memref<8x2x128xf32, #tpu.memory_space<vmem>>, vector<1x2x128xf32>
    %361 = vector.shape_cast %360 : vector<1x2x128xf32> to vector<2x128xf32>
    %362 = vector.shape_cast %359 : vector<2x128xf32> to vector<1x2x128xf32>
    tpu.vector_store %arg19[%c3, %c0_72, %c0_73], %362 {strides = array<i32>} : memref<8x2x128xf32, #tpu.memory_space<vmem>>, vector<1x2x128xf32>,
    %363 = vector.extract_strided_slice %237 {offsets = [8, 0], sizes = [2, 512], strides = [1, 1]} : vector<16x512xf32> to vector<2x512xf32>
    %cst_74 = arith.constant dense<0.000000e+00> : vector<2x512xf32>
    %364 = tpu.matmul %359, %238, %cst_74 {dimension_numbers = #tpu.dot_dimension_numbers<[1], [0], [0], [1], [0, 0, 1, 1], [], []>} : vector<2x128xf32>, vector<128x512xf32>, vector<2x512xf32> -> vector<2x512xf32>
    %365 = arith.addf %363, %364 : vector<2x512xf32>
    %366 = vector.extract_strided_slice %365 {offsets = [0, 0], sizes = [2, 128], strides = [1, 1]} : vector<2x512xf32> to vector<2x128xf32>
    %367 = arith.negf %366 : vector<2x128xf32>
    %368 = math.exp %367 : vector<2x128xf32>
    %cst_75 = arith.constant 1.000000e+00 : f32
    %369 = vector.broadcast %cst_75 : f32 to vector<2x128xf32>
    %370 = arith.addf %369, %368 : vector<2x128xf32>
    %371 = arith.divf %369, %370 : vector<2x128xf32>
    %372 = vector.extract_strided_slice %365 {offsets = [0, 128], sizes = [2, 128], strides = [1, 1]} : vector<2x512xf32> to vector<2x128xf32>
    %373 = arith.negf %372 : vector<2x128xf32>
    %374 = math.exp %373 : vector<2x128xf32>
    %cst_76 = arith.constant 1.000000e+00 : f32
    %375 = vector.broadcast %cst_76 : f32 to vector<2x128xf32>
    %376 = arith.addf %375, %374 : vector<2x128xf32>
    %377 = arith.divf %375, %376 : vector<2x128xf32>
    %378 = vector.extract_strided_slice %365 {offsets = [0, 256], sizes = [2, 128], strides = [1, 1]} : vector<2x512xf32> to vector<2x128xf32>
    %379 = math.tanh %378 : vector<2x128xf32>
    %380 = vector.extract_strided_slice %365 {offsets = [0, 384], sizes = [2, 128], strides = [1, 1]} : vector<2x512xf32> to vector<2x128xf32>
    %381 = arith.negf %380 : vector<2x128xf32>
    %382 = math.exp %381 : vector<2x128xf32>
    %cst_77 = arith.constant 1.000000e+00 : f32
    %383 = vector.broadcast %cst_77 : f32 to vector<2x128xf32>
    %384 = arith.addf %383, %382 : vector<2x128xf32>
    %385 = arith.divf %383, %384 : vector<2x128xf32>
    %386 = arith.mulf %377, %357 : vector<2x128xf32>
    %387 = arith.mulf %371, %379 : vector<2x128xf32>
    %388 = arith.addf %386, %387 : vector<2x128xf32>
    %389 = math.tanh %388 : vector<2x128xf32>
    %390 = arith.mulf %385, %389 : vector<2x128xf32>
    %c4 = arith.constant 4 : index
    %c0_78 = arith.constant 0 : index
    %c0_79 = arith.constant 0 : index
    %391 = vector.load %arg19[%c4, %c0_78, %c0_79] : memref<8x2x128xf32, #tpu.memory_space<vmem>>, vector<1x2x128xf32>
    %392 = vector.shape_cast %391 : vector<1x2x128xf32> to vector<2x128xf32>
    %393 = vector.shape_cast %390 : vector<2x128xf32> to vector<1x2x128xf32>
    tpu.vector_store %arg19[%c4, %c0_78, %c0_79], %393 {strides = array<i32>} : memref<8x2x128xf32, #tpu.memory_space<vmem>>, vector<1x2x128xf32>,
    %394 = vector.extract_strided_slice %237 {offsets = [10, 0], sizes = [2, 512], strides = [1, 1]} : vector<16x512xf32> to vector<2x512xf32>
    %cst_80 = arith.constant dense<0.000000e+00> : vector<2x512xf32>
    %395 = tpu.matmul %390, %238, %cst_80 {dimension_numbers = #tpu.dot_dimension_numbers<[1], [0], [0], [1], [0, 0, 1, 1], [], []>} : vector<2x128xf32>, vector<128x512xf32>, vector<2x512xf32> -> vector<2x512xf32>
    %396 = arith.addf %394, %395 : vector<2x512xf32>
    %397 = vector.extract_strided_slice %396 {offsets = [0, 0], sizes = [2, 128], strides = [1, 1]} : vector<2x512xf32> to vector<2x128xf32>
    %398 = arith.negf %397 : vector<2x128xf32>
    %399 = math.exp %398 : vector<2x128xf32>
    %cst_81 = arith.constant 1.000000e+00 : f32
    %400 = vector.broadcast %cst_81 : f32 to vector<2x128xf32>
    %401 = arith.addf %400, %399 : vector<2x128xf32>
    %402 = arith.divf %400, %401 : vector<2x128xf32>
    %403 = vector.extract_strided_slice %396 {offsets = [0, 128], sizes = [2, 128], strides = [1, 1]} : vector<2x512xf32> to vector<2x128xf32>
    %404 = arith.negf %403 : vector<2x128xf32>
    %405 = math.exp %404 : vector<2x128xf32>
    %cst_82 = arith.constant 1.000000e+00 : f32
    %406 = vector.broadcast %cst_82 : f32 to vector<2x128xf32>
    %407 = arith.addf %406, %405 : vector<2x128xf32>
    %408 = arith.divf %406, %407 : vector<2x128xf32>
    %409 = vector.extract_strided_slice %396 {offsets = [0, 256], sizes = [2, 128], strides = [1, 1]} : vector<2x512xf32> to vector<2x128xf32>
    %410 = math.tanh %409 : vector<2x128xf32>
    %411 = vector.extract_strided_slice %396 {offsets = [0, 384], sizes = [2, 128], strides = [1, 1]} : vector<2x512xf32> to vector<2x128xf32>
    %412 = arith.negf %411 : vector<2x128xf32>
    %413 = math.exp %412 : vector<2x128xf32>
    %cst_83 = arith.constant 1.000000e+00 : f32
    %414 = vector.broadcast %cst_83 : f32 to vector<2x128xf32>
    %415 = arith.addf %414, %413 : vector<2x128xf32>
    %416 = arith.divf %414, %415 : vector<2x128xf32>
    %417 = arith.mulf %408, %388 : vector<2x128xf32>
    %418 = arith.mulf %402, %410 : vector<2x128xf32>
    %419 = arith.addf %417, %418 : vector<2x128xf32>
    %420 = math.tanh %419 : vector<2x128xf32>
    %421 = arith.mulf %416, %420 : vector<2x128xf32>
    %c5 = arith.constant 5 : index
    %c0_84 = arith.constant 0 : index
    %c0_85 = arith.constant 0 : index
    %422 = vector.load %arg19[%c5, %c0_84, %c0_85] : memref<8x2x128xf32, #tpu.memory_space<vmem>>, vector<1x2x128xf32>
    %423 = vector.shape_cast %422 : vector<1x2x128xf32> to vector<2x128xf32>
    %424 = vector.shape_cast %421 : vector<2x128xf32> to vector<1x2x128xf32>
    tpu.vector_store %arg19[%c5, %c0_84, %c0_85], %424 {strides = array<i32>} : memref<8x2x128xf32, #tpu.memory_space<vmem>>, vector<1x2x128xf32>,
    %425 = vector.extract_strided_slice %237 {offsets = [12, 0], sizes = [2, 512], strides = [1, 1]} : vector<16x512xf32> to vector<2x512xf32>
    %cst_86 = arith.constant dense<0.000000e+00> : vector<2x512xf32>
    %426 = tpu.matmul %421, %238, %cst_86 {dimension_numbers = #tpu.dot_dimension_numbers<[1], [0], [0], [1], [0, 0, 1, 1], [], []>} : vector<2x128xf32>, vector<128x512xf32>, vector<2x512xf32> -> vector<2x512xf32>
    %427 = arith.addf %425, %426 : vector<2x512xf32>
    %428 = vector.extract_strided_slice %427 {offsets = [0, 0], sizes = [2, 128], strides = [1, 1]} : vector<2x512xf32> to vector<2x128xf32>
    %429 = arith.negf %428 : vector<2x128xf32>
    %430 = math.exp %429 : vector<2x128xf32>
    %cst_87 = arith.constant 1.000000e+00 : f32
    %431 = vector.broadcast %cst_87 : f32 to vector<2x128xf32>
    %432 = arith.addf %431, %430 : vector<2x128xf32>
    %433 = arith.divf %431, %432 : vector<2x128xf32>
    %434 = vector.extract_strided_slice %427 {offsets = [0, 128], sizes = [2, 128], strides = [1, 1]} : vector<2x512xf32> to vector<2x128xf32>
    %435 = arith.negf %434 : vector<2x128xf32>
    %436 = math.exp %435 : vector<2x128xf32>
    %cst_88 = arith.constant 1.000000e+00 : f32
    %437 = vector.broadcast %cst_88 : f32 to vector<2x128xf32>
    %438 = arith.addf %437, %436 : vector<2x128xf32>
    %439 = arith.divf %437, %438 : vector<2x128xf32>
    %440 = vector.extract_strided_slice %427 {offsets = [0, 256], sizes = [2, 128], strides = [1, 1]} : vector<2x512xf32> to vector<2x128xf32>
    %441 = math.tanh %440 : vector<2x128xf32>
    %442 = vector.extract_strided_slice %427 {offsets = [0, 384], sizes = [2, 128], strides = [1, 1]} : vector<2x512xf32> to vector<2x128xf32>
    %443 = arith.negf %442 : vector<2x128xf32>
    %444 = math.exp %443 : vector<2x128xf32>
    %cst_89 = arith.constant 1.000000e+00 : f32
    %445 = vector.broadcast %cst_89 : f32 to vector<2x128xf32>
    %446 = arith.addf %445, %444 : vector<2x128xf32>
    %447 = arith.divf %445, %446 : vector<2x128xf32>
    %448 = arith.mulf %439, %419 : vector<2x128xf32>
    %449 = arith.mulf %433, %441 : vector<2x128xf32>
    %450 = arith.addf %448, %449 : vector<2x128xf32>
    %451 = math.tanh %450 : vector<2x128xf32>
    %452 = arith.mulf %447, %451 : vector<2x128xf32>
    %c6 = arith.constant 6 : index
    %c0_90 = arith.constant 0 : index
    %c0_91 = arith.constant 0 : index
    %453 = vector.load %arg19[%c6, %c0_90, %c0_91] : memref<8x2x128xf32, #tpu.memory_space<vmem>>, vector<1x2x128xf32>
    %454 = vector.shape_cast %453 : vector<1x2x128xf32> to vector<2x128xf32>
    %455 = vector.shape_cast %452 : vector<2x128xf32> to vector<1x2x128xf32>
    tpu.vector_store %arg19[%c6, %c0_90, %c0_91], %455 {strides = array<i32>} : memref<8x2x128xf32, #tpu.memory_space<vmem>>, vector<1x2x128xf32>,
    %456 = vector.extract_strided_slice %237 {offsets = [14, 0], sizes = [2, 512], strides = [1, 1]} : vector<16x512xf32> to vector<2x512xf32>
    %cst_92 = arith.constant dense<0.000000e+00> : vector<2x512xf32>
    %457 = tpu.matmul %452, %238, %cst_92 {dimension_numbers = #tpu.dot_dimension_numbers<[1], [0], [0], [1], [0, 0, 1, 1], [], []>} : vector<2x128xf32>, vector<128x512xf32>, vector<2x512xf32> -> vector<2x512xf32>
    %458 = arith.addf %456, %457 : vector<2x512xf32>
    %459 = vector.extract_strided_slice %458 {offsets = [0, 0], sizes = [2, 128], strides = [1, 1]} : vector<2x512xf32> to vector<2x128xf32>
    %460 = arith.negf %459 : vector<2x128xf32>
    %461 = math.exp %460 : vector<2x128xf32>
    %cst_93 = arith.constant 1.000000e+00 : f32
    %462 = vector.broadcast %cst_93 : f32 to vector<2x128xf32>
    %463 = arith.addf %462, %461 : vector<2x128xf32>
    %464 = arith.divf %462, %463 : vector<2x128xf32>
    %465 = vector.extract_strided_slice %458 {offsets = [0, 128], sizes = [2, 128], strides = [1, 1]} : vector<2x512xf32> to vector<2x128xf32>
    %466 = arith.negf %465 : vector<2x128xf32>
    %467 = math.exp %466 : vector<2x128xf32>
    %cst_94 = arith.constant 1.000000e+00 : f32
    %468 = vector.broadcast %cst_94 : f32 to vector<2x128xf32>
    %469 = arith.addf %468, %467 : vector<2x128xf32>
    %470 = arith.divf %468, %469 : vector<2x128xf32>
    %471 = vector.extract_strided_slice %458 {offsets = [0, 256], sizes = [2, 128], strides = [1, 1]} : vector<2x512xf32> to vector<2x128xf32>
    %472 = math.tanh %471 : vector<2x128xf32>
    %473 = vector.extract_strided_slice %458 {offsets = [0, 384], sizes = [2, 128], strides = [1, 1]} : vector<2x512xf32> to vector<2x128xf32>
    %474 = arith.negf %473 : vector<2x128xf32>
    %475 = math.exp %474 : vector<2x128xf32>
    %cst_95 = arith.constant 1.000000e+00 : f32
    %476 = vector.broadcast %cst_95 : f32 to vector<2x128xf32>
    %477 = arith.addf %476, %475 : vector<2x128xf32>
    %478 = arith.divf %476, %477 : vector<2x128xf32>
    %479 = arith.mulf %470, %450 : vector<2x128xf32>
    %480 = arith.mulf %464, %472 : vector<2x128xf32>
    %481 = arith.addf %479, %480 : vector<2x128xf32>
    %482 = math.tanh %481 : vector<2x128xf32>
    %483 = arith.mulf %478, %482 : vector<2x128xf32>
    %c7 = arith.constant 7 : index
    %c0_96 = arith.constant 0 : index
    %c0_97 = arith.constant 0 : index
    %484 = vector.load %arg19[%c7, %c0_96, %c0_97] : memref<8x2x128xf32, #tpu.memory_space<vmem>>, vector<1x2x128xf32>
    %485 = vector.shape_cast %484 : vector<1x2x128xf32> to vector<2x128xf32>
    %486 = vector.shape_cast %483 : vector<2x128xf32> to vector<1x2x128xf32>
    tpu.vector_store %arg19[%c7, %c0_96, %c0_97], %486 {strides = array<i32>} : memref<8x2x128xf32, #tpu.memory_space<vmem>>, vector<1x2x128xf32>,
    %c0_98 = arith.constant 0 : index
    %c0_99 = arith.constant 0 : index
    %487 = vector.load %arg2[%c0_98, %c0_99] : memref<16x128xf32, #tpu.memory_space<vmem>>, vector<16x128xf32>
    %c0_100 = arith.constant 0 : index
    %c0_101 = arith.constant 0 : index
    %488 = vector.load %arg9[%c0_100, %c0_101] : memref<128x512xf32, #tpu.memory_space<vmem>>, vector<128x512xf32>
    %cst_102 = arith.constant dense<0.000000e+00> : vector<16x512xf32>
    %489 = tpu.matmul %487, %488, %cst_102 {dimension_numbers = #tpu.dot_dimension_numbers<[1], [0], [0], [1], [0, 0, 1, 1], [], []>} : vector<16x128xf32>, vector<128x512xf32>, vector<16x512xf32> -> vector<16x512xf32>
    %c0_103 = arith.constant 0 : index
    %c0_104 = arith.constant 0 : index
    %490 = vector.load %arg11[%c0_103, %c0_104] : memref<1x512xf32, #tpu.memory_space<vmem>>, vector<1x512xf32>
    %491 = vector.broadcast %490 : vector<1x512xf32> to vector<16x512xf32>
    %492 = arith.addf %489, %491 : vector<16x512xf32>
    %c0_105 = arith.constant 0 : index
    %c0_106 = arith.constant 0 : index
    %493 = vector.load %arg10[%c0_105, %c0_106] : memref<128x512xf32, #tpu.memory_space<vmem>>, vector<128x512xf32>
    %494 = vector.extract_strided_slice %492 {offsets = [0, 0], sizes = [2, 512], strides = [1, 1]} : vector<16x512xf32> to vector<2x512xf32>
    %cst_107 = arith.constant dense<0.000000e+00> : vector<2x512xf32>
    %495 = tpu.matmul %483, %493, %cst_107 {dimension_numbers = #tpu.dot_dimension_numbers<[1], [0], [0], [1], [0, 0, 1, 1], [], []>} : vector<2x128xf32>, vector<128x512xf32>, vector<2x512xf32> -> vector<2x512xf32>
    %496 = arith.addf %494, %495 : vector<2x512xf32>
    %497 = vector.extract_strided_slice %496 {offsets = [0, 0], sizes = [2, 128], strides = [1, 1]} : vector<2x512xf32> to vector<2x128xf32>
    %498 = arith.negf %497 : vector<2x128xf32>
    %499 = math.exp %498 : vector<2x128xf32>
    %cst_108 = arith.constant 1.000000e+00 : f32
    %500 = vector.broadcast %cst_108 : f32 to vector<2x128xf32>
    %501 = arith.addf %500, %499 : vector<2x128xf32>
    %502 = arith.divf %500, %501 : vector<2x128xf32>
    %503 = vector.extract_strided_slice %496 {offsets = [0, 128], sizes = [2, 128], strides = [1, 1]} : vector<2x512xf32> to vector<2x128xf32>
    %504 = arith.negf %503 : vector<2x128xf32>
    %505 = math.exp %504 : vector<2x128xf32>
    %cst_109 = arith.constant 1.000000e+00 : f32
    %506 = vector.broadcast %cst_109 : f32 to vector<2x128xf32>
    %507 = arith.addf %506, %505 : vector<2x128xf32>
    %508 = arith.divf %506, %507 : vector<2x128xf32>
    %509 = vector.extract_strided_slice %496 {offsets = [0, 256], sizes = [2, 128], strides = [1, 1]} : vector<2x512xf32> to vector<2x128xf32>
    %510 = math.tanh %509 : vector<2x128xf32>
    %511 = vector.extract_strided_slice %496 {offsets = [0, 384], sizes = [2, 128], strides = [1, 1]} : vector<2x512xf32> to vector<2x128xf32>
    %512 = arith.negf %511 : vector<2x128xf32>
    %513 = math.exp %512 : vector<2x128xf32>
    %cst_110 = arith.constant 1.000000e+00 : f32
    %514 = vector.broadcast %cst_110 : f32 to vector<2x128xf32>
    %515 = arith.addf %514, %513 : vector<2x128xf32>
    %516 = arith.divf %514, %515 : vector<2x128xf32>
    %517 = arith.mulf %508, %481 : vector<2x128xf32>
    %518 = arith.mulf %502, %510 : vector<2x128xf32>
    %519 = arith.addf %517, %518 : vector<2x128xf32>
    %520 = math.tanh %519 : vector<2x128xf32>
    %521 = arith.mulf %516, %520 : vector<2x128xf32>
    %c0_111 = arith.constant 0 : index
    %c0_112 = arith.constant 0 : index
    %c0_113 = arith.constant 0 : index
    %522 = vector.load %arg20[%c0_111, %c0_112, %c0_113] : memref<8x2x128xf32, #tpu.memory_space<vmem>>, vector<1x2x128xf32>
    %523 = vector.shape_cast %522 : vector<1x2x128xf32> to vector<2x128xf32>
    %524 = vector.shape_cast %521 : vector<2x128xf32> to vector<1x2x128xf32>
    tpu.vector_store %arg20[%c0_111, %c0_112, %c0_113], %524 {strides = array<i32>} : memref<8x2x128xf32, #tpu.memory_space<vmem>>, vector<1x2x128xf32>,
    %525 = vector.extract_strided_slice %492 {offsets = [2, 0], sizes = [2, 512], strides = [1, 1]} : vector<16x512xf32> to vector<2x512xf32>
    %cst_114 = arith.constant dense<0.000000e+00> : vector<2x512xf32>
    %526 = tpu.matmul %521, %493, %cst_114 {dimension_numbers = #tpu.dot_dimension_numbers<[1], [0], [0], [1], [0, 0, 1, 1], [], []>} : vector<2x128xf32>, vector<128x512xf32>, vector<2x512xf32> -> vector<2x512xf32>
    %527 = arith.addf %525, %526 : vector<2x512xf32>
    %528 = vector.extract_strided_slice %527 {offsets = [0, 0], sizes = [2, 128], strides = [1, 1]} : vector<2x512xf32> to vector<2x128xf32>
    %529 = arith.negf %528 : vector<2x128xf32>
    %530 = math.exp %529 : vector<2x128xf32>
    %cst_115 = arith.constant 1.000000e+00 : f32
    %531 = vector.broadcast %cst_115 : f32 to vector<2x128xf32>
    %532 = arith.addf %531, %530 : vector<2x128xf32>
    %533 = arith.divf %531, %532 : vector<2x128xf32>
    %534 = vector.extract_strided_slice %527 {offsets = [0, 128], sizes = [2, 128], strides = [1, 1]} : vector<2x512xf32> to vector<2x128xf32>
    %535 = arith.negf %534 : vector<2x128xf32>
    %536 = math.exp %535 : vector<2x128xf32>
    %cst_116 = arith.constant 1.000000e+00 : f32
    %537 = vector.broadcast %cst_116 : f32 to vector<2x128xf32>
    %538 = arith.addf %537, %536 : vector<2x128xf32>
    %539 = arith.divf %537, %538 : vector<2x128xf32>
    %540 = vector.extract_strided_slice %527 {offsets = [0, 256], sizes = [2, 128], strides = [1, 1]} : vector<2x512xf32> to vector<2x128xf32>
    %541 = math.tanh %540 : vector<2x128xf32>
    %542 = vector.extract_strided_slice %527 {offsets = [0, 384], sizes = [2, 128], strides = [1, 1]} : vector<2x512xf32> to vector<2x128xf32>
    %543 = arith.negf %542 : vector<2x128xf32>
    %544 = math.exp %543 : vector<2x128xf32>
    %cst_117 = arith.constant 1.000000e+00 : f32
    %545 = vector.broadcast %cst_117 : f32 to vector<2x128xf32>
    %546 = arith.addf %545, %544 : vector<2x128xf32>
    %547 = arith.divf %545, %546 : vector<2x128xf32>
    %548 = arith.mulf %539, %519 : vector<2x128xf32>
    %549 = arith.mulf %533, %541 : vector<2x128xf32>
    %550 = arith.addf %548, %549 : vector<2x128xf32>
    %551 = math.tanh %550 : vector<2x128xf32>
    %552 = arith.mulf %547, %551 : vector<2x128xf32>
    %c1_118 = arith.constant 1 : index
    %c0_119 = arith.constant 0 : index
    %c0_120 = arith.constant 0 : index
    %553 = vector.load %arg20[%c1_118, %c0_119, %c0_120] : memref<8x2x128xf32, #tpu.memory_space<vmem>>, vector<1x2x128xf32>
    %554 = vector.shape_cast %553 : vector<1x2x128xf32> to vector<2x128xf32>
    %555 = vector.shape_cast %552 : vector<2x128xf32> to vector<1x2x128xf32>
    tpu.vector_store %arg20[%c1_118, %c0_119, %c0_120], %555 {strides = array<i32>} : memref<8x2x128xf32, #tpu.memory_space<vmem>>, vector<1x2x128xf32>,
    %556 = vector.extract_strided_slice %492 {offsets = [4, 0], sizes = [2, 512], strides = [1, 1]} : vector<16x512xf32> to vector<2x512xf32>
    %cst_121 = arith.constant dense<0.000000e+00> : vector<2x512xf32>
    %557 = tpu.matmul %552, %493, %cst_121 {dimension_numbers = #tpu.dot_dimension_numbers<[1], [0], [0], [1], [0, 0, 1, 1], [], []>} : vector<2x128xf32>, vector<128x512xf32>, vector<2x512xf32> -> vector<2x512xf32>
    %558 = arith.addf %556, %557 : vector<2x512xf32>
    %559 = vector.extract_strided_slice %558 {offsets = [0, 0], sizes = [2, 128], strides = [1, 1]} : vector<2x512xf32> to vector<2x128xf32>
    %560 = arith.negf %559 : vector<2x128xf32>
    %561 = math.exp %560 : vector<2x128xf32>
    %cst_122 = arith.constant 1.000000e+00 : f32
    %562 = vector.broadcast %cst_122 : f32 to vector<2x128xf32>
    %563 = arith.addf %562, %561 : vector<2x128xf32>
    %564 = arith.divf %562, %563 : vector<2x128xf32>
    %565 = vector.extract_strided_slice %558 {offsets = [0, 128], sizes = [2, 128], strides = [1, 1]} : vector<2x512xf32> to vector<2x128xf32>
    %566 = arith.negf %565 : vector<2x128xf32>
    %567 = math.exp %566 : vector<2x128xf32>
    %cst_123 = arith.constant 1.000000e+00 : f32
    %568 = vector.broadcast %cst_123 : f32 to vector<2x128xf32>
    %569 = arith.addf %568, %567 : vector<2x128xf32>
    %570 = arith.divf %568, %569 : vector<2x128xf32>
    %571 = vector.extract_strided_slice %558 {offsets = [0, 256], sizes = [2, 128], strides = [1, 1]} : vector<2x512xf32> to vector<2x128xf32>
    %572 = math.tanh %571 : vector<2x128xf32>
    %573 = vector.extract_strided_slice %558 {offsets = [0, 384], sizes = [2, 128], strides = [1, 1]} : vector<2x512xf32> to vector<2x128xf32>
    %574 = arith.negf %573 : vector<2x128xf32>
    %575 = math.exp %574 : vector<2x128xf32>
    %cst_124 = arith.constant 1.000000e+00 : f32
    %576 = vector.broadcast %cst_124 : f32 to vector<2x128xf32>
    %577 = arith.addf %576, %575 : vector<2x128xf32>
    %578 = arith.divf %576, %577 : vector<2x128xf32>
    %579 = arith.mulf %570, %550 : vector<2x128xf32>
    %580 = arith.mulf %564, %572 : vector<2x128xf32>
    %581 = arith.addf %579, %580 : vector<2x128xf32>
    %582 = math.tanh %581 : vector<2x128xf32>
    %583 = arith.mulf %578, %582 : vector<2x128xf32>
    %c2_125 = arith.constant 2 : index
    %c0_126 = arith.constant 0 : index
    %c0_127 = arith.constant 0 : index
    %584 = vector.load %arg20[%c2_125, %c0_126, %c0_127] : memref<8x2x128xf32, #tpu.memory_space<vmem>>, vector<1x2x128xf32>
    %585 = vector.shape_cast %584 : vector<1x2x128xf32> to vector<2x128xf32>
    %586 = vector.shape_cast %583 : vector<2x128xf32> to vector<1x2x128xf32>
    tpu.vector_store %arg20[%c2_125, %c0_126, %c0_127], %586 {strides = array<i32>} : memref<8x2x128xf32, #tpu.memory_space<vmem>>, vector<1x2x128xf32>,
    %587 = vector.extract_strided_slice %492 {offsets = [6, 0], sizes = [2, 512], strides = [1, 1]} : vector<16x512xf32> to vector<2x512xf32>
    %cst_128 = arith.constant dense<0.000000e+00> : vector<2x512xf32>
    %588 = tpu.matmul %583, %493, %cst_128 {dimension_numbers = #tpu.dot_dimension_numbers<[1], [0], [0], [1], [0, 0, 1, 1], [], []>} : vector<2x128xf32>, vector<128x512xf32>, vector<2x512xf32> -> vector<2x512xf32>
    %589 = arith.addf %587, %588 : vector<2x512xf32>
    %590 = vector.extract_strided_slice %589 {offsets = [0, 0], sizes = [2, 128], strides = [1, 1]} : vector<2x512xf32> to vector<2x128xf32>
    %591 = arith.negf %590 : vector<2x128xf32>
    %592 = math.exp %591 : vector<2x128xf32>
    %cst_129 = arith.constant 1.000000e+00 : f32
    %593 = vector.broadcast %cst_129 : f32 to vector<2x128xf32>
    %594 = arith.addf %593, %592 : vector<2x128xf32>
    %595 = arith.divf %593, %594 : vector<2x128xf32>
    %596 = vector.extract_strided_slice %589 {offsets = [0, 128], sizes = [2, 128], strides = [1, 1]} : vector<2x512xf32> to vector<2x128xf32>
    %597 = arith.negf %596 : vector<2x128xf32>
    %598 = math.exp %597 : vector<2x128xf32>
    %cst_130 = arith.constant 1.000000e+00 : f32
    %599 = vector.broadcast %cst_130 : f32 to vector<2x128xf32>
    %600 = arith.addf %599, %598 : vector<2x128xf32>
    %601 = arith.divf %599, %600 : vector<2x128xf32>
    %602 = vector.extract_strided_slice %589 {offsets = [0, 256], sizes = [2, 128], strides = [1, 1]} : vector<2x512xf32> to vector<2x128xf32>
    %603 = math.tanh %602 : vector<2x128xf32>
    %604 = vector.extract_strided_slice %589 {offsets = [0, 384], sizes = [2, 128], strides = [1, 1]} : vector<2x512xf32> to vector<2x128xf32>
    %605 = arith.negf %604 : vector<2x128xf32>
    %606 = math.exp %605 : vector<2x128xf32>
    %cst_131 = arith.constant 1.000000e+00 : f32
    %607 = vector.broadcast %cst_131 : f32 to vector<2x128xf32>
    %608 = arith.addf %607, %606 : vector<2x128xf32>
    %609 = arith.divf %607, %608 : vector<2x128xf32>
    %610 = arith.mulf %601, %581 : vector<2x128xf32>
    %611 = arith.mulf %595, %603 : vector<2x128xf32>
    %612 = arith.addf %610, %611 : vector<2x128xf32>
    %613 = math.tanh %612 : vector<2x128xf32>
    %614 = arith.mulf %609, %613 : vector<2x128xf32>
    %c3_132 = arith.constant 3 : index
    %c0_133 = arith.constant 0 : index
    %c0_134 = arith.constant 0 : index
    %615 = vector.load %arg20[%c3_132, %c0_133, %c0_134] : memref<8x2x128xf32, #tpu.memory_space<vmem>>, vector<1x2x128xf32>
    %616 = vector.shape_cast %615 : vector<1x2x128xf32> to vector<2x128xf32>
    %617 = vector.shape_cast %614 : vector<2x128xf32> to vector<1x2x128xf32>
    tpu.vector_store %arg20[%c3_132, %c0_133, %c0_134], %617 {strides = array<i32>} : memref<8x2x128xf32, #tpu.memory_space<vmem>>, vector<1x2x128xf32>,
    %618 = vector.extract_strided_slice %492 {offsets = [8, 0], sizes = [2, 512], strides = [1, 1]} : vector<16x512xf32> to vector<2x512xf32>
    %cst_135 = arith.constant dense<0.000000e+00> : vector<2x512xf32>
    %619 = tpu.matmul %614, %493, %cst_135 {dimension_numbers = #tpu.dot_dimension_numbers<[1], [0], [0], [1], [0, 0, 1, 1], [], []>} : vector<2x128xf32>, vector<128x512xf32>, vector<2x512xf32> -> vector<2x512xf32>
    %620 = arith.addf %618, %619 : vector<2x512xf32>
    %621 = vector.extract_strided_slice %620 {offsets = [0, 0], sizes = [2, 128], strides = [1, 1]} : vector<2x512xf32> to vector<2x128xf32>
    %622 = arith.negf %621 : vector<2x128xf32>
    %623 = math.exp %622 : vector<2x128xf32>
    %cst_136 = arith.constant 1.000000e+00 : f32
    %624 = vector.broadcast %cst_136 : f32 to vector<2x128xf32>
    %625 = arith.addf %624, %623 : vector<2x128xf32>
    %626 = arith.divf %624, %625 : vector<2x128xf32>
    %627 = vector.extract_strided_slice %620 {offsets = [0, 128], sizes = [2, 128], strides = [1, 1]} : vector<2x512xf32> to vector<2x128xf32>
    %628 = arith.negf %627 : vector<2x128xf32>
    %629 = math.exp %628 : vector<2x128xf32>
    %cst_137 = arith.constant 1.000000e+00 : f32
    %630 = vector.broadcast %cst_137 : f32 to vector<2x128xf32>
    %631 = arith.addf %630, %629 : vector<2x128xf32>
    %632 = arith.divf %630, %631 : vector<2x128xf32>
    %633 = vector.extract_strided_slice %620 {offsets = [0, 256], sizes = [2, 128], strides = [1, 1]} : vector<2x512xf32> to vector<2x128xf32>
    %634 = math.tanh %633 : vector<2x128xf32>
    %635 = vector.extract_strided_slice %620 {offsets = [0, 384], sizes = [2, 128], strides = [1, 1]} : vector<2x512xf32> to vector<2x128xf32>
    %636 = arith.negf %635 : vector<2x128xf32>
    %637 = math.exp %636 : vector<2x128xf32>
    %cst_138 = arith.constant 1.000000e+00 : f32
    %638 = vector.broadcast %cst_138 : f32 to vector<2x128xf32>
    %639 = arith.addf %638, %637 : vector<2x128xf32>
    %640 = arith.divf %638, %639 : vector<2x128xf32>
    %641 = arith.mulf %632, %612 : vector<2x128xf32>
    %642 = arith.mulf %626, %634 : vector<2x128xf32>
    %643 = arith.addf %641, %642 : vector<2x128xf32>
    %644 = math.tanh %643 : vector<2x128xf32>
    %645 = arith.mulf %640, %644 : vector<2x128xf32>
    %c4_139 = arith.constant 4 : index
    %c0_140 = arith.constant 0 : index
    %c0_141 = arith.constant 0 : index
    %646 = vector.load %arg20[%c4_139, %c0_140, %c0_141] : memref<8x2x128xf32, #tpu.memory_space<vmem>>, vector<1x2x128xf32>
    %647 = vector.shape_cast %646 : vector<1x2x128xf32> to vector<2x128xf32>
    %648 = vector.shape_cast %645 : vector<2x128xf32> to vector<1x2x128xf32>
    tpu.vector_store %arg20[%c4_139, %c0_140, %c0_141], %648 {strides = array<i32>} : memref<8x2x128xf32, #tpu.memory_space<vmem>>, vector<1x2x128xf32>,
    %649 = vector.extract_strided_slice %492 {offsets = [10, 0], sizes = [2, 512], strides = [1, 1]} : vector<16x512xf32> to vector<2x512xf32>
    %cst_142 = arith.constant dense<0.000000e+00> : vector<2x512xf32>
    %650 = tpu.matmul %645, %493, %cst_142 {dimension_numbers = #tpu.dot_dimension_numbers<[1], [0], [0], [1], [0, 0, 1, 1], [], []>} : vector<2x128xf32>, vector<128x512xf32>, vector<2x512xf32> -> vector<2x512xf32>
    %651 = arith.addf %649, %650 : vector<2x512xf32>
    %652 = vector.extract_strided_slice %651 {offsets = [0, 0], sizes = [2, 128], strides = [1, 1]} : vector<2x512xf32> to vector<2x128xf32>
    %653 = arith.negf %652 : vector<2x128xf32>
    %654 = math.exp %653 : vector<2x128xf32>
    %cst_143 = arith.constant 1.000000e+00 : f32
    %655 = vector.broadcast %cst_143 : f32 to vector<2x128xf32>
    %656 = arith.addf %655, %654 : vector<2x128xf32>
    %657 = arith.divf %655, %656 : vector<2x128xf32>
    %658 = vector.extract_strided_slice %651 {offsets = [0, 128], sizes = [2, 128], strides = [1, 1]} : vector<2x512xf32> to vector<2x128xf32>
    %659 = arith.negf %658 : vector<2x128xf32>
    %660 = math.exp %659 : vector<2x128xf32>
    %cst_144 = arith.constant 1.000000e+00 : f32
    %661 = vector.broadcast %cst_144 : f32 to vector<2x128xf32>
    %662 = arith.addf %661, %660 : vector<2x128xf32>
    %663 = arith.divf %661, %662 : vector<2x128xf32>
    %664 = vector.extract_strided_slice %651 {offsets = [0, 256], sizes = [2, 128], strides = [1, 1]} : vector<2x512xf32> to vector<2x128xf32>
    %665 = math.tanh %664 : vector<2x128xf32>
    %666 = vector.extract_strided_slice %651 {offsets = [0, 384], sizes = [2, 128], strides = [1, 1]} : vector<2x512xf32> to vector<2x128xf32>
    %667 = arith.negf %666 : vector<2x128xf32>
    %668 = math.exp %667 : vector<2x128xf32>
    %cst_145 = arith.constant 1.000000e+00 : f32
    %669 = vector.broadcast %cst_145 : f32 to vector<2x128xf32>
    %670 = arith.addf %669, %668 : vector<2x128xf32>
    %671 = arith.divf %669, %670 : vector<2x128xf32>
    %672 = arith.mulf %663, %643 : vector<2x128xf32>
    %673 = arith.mulf %657, %665 : vector<2x128xf32>
    %674 = arith.addf %672, %673 : vector<2x128xf32>
    %675 = math.tanh %674 : vector<2x128xf32>
    %676 = arith.mulf %671, %675 : vector<2x128xf32>
    %c5_146 = arith.constant 5 : index
    %c0_147 = arith.constant 0 : index
    %c0_148 = arith.constant 0 : index
    %677 = vector.load %arg20[%c5_146, %c0_147, %c0_148] : memref<8x2x128xf32, #tpu.memory_space<vmem>>, vector<1x2x128xf32>
    %678 = vector.shape_cast %677 : vector<1x2x128xf32> to vector<2x128xf32>
    %679 = vector.shape_cast %676 : vector<2x128xf32> to vector<1x2x128xf32>
    tpu.vector_store %arg20[%c5_146, %c0_147, %c0_148], %679 {strides = array<i32>} : memref<8x2x128xf32, #tpu.memory_space<vmem>>, vector<1x2x128xf32>,
    %680 = vector.extract_strided_slice %492 {offsets = [12, 0], sizes = [2, 512], strides = [1, 1]} : vector<16x512xf32> to vector<2x512xf32>
    %cst_149 = arith.constant dense<0.000000e+00> : vector<2x512xf32>
    %681 = tpu.matmul %676, %493, %cst_149 {dimension_numbers = #tpu.dot_dimension_numbers<[1], [0], [0], [1], [0, 0, 1, 1], [], []>} : vector<2x128xf32>, vector<128x512xf32>, vector<2x512xf32> -> vector<2x512xf32>
    %682 = arith.addf %680, %681 : vector<2x512xf32>
    %683 = vector.extract_strided_slice %682 {offsets = [0, 0], sizes = [2, 128], strides = [1, 1]} : vector<2x512xf32> to vector<2x128xf32>
    %684 = arith.negf %683 : vector<2x128xf32>
    %685 = math.exp %684 : vector<2x128xf32>
    %cst_150 = arith.constant 1.000000e+00 : f32
    %686 = vector.broadcast %cst_150 : f32 to vector<2x128xf32>
    %687 = arith.addf %686, %685 : vector<2x128xf32>
    %688 = arith.divf %686, %687 : vector<2x128xf32>
    %689 = vector.extract_strided_slice %682 {offsets = [0, 128], sizes = [2, 128], strides = [1, 1]} : vector<2x512xf32> to vector<2x128xf32>
    %690 = arith.negf %689 : vector<2x128xf32>
    %691 = math.exp %690 : vector<2x128xf32>
    %cst_151 = arith.constant 1.000000e+00 : f32
    %692 = vector.broadcast %cst_151 : f32 to vector<2x128xf32>
    %693 = arith.addf %692, %691 : vector<2x128xf32>
    %694 = arith.divf %692, %693 : vector<2x128xf32>
    %695 = vector.extract_strided_slice %682 {offsets = [0, 256], sizes = [2, 128], strides = [1, 1]} : vector<2x512xf32> to vector<2x128xf32>
    %696 = math.tanh %695 : vector<2x128xf32>
    %697 = vector.extract_strided_slice %682 {offsets = [0, 384], sizes = [2, 128], strides = [1, 1]} : vector<2x512xf32> to vector<2x128xf32>
    %698 = arith.negf %697 : vector<2x128xf32>
    %699 = math.exp %698 : vector<2x128xf32>
    %cst_152 = arith.constant 1.000000e+00 : f32
    %700 = vector.broadcast %cst_152 : f32 to vector<2x128xf32>
    %701 = arith.addf %700, %699 : vector<2x128xf32>
    %702 = arith.divf %700, %701 : vector<2x128xf32>
    %703 = arith.mulf %694, %674 : vector<2x128xf32>
    %704 = arith.mulf %688, %696 : vector<2x128xf32>
    %705 = arith.addf %703, %704 : vector<2x128xf32>
    %706 = math.tanh %705 : vector<2x128xf32>
    %707 = arith.mulf %702, %706 : vector<2x128xf32>
    %c6_153 = arith.constant 6 : index
    %c0_154 = arith.constant 0 : index
    %c0_155 = arith.constant 0 : index
    %708 = vector.load %arg20[%c6_153, %c0_154, %c0_155] : memref<8x2x128xf32, #tpu.memory_space<vmem>>, vector<1x2x128xf32>
    %709 = vector.shape_cast %708 : vector<1x2x128xf32> to vector<2x128xf32>
    %710 = vector.shape_cast %707 : vector<2x128xf32> to vector<1x2x128xf32>
    tpu.vector_store %arg20[%c6_153, %c0_154, %c0_155], %710 {strides = array<i32>} : memref<8x2x128xf32, #tpu.memory_space<vmem>>, vector<1x2x128xf32>,
    %711 = vector.extract_strided_slice %492 {offsets = [14, 0], sizes = [2, 512], strides = [1, 1]} : vector<16x512xf32> to vector<2x512xf32>
    %cst_156 = arith.constant dense<0.000000e+00> : vector<2x512xf32>
    %712 = tpu.matmul %707, %493, %cst_156 {dimension_numbers = #tpu.dot_dimension_numbers<[1], [0], [0], [1], [0, 0, 1, 1], [], []>} : vector<2x128xf32>, vector<128x512xf32>, vector<2x512xf32> -> vector<2x512xf32>
    %713 = arith.addf %711, %712 : vector<2x512xf32>
    %714 = vector.extract_strided_slice %713 {offsets = [0, 0], sizes = [2, 128], strides = [1, 1]} : vector<2x512xf32> to vector<2x128xf32>
    %715 = arith.negf %714 : vector<2x128xf32>
    %716 = math.exp %715 : vector<2x128xf32>
    %cst_157 = arith.constant 1.000000e+00 : f32
    %717 = vector.broadcast %cst_157 : f32 to vector<2x128xf32>
    %718 = arith.addf %717, %716 : vector<2x128xf32>
    %719 = arith.divf %717, %718 : vector<2x128xf32>
    %720 = vector.extract_strided_slice %713 {offsets = [0, 128], sizes = [2, 128], strides = [1, 1]} : vector<2x512xf32> to vector<2x128xf32>
    %721 = arith.negf %720 : vector<2x128xf32>
    %722 = math.exp %721 : vector<2x128xf32>
    %cst_158 = arith.constant 1.000000e+00 : f32
    %723 = vector.broadcast %cst_158 : f32 to vector<2x128xf32>
    %724 = arith.addf %723, %722 : vector<2x128xf32>
    %725 = arith.divf %723, %724 : vector<2x128xf32>
    %726 = vector.extract_strided_slice %713 {offsets = [0, 256], sizes = [2, 128], strides = [1, 1]} : vector<2x512xf32> to vector<2x128xf32>
    %727 = math.tanh %726 : vector<2x128xf32>
    %728 = vector.extract_strided_slice %713 {offsets = [0, 384], sizes = [2, 128], strides = [1, 1]} : vector<2x512xf32> to vector<2x128xf32>
    %729 = arith.negf %728 : vector<2x128xf32>
    %730 = math.exp %729 : vector<2x128xf32>
    %cst_159 = arith.constant 1.000000e+00 : f32
    %731 = vector.broadcast %cst_159 : f32 to vector<2x128xf32>
    %732 = arith.addf %731, %730 : vector<2x128xf32>
    %733 = arith.divf %731, %732 : vector<2x128xf32>
    %734 = arith.mulf %725, %705 : vector<2x128xf32>
    %735 = arith.mulf %719, %727 : vector<2x128xf32>
    %736 = arith.addf %734, %735 : vector<2x128xf32>
    %737 = math.tanh %736 : vector<2x128xf32>
    %738 = arith.mulf %733, %737 : vector<2x128xf32>
    %c7_160 = arith.constant 7 : index
    %c0_161 = arith.constant 0 : index
    %c0_162 = arith.constant 0 : index
    %739 = vector.load %arg20[%c7_160, %c0_161, %c0_162] : memref<8x2x128xf32, #tpu.memory_space<vmem>>, vector<1x2x128xf32>
    %740 = vector.shape_cast %739 : vector<1x2x128xf32> to vector<2x128xf32>
    %741 = vector.shape_cast %738 : vector<2x128xf32> to vector<1x2x128xf32>
    tpu.vector_store %arg20[%c7_160, %c0_161, %c0_162], %741 {strides = array<i32>} : memref<8x2x128xf32, #tpu.memory_space<vmem>>, vector<1x2x128xf32>,
    %c0_163 = arith.constant 0 : index
    %c0_164 = arith.constant 0 : index
    %742 = vector.load %arg17[%c0_163, %c0_164] : memref<2x128xf32, #tpu.memory_space<vmem>>, vector<2x128xf32>
    tpu.vector_store %arg17[%c0_163, %c0_164], %738 {strides = array<i32>} : memref<2x128xf32, #tpu.memory_space<vmem>>, vector<2x128xf32>,
    %c0_165 = arith.constant 0 : index
    %c0_166 = arith.constant 0 : index
    %743 = vector.load %arg18[%c0_165, %c0_166] : memref<2x128xf32, #tpu.memory_space<vmem>>, vector<2x128xf32>
    tpu.vector_store %arg18[%c0_165, %c0_166], %736 {strides = array<i32>} : memref<2x128xf32, #tpu.memory_space<vmem>>, vector<2x128xf32>,
    %c0_167 = arith.constant 0 : index
    %c0_168 = arith.constant 0 : index
    %c0_169 = arith.constant 0 : index
    %744 = vector.load %arg19[%c0_167, %c0_168, %c0_169] : memref<8x2x128xf32, #tpu.memory_space<vmem>>, vector<8x2x128xf32>
    %c0_170 = arith.constant 0 : index
    %c0_171 = arith.constant 0 : index
    %c0_172 = arith.constant 0 : index
    %745 = vector.load %arg20[%c0_170, %c0_171, %c0_172] : memref<8x2x128xf32, #tpu.memory_space<vmem>>, vector<8x2x128xf32>
    %c0_173 = arith.constant 0 : index
    %c0_174 = arith.constant 0 : index
    %746 = vector.load %arg12[%c0_173, %c0_174] : memref<128x128xf32, #tpu.memory_space<vmem>>, vector<128x128xf32>
    %c0_175 = arith.constant 0 : index
    %c0_176 = arith.constant 0 : index
    %747 = vector.load %arg13[%c0_175, %c0_176] : memref<128x128xf32, #tpu.memory_space<vmem>>, vector<128x128xf32>
    %c0_177 = arith.constant 0 : index
    %c0_178 = arith.constant 0 : index
    %748 = vector.load %arg14[%c0_177, %c0_178] : memref<128x128xf32, #tpu.memory_space<vmem>>, vector<128x128xf32>
    %c0_179 = arith.constant 0 : index
    %c0_180 = arith.constant 0 : index
    %749 = vector.load %arg15[%c0_179, %c0_180] : memref<1x128xf32, #tpu.memory_space<vmem>>, vector<1x128xf32>
    %750 = vector.extract_strided_slice %745 {offsets = [0, 0, 0], sizes = [8, 1, 128], strides = [1, 1, 1]} : vector<8x2x128xf32> to vector<8x1x128xf32>
    %751 = vector.shape_cast %750 : vector<8x1x128xf32> to vector<8x128xf32>
    %752 = vector.extract_strided_slice %744 {offsets = [0, 0, 0], sizes = [8, 1, 128], strides = [1, 1, 1]} : vector<8x2x128xf32> to vector<8x1x128xf32>
    %753 = vector.shape_cast %752 : vector<8x1x128xf32> to vector<8x128xf32>
    %cst_181 = arith.constant dense<0.000000e+00> : vector<8x8xf32>
    %754 = tpu.matmul %751, %753, %cst_181 {dimension_numbers = #tpu.dot_dimension_numbers<[1], [1], [0], [0], [0, 0, 1, 0], [], []>} : vector<8x128xf32>, vector<8x128xf32>, vector<8x8xf32> -> vector<8x8xf32>
    %cst_182 = arith.constant dense<0xFF800000> : vector<8xf32>
    %755 = vector.multi_reduction <maximumf>, %754, %cst_182 [1] : vector<8x8xf32> to vector<8xf32>
    %756 = vector.shape_cast %755 : vector<8xf32> to vector<8x1xf32>
    %757 = vector.broadcast %756 : vector<8x1xf32> to vector<8x8xf32>
    %758 = arith.subf %754, %757 : vector<8x8xf32>
    %759 = math.exp %758 : vector<8x8xf32>
    %cst_183 = arith.constant dense<0.000000e+00> : vector<8xf32>
    %760 = vector.multi_reduction <add>, %759, %cst_183 [1] : vector<8x8xf32> to vector<8xf32>
    %761 = vector.shape_cast %760 : vector<8xf32> to vector<8x1xf32>
    %762 = tpu.reciprocal %761 {approx = true} : vector<8x1xf32> -> vector<8x1xf32>
    %763 = vector.broadcast %762 : vector<8x1xf32> to vector<8x8xf32>
    %764 = arith.mulf %759, %763 : vector<8x8xf32>
    %cst_184 = arith.constant dense<0.000000e+00> : vector<8x128xf32>
    %765 = tpu.matmul %764, %753, %cst_184 {dimension_numbers = #tpu.dot_dimension_numbers<[1], [0], [0], [1], [0, 0, 1, 1], [], []>} : vector<8x8xf32>, vector<8x128xf32>, vector<8x128xf32> -> vector<8x128xf32>
    %cst_185 = arith.constant dense<0.000000e+00> : vector<8x128xf32>
    %766 = tpu.matmul %751, %746, %cst_185 {dimension_numbers = #tpu.dot_dimension_numbers<[1], [0], [0], [1], [0, 0, 1, 1], [], []>} : vector<8x128xf32>, vector<128x128xf32>, vector<8x128xf32> -> vector<8x128xf32>
    %cst_186 = arith.constant dense<0.000000e+00> : vector<8x128xf32>
    %767 = tpu.matmul %765, %747, %cst_186 {dimension_numbers = #tpu.dot_dimension_numbers<[1], [0], [0], [1], [0, 0, 1, 1], [], []>} : vector<8x128xf32>, vector<128x128xf32>, vector<8x128xf32> -> vector<8x128xf32>
    %768 = arith.addf %766, %767 : vector<8x128xf32>
    %769 = math.tanh %768 : vector<8x128xf32>
    %cst_187 = arith.constant dense<0.000000e+00> : vector<8x128xf32>
    %770 = tpu.matmul %769, %748, %cst_187 {dimension_numbers = #tpu.dot_dimension_numbers<[1], [0], [0], [1], [0, 0, 1, 1], [], []>} : vector<8x128xf32>, vector<128x128xf32>, vector<8x128xf32> -> vector<8x128xf32>
    %771 = vector.broadcast %749 : vector<1x128xf32> to vector<8x128xf32>
    %772 = arith.addf %770, %771 : vector<8x128xf32>
    %cst_188 = arith.constant dense<0xFF800000> : vector<8xf32>
    %773 = vector.multi_reduction <maximumf>, %772, %cst_188 [1] : vector<8x128xf32> to vector<8xf32>
    %774 = vector.shape_cast %773 : vector<8xf32> to vector<8x1xf32>
    %775 = vector.broadcast %774 : vector<8x1xf32> to vector<8x128xf32>
    %776 = arith.subf %772, %775 : vector<8x128xf32>
    %777 = math.exp %776 : vector<8x128xf32>
    %cst_189 = arith.constant dense<0.000000e+00> : vector<8xf32>
    %778 = vector.multi_reduction <add>, %777, %cst_189 [1] : vector<8x128xf32> to vector<8xf32>
    %779 = vector.shape_cast %778 : vector<8xf32> to vector<8x1xf32>
    %780 = tpu.reciprocal %779 {approx = true} : vector<8x1xf32> -> vector<8x1xf32>
    %781 = vector.broadcast %780 : vector<8x1xf32> to vector<8x128xf32>
    %782 = arith.mulf %777, %781 : vector<8x128xf32>
    %c0_190 = arith.constant 0 : index
    %c0_191 = arith.constant 0 : index
    %c0_192 = arith.constant 0 : index
    %783 = vector.load %arg16[%c0_190, %c0_191, %c0_192] : memref<2x8x128xf32, #tpu.memory_space<vmem>>, vector<1x8x128xf32>
    %784 = vector.shape_cast %783 : vector<1x8x128xf32> to vector<8x128xf32>
    %785 = vector.shape_cast %782 : vector<8x128xf32> to vector<1x8x128xf32>
    tpu.vector_store %arg16[%c0_190, %c0_191, %c0_192], %785 {strides = array<i32>} : memref<2x8x128xf32, #tpu.memory_space<vmem>>, vector<1x8x128xf32>,
    %786 = vector.extract_strided_slice %745 {offsets = [0, 1, 0], sizes = [8, 1, 128], strides = [1, 1, 1]} : vector<8x2x128xf32> to vector<8x1x128xf32>
    %787 = vector.shape_cast %786 : vector<8x1x128xf32> to vector<8x128xf32>
    %788 = vector.extract_strided_slice %744 {offsets = [0, 1, 0], sizes = [8, 1, 128], strides = [1, 1, 1]} : vector<8x2x128xf32> to vector<8x1x128xf32>
    %789 = vector.shape_cast %788 : vector<8x1x128xf32> to vector<8x128xf32>
    %cst_193 = arith.constant dense<0.000000e+00> : vector<8x8xf32>
    %790 = tpu.matmul %787, %789, %cst_193 {dimension_numbers = #tpu.dot_dimension_numbers<[1], [1], [0], [0], [0, 0, 1, 0], [], []>} : vector<8x128xf32>, vector<8x128xf32>, vector<8x8xf32> -> vector<8x8xf32>
    %cst_194 = arith.constant dense<0xFF800000> : vector<8xf32>
    %791 = vector.multi_reduction <maximumf>, %790, %cst_194 [1] : vector<8x8xf32> to vector<8xf32>
    %792 = vector.shape_cast %791 : vector<8xf32> to vector<8x1xf32>
    %793 = vector.broadcast %792 : vector<8x1xf32> to vector<8x8xf32>
    %794 = arith.subf %790, %793 : vector<8x8xf32>
    %795 = math.exp %794 : vector<8x8xf32>
    %cst_195 = arith.constant dense<0.000000e+00> : vector<8xf32>
    %796 = vector.multi_reduction <add>, %795, %cst_195 [1] : vector<8x8xf32> to vector<8xf32>
    %797 = vector.shape_cast %796 : vector<8xf32> to vector<8x1xf32>
    %798 = tpu.reciprocal %797 {approx = true} : vector<8x1xf32> -> vector<8x1xf32>
    %799 = vector.broadcast %798 : vector<8x1xf32> to vector<8x8xf32>
    %800 = arith.mulf %795, %799 : vector<8x8xf32>
    %cst_196 = arith.constant dense<0.000000e+00> : vector<8x128xf32>
    %801 = tpu.matmul %800, %789, %cst_196 {dimension_numbers = #tpu.dot_dimension_numbers<[1], [0], [0], [1], [0, 0, 1, 1], [], []>} : vector<8x8xf32>, vector<8x128xf32>, vector<8x128xf32> -> vector<8x128xf32>
    %cst_197 = arith.constant dense<0.000000e+00> : vector<8x128xf32>
    %802 = tpu.matmul %787, %746, %cst_197 {dimension_numbers = #tpu.dot_dimension_numbers<[1], [0], [0], [1], [0, 0, 1, 1], [], []>} : vector<8x128xf32>, vector<128x128xf32>, vector<8x128xf32> -> vector<8x128xf32>
    %cst_198 = arith.constant dense<0.000000e+00> : vector<8x128xf32>
    %803 = tpu.matmul %801, %747, %cst_198 {dimension_numbers = #tpu.dot_dimension_numbers<[1], [0], [0], [1], [0, 0, 1, 1], [], []>} : vector<8x128xf32>, vector<128x128xf32>, vector<8x128xf32> -> vector<8x128xf32>
    %804 = arith.addf %802, %803 : vector<8x128xf32>
    %805 = math.tanh %804 : vector<8x128xf32>
    %cst_199 = arith.constant dense<0.000000e+00> : vector<8x128xf32>
    %806 = tpu.matmul %805, %748, %cst_199 {dimension_numbers = #tpu.dot_dimension_numbers<[1], [0], [0], [1], [0, 0, 1, 1], [], []>} : vector<8x128xf32>, vector<128x128xf32>, vector<8x128xf32> -> vector<8x128xf32>
    %807 = vector.broadcast %749 : vector<1x128xf32> to vector<8x128xf32>
    %808 = arith.addf %806, %807 : vector<8x128xf32>
    %cst_200 = arith.constant dense<0xFF800000> : vector<8xf32>
    %809 = vector.multi_reduction <maximumf>, %808, %cst_200 [1] : vector<8x128xf32> to vector<8xf32>
    %810 = vector.shape_cast %809 : vector<8xf32> to vector<8x1xf32>
    %811 = vector.broadcast %810 : vector<8x1xf32> to vector<8x128xf32>
    %812 = arith.subf %808, %811 : vector<8x128xf32>
    %813 = math.exp %812 : vector<8x128xf32>
    %cst_201 = arith.constant dense<0.000000e+00> : vector<8xf32>
    %814 = vector.multi_reduction <add>, %813, %cst_201 [1] : vector<8x128xf32> to vector<8xf32>
    %815 = vector.shape_cast %814 : vector<8xf32> to vector<8x1xf32>
    %816 = tpu.reciprocal %815 {approx = true} : vector<8x1xf32> -> vector<8x1xf32>
    %817 = vector.broadcast %816 : vector<8x1xf32> to vector<8x128xf32>
    %818 = arith.mulf %813, %817 : vector<8x128xf32>
    %c1_202 = arith.constant 1 : index
    %c0_203 = arith.constant 0 : index
    %c0_204 = arith.constant 0 : index
    %819 = vector.load %arg16[%c1_202, %c0_203, %c0_204] : memref<2x8x128xf32, #tpu.memory_space<vmem>>, vector<1x8x128xf32>
    %820 = vector.shape_cast %819 : vector<1x8x128xf32> to vector<8x128xf32>
    %821 = vector.shape_cast %818 : vector<8x128xf32> to vector<1x8x128xf32>
    tpu.vector_store %arg16[%c1_202, %c0_203, %c0_204], %821 {strides = array<i32>} : memref<2x8x128xf32, #tpu.memory_space<vmem>>, vector<1x8x128xf32>,
    return
  }
}

</mosaic_0001>

<llo_original>
// kernel: seq_to_seq_q_forward.1
$region0: #{seq_to_seq_q_forward.1}
  #allocation0 [shape = 'u32[]', space=smem, size = 0x4, offset = 0x4, fixed_abs, tag = 'smem constant byte address 0x4 - core index']
  #allocation1 [shape = 'u32[144,128]{1,0:T(1,128)}', space=vmem, size = 0x12000, scoped, tag = 'internal scratch']
  #allocation2 [shape = 'f32[8,2,128]{2,1,0:T(2,128)}', space=vmem, size = 0x2000, scoped, tag = 'scratch operand']
  #allocation3 [shape = 'f32[8,2,128]{2,1,0:T(2,128)}', space=vmem, size = 0x2000, scoped, tag = 'scratch operand']
  %s0 = inlined_call_operand.vmem [shape: f32[16,128], index: 0, kind: input, shape index: {}]
  %s1 = inlined_call_operand.vmem [shape: f32[16,128], index: 1, kind: input, shape index: {}]
  %s2 = inlined_call_operand.vmem [shape: f32[16,128], index: 2, kind: input, shape index: {}]
  %s3 = inlined_call_operand.vmem [shape: f32[128,512], index: 3, kind: input, shape index: {}]
  %s4 = inlined_call_operand.hbm [shape: f32[128,512], index: 4, kind: input, shape index: {}]
  %s5 = inlined_call_operand.vmem [shape: f32[1,512], index: 5, kind: input, shape index: {}]
  %s6 = inlined_call_operand.hbm [shape: f32[128,512], index: 6, kind: input, shape index: {}]
  %s7 = inlined_call_operand.hbm [shape: f32[128,512], index: 7, kind: input, shape index: {}]
  %s8 = inlined_call_operand.vmem [shape: f32[1,512], index: 8, kind: input, shape index: {}]
  %s9 = inlined_call_operand.hbm [shape: f32[128,512], index: 9, kind: input, shape index: {}]
  %s10 = inlined_call_operand.hbm [shape: f32[128,512], index: 10, kind: input, shape index: {}]
  %s11 = inlined_call_operand.vmem [shape: f32[1,512], index: 11, kind: input, shape index: {}]
  %s12 = inlined_call_operand.vmem [shape: f32[128,128], index: 12, kind: input, shape index: {}]
  %s13 = inlined_call_operand.vmem [shape: f32[128,128], index: 13, kind: input, shape index: {}]
  %s14 = inlined_call_operand.vmem [shape: f32[128,128], index: 14, kind: input, shape index: {}]
  %s15 = inlined_call_operand.vmem [shape: f32[1,128], index: 15, kind: input, shape index: {}]
  %s16 = inlined_call_operand.hbm [shape: f32[2,8,128], index: 16, kind: output, shape index: {0}]
  %s17 = inlined_call_operand.hbm [shape: f32[2,128], index: 17, kind: output, shape index: {1}]
  %s18 = inlined_call_operand.hbm [shape: f32[2,128], index: 18, kind: output, shape index: {2}]
  %19 = xla_tuple %s16, %s17, %s18
  %s20 = sld [smem:[#allocation0]]
  $region110: #{seq_to_seq_q_forward.1} parent=0
    _
  %s22 = ssub.s32 1, %s20
  %s23 = scalar_select 0, %s22, %s20
  $region1: #{seq_to_seq_q_forward.1} parent=0
    #allocation4 [shape = 'u8[262144]{0}', space=vmem, size = 0x40000, scoped, tag = 'input window, operand 4, single buffered']
    #allocation5 [shape = 's32[1]{0}', space=sflag, size = 0x4, scoped, tag = 'scoped memory for seq_to_seq_q_forward.1']
    #allocation6 [shape = 's32[1]{0}', space=sflag, size = 0x4, scoped, tag = 'scoped memory for seq_to_seq_q_forward.1']
    #allocation7 [shape = 'u8[262144]{0}', space=vmem, size = 0x40000, scoped, tag = 'input window, operand 6, single buffered']
    #allocation8 [shape = 's32[1]{0}', space=sflag, size = 0x4, scoped, tag = 'scoped memory for seq_to_seq_q_forward.1']
    #allocation9 [shape = 'u8[262144]{0}', space=vmem, size = 0x40000, scoped, tag = 'input window, operand 7, single buffered']
    #allocation10 [shape = 'u8[262144]{0}', space=vmem, size = 0x40000, scoped, tag = 'input window, operand 9, single buffered']
    #allocation11 [shape = 's32[1]{0}', space=sflag, size = 0x4, scoped, tag = 'scoped memory for seq_to_seq_q_forward.1']
    #allocation12 [shape = 'u8[262144]{0}', space=vmem, size = 0x40000, scoped, tag = 'input window, operand 10, single buffered']
    #allocation13 [shape = 'u8[8192]{0}', space=vmem, size = 0x2000, scoped, tag = 'output window, operand 0, single buffered']
    #allocation14 [shape = 'u8[1024]{0}', space=vmem, size = 0x400, scoped, tag = 'output window, operand 1, single buffered']
    #allocation15 [shape = 's32[1]{0}', space=sflag, size = 0x4, scoped, tag = 'scoped memory for seq_to_seq_q_forward.1']
    #allocation16 [shape = 'u8[1024]{0}', space=vmem, size = 0x400, scoped, tag = 'output window, operand 2, single buffered']
    %24 = vsyncpa [#allocation5], 0
    %25 = vsyncpa [#allocation8], 0
    %26 = vsyncpa [#allocation11], 0
    %27 = vsyncpa [#allocation6], 0
    %28 = vsyncpa [#allocation15], 0
    // Predicated region
    $region2: #{seq_to_seq_q_forward.1} parent=1 // pred_check
      _
    $region3: #{seq_to_seq_q_forward.1} parent=1 // pred_check_branch
      %30 = sbr.rel (0) target = $region5
    $region4: #{seq_to_seq_q_forward.1} parent=1 // pred_region
      _
    $region5: #{seq_to_seq_q_forward.1} parent=1 // pred_fallthru
      _
    // Predicated region
    $region6: #{seq_to_seq_q_forward.1} parent=1 // pred_check
      _
    $region7: #{seq_to_seq_q_forward.1} parent=1 // pred_check_branch
      %32 = sbr.rel (0) target = $region9
    $region8: #{seq_to_seq_q_forward.1} parent=1 // pred_region
      _
    $region9: #{seq_to_seq_q_forward.1} parent=1 // pred_fallthru
      _
    // Predicated region
    $region10: #{seq_to_seq_q_forward.1} parent=1 // pred_check
      _
    $region11: #{seq_to_seq_q_forward.1} parent=1 // pred_check_branch
      %34 = sbr.rel (0) target = $region13
    $region12: #{seq_to_seq_q_forward.1} parent=1 // pred_region
      _
    $region13: #{seq_to_seq_q_forward.1} parent=1 // pred_fallthru
      _
    // Predicated region
    $region14: #{seq_to_seq_q_forward.1} parent=1 // pred_check
      _
    $region15: #{seq_to_seq_q_forward.1} parent=1 // pred_check_branch
      %36 = sbr.rel (0) target = $region17
    $region16: #{seq_to_seq_q_forward.1} parent=1 // pred_region
      _
    $region17: #{seq_to_seq_q_forward.1} parent=1 // pred_fallthru
      _
    // Predicated region
    $region18: #{seq_to_seq_q_forward.1} parent=1 // pred_check
      _
    $region19: #{seq_to_seq_q_forward.1} parent=1 // pred_check_branch
      %38 = sbr.rel (0) target = $region21
    $region20: #{seq_to_seq_q_forward.1} parent=1 // pred_region
      %s40 = ssub.s32 8192, 8192
      %41 = vsyncadd [#allocation5], %s40
      %s42 = sshll.u32 [#allocation4], 4
      %s43 = int_to_ptr.vmem [resolvable:$true] %s42
      %48 = dma.hbm_to_vmem [thread:$0]  %s4, 8192, %s43, [#allocation5], 512, 512, 32
    $region21: #{seq_to_seq_q_forward.1} parent=1 // pred_fallthru
      _
    // Predicated region
    $region22: #{seq_to_seq_q_forward.1} parent=1 // pred_check
      _
    $region23: #{seq_to_seq_q_forward.1} parent=1 // pred_check_branch
      %50 = sbr.rel (0) target = $region25
    $region24: #{seq_to_seq_q_forward.1} parent=1 // pred_region
      _
    $region25: #{seq_to_seq_q_forward.1} parent=1 // pred_fallthru
      _
    // Predicated region
    $region26: #{seq_to_seq_q_forward.1} parent=1 // pred_check
      _
    $region27: #{seq_to_seq_q_forward.1} parent=1 // pred_check_branch
      %52 = sbr.rel (0) target = $region29
    $region28: #{seq_to_seq_q_forward.1} parent=1 // pred_region
      %s54 = ssub.s32 8192, 8192
      %55 = vsyncadd [#allocation8], %s54
      %s56 = sshll.u32 [#allocation7], 4
      %s57 = int_to_ptr.vmem [resolvable:$true] %s56
      %62 = dma.hbm_to_vmem [thread:$0]  %s6, 8192, %s57, [#allocation8], 512, 512, 32
    $region29: #{seq_to_seq_q_forward.1} parent=1 // pred_fallthru
      _
    // Predicated region
    $region30: #{seq_to_seq_q_forward.1} parent=1 // pred_check
      _
    $region31: #{seq_to_seq_q_forward.1} parent=1 // pred_check_branch
      %64 = sbr.rel (0) target = $region33
    $region32: #{seq_to_seq_q_forward.1} parent=1 // pred_region
      %s66 = ssub.s32 8192, 8192
      %67 = vsyncadd [#allocation8], %s66
      %s68 = sshll.u32 [#allocation9], 4
      %s69 = int_to_ptr.vmem [resolvable:$true] %s68
      %74 = dma.hbm_to_vmem [thread:$0]  %s7, 8192, %s69, [#allocation8], 512, 512, 32
    $region33: #{seq_to_seq_q_forward.1} parent=1 // pred_fallthru
      _
    // Predicated region
    $region34: #{seq_to_seq_q_forward.1} parent=1 // pred_check
      _
    $region35: #{seq_to_seq_q_forward.1} parent=1 // pred_check_branch
      %76 = sbr.rel (0) target = $region37
    $region36: #{seq_to_seq_q_forward.1} parent=1 // pred_region
      _
    $region37: #{seq_to_seq_q_forward.1} parent=1 // pred_fallthru
      _
    // Predicated region
    $region38: #{seq_to_seq_q_forward.1} parent=1 // pred_check
      _
    $region39: #{seq_to_seq_q_forward.1} parent=1 // pred_check_branch
      %78 = sbr.rel (0) target = $region41
    $region40: #{seq_to_seq_q_forward.1} parent=1 // pred_region
      %s80 = ssub.s32 8192, 8192
      %81 = vsyncadd [#allocation11], %s80
      %s82 = sshll.u32 [#allocation10], 4
      %s83 = int_to_ptr.vmem [resolvable:$true] %s82
      %88 = dma.hbm_to_vmem [thread:$0]  %s9, 8192, %s83, [#allocation11], 512, 512, 32
    $region41: #{seq_to_seq_q_forward.1} parent=1 // pred_fallthru
      _
    // Predicated region
    $region42: #{seq_to_seq_q_forward.1} parent=1 // pred_check
      _
    $region43: #{seq_to_seq_q_forward.1} parent=1 // pred_check_branch
      %90 = sbr.rel (0) target = $region45
    $region44: #{seq_to_seq_q_forward.1} parent=1 // pred_region
      %s92 = ssub.s32 8192, 8192
      %93 = vsyncadd [#allocation11], %s92
      %s94 = sshll.u32 [#allocation12], 4
      %s95 = int_to_ptr.vmem [resolvable:$true] %s94
      %100 = dma.hbm_to_vmem [thread:$0]  %s10, 8192, %s95, [#allocation11], 512, 512, 32
    $region45: #{seq_to_seq_q_forward.1} parent=1 // pred_fallthru
      _
    // Predicated region
    $region46: #{seq_to_seq_q_forward.1} parent=1 // pred_check
      _
    $region47: #{seq_to_seq_q_forward.1} parent=1 // pred_check_branch
      %102 = sbr.rel (0) target = $region49
    $region48: #{seq_to_seq_q_forward.1} parent=1 // pred_region
      _
    $region49: #{seq_to_seq_q_forward.1} parent=1 // pred_fallthru
      _
    // Predicated region
    $region50: #{seq_to_seq_q_forward.1} parent=1 // pred_check
      _
    $region51: #{seq_to_seq_q_forward.1} parent=1 // pred_check_branch
      %104 = sbr.rel (0) target = $region53
    $region52: #{seq_to_seq_q_forward.1} parent=1 // pred_region
      _
    $region53: #{seq_to_seq_q_forward.1} parent=1 // pred_fallthru
      _
    // Predicated region
    $region54: #{seq_to_seq_q_forward.1} parent=1 // pred_check
      _
    $region55: #{seq_to_seq_q_forward.1} parent=1 // pred_check_branch
      %106 = sbr.rel (0) target = $region57
    $region56: #{seq_to_seq_q_forward.1} parent=1 // pred_region
      _
    $region57: #{seq_to_seq_q_forward.1} parent=1 // pred_fallthru
      _
    // Predicated region
    $region58: #{seq_to_seq_q_forward.1} parent=1 // pred_check
      _
    $region59: #{seq_to_seq_q_forward.1} parent=1 // pred_check_branch
      %108 = sbr.rel (0) target = $region61
    $region60: #{seq_to_seq_q_forward.1} parent=1 // pred_region
      _
    $region61: #{seq_to_seq_q_forward.1} parent=1 // pred_fallthru
      _
    // Predicated region
    $region62: #{seq_to_seq_q_forward.1} parent=1 // pred_check
      _
    $region63: #{seq_to_seq_q_forward.1} parent=1 // pred_check_branch
      %110 = sbr.rel (0) target = $region65
    $region64: #{seq_to_seq_q_forward.1} parent=1 // pred_region
      _
    $region65: #{seq_to_seq_q_forward.1} parent=1 // pred_fallthru
      _
    // Predicated region
    $region66: #{seq_to_seq_q_forward.1} parent=1 // pred_check
      _
    $region67: #{seq_to_seq_q_forward.1} parent=1 // pred_check_branch
      %112 = sbr.rel (0) target = $region69
    $region68: #{seq_to_seq_q_forward.1} parent=1 // pred_region
      %113 = dma.done [#allocation5], 8192
    $region69: #{seq_to_seq_q_forward.1} parent=1 // pred_fallthru
      _
    // Predicated region
    $region70: #{seq_to_seq_q_forward.1} parent=1 // pred_check
      _
    $region71: #{seq_to_seq_q_forward.1} parent=1 // pred_check_branch
      %115 = sbr.rel (0) target = $region73
    $region72: #{seq_to_seq_q_forward.1} parent=1 // pred_region
      %116 = dma.done [#allocation8], 8192
    $region73: #{seq_to_seq_q_forward.1} parent=1 // pred_fallthru
      _
    // Predicated region
    $region74: #{seq_to_seq_q_forward.1} parent=1 // pred_check
      _
    $region75: #{seq_to_seq_q_forward.1} parent=1 // pred_check_branch
      %118 = sbr.rel (0) target = $region77
    $region76: #{seq_to_seq_q_forward.1} parent=1 // pred_region
      %119 = dma.done [#allocation8], 8192
    $region77: #{seq_to_seq_q_forward.1} parent=1 // pred_fallthru
      _
    // Predicated region
    $region78: #{seq_to_seq_q_forward.1} parent=1 // pred_check
      _
    $region79: #{seq_to_seq_q_forward.1} parent=1 // pred_check_branch
      %121 = sbr.rel (0) target = $region81
    $region80: #{seq_to_seq_q_forward.1} parent=1 // pred_region
      %122 = dma.done [#allocation11], 8192
    $region81: #{seq_to_seq_q_forward.1} parent=1 // pred_fallthru
      _
    // Predicated region
    $region82: #{seq_to_seq_q_forward.1} parent=1 // pred_check
      _
    $region83: #{seq_to_seq_q_forward.1} parent=1 // pred_check_branch
      %124 = sbr.rel (0) target = $region85
    $region84: #{seq_to_seq_q_forward.1} parent=1 // pred_region
      %125 = dma.done [#allocation11], 8192
    $region85: #{seq_to_seq_q_forward.1} parent=1 // pred_fallthru
      _
    %v126 = vld [vmem:[%s0] sm:$0xff]
    %v127 = vld [vmem:[%s0 + $0x8] sm:$0xff]
    %v128 = vld [vmem:[%s3] sm:$0xff]
    %v129 = vld [vmem:[%s3 + $0x8] sm:$0xff]
    %v130 = vld [vmem:[%s3 + $0x10] sm:$0xff]
    %v131 = vld [vmem:[%s3 + $0x18] sm:$0xff]
    %v132 = vld [vmem:[%s3 + $0x20] sm:$0xff]
    %v133 = vld [vmem:[%s3 + $0x28] sm:$0xff]
    %v134 = vld [vmem:[%s3 + $0x30] sm:$0xff]
    %v135 = vld [vmem:[%s3 + $0x38] sm:$0xff]
    %v136 = vld [vmem:[%s3 + $0x40] sm:$0xff]
    %v137 = vld [vmem:[%s3 + $0x48] sm:$0xff]
    %v138 = vld [vmem:[%s3 + $0x50] sm:$0xff]
    %v139 = vld [vmem:[%s3 + $0x58] sm:$0xff]
    %v140 = vld [vmem:[%s3 + $0x60] sm:$0xff]
    %v141 = vld [vmem:[%s3 + $0x68] sm:$0xff]
    %v142 = vld [vmem:[%s3 + $0x70] sm:$0xff]
    %v143 = vld [vmem:[%s3 + $0x78] sm:$0xff]
    %v144 = vld [vmem:[%s3 + $0x80] sm:$0xff]
    %v145 = vld [vmem:[%s3 + $0x88] sm:$0xff]
    %v146 = vld [vmem:[%s3 + $0x90] sm:$0xff]
    %v147 = vld [vmem:[%s3 + $0x98] sm:$0xff]
    %v148 = vld [vmem:[%s3 + $0xa0] sm:$0xff]
    %v149 = vld [vmem:[%s3 + $0xa8] sm:$0xff]
    %v150 = vld [vmem:[%s3 + $0xb0] sm:$0xff]
    %v151 = vld [vmem:[%s3 + $0xb8] sm:$0xff]
    %v152 = vld [vmem:[%s3 + $0xc0] sm:$0xff]
    %v153 = vld [vmem:[%s3 + $0xc8] sm:$0xff]
    %v154 = vld [vmem:[%s3 + $0xd0] sm:$0xff]
    %v155 = vld [vmem:[%s3 + $0xd8] sm:$0xff]
    %v156 = vld [vmem:[%s3 + $0xe0] sm:$0xff]
    %v157 = vld [vmem:[%s3 + $0xe8] sm:$0xff]
    %v158 = vld [vmem:[%s3 + $0xf0] sm:$0xff]
    %v159 = vld [vmem:[%s3 + $0xf8] sm:$0xff]
    %v160 = vld [vmem:[%s3 + $0x100] sm:$0xff]
    %v161 = vld [vmem:[%s3 + $0x108] sm:$0xff]
    %v162 = vld [vmem:[%s3 + $0x110] sm:$0xff]
    %v163 = vld [vmem:[%s3 + $0x118] sm:$0xff]
    %v164 = vld [vmem:[%s3 + $0x120] sm:$0xff]
    %v165 = vld [vmem:[%s3 + $0x128] sm:$0xff]
    %v166 = vld [vmem:[%s3 + $0x130] sm:$0xff]
    %v167 = vld [vmem:[%s3 + $0x138] sm:$0xff]
    %v168 = vld [vmem:[%s3 + $0x140] sm:$0xff]
    %v169 = vld [vmem:[%s3 + $0x148] sm:$0xff]
    %v170 = vld [vmem:[%s3 + $0x150] sm:$0xff]
    %v171 = vld [vmem:[%s3 + $0x158] sm:$0xff]
    %v172 = vld [vmem:[%s3 + $0x160] sm:$0xff]
    %v173 = vld [vmem:[%s3 + $0x168] sm:$0xff]
    %v174 = vld [vmem:[%s3 + $0x170] sm:$0xff]
    %v175 = vld [vmem:[%s3 + $0x178] sm:$0xff]
    %v176 = vld [vmem:[%s3 + $0x180] sm:$0xff]
    %v177 = vld [vmem:[%s3 + $0x188] sm:$0xff]
    %v178 = vld [vmem:[%s3 + $0x190] sm:$0xff]
    %v179 = vld [vmem:[%s3 + $0x198] sm:$0xff]
    %v180 = vld [vmem:[%s3 + $0x1a0] sm:$0xff]
    %v181 = vld [vmem:[%s3 + $0x1a8] sm:$0xff]
    %v182 = vld [vmem:[%s3 + $0x1b0] sm:$0xff]
    %v183 = vld [vmem:[%s3 + $0x1b8] sm:$0xff]
    %v184 = vld [vmem:[%s3 + $0x1c0] sm:$0xff]
    %v185 = vld [vmem:[%s3 + $0x1c8] sm:$0xff]
    %v186 = vld [vmem:[%s3 + $0x1d0] sm:$0xff]
    %v187 = vld [vmem:[%s3 + $0x1d8] sm:$0xff]
    %v188 = vld [vmem:[%s3 + $0x1e0] sm:$0xff]
    %v189 = vld [vmem:[%s3 + $0x1e8] sm:$0xff]
    %v190 = vld [vmem:[%s3 + $0x1f0] sm:$0xff]
    %v191 = vld [vmem:[%s3 + $0x1f8] sm:$0xff]
    %v192 = vld [vmem:[%s5] sm:$0xf]
    %v194 = vlaneseq
    %v195 = vshrl.u32 %v194, 7
    %v196 = vsub.s32 0, %v195
    %v197 = vrot.slane %v192, %v196
    %v198 = vlaneseq
    %v199 = vshrl.u32 %v198, 7
    %v200 = vsub.s32 1, %v199
    %v201 = vrot.slane %v192, %v200
    %v202 = vlaneseq
    %v203 = vshrl.u32 %v202, 7
    %v204 = vsub.s32 2, %v203
    %v205 = vrot.slane %v192, %v204
    %v206 = vlaneseq
    %v207 = vshrl.u32 %v206, 7
    %v208 = vsub.s32 3, %v207
    %v209 = vrot.slane %v192, %v208
    %214 = vmatprep.subr.mxu0 %v129
    %215 = vmatpush1.msra.mxu0 %v128
    %216 = vmatprep.subr.mxu0 %v133
    %217 = vmatpush1.msra.mxu0 %v132
    %218 = vmatprep.subr.mxu0 %v137
    %219 = vmatpush1.msra.mxu0 %v136
    %220 = vmatprep.subr.mxu0 %v141
    %221 = vmatpush1.msra.mxu0 %v140
    %222 = vmatprep.subr.mxu0 %v145
    %223 = vmatpush1.msra.mxu0 %v144
    %224 = vmatprep.subr.mxu0 %v149
    %225 = vmatpush1.msra.mxu0 %v148
    %226 = vmatprep.subr.mxu0 %v153
    %227 = vmatpush1.msra.mxu0 %v152
    %228 = vmatprep.subr.mxu0 %v157
    %229 = vmatpush1.msra.mxu0 %v156
    %230 = vmatprep.subr.mxu0 %v161
    %231 = vmatpush1.msra.mxu0 %v160
    %232 = vmatprep.subr.mxu0 %v165
    %233 = vmatpush1.msra.mxu0 %v164
    %234 = vmatprep.subr.mxu0 %v169
    %235 = vmatpush1.msra.mxu0 %v168
    %236 = vmatprep.subr.mxu0 %v173
    %237 = vmatpush1.msra.mxu0 %v172
    %238 = vmatprep.subr.mxu0 %v177
    %239 = vmatpush1.msra.mxu0 %v176
    %240 = vmatprep.subr.mxu0 %v181
    %241 = vmatpush1.msra.mxu0 %v180
    %242 = vmatprep.subr.mxu0 %v185
    %243 = vmatpush1.msra.mxu0 %v184
    %244 = vmatprep.subr.mxu0 %v189
    %245 = vmatpush1.msra.mxu0 %v188
    %246 = vmatprep.subr.mxu0 0.0
    %247 = vmatpush1.msra.mxu0 0.0
    %248 = vmatprep.subr.mxu0 0.0
    %249 = vmatpush1.msra.mxu0 0.0
    %250 = vmatprep.subr.mxu0 0.0
    %251 = vmatpush1.msra.mxu0 0.0
    %252 = vmatprep.subr.mxu0 0.0
    %253 = vmatpush1.msra.mxu0 0.0
    %254 = vmatprep.subr.mxu0 0.0
    %255 = vmatpush1.msra.mxu0 0.0
    %256 = vmatprep.subr.mxu0 0.0
    %257 = vmatpush1.msra.mxu0 0.0
    %258 = vmatprep.subr.mxu0 0.0
    %259 = vmatpush1.msra.mxu0 0.0
    %260 = vmatprep.subr.mxu0 0.0
    %261 = vmatpush1.msra.mxu0 0.0
    %262 = vmatprep.subr.mxu0 0.0
    %263 = vmatpush1.msra.mxu0 0.0
    %264 = vmatprep.subr.mxu0 0.0
    %265 = vmatpush1.msra.mxu0 0.0
    %266 = vmatprep.subr.mxu0 0.0
    %267 = vmatpush1.msra.mxu0 0.0
    %268 = vmatprep.subr.mxu0 0.0
    %269 = vmatpush1.msra.mxu0 0.0
    %270 = vmatprep.subr.mxu0 0.0
    %271 = vmatpush1.msra.mxu0 0.0
    %272 = vmatprep.subr.mxu0 0.0
    %273 = vmatpush1.msra.mxu0 0.0
    %274 = vmatprep.subr.mxu0 0.0
    %275 = vmatpush1.msra.mxu0 0.0
    %276 = vmatprep.subr.mxu0 0.0
    %277 = vmatpush1.msra.mxu0 0.0
    %278 = vmatprep.mubr.f32.mxu0 0.0
    %279 = vmatmul.mubr.f32.gmra.mrb[0].mxu0 %v126
    %v280 = vpop.f32.mrb[0].mxu0
    %v281 = vadd.f32 %v197, %v280
    %v282 = vpop.f32.mrb[0].mxu0
    %v283 = vadd.f32 %v201, %v282
    %284 = vmatprep.mubr.f32.mxu0 0.0
    %285 = vmatmul.mubr.f32.gmra.mrb[0].mxu0 %v127
    %v286 = vpop.f32.mrb[0].mxu0
    %v287 = vadd.f32 %v197, %v286
    %v288 = vpop.f32.mrb[0].mxu0
    %v289 = vadd.f32 %v201, %v288
    %290 = vdwg.mxu0
    %291 = vmatprep.subr.mxu0 %v131
    %292 = vmatpush1.msra.mxu0 %v130
    %293 = vmatprep.subr.mxu0 %v135
    %294 = vmatpush1.msra.mxu0 %v134
    %295 = vmatprep.subr.mxu0 %v139
    %296 = vmatpush1.msra.mxu0 %v138
    %297 = vmatprep.subr.mxu0 %v143
    %298 = vmatpush1.msra.mxu0 %v142
    %299 = vmatprep.subr.mxu0 %v147
    %300 = vmatpush1.msra.mxu0 %v146
    %301 = vmatprep.subr.mxu0 %v151
    %302 = vmatpush1.msra.mxu0 %v150
    %303 = vmatprep.subr.mxu0 %v155
    %304 = vmatpush1.msra.mxu0 %v154
    %305 = vmatprep.subr.mxu0 %v159
    %306 = vmatpush1.msra.mxu0 %v158
    %307 = vmatprep.subr.mxu0 %v163
    %308 = vmatpush1.msra.mxu0 %v162
    %309 = vmatprep.subr.mxu0 %v167
    %310 = vmatpush1.msra.mxu0 %v166
    %311 = vmatprep.subr.mxu0 %v171
    %312 = vmatpush1.msra.mxu0 %v170
    %313 = vmatprep.subr.mxu0 %v175
    %314 = vmatpush1.msra.mxu0 %v174
    %315 = vmatprep.subr.mxu0 %v179
    %316 = vmatpush1.msra.mxu0 %v178
    %317 = vmatprep.subr.mxu0 %v183
    %318 = vmatpush1.msra.mxu0 %v182
    %319 = vmatprep.subr.mxu0 %v187
    %320 = vmatpush1.msra.mxu0 %v186
    %321 = vmatprep.subr.mxu0 %v191
    %322 = vmatpush1.msra.mxu0 %v190
    %323 = vmatprep.subr.mxu0 0.0
    %324 = vmatpush1.msra.mxu0 0.0
    %325 = vmatprep.subr.mxu0 0.0
    %326 = vmatpush1.msra.mxu0 0.0
    %327 = vmatprep.subr.mxu0 0.0
    %328 = vmatpush1.msra.mxu0 0.0
    %329 = vmatprep.subr.mxu0 0.0
    %330 = vmatpush1.msra.mxu0 0.0
    %331 = vmatprep.subr.mxu0 0.0
    %332 = vmatpush1.msra.mxu0 0.0
    %333 = vmatprep.subr.mxu0 0.0
    %334 = vmatpush1.msra.mxu0 0.0
    %335 = vmatprep.subr.mxu0 0.0
    %336 = vmatpush1.msra.mxu0 0.0
    %337 = vmatprep.subr.mxu0 0.0
    %338 = vmatpush1.msra.mxu0 0.0
    %339 = vmatprep.subr.mxu0 0.0
    %340 = vmatpush1.msra.mxu0 0.0
    %341 = vmatprep.subr.mxu0 0.0
    %342 = vmatpush1.msra.mxu0 0.0
    %343 = vmatprep.subr.mxu0 0.0
    %344 = vmatpush1.msra.mxu0 0.0
    %345 = vmatprep.subr.mxu0 0.0
    %346 = vmatpush1.msra.mxu0 0.0
    %347 = vmatprep.subr.mxu0 0.0
    %348 = vmatpush1.msra.mxu0 0.0
    %349 = vmatprep.subr.mxu0 0.0
    %350 = vmatpush1.msra.mxu0 0.0
    %351 = vmatprep.subr.mxu0 0.0
    %352 = vmatpush1.msra.mxu0 0.0
    %353 = vmatprep.subr.mxu0 0.0
    %354 = vmatpush1.msra.mxu0 0.0
    %355 = vmatprep.mubr.f32.mxu0 0.0
    %356 = vmatmul.mubr.f32.gmra.mrb[0].mxu0 %v126
    %v357 = vpop.f32.mrb[0].mxu0
    %v358 = vadd.f32 %v205, %v357
    %v359 = vpop.f32.mrb[0].mxu0
    %v360 = vadd.f32 %v209, %v359
    %361 = vmatprep.mubr.f32.mxu0 0.0
    %362 = vmatmul.mubr.f32.gmra.mrb[0].mxu0 %v127
    %v363 = vpop.f32.mrb[0].mxu0
    %v364 = vadd.f32 %v205, %v363
    %v365 = vpop.f32.mrb[0].mxu0
    %v366 = vadd.f32 %v209, %v365
    %367 = vdwg.mxu0
    %v368 = vld [vmem:[#allocation4] sm:$0xff]
    %v369 = vld [vmem:[#allocation4 + $0x8] sm:$0xff]
    %v370 = vld [vmem:[#allocation4 + $0x10] sm:$0xff]
    %v371 = vld [vmem:[#allocation4 + $0x18] sm:$0xff]
    %v372 = vld [vmem:[#allocation4 + $0x20] sm:$0xff]
    %v373 = vld [vmem:[#allocation4 + $0x28] sm:$0xff]
    %v374 = vld [vmem:[#allocation4 + $0x30] sm:$0xff]
    %v375 = vld [vmem:[#allocation4 + $0x38] sm:$0xff]
    %v376 = vld [vmem:[#allocation4 + $0x40] sm:$0xff]
    %v377 = vld [vmem:[#allocation4 + $0x48] sm:$0xff]
    %v378 = vld [vmem:[#allocation4 + $0x50] sm:$0xff]
    %v379 = vld [vmem:[#allocation4 + $0x58] sm:$0xff]
    %v380 = vld [vmem:[#allocation4 + $0x60] sm:$0xff]
    %v381 = vld [vmem:[#allocation4 + $0x68] sm:$0xff]
    %v382 = vld [vmem:[#allocation4 + $0x70] sm:$0xff]
    %v383 = vld [vmem:[#allocation4 + $0x78] sm:$0xff]
    %v384 = vld [vmem:[#allocation4 + $0x80] sm:$0xff]
    %v385 = vld [vmem:[#allocation4 + $0x88] sm:$0xff]
    %v386 = vld [vmem:[#allocation4 + $0x90] sm:$0xff]
    %v387 = vld [vmem:[#allocation4 + $0x98] sm:$0xff]
    %v388 = vld [vmem:[#allocation4 + $0xa0] sm:$0xff]
    %v389 = vld [vmem:[#allocation4 + $0xa8] sm:$0xff]
    %v390 = vld [vmem:[#allocation4 + $0xb0] sm:$0xff]
    %v391 = vld [vmem:[#allocation4 + $0xb8] sm:$0xff]
    %v392 = vld [vmem:[#allocation4 + $0xc0] sm:$0xff]
    %v393 = vld [vmem:[#allocation4 + $0xc8] sm:$0xff]
    %v394 = vld [vmem:[#allocation4 + $0xd0] sm:$0xff]
    %v395 = vld [vmem:[#allocation4 + $0xd8] sm:$0xff]
    %v396 = vld [vmem:[#allocation4 + $0xe0] sm:$0xff]
    %v397 = vld [vmem:[#allocation4 + $0xe8] sm:$0xff]
    %v398 = vld [vmem:[#allocation4 + $0xf0] sm:$0xff]
    %v399 = vld [vmem:[#allocation4 + $0xf8] sm:$0xff]
    %v400 = vld [vmem:[#allocation4 + $0x100] sm:$0xff]
    %v401 = vld [vmem:[#allocation4 + $0x108] sm:$0xff]
    %v402 = vld [vmem:[#allocation4 + $0x110] sm:$0xff]
    %v403 = vld [vmem:[#allocation4 + $0x118] sm:$0xff]
    %v404 = vld [vmem:[#allocation4 + $0x120] sm:$0xff]
    %v405 = vld [vmem:[#allocation4 + $0x128] sm:$0xff]
    %v406 = vld [vmem:[#allocation4 + $0x130] sm:$0xff]
    %v407 = vld [vmem:[#allocation4 + $0x138] sm:$0xff]
    %v408 = vld [vmem:[#allocation4 + $0x140] sm:$0xff]
    %v409 = vld [vmem:[#allocation4 + $0x148] sm:$0xff]
    %v410 = vld [vmem:[#allocation4 + $0x150] sm:$0xff]
    %v411 = vld [vmem:[#allocation4 + $0x158] sm:$0xff]
    %v412 = vld [vmem:[#allocation4 + $0x160] sm:$0xff]
    %v413 = vld [vmem:[#allocation4 + $0x168] sm:$0xff]
    %v414 = vld [vmem:[#allocation4 + $0x170] sm:$0xff]
    %v415 = vld [vmem:[#allocation4 + $0x178] sm:$0xff]
    %v416 = vld [vmem:[#allocation4 + $0x180] sm:$0xff]
    %v417 = vld [vmem:[#allocation4 + $0x188] sm:$0xff]
    %v418 = vld [vmem:[#allocation4 + $0x190] sm:$0xff]
    %v419 = vld [vmem:[#allocation4 + $0x198] sm:$0xff]
    %v420 = vld [vmem:[#allocation4 + $0x1a0] sm:$0xff]
    %v421 = vld [vmem:[#allocation4 + $0x1a8] sm:$0xff]
    %v422 = vld [vmem:[#allocation4 + $0x1b0] sm:$0xff]
    %v423 = vld [vmem:[#allocation4 + $0x1b8] sm:$0xff]
    %v424 = vld [vmem:[#allocation4 + $0x1c0] sm:$0xff]
    %v425 = vld [vmem:[#allocation4 + $0x1c8] sm:$0xff]
    %v426 = vld [vmem:[#allocation4 + $0x1d0] sm:$0xff]
    %v427 = vld [vmem:[#allocation4 + $0x1d8] sm:$0xff]
    %v428 = vld [vmem:[#allocation4 + $0x1e0] sm:$0xff]
    %v429 = vld [vmem:[#allocation4 + $0x1e8] sm:$0xff]
    %v430 = vld [vmem:[#allocation4 + $0x1f0] sm:$0xff]
    %v431 = vld [vmem:[#allocation4 + $0x1f8] sm:$0xff]
    %432 = vmatprep.subr.mxu0 %v369
    %433 = vmatpush1.msra.mxu0 %v368
    %434 = vmatprep.subr.mxu0 %v373
    %435 = vmatpush1.msra.mxu0 %v372
    %436 = vmatprep.subr.mxu0 %v377
    %437 = vmatpush1.msra.mxu0 %v376
    %438 = vmatprep.subr.mxu0 %v381
    %439 = vmatpush1.msra.mxu0 %v380
    %440 = vmatprep.subr.mxu0 %v385
    %441 = vmatpush1.msra.mxu0 %v384
    %442 = vmatprep.subr.mxu0 %v389
    %443 = vmatpush1.msra.mxu0 %v388
    %444 = vmatprep.subr.mxu0 %v393
    %445 = vmatpush1.msra.mxu0 %v392
    %446 = vmatprep.subr.mxu0 %v397
    %447 = vmatpush1.msra.mxu0 %v396
    %448 = vmatprep.subr.mxu0 %v401
    %449 = vmatpush1.msra.mxu0 %v400
    %450 = vmatprep.subr.mxu0 %v405
    %451 = vmatpush1.msra.mxu0 %v404
    %452 = vmatprep.subr.mxu0 %v409
    %453 = vmatpush1.msra.mxu0 %v408
    %454 = vmatprep.subr.mxu0 %v413
    %455 = vmatpush1.msra.mxu0 %v412
    %456 = vmatprep.subr.mxu0 %v417
    %457 = vmatpush1.msra.mxu0 %v416
    %458 = vmatprep.subr.mxu0 %v421
    %459 = vmatpush1.msra.mxu0 %v420
    %460 = vmatprep.subr.mxu0 %v425
    %461 = vmatpush1.msra.mxu0 %v424
    %462 = vmatprep.subr.mxu0 %v429
    %463 = vmatpush1.msra.mxu0 %v428
    %464 = vmatprep.subr.mxu0 0.0
    %465 = vmatpush1.msra.mxu0 0.0
    %466 = vmatprep.subr.mxu0 0.0
    %467 = vmatpush1.msra.mxu0 0.0
    %468 = vmatprep.subr.mxu0 0.0
    %469 = vmatpush1.msra.mxu0 0.0
    %470 = vmatprep.subr.mxu0 0.0
    %471 = vmatpush1.msra.mxu0 0.0
    %472 = vmatprep.subr.mxu0 0.0
    %473 = vmatpush1.msra.mxu0 0.0
    %474 = vmatprep.subr.mxu0 0.0
    %475 = vmatpush1.msra.mxu0 0.0
    %476 = vmatprep.subr.mxu0 0.0
    %477 = vmatpush1.msra.mxu0 0.0
    %478 = vmatprep.subr.mxu0 0.0
    %479 = vmatpush1.msra.mxu0 0.0
    %480 = vmatprep.subr.mxu0 0.0
    %481 = vmatpush1.msra.mxu0 0.0
    %482 = vmatprep.subr.mxu0 0.0
    %483 = vmatpush1.msra.mxu0 0.0
    %484 = vmatprep.subr.mxu0 0.0
    %485 = vmatpush1.msra.mxu0 0.0
    %486 = vmatprep.subr.mxu0 0.0
    %487 = vmatpush1.msra.mxu0 0.0
    %488 = vmatprep.subr.mxu0 0.0
    %489 = vmatpush1.msra.mxu0 0.0
    %490 = vmatprep.subr.mxu0 0.0
    %491 = vmatpush1.msra.mxu0 0.0
    %492 = vmatprep.subr.mxu0 0.0
    %493 = vmatpush1.msra.mxu0 0.0
    %494 = vmatprep.subr.mxu0 0.0
    %495 = vmatpush1.msra.mxu0 0.0
    %496 = vmatprep.mubr.f32.mxu0 0.0
    %497 = vmatmul.mubr.f32.gmra.mrb[0].mxu0 0.0
    %v498 = vpop.f32.mrb[0].mxu0
    %v499 = vadd.f32 0.0, %v498
    %v500 = vpop.f32.mrb[0].mxu0
    %v501 = vadd.f32 0.0, %v500
    %502 = vdwg.mxu0
    %503 = vmatprep.subr.mxu0 %v371
    %504 = vmatpush1.msra.mxu0 %v370
    %505 = vmatprep.subr.mxu0 %v375
    %506 = vmatpush1.msra.mxu0 %v374
    %507 = vmatprep.subr.mxu0 %v379
    %508 = vmatpush1.msra.mxu0 %v378
    %509 = vmatprep.subr.mxu0 %v383
    %510 = vmatpush1.msra.mxu0 %v382
    %511 = vmatprep.subr.mxu0 %v387
    %512 = vmatpush1.msra.mxu0 %v386
    %513 = vmatprep.subr.mxu0 %v391
    %514 = vmatpush1.msra.mxu0 %v390
    %515 = vmatprep.subr.mxu0 %v395
    %516 = vmatpush1.msra.mxu0 %v394
    %517 = vmatprep.subr.mxu0 %v399
    %518 = vmatpush1.msra.mxu0 %v398
    %519 = vmatprep.subr.mxu0 %v403
    %520 = vmatpush1.msra.mxu0 %v402
    %521 = vmatprep.subr.mxu0 %v407
    %522 = vmatpush1.msra.mxu0 %v406
    %523 = vmatprep.subr.mxu0 %v411
    %524 = vmatpush1.msra.mxu0 %v410
    %525 = vmatprep.subr.mxu0 %v415
    %526 = vmatpush1.msra.mxu0 %v414
    %527 = vmatprep.subr.mxu0 %v419
    %528 = vmatpush1.msra.mxu0 %v418
    %529 = vmatprep.subr.mxu0 %v423
    %530 = vmatpush1.msra.mxu0 %v422
    %531 = vmatprep.subr.mxu0 %v427
    %532 = vmatpush1.msra.mxu0 %v426
    %533 = vmatprep.subr.mxu0 %v431
    %534 = vmatpush1.msra.mxu0 %v430
    %535 = vmatprep.subr.mxu0 0.0
    %536 = vmatpush1.msra.mxu0 0.0
    %537 = vmatprep.subr.mxu0 0.0
    %538 = vmatpush1.msra.mxu0 0.0
    %539 = vmatprep.subr.mxu0 0.0
    %540 = vmatpush1.msra.mxu0 0.0
    %541 = vmatprep.subr.mxu0 0.0
    %542 = vmatpush1.msra.mxu0 0.0
    %543 = vmatprep.subr.mxu0 0.0
    %544 = vmatpush1.msra.mxu0 0.0
    %545 = vmatprep.subr.mxu0 0.0
    %546 = vmatpush1.msra.mxu0 0.0
    %547 = vmatprep.subr.mxu0 0.0
    %548 = vmatpush1.msra.mxu0 0.0
    %549 = vmatprep.subr.mxu0 0.0
    %550 = vmatpush1.msra.mxu0 0.0
    %551 = vmatprep.subr.mxu0 0.0
    %552 = vmatpush1.msra.mxu0 0.0
    %553 = vmatprep.subr.mxu0 0.0
    %554 = vmatpush1.msra.mxu0 0.0
    %555 = vmatprep.subr.mxu0 0.0
    %556 = vmatpush1.msra.mxu0 0.0
    %557 = vmatprep.subr.mxu0 0.0
    %558 = vmatpush1.msra.mxu0 0.0
    %559 = vmatprep.subr.mxu0 0.0
    %560 = vmatpush1.msra.mxu0 0.0
    %561 = vmatprep.subr.mxu0 0.0
    %562 = vmatpush1.msra.mxu0 0.0
    %563 = vmatprep.subr.mxu0 0.0
    %564 = vmatpush1.msra.mxu0 0.0
    %565 = vmatprep.subr.mxu0 0.0
    %566 = vmatpush1.msra.mxu0 0.0
    %567 = vmatprep.mubr.f32.mxu0 0.0
    %568 = vmatmul.mubr.f32.gmra.mrb[0].mxu0 0.0
    %v569 = vpop.f32.mrb[0].mxu0
    %v570 = vadd.f32 0.0, %v569
    %v571 = vpop.f32.mrb[0].mxu0
    %v572 = vadd.f32 0.0, %v571
    %573 = vdwg.mxu0
    %v574 = vadd.f32 %v281, %v499
    %v575 = vadd.f32 %v283, %v501
    %v576 = vadd.f32 %v358, %v570
    %v577 = vadd.f32 %v360, %v572
    %v578 = vxor.u32 %v574, 2147483648
    %v579 = vmul.f32 %v578, 1.442695
    %v580 = vpow.pop %v579
    %v581 = vadd.f32 %v580, 1.0
    %v582 = vrcp.pop %v581
    %v583 = vmul.f32 1.0, %v582
    %v584 = vxor.u32 %v575, 2147483648
    %v585 = vmul.f32 %v584, 1.442695
    %v586 = vpow.pop %v585
    %v587 = vadd.f32 %v586, 1.0
    %v588 = vrcp.pop %v587
    %v589 = vmul.f32 1.0, %v588
    %v590 = vtanh.pop %v576
    %v591 = vxor.u32 %v577, 2147483648
    %v592 = vmul.f32 %v591, 1.442695
    %v593 = vpow.pop %v592
    %v594 = vadd.f32 %v593, 1.0
    %v595 = vrcp.pop %v594
    %v596 = vmul.f32 1.0, %v595
    %v597 = vmul.f32 %v589, 0.0
    %v598 = vmul.f32 %v583, %v590
    %v599 = vadd.f32 %v597, %v598
    %v600 = vtanh.pop %v599
    %v601 = vmul.f32 %v596, %v600
    %602 = vmatprep.subr.mxu0 %v369
    %603 = vmatpush1.msra.mxu0 %v368
    %604 = vmatprep.subr.mxu0 %v373
    %605 = vmatpush1.msra.mxu0 %v372
    %606 = vmatprep.subr.mxu0 %v377
    %607 = vmatpush1.msra.mxu0 %v376
    %608 = vmatprep.subr.mxu0 %v381
    %609 = vmatpush1.msra.mxu0 %v380
    %610 = vmatprep.subr.mxu0 %v385
    %611 = vmatpush1.msra.mxu0 %v384
    %612 = vmatprep.subr.mxu0 %v389
    %613 = vmatpush1.msra.mxu0 %v388
    %614 = vmatprep.subr.mxu0 %v393
    %615 = vmatpush1.msra.mxu0 %v392
    %616 = vmatprep.subr.mxu0 %v397
    %617 = vmatpush1.msra.mxu0 %v396
    %618 = vmatprep.subr.mxu0 %v401
    %619 = vmatpush1.msra.mxu0 %v400
    %620 = vmatprep.subr.mxu0 %v405
    %621 = vmatpush1.msra.mxu0 %v404
    %622 = vmatprep.subr.mxu0 %v409
    %623 = vmatpush1.msra.mxu0 %v408
    %624 = vmatprep.subr.mxu0 %v413
    %625 = vmatpush1.msra.mxu0 %v412
    %626 = vmatprep.subr.mxu0 %v417
    %627 = vmatpush1.msra.mxu0 %v416
    %628 = vmatprep.subr.mxu0 %v421
    %629 = vmatpush1.msra.mxu0 %v420
    %630 = vmatprep.subr.mxu0 %v425
    %631 = vmatpush1.msra.mxu0 %v424
    %632 = vmatprep.subr.mxu0 %v429
    %633 = vmatpush1.msra.mxu0 %v428
    %634 = vmatprep.subr.mxu0 0.0
    %635 = vmatpush1.msra.mxu0 0.0
    %636 = vmatprep.subr.mxu0 0.0
    %637 = vmatpush1.msra.mxu0 0.0
    %638 = vmatprep.subr.mxu0 0.0
    %639 = vmatpush1.msra.mxu0 0.0
    %640 = vmatprep.subr.mxu0 0.0
    %641 = vmatpush1.msra.mxu0 0.0
    %642 = vmatprep.subr.mxu0 0.0
    %643 = vmatpush1.msra.mxu0 0.0
    %644 = vmatprep.subr.mxu0 0.0
    %645 = vmatpush1.msra.mxu0 0.0
    %646 = vmatprep.subr.mxu0 0.0
    %647 = vmatpush1.msra.mxu0 0.0
    %648 = vmatprep.subr.mxu0 0.0
    %649 = vmatpush1.msra.mxu0 0.0
    %650 = vmatprep.subr.mxu0 0.0
    %651 = vmatpush1.msra.mxu0 0.0
    %652 = vmatprep.subr.mxu0 0.0
    %653 = vmatpush1.msra.mxu0 0.0
    %654 = vmatprep.subr.mxu0 0.0
    %655 = vmatpush1.msra.mxu0 0.0
    %656 = vmatprep.subr.mxu0 0.0
    %657 = vmatpush1.msra.mxu0 0.0
    %658 = vmatprep.subr.mxu0 0.0
    %659 = vmatpush1.msra.mxu0 0.0
    %660 = vmatprep.subr.mxu0 0.0
    %661 = vmatpush1.msra.mxu0 0.0
    %662 = vmatprep.subr.mxu0 0.0
    %663 = vmatpush1.msra.mxu0 0.0
    %664 = vmatprep.subr.mxu0 0.0
    %665 = vmatpush1.msra.mxu0 0.0
    %666 = vmatprep.mubr.f32.mxu0 0.0
    %667 = vmatmul.mubr.f32.gmra.mrb[0].mxu0 %v601
    %v668 = vpop.f32.mrb[0].mxu0
    %v669 = vadd.f32 0.0, %v668
    %v670 = vpop.f32.mrb[0].mxu0
    %v671 = vadd.f32 0.0, %v670
    %672 = vdwg.mxu0
    %673 = vmatprep.subr.mxu0 %v371
    %674 = vmatpush1.msra.mxu0 %v370
    %675 = vmatprep.subr.mxu0 %v375
    %676 = vmatpush1.msra.mxu0 %v374
    %677 = vmatprep.subr.mxu0 %v379
    %678 = vmatpush1.msra.mxu0 %v378
    %679 = vmatprep.subr.mxu0 %v383
    %680 = vmatpush1.msra.mxu0 %v382
    %681 = vmatprep.subr.mxu0 %v387
    %682 = vmatpush1.msra.mxu0 %v386
    %683 = vmatprep.subr.mxu0 %v391
    %684 = vmatpush1.msra.mxu0 %v390
    %685 = vmatprep.subr.mxu0 %v395
    %686 = vmatpush1.msra.mxu0 %v394
    %687 = vmatprep.subr.mxu0 %v399
    %688 = vmatpush1.msra.mxu0 %v398
    %689 = vmatprep.subr.mxu0 %v403
    %690 = vmatpush1.msra.mxu0 %v402
    %691 = vmatprep.subr.mxu0 %v407
    %692 = vmatpush1.msra.mxu0 %v406
    %693 = vmatprep.subr.mxu0 %v411
    %694 = vmatpush1.msra.mxu0 %v410
    %695 = vmatprep.subr.mxu0 %v415
    %696 = vmatpush1.msra.mxu0 %v414
    %697 = vmatprep.subr.mxu0 %v419
    %698 = vmatpush1.msra.mxu0 %v418
    %699 = vmatprep.subr.mxu0 %v423
    %700 = vmatpush1.msra.mxu0 %v422
    %701 = vmatprep.subr.mxu0 %v427
    %702 = vmatpush1.msra.mxu0 %v426
    %703 = vmatprep.subr.mxu0 %v431
    %704 = vmatpush1.msra.mxu0 %v430
    %705 = vmatprep.subr.mxu0 0.0
    %706 = vmatpush1.msra.mxu0 0.0
    %707 = vmatprep.subr.mxu0 0.0
    %708 = vmatpush1.msra.mxu0 0.0
    %709 = vmatprep.subr.mxu0 0.0
    %710 = vmatpush1.msra.mxu0 0.0
    %711 = vmatprep.subr.mxu0 0.0
    %712 = vmatpush1.msra.mxu0 0.0
    %713 = vmatprep.subr.mxu0 0.0
    %714 = vmatpush1.msra.mxu0 0.0
    %715 = vmatprep.subr.mxu0 0.0
    %716 = vmatpush1.msra.mxu0 0.0
    %717 = vmatprep.subr.mxu0 0.0
    %718 = vmatpush1.msra.mxu0 0.0
    %719 = vmatprep.subr.mxu0 0.0
    %720 = vmatpush1.msra.mxu0 0.0
    %721 = vmatprep.subr.mxu0 0.0
    %722 = vmatpush1.msra.mxu0 0.0
    %723 = vmatprep.subr.mxu0 0.0
    %724 = vmatpush1.msra.mxu0 0.0
    %725 = vmatprep.subr.mxu0 0.0
    %726 = vmatpush1.msra.mxu0 0.0
    %727 = vmatprep.subr.mxu0 0.0
    %728 = vmatpush1.msra.mxu0 0.0
    %729 = vmatprep.subr.mxu0 0.0
    %730 = vmatpush1.msra.mxu0 0.0
    %731 = vmatprep.subr.mxu0 0.0
    %732 = vmatpush1.msra.mxu0 0.0
    %733 = vmatprep.subr.mxu0 0.0
    %734 = vmatpush1.msra.mxu0 0.0
    %735 = vmatprep.subr.mxu0 0.0
    %736 = vmatpush1.msra.mxu0 0.0
    %737 = vmatprep.mubr.f32.mxu0 0.0
    %738 = vmatmul.mubr.f32.gmra.mrb[0].mxu0 %v601
    %v739 = vpop.f32.mrb[0].mxu0
    %v740 = vadd.f32 0.0, %v739
    %v741 = vpop.f32.mrb[0].mxu0
    %v742 = vadd.f32 0.0, %v741
    %743 = vdwg.mxu0
    %v748 = vrot.slane %v669, 6
    %v749 = vrot.slane %v671, 6
    %v750 = vrot.slane %v740, 6
    %v751 = vrot.slane %v742, 6
    %v756 = vadd.f32 %v281, %v748
    %v757 = vadd.f32 %v283, %v749
    %v758 = vadd.f32 %v358, %v750
    %v759 = vadd.f32 %v360, %v751
    %v760 = vxor.u32 %v756, 2147483648
    %v761 = vmul.f32 %v760, 1.442695
    %v762 = vpow.pop %v761
    %v763 = vadd.f32 %v762, 1.0
    %v764 = vrcp.pop %v763
    %v765 = vmul.f32 1.0, %v764
    %v766 = vxor.u32 %v757, 2147483648
    %v767 = vmul.f32 %v766, 1.442695
    %v768 = vpow.pop %v767
    %v769 = vadd.f32 %v768, 1.0
    %v770 = vrcp.pop %v769
    %v771 = vmul.f32 1.0, %v770
    %v772 = vtanh.pop %v758
    %v773 = vxor.u32 %v759, 2147483648
    %v774 = vmul.f32 %v773, 1.442695
    %v775 = vpow.pop %v774
    %v776 = vadd.f32 %v775, 1.0
    %v777 = vrcp.pop %v776
    %v778 = vmul.f32 1.0, %v777
    %v780 = vrot.slane %v599, 6
    %v782 = vmul.f32 %v771, %v780
    %v783 = vmul.f32 %v765, %v772
    %v784 = vadd.f32 %v782, %v783
    %v785 = vtanh.pop %v784
    %v786 = vmul.f32 %v778, %v785
    %v788 = vrot.slane %v786, 2
    %790 = vmatprep.subr.mxu0 %v369
    %791 = vmatpush1.msra.mxu0 %v368
    %792 = vmatprep.subr.mxu0 %v373
    %793 = vmatpush1.msra.mxu0 %v372
    %794 = vmatprep.subr.mxu0 %v377
    %795 = vmatpush1.msra.mxu0 %v376
    %796 = vmatprep.subr.mxu0 %v381
    %797 = vmatpush1.msra.mxu0 %v380
    %798 = vmatprep.subr.mxu0 %v385
    %799 = vmatpush1.msra.mxu0 %v384
    %800 = vmatprep.subr.mxu0 %v389
    %801 = vmatpush1.msra.mxu0 %v388
    %802 = vmatprep.subr.mxu0 %v393
    %803 = vmatpush1.msra.mxu0 %v392
    %804 = vmatprep.subr.mxu0 %v397
    %805 = vmatpush1.msra.mxu0 %v396
    %806 = vmatprep.subr.mxu0 %v401
    %807 = vmatpush1.msra.mxu0 %v400
    %808 = vmatprep.subr.mxu0 %v405
    %809 = vmatpush1.msra.mxu0 %v404
    %810 = vmatprep.subr.mxu0 %v409
    %811 = vmatpush1.msra.mxu0 %v408
    %812 = vmatprep.subr.mxu0 %v413
    %813 = vmatpush1.msra.mxu0 %v412
    %814 = vmatprep.subr.mxu0 %v417
    %815 = vmatpush1.msra.mxu0 %v416
    %816 = vmatprep.subr.mxu0 %v421
    %817 = vmatpush1.msra.mxu0 %v420
    %818 = vmatprep.subr.mxu0 %v425
    %819 = vmatpush1.msra.mxu0 %v424
    %820 = vmatprep.subr.mxu0 %v429
    %821 = vmatpush1.msra.mxu0 %v428
    %822 = vmatprep.subr.mxu0 0.0
    %823 = vmatpush1.msra.mxu0 0.0
    %824 = vmatprep.subr.mxu0 0.0
    %825 = vmatpush1.msra.mxu0 0.0
    %826 = vmatprep.subr.mxu0 0.0
    %827 = vmatpush1.msra.mxu0 0.0
    %828 = vmatprep.subr.mxu0 0.0
    %829 = vmatpush1.msra.mxu0 0.0
    %830 = vmatprep.subr.mxu0 0.0
    %831 = vmatpush1.msra.mxu0 0.0
    %832 = vmatprep.subr.mxu0 0.0
    %833 = vmatpush1.msra.mxu0 0.0
    %834 = vmatprep.subr.mxu0 0.0
    %835 = vmatpush1.msra.mxu0 0.0
    %836 = vmatprep.subr.mxu0 0.0
    %837 = vmatpush1.msra.mxu0 0.0
    %838 = vmatprep.subr.mxu0 0.0
    %839 = vmatpush1.msra.mxu0 0.0
    %840 = vmatprep.subr.mxu0 0.0
    %841 = vmatpush1.msra.mxu0 0.0
    %842 = vmatprep.subr.mxu0 0.0
    %843 = vmatpush1.msra.mxu0 0.0
    %844 = vmatprep.subr.mxu0 0.0
    %845 = vmatpush1.msra.mxu0 0.0
    %846 = vmatprep.subr.mxu0 0.0
    %847 = vmatpush1.msra.mxu0 0.0
    %848 = vmatprep.subr.mxu0 0.0
    %849 = vmatpush1.msra.mxu0 0.0
    %850 = vmatprep.subr.mxu0 0.0
    %851 = vmatpush1.msra.mxu0 0.0
    %852 = vmatprep.subr.mxu0 0.0
    %853 = vmatpush1.msra.mxu0 0.0
    %854 = vmatprep.mubr.f32.mxu0 0.0
    %855 = vmatmul.mubr.f32.gmra.mrb[0].mxu0 %v788
    %v856 = vpop.f32.mrb[0].mxu0
    %v857 = vadd.f32 0.0, %v856
    %v858 = vpop.f32.mrb[0].mxu0
    %v859 = vadd.f32 0.0, %v858
    %860 = vdwg.mxu0
    %861 = vmatprep.subr.mxu0 %v371
    %862 = vmatpush1.msra.mxu0 %v370
    %863 = vmatprep.subr.mxu0 %v375
    %864 = vmatpush1.msra.mxu0 %v374
    %865 = vmatprep.subr.mxu0 %v379
    %866 = vmatpush1.msra.mxu0 %v378
    %867 = vmatprep.subr.mxu0 %v383
    %868 = vmatpush1.msra.mxu0 %v382
    %869 = vmatprep.subr.mxu0 %v387
    %870 = vmatpush1.msra.mxu0 %v386
    %871 = vmatprep.subr.mxu0 %v391
    %872 = vmatpush1.msra.mxu0 %v390
    %873 = vmatprep.subr.mxu0 %v395
    %874 = vmatpush1.msra.mxu0 %v394
    %875 = vmatprep.subr.mxu0 %v399
    %876 = vmatpush1.msra.mxu0 %v398
    %877 = vmatprep.subr.mxu0 %v403
    %878 = vmatpush1.msra.mxu0 %v402
    %879 = vmatprep.subr.mxu0 %v407
    %880 = vmatpush1.msra.mxu0 %v406
    %881 = vmatprep.subr.mxu0 %v411
    %882 = vmatpush1.msra.mxu0 %v410
    %883 = vmatprep.subr.mxu0 %v415
    %884 = vmatpush1.msra.mxu0 %v414
    %885 = vmatprep.subr.mxu0 %v419
    %886 = vmatpush1.msra.mxu0 %v418
    %887 = vmatprep.subr.mxu0 %v423
    %888 = vmatpush1.msra.mxu0 %v422
    %889 = vmatprep.subr.mxu0 %v427
    %890 = vmatpush1.msra.mxu0 %v426
    %891 = vmatprep.subr.mxu0 %v431
    %892 = vmatpush1.msra.mxu0 %v430
    %893 = vmatprep.subr.mxu0 0.0
    %894 = vmatpush1.msra.mxu0 0.0
    %895 = vmatprep.subr.mxu0 0.0
    %896 = vmatpush1.msra.mxu0 0.0
    %897 = vmatprep.subr.mxu0 0.0
    %898 = vmatpush1.msra.mxu0 0.0
    %899 = vmatprep.subr.mxu0 0.0
    %900 = vmatpush1.msra.mxu0 0.0
    %901 = vmatprep.subr.mxu0 0.0
    %902 = vmatpush1.msra.mxu0 0.0
    %903 = vmatprep.subr.mxu0 0.0
    %904 = vmatpush1.msra.mxu0 0.0
    %905 = vmatprep.subr.mxu0 0.0
    %906 = vmatpush1.msra.mxu0 0.0
    %907 = vmatprep.subr.mxu0 0.0
    %908 = vmatpush1.msra.mxu0 0.0
    %909 = vmatprep.subr.mxu0 0.0
    %910 = vmatpush1.msra.mxu0 0.0
    %911 = vmatprep.subr.mxu0 0.0
    %912 = vmatpush1.msra.mxu0 0.0
    %913 = vmatprep.subr.mxu0 0.0
    %914 = vmatpush1.msra.mxu0 0.0
    %915 = vmatprep.subr.mxu0 0.0
    %916 = vmatpush1.msra.mxu0 0.0
    %917 = vmatprep.subr.mxu0 0.0
    %918 = vmatpush1.msra.mxu0 0.0
    %919 = vmatprep.subr.mxu0 0.0
    %920 = vmatpush1.msra.mxu0 0.0
    %921 = vmatprep.subr.mxu0 0.0
    %922 = vmatpush1.msra.mxu0 0.0
    %923 = vmatprep.subr.mxu0 0.0
    %924 = vmatpush1.msra.mxu0 0.0
    %925 = vmatprep.mubr.f32.mxu0 0.0
    %926 = vmatmul.mubr.f32.gmra.mrb[0].mxu0 %v788
    %v927 = vpop.f32.mrb[0].mxu0
    %v928 = vadd.f32 0.0, %v927
    %v929 = vpop.f32.mrb[0].mxu0
    %v930 = vadd.f32 0.0, %v929
    %931 = vdwg.mxu0
    %v936 = vrot.slane %v857, 4
    %v937 = vrot.slane %v859, 4
    %v938 = vrot.slane %v928, 4
    %v939 = vrot.slane %v930, 4
    %v944 = vadd.f32 %v281, %v936
    %v945 = vadd.f32 %v283, %v937
    %v946 = vadd.f32 %v358, %v938
    %v947 = vadd.f32 %v360, %v939
    %v948 = vxor.u32 %v944, 2147483648
    %v949 = vmul.f32 %v948, 1.442695
    %v950 = vpow.pop %v949
    %v951 = vadd.f32 %v950, 1.0
    %v952 = vrcp.pop %v951
    %v953 = vmul.f32 1.0, %v952
    %v954 = vxor.u32 %v945, 2147483648
    %v955 = vmul.f32 %v954, 1.442695
    %v956 = vpow.pop %v955
    %v957 = vadd.f32 %v956, 1.0
    %v958 = vrcp.pop %v957
    %v959 = vmul.f32 1.0, %v958
    %v960 = vtanh.pop %v946
    %v961 = vxor.u32 %v947, 2147483648
    %v962 = vmul.f32 %v961, 1.442695
    %v963 = vpow.pop %v962
    %v964 = vadd.f32 %v963, 1.0
    %v965 = vrcp.pop %v964
    %v966 = vmul.f32 1.0, %v965
    %v968 = vrot.slane %v784, 6
    %v970 = vmul.f32 %v959, %v968
    %v971 = vmul.f32 %v953, %v960
    %v972 = vadd.f32 %v970, %v971
    %v973 = vtanh.pop %v972
    %v974 = vmul.f32 %v966, %v973
    %v976 = vrot.slane %v974, 4
    %978 = vmatprep.subr.mxu0 %v369
    %979 = vmatpush1.msra.mxu0 %v368
    %980 = vmatprep.subr.mxu0 %v373
    %981 = vmatpush1.msra.mxu0 %v372
    %982 = vmatprep.subr.mxu0 %v377
    %983 = vmatpush1.msra.mxu0 %v376
    %984 = vmatprep.subr.mxu0 %v381
    %985 = vmatpush1.msra.mxu0 %v380
    %986 = vmatprep.subr.mxu0 %v385
    %987 = vmatpush1.msra.mxu0 %v384
    %988 = vmatprep.subr.mxu0 %v389
    %989 = vmatpush1.msra.mxu0 %v388
    %990 = vmatprep.subr.mxu0 %v393
    %991 = vmatpush1.msra.mxu0 %v392
    %992 = vmatprep.subr.mxu0 %v397
    %993 = vmatpush1.msra.mxu0 %v396
    %994 = vmatprep.subr.mxu0 %v401
    %995 = vmatpush1.msra.mxu0 %v400
    %996 = vmatprep.subr.mxu0 %v405
    %997 = vmatpush1.msra.mxu0 %v404
    %998 = vmatprep.subr.mxu0 %v409
    %999 = vmatpush1.msra.mxu0 %v408
    %1000 = vmatprep.subr.mxu0 %v413
    %1001 = vmatpush1.msra.mxu0 %v412
    %1002 = vmatprep.subr.mxu0 %v417
    %1003 = vmatpush1.msra.mxu0 %v416
    %1004 = vmatprep.subr.mxu0 %v421
    %1005 = vmatpush1.msra.mxu0 %v420
    %1006 = vmatprep.subr.mxu0 %v425
    %1007 = vmatpush1.msra.mxu0 %v424
    %1008 = vmatprep.subr.mxu0 %v429
    %1009 = vmatpush1.msra.mxu0 %v428
    %1010 = vmatprep.subr.mxu0 0.0
    %1011 = vmatpush1.msra.mxu0 0.0
    %1012 = vmatprep.subr.mxu0 0.0
    %1013 = vmatpush1.msra.mxu0 0.0
    %1014 = vmatprep.subr.mxu0 0.0
    %1015 = vmatpush1.msra.mxu0 0.0
    %1016 = vmatprep.subr.mxu0 0.0
    %1017 = vmatpush1.msra.mxu0 0.0
    %1018 = vmatprep.subr.mxu0 0.0
    %1019 = vmatpush1.msra.mxu0 0.0
    %1020 = vmatprep.subr.mxu0 0.0
    %1021 = vmatpush1.msra.mxu0 0.0
    %1022 = vmatprep.subr.mxu0 0.0
    %1023 = vmatpush1.msra.mxu0 0.0
    %1024 = vmatprep.subr.mxu0 0.0
    %1025 = vmatpush1.msra.mxu0 0.0
    %1026 = vmatprep.subr.mxu0 0.0
    %1027 = vmatpush1.msra.mxu0 0.0
    %1028 = vmatprep.subr.mxu0 0.0
    %1029 = vmatpush1.msra.mxu0 0.0
    %1030 = vmatprep.subr.mxu0 0.0
    %1031 = vmatpush1.msra.mxu0 0.0
    %1032 = vmatprep.subr.mxu0 0.0
    %1033 = vmatpush1.msra.mxu0 0.0
    %1034 = vmatprep.subr.mxu0 0.0
    %1035 = vmatpush1.msra.mxu0 0.0
    %1036 = vmatprep.subr.mxu0 0.0
    %1037 = vmatpush1.msra.mxu0 0.0
    %1038 = vmatprep.subr.mxu0 0.0
    %1039 = vmatpush1.msra.mxu0 0.0
    %1040 = vmatprep.subr.mxu0 0.0
    %1041 = vmatpush1.msra.mxu0 0.0
    %1042 = vmatprep.mubr.f32.mxu0 0.0
    %1043 = vmatmul.mubr.f32.gmra.mrb[0].mxu0 %v976
    %v1044 = vpop.f32.mrb[0].mxu0
    %v1045 = vadd.f32 0.0, %v1044
    %v1046 = vpop.f32.mrb[0].mxu0
    %v1047 = vadd.f32 0.0, %v1046
    %1048 = vdwg.mxu0
    %1049 = vmatprep.subr.mxu0 %v371
    %1050 = vmatpush1.msra.mxu0 %v370
    %1051 = vmatprep.subr.mxu0 %v375
    %1052 = vmatpush1.msra.mxu0 %v374
    %1053 = vmatprep.subr.mxu0 %v379
    %1054 = vmatpush1.msra.mxu0 %v378
    %1055 = vmatprep.subr.mxu0 %v383
    %1056 = vmatpush1.msra.mxu0 %v382
    %1057 = vmatprep.subr.mxu0 %v387
    %1058 = vmatpush1.msra.mxu0 %v386
    %1059 = vmatprep.subr.mxu0 %v391
    %1060 = vmatpush1.msra.mxu0 %v390
    %1061 = vmatprep.subr.mxu0 %v395
    %1062 = vmatpush1.msra.mxu0 %v394
    %1063 = vmatprep.subr.mxu0 %v399
    %1064 = vmatpush1.msra.mxu0 %v398
    %1065 = vmatprep.subr.mxu0 %v403
    %1066 = vmatpush1.msra.mxu0 %v402
    %1067 = vmatprep.subr.mxu0 %v407
    %1068 = vmatpush1.msra.mxu0 %v406
    %1069 = vmatprep.subr.mxu0 %v411
    %1070 = vmatpush1.msra.mxu0 %v410
    %1071 = vmatprep.subr.mxu0 %v415
    %1072 = vmatpush1.msra.mxu0 %v414
    %1073 = vmatprep.subr.mxu0 %v419
    %1074 = vmatpush1.msra.mxu0 %v418
    %1075 = vmatprep.subr.mxu0 %v423
    %1076 = vmatpush1.msra.mxu0 %v422
    %1077 = vmatprep.subr.mxu0 %v427
    %1078 = vmatpush1.msra.mxu0 %v426
    %1079 = vmatprep.subr.mxu0 %v431
    %1080 = vmatpush1.msra.mxu0 %v430
    %1081 = vmatprep.subr.mxu0 0.0
    %1082 = vmatpush1.msra.mxu0 0.0
    %1083 = vmatprep.subr.mxu0 0.0
    %1084 = vmatpush1.msra.mxu0 0.0
    %1085 = vmatprep.subr.mxu0 0.0
    %1086 = vmatpush1.msra.mxu0 0.0
    %1087 = vmatprep.subr.mxu0 0.0
    %1088 = vmatpush1.msra.mxu0 0.0
    %1089 = vmatprep.subr.mxu0 0.0
    %1090 = vmatpush1.msra.mxu0 0.0
    %1091 = vmatprep.subr.mxu0 0.0
    %1092 = vmatpush1.msra.mxu0 0.0
    %1093 = vmatprep.subr.mxu0 0.0
    %1094 = vmatpush1.msra.mxu0 0.0
    %1095 = vmatprep.subr.mxu0 0.0
    %1096 = vmatpush1.msra.mxu0 0.0
    %1097 = vmatprep.subr.mxu0 0.0
    %1098 = vmatpush1.msra.mxu0 0.0
    %1099 = vmatprep.subr.mxu0 0.0
    %1100 = vmatpush1.msra.mxu0 0.0
    %1101 = vmatprep.subr.mxu0 0.0
    %1102 = vmatpush1.msra.mxu0 0.0
    %1103 = vmatprep.subr.mxu0 0.0
    %1104 = vmatpush1.msra.mxu0 0.0
    %1105 = vmatprep.subr.mxu0 0.0
    %1106 = vmatpush1.msra.mxu0 0.0
    %1107 = vmatprep.subr.mxu0 0.0
    %1108 = vmatpush1.msra.mxu0 0.0
    %1109 = vmatprep.subr.mxu0 0.0
    %1110 = vmatpush1.msra.mxu0 0.0
    %1111 = vmatprep.subr.mxu0 0.0
    %1112 = vmatpush1.msra.mxu0 0.0
    %1113 = vmatprep.mubr.f32.mxu0 0.0
    %1114 = vmatmul.mubr.f32.gmra.mrb[0].mxu0 %v976
    %v1115 = vpop.f32.mrb[0].mxu0
    %v1116 = vadd.f32 0.0, %v1115
    %v1117 = vpop.f32.mrb[0].mxu0
    %v1118 = vadd.f32 0.0, %v1117
    %1119 = vdwg.mxu0
    %v1124 = vrot.slane %v1045, 2
    %v1125 = vrot.slane %v1047, 2
    %v1126 = vrot.slane %v1116, 2
    %v1127 = vrot.slane %v1118, 2
    %v1132 = vadd.f32 %v281, %v1124
    %v1133 = vadd.f32 %v283, %v1125
    %v1134 = vadd.f32 %v358, %v1126
    %v1135 = vadd.f32 %v360, %v1127
    %v1136 = vxor.u32 %v1132, 2147483648
    %v1137 = vmul.f32 %v1136, 1.442695
    %v1138 = vpow.pop %v1137
    %v1139 = vadd.f32 %v1138, 1.0
    %v1140 = vrcp.pop %v1139
    %v1141 = vmul.f32 1.0, %v1140
    %v1142 = vxor.u32 %v1133, 2147483648
    %v1143 = vmul.f32 %v1142, 1.442695
    %v1144 = vpow.pop %v1143
    %v1145 = vadd.f32 %v1144, 1.0
    %v1146 = vrcp.pop %v1145
    %v1147 = vmul.f32 1.0, %v1146
    %v1148 = vtanh.pop %v1134
    %v1149 = vxor.u32 %v1135, 2147483648
    %v1150 = vmul.f32 %v1149, 1.442695
    %v1151 = vpow.pop %v1150
    %v1152 = vadd.f32 %v1151, 1.0
    %v1153 = vrcp.pop %v1152
    %v1154 = vmul.f32 1.0, %v1153
    %v1156 = vrot.slane %v972, 6
    %v1158 = vmul.f32 %v1147, %v1156
    %v1159 = vmul.f32 %v1141, %v1148
    %v1160 = vadd.f32 %v1158, %v1159
    %v1161 = vtanh.pop %v1160
    %v1162 = vmul.f32 %v1154, %v1161
    %v1164 = vrot.slane %v1162, 6
    %1166 = vmatprep.subr.mxu0 %v369
    %1167 = vmatpush1.msra.mxu0 %v368
    %1168 = vmatprep.subr.mxu0 %v373
    %1169 = vmatpush1.msra.mxu0 %v372
    %1170 = vmatprep.subr.mxu0 %v377
    %1171 = vmatpush1.msra.mxu0 %v376
    %1172 = vmatprep.subr.mxu0 %v381
    %1173 = vmatpush1.msra.mxu0 %v380
    %1174 = vmatprep.subr.mxu0 %v385
    %1175 = vmatpush1.msra.mxu0 %v384
    %1176 = vmatprep.subr.mxu0 %v389
    %1177 = vmatpush1.msra.mxu0 %v388
    %1178 = vmatprep.subr.mxu0 %v393
    %1179 = vmatpush1.msra.mxu0 %v392
    %1180 = vmatprep.subr.mxu0 %v397
    %1181 = vmatpush1.msra.mxu0 %v396
    %1182 = vmatprep.subr.mxu0 %v401
    %1183 = vmatpush1.msra.mxu0 %v400
    %1184 = vmatprep.subr.mxu0 %v405
    %1185 = vmatpush1.msra.mxu0 %v404
    %1186 = vmatprep.subr.mxu0 %v409
    %1187 = vmatpush1.msra.mxu0 %v408
    %1188 = vmatprep.subr.mxu0 %v413
    %1189 = vmatpush1.msra.mxu0 %v412
    %1190 = vmatprep.subr.mxu0 %v417
    %1191 = vmatpush1.msra.mxu0 %v416
    %1192 = vmatprep.subr.mxu0 %v421
    %1193 = vmatpush1.msra.mxu0 %v420
    %1194 = vmatprep.subr.mxu0 %v425
    %1195 = vmatpush1.msra.mxu0 %v424
    %1196 = vmatprep.subr.mxu0 %v429
    %1197 = vmatpush1.msra.mxu0 %v428
    %1198 = vmatprep.subr.mxu0 0.0
    %1199 = vmatpush1.msra.mxu0 0.0
    %1200 = vmatprep.subr.mxu0 0.0
    %1201 = vmatpush1.msra.mxu0 0.0
    %1202 = vmatprep.subr.mxu0 0.0
    %1203 = vmatpush1.msra.mxu0 0.0
    %1204 = vmatprep.subr.mxu0 0.0
    %1205 = vmatpush1.msra.mxu0 0.0
    %1206 = vmatprep.subr.mxu0 0.0
    %1207 = vmatpush1.msra.mxu0 0.0
    %1208 = vmatprep.subr.mxu0 0.0
    %1209 = vmatpush1.msra.mxu0 0.0
    %1210 = vmatprep.subr.mxu0 0.0
    %1211 = vmatpush1.msra.mxu0 0.0
    %1212 = vmatprep.subr.mxu0 0.0
    %1213 = vmatpush1.msra.mxu0 0.0
    %1214 = vmatprep.subr.mxu0 0.0
    %1215 = vmatpush1.msra.mxu0 0.0
    %1216 = vmatprep.subr.mxu0 0.0
    %1217 = vmatpush1.msra.mxu0 0.0
    %1218 = vmatprep.subr.mxu0 0.0
    %1219 = vmatpush1.msra.mxu0 0.0
    %1220 = vmatprep.subr.mxu0 0.0
    %1221 = vmatpush1.msra.mxu0 0.0
    %1222 = vmatprep.subr.mxu0 0.0
    %1223 = vmatpush1.msra.mxu0 0.0
    %1224 = vmatprep.subr.mxu0 0.0
    %1225 = vmatpush1.msra.mxu0 0.0
    %1226 = vmatprep.subr.mxu0 0.0
    %1227 = vmatpush1.msra.mxu0 0.0
    %1228 = vmatprep.subr.mxu0 0.0
    %1229 = vmatpush1.msra.mxu0 0.0
    %1230 = vmatprep.mubr.f32.mxu0 0.0
    %1231 = vmatmul.mubr.f32.gmra.mrb[0].mxu0 %v1164
    %v1232 = vpop.f32.mrb[0].mxu0
    %v1233 = vadd.f32 0.0, %v1232
    %v1234 = vpop.f32.mrb[0].mxu0
    %v1235 = vadd.f32 0.0, %v1234
    %1236 = vdwg.mxu0
    %1237 = vmatprep.subr.mxu0 %v371
    %1238 = vmatpush1.msra.mxu0 %v370
    %1239 = vmatprep.subr.mxu0 %v375
    %1240 = vmatpush1.msra.mxu0 %v374
    %1241 = vmatprep.subr.mxu0 %v379
    %1242 = vmatpush1.msra.mxu0 %v378
    %1243 = vmatprep.subr.mxu0 %v383
    %1244 = vmatpush1.msra.mxu0 %v382
    %1245 = vmatprep.subr.mxu0 %v387
    %1246 = vmatpush1.msra.mxu0 %v386
    %1247 = vmatprep.subr.mxu0 %v391
    %1248 = vmatpush1.msra.mxu0 %v390
    %1249 = vmatprep.subr.mxu0 %v395
    %1250 = vmatpush1.msra.mxu0 %v394
    %1251 = vmatprep.subr.mxu0 %v399
    %1252 = vmatpush1.msra.mxu0 %v398
    %1253 = vmatprep.subr.mxu0 %v403
    %1254 = vmatpush1.msra.mxu0 %v402
    %1255 = vmatprep.subr.mxu0 %v407
    %1256 = vmatpush1.msra.mxu0 %v406
    %1257 = vmatprep.subr.mxu0 %v411
    %1258 = vmatpush1.msra.mxu0 %v410
    %1259 = vmatprep.subr.mxu0 %v415
    %1260 = vmatpush1.msra.mxu0 %v414
    %1261 = vmatprep.subr.mxu0 %v419
    %1262 = vmatpush1.msra.mxu0 %v418
    %1263 = vmatprep.subr.mxu0 %v423
    %1264 = vmatpush1.msra.mxu0 %v422
    %1265 = vmatprep.subr.mxu0 %v427
    %1266 = vmatpush1.msra.mxu0 %v426
    %1267 = vmatprep.subr.mxu0 %v431
    %1268 = vmatpush1.msra.mxu0 %v430
    %1269 = vmatprep.subr.mxu0 0.0
    %1270 = vmatpush1.msra.mxu0 0.0
    %1271 = vmatprep.subr.mxu0 0.0
    %1272 = vmatpush1.msra.mxu0 0.0
    %1273 = vmatprep.subr.mxu0 0.0
    %1274 = vmatpush1.msra.mxu0 0.0
    %1275 = vmatprep.subr.mxu0 0.0
    %1276 = vmatpush1.msra.mxu0 0.0
    %1277 = vmatprep.subr.mxu0 0.0
    %1278 = vmatpush1.msra.mxu0 0.0
    %1279 = vmatprep.subr.mxu0 0.0
    %1280 = vmatpush1.msra.mxu0 0.0
    %1281 = vmatprep.subr.mxu0 0.0
    %1282 = vmatpush1.msra.mxu0 0.0
    %1283 = vmatprep.subr.mxu0 0.0
    %1284 = vmatpush1.msra.mxu0 0.0
    %1285 = vmatprep.subr.mxu0 0.0
    %1286 = vmatpush1.msra.mxu0 0.0
    %1287 = vmatprep.subr.mxu0 0.0
    %1288 = vmatpush1.msra.mxu0 0.0
    %1289 = vmatprep.subr.mxu0 0.0
    %1290 = vmatpush1.msra.mxu0 0.0
    %1291 = vmatprep.subr.mxu0 0.0
    %1292 = vmatpush1.msra.mxu0 0.0
    %1293 = vmatprep.subr.mxu0 0.0
    %1294 = vmatpush1.msra.mxu0 0.0
    %1295 = vmatprep.subr.mxu0 0.0
    %1296 = vmatpush1.msra.mxu0 0.0
    %1297 = vmatprep.subr.mxu0 0.0
    %1298 = vmatpush1.msra.mxu0 0.0
    %1299 = vmatprep.subr.mxu0 0.0
    %1300 = vmatpush1.msra.mxu0 0.0
    %1301 = vmatprep.mubr.f32.mxu0 0.0
    %1302 = vmatmul.mubr.f32.gmra.mrb[0].mxu0 %v1164
    %v1303 = vpop.f32.mrb[0].mxu0
    %v1304 = vadd.f32 0.0, %v1303
    %v1305 = vpop.f32.mrb[0].mxu0
    %v1306 = vadd.f32 0.0, %v1305
    %1307 = vdwg.mxu0
    %v1308 = vadd.f32 %v287, %v1233
    %v1309 = vadd.f32 %v289, %v1235
    %v1310 = vadd.f32 %v364, %v1304
    %v1311 = vadd.f32 %v366, %v1306
    %v1312 = vxor.u32 %v1308, 2147483648
    %v1313 = vmul.f32 %v1312, 1.442695
    %v1314 = vpow.pop %v1313
    %v1315 = vadd.f32 %v1314, 1.0
    %v1316 = vrcp.pop %v1315
    %v1317 = vmul.f32 1.0, %v1316
    %v1318 = vxor.u32 %v1309, 2147483648
    %v1319 = vmul.f32 %v1318, 1.442695
    %v1320 = vpow.pop %v1319
    %v1321 = vadd.f32 %v1320, 1.0
    %v1322 = vrcp.pop %v1321
    %v1323 = vmul.f32 1.0, %v1322
    %v1324 = vtanh.pop %v1310
    %v1325 = vxor.u32 %v1311, 2147483648
    %v1326 = vmul.f32 %v1325, 1.442695
    %v1327 = vpow.pop %v1326
    %v1328 = vadd.f32 %v1327, 1.0
    %v1329 = vrcp.pop %v1328
    %v1330 = vmul.f32 1.0, %v1329
    %v1332 = vrot.slane %v1160, 6
    %v1334 = vmul.f32 %v1323, %v1332
    %v1335 = vmul.f32 %v1317, %v1324
    %v1336 = vadd.f32 %v1334, %v1335
    %v1337 = vtanh.pop %v1336
    %v1338 = vmul.f32 %v1330, %v1337
    %1339 = vmatprep.subr.mxu0 %v369
    %1340 = vmatpush1.msra.mxu0 %v368
    %1341 = vmatprep.subr.mxu0 %v373
    %1342 = vmatpush1.msra.mxu0 %v372
    %1343 = vmatprep.subr.mxu0 %v377
    %1344 = vmatpush1.msra.mxu0 %v376
    %1345 = vmatprep.subr.mxu0 %v381
    %1346 = vmatpush1.msra.mxu0 %v380
    %1347 = vmatprep.subr.mxu0 %v385
    %1348 = vmatpush1.msra.mxu0 %v384
    %1349 = vmatprep.subr.mxu0 %v389
    %1350 = vmatpush1.msra.mxu0 %v388
    %1351 = vmatprep.subr.mxu0 %v393
    %1352 = vmatpush1.msra.mxu0 %v392
    %1353 = vmatprep.subr.mxu0 %v397
    %1354 = vmatpush1.msra.mxu0 %v396
    %1355 = vmatprep.subr.mxu0 %v401
    %1356 = vmatpush1.msra.mxu0 %v400
    %1357 = vmatprep.subr.mxu0 %v405
    %1358 = vmatpush1.msra.mxu0 %v404
    %1359 = vmatprep.subr.mxu0 %v409
    %1360 = vmatpush1.msra.mxu0 %v408
    %1361 = vmatprep.subr.mxu0 %v413
    %1362 = vmatpush1.msra.mxu0 %v412
    %1363 = vmatprep.subr.mxu0 %v417
    %1364 = vmatpush1.msra.mxu0 %v416
    %1365 = vmatprep.subr.mxu0 %v421
    %1366 = vmatpush1.msra.mxu0 %v420
    %1367 = vmatprep.subr.mxu0 %v425
    %1368 = vmatpush1.msra.mxu0 %v424
    %1369 = vmatprep.subr.mxu0 %v429
    %1370 = vmatpush1.msra.mxu0 %v428
    %1371 = vmatprep.subr.mxu0 0.0
    %1372 = vmatpush1.msra.mxu0 0.0
    %1373 = vmatprep.subr.mxu0 0.0
    %1374 = vmatpush1.msra.mxu0 0.0
    %1375 = vmatprep.subr.mxu0 0.0
    %1376 = vmatpush1.msra.mxu0 0.0
    %1377 = vmatprep.subr.mxu0 0.0
    %1378 = vmatpush1.msra.mxu0 0.0
    %1379 = vmatprep.subr.mxu0 0.0
    %1380 = vmatpush1.msra.mxu0 0.0
    %1381 = vmatprep.subr.mxu0 0.0
    %1382 = vmatpush1.msra.mxu0 0.0
    %1383 = vmatprep.subr.mxu0 0.0
    %1384 = vmatpush1.msra.mxu0 0.0
    %1385 = vmatprep.subr.mxu0 0.0
    %1386 = vmatpush1.msra.mxu0 0.0
    %1387 = vmatprep.subr.mxu0 0.0
    %1388 = vmatpush1.msra.mxu0 0.0
    %1389 = vmatprep.subr.mxu0 0.0
    %1390 = vmatpush1.msra.mxu0 0.0
    %1391 = vmatprep.subr.mxu0 0.0
    %1392 = vmatpush1.msra.mxu0 0.0
    %1393 = vmatprep.subr.mxu0 0.0
    %1394 = vmatpush1.msra.mxu0 0.0
    %1395 = vmatprep.subr.mxu0 0.0
    %1396 = vmatpush1.msra.mxu0 0.0
    %1397 = vmatprep.subr.mxu0 0.0
    %1398 = vmatpush1.msra.mxu0 0.0
    %1399 = vmatprep.subr.mxu0 0.0
    %1400 = vmatpush1.msra.mxu0 0.0
    %1401 = vmatprep.subr.mxu0 0.0
    %1402 = vmatpush1.msra.mxu0 0.0
    %1403 = vmatprep.mubr.f32.mxu0 0.0
    %1404 = vmatmul.mubr.f32.gmra.mrb[0].mxu0 %v1338
    %v1405 = vpop.f32.mrb[0].mxu0
    %v1406 = vadd.f32 0.0, %v1405
    %v1407 = vpop.f32.mrb[0].mxu0
    %v1408 = vadd.f32 0.0, %v1407
    %1409 = vdwg.mxu0
    %1410 = vmatprep.subr.mxu0 %v371
    %1411 = vmatpush1.msra.mxu0 %v370
    %1412 = vmatprep.subr.mxu0 %v375
    %1413 = vmatpush1.msra.mxu0 %v374
    %1414 = vmatprep.subr.mxu0 %v379
    %1415 = vmatpush1.msra.mxu0 %v378
    %1416 = vmatprep.subr.mxu0 %v383
    %1417 = vmatpush1.msra.mxu0 %v382
    %1418 = vmatprep.subr.mxu0 %v387
    %1419 = vmatpush1.msra.mxu0 %v386
    %1420 = vmatprep.subr.mxu0 %v391
    %1421 = vmatpush1.msra.mxu0 %v390
    %1422 = vmatprep.subr.mxu0 %v395
    %1423 = vmatpush1.msra.mxu0 %v394
    %1424 = vmatprep.subr.mxu0 %v399
    %1425 = vmatpush1.msra.mxu0 %v398
    %1426 = vmatprep.subr.mxu0 %v403
    %1427 = vmatpush1.msra.mxu0 %v402
    %1428 = vmatprep.subr.mxu0 %v407
    %1429 = vmatpush1.msra.mxu0 %v406
    %1430 = vmatprep.subr.mxu0 %v411
    %1431 = vmatpush1.msra.mxu0 %v410
    %1432 = vmatprep.subr.mxu0 %v415
    %1433 = vmatpush1.msra.mxu0 %v414
    %1434 = vmatprep.subr.mxu0 %v419
    %1435 = vmatpush1.msra.mxu0 %v418
    %1436 = vmatprep.subr.mxu0 %v423
    %1437 = vmatpush1.msra.mxu0 %v422
    %1438 = vmatprep.subr.mxu0 %v427
    %1439 = vmatpush1.msra.mxu0 %v426
    %1440 = vmatprep.subr.mxu0 %v431
    %1441 = vmatpush1.msra.mxu0 %v430
    %1442 = vmatprep.subr.mxu0 0.0
    %1443 = vmatpush1.msra.mxu0 0.0
    %1444 = vmatprep.subr.mxu0 0.0
    %1445 = vmatpush1.msra.mxu0 0.0
    %1446 = vmatprep.subr.mxu0 0.0
    %1447 = vmatpush1.msra.mxu0 0.0
    %1448 = vmatprep.subr.mxu0 0.0
    %1449 = vmatpush1.msra.mxu0 0.0
    %1450 = vmatprep.subr.mxu0 0.0
    %1451 = vmatpush1.msra.mxu0 0.0
    %1452 = vmatprep.subr.mxu0 0.0
    %1453 = vmatpush1.msra.mxu0 0.0
    %1454 = vmatprep.subr.mxu0 0.0
    %1455 = vmatpush1.msra.mxu0 0.0
    %1456 = vmatprep.subr.mxu0 0.0
    %1457 = vmatpush1.msra.mxu0 0.0
    %1458 = vmatprep.subr.mxu0 0.0
    %1459 = vmatpush1.msra.mxu0 0.0
    %1460 = vmatprep.subr.mxu0 0.0
    %1461 = vmatpush1.msra.mxu0 0.0
    %1462 = vmatprep.subr.mxu0 0.0
    %1463 = vmatpush1.msra.mxu0 0.0
    %1464 = vmatprep.subr.mxu0 0.0
    %1465 = vmatpush1.msra.mxu0 0.0
    %1466 = vmatprep.subr.mxu0 0.0
    %1467 = vmatpush1.msra.mxu0 0.0
    %1468 = vmatprep.subr.mxu0 0.0
    %1469 = vmatpush1.msra.mxu0 0.0
    %1470 = vmatprep.subr.mxu0 0.0
    %1471 = vmatpush1.msra.mxu0 0.0
    %1472 = vmatprep.subr.mxu0 0.0
    %1473 = vmatpush1.msra.mxu0 0.0
    %1474 = vmatprep.mubr.f32.mxu0 0.0
    %1475 = vmatmul.mubr.f32.gmra.mrb[0].mxu0 %v1338
    %v1476 = vpop.f32.mrb[0].mxu0
    %v1477 = vadd.f32 0.0, %v1476
    %v1478 = vpop.f32.mrb[0].mxu0
    %v1479 = vadd.f32 0.0, %v1478
    %1480 = vdwg.mxu0
    %v1485 = vrot.slane %v1406, 6
    %v1486 = vrot.slane %v1408, 6
    %v1487 = vrot.slane %v1477, 6
    %v1488 = vrot.slane %v1479, 6
    %v1493 = vadd.f32 %v287, %v1485
    %v1494 = vadd.f32 %v289, %v1486
    %v1495 = vadd.f32 %v364, %v1487
    %v1496 = vadd.f32 %v366, %v1488
    %v1497 = vxor.u32 %v1493, 2147483648
    %v1498 = vmul.f32 %v1497, 1.442695
    %v1499 = vpow.pop %v1498
    %v1500 = vadd.f32 %v1499, 1.0
    %v1501 = vrcp.pop %v1500
    %v1502 = vmul.f32 1.0, %v1501
    %v1503 = vxor.u32 %v1494, 2147483648
    %v1504 = vmul.f32 %v1503, 1.442695
    %v1505 = vpow.pop %v1504
    %v1506 = vadd.f32 %v1505, 1.0
    %v1507 = vrcp.pop %v1506
    %v1508 = vmul.f32 1.0, %v1507
    %v1509 = vtanh.pop %v1495
    %v1510 = vxor.u32 %v1496, 2147483648
    %v1511 = vmul.f32 %v1510, 1.442695
    %v1512 = vpow.pop %v1511
    %v1513 = vadd.f32 %v1512, 1.0
    %v1514 = vrcp.pop %v1513
    %v1515 = vmul.f32 1.0, %v1514
    %v1517 = vrot.slane %v1336, 6
    %v1519 = vmul.f32 %v1508, %v1517
    %v1520 = vmul.f32 %v1502, %v1509
    %v1521 = vadd.f32 %v1519, %v1520
    %v1522 = vtanh.pop %v1521
    %v1523 = vmul.f32 %v1515, %v1522
    %v1525 = vrot.slane %v1523, 2
    %1527 = vmatprep.subr.mxu0 %v369
    %1528 = vmatpush1.msra.mxu0 %v368
    %1529 = vmatprep.subr.mxu0 %v373
    %1530 = vmatpush1.msra.mxu0 %v372
    %1531 = vmatprep.subr.mxu0 %v377
    %1532 = vmatpush1.msra.mxu0 %v376
    %1533 = vmatprep.subr.mxu0 %v381
    %1534 = vmatpush1.msra.mxu0 %v380
    %1535 = vmatprep.subr.mxu0 %v385
    %1536 = vmatpush1.msra.mxu0 %v384
    %1537 = vmatprep.subr.mxu0 %v389
    %1538 = vmatpush1.msra.mxu0 %v388
    %1539 = vmatprep.subr.mxu0 %v393
    %1540 = vmatpush1.msra.mxu0 %v392
    %1541 = vmatprep.subr.mxu0 %v397
    %1542 = vmatpush1.msra.mxu0 %v396
    %1543 = vmatprep.subr.mxu0 %v401
    %1544 = vmatpush1.msra.mxu0 %v400
    %1545 = vmatprep.subr.mxu0 %v405
    %1546 = vmatpush1.msra.mxu0 %v404
    %1547 = vmatprep.subr.mxu0 %v409
    %1548 = vmatpush1.msra.mxu0 %v408
    %1549 = vmatprep.subr.mxu0 %v413
    %1550 = vmatpush1.msra.mxu0 %v412
    %1551 = vmatprep.subr.mxu0 %v417
    %1552 = vmatpush1.msra.mxu0 %v416
    %1553 = vmatprep.subr.mxu0 %v421
    %1554 = vmatpush1.msra.mxu0 %v420
    %1555 = vmatprep.subr.mxu0 %v425
    %1556 = vmatpush1.msra.mxu0 %v424
    %1557 = vmatprep.subr.mxu0 %v429
    %1558 = vmatpush1.msra.mxu0 %v428
    %1559 = vmatprep.subr.mxu0 0.0
    %1560 = vmatpush1.msra.mxu0 0.0
    %1561 = vmatprep.subr.mxu0 0.0
    %1562 = vmatpush1.msra.mxu0 0.0
    %1563 = vmatprep.subr.mxu0 0.0
    %1564 = vmatpush1.msra.mxu0 0.0
    %1565 = vmatprep.subr.mxu0 0.0
    %1566 = vmatpush1.msra.mxu0 0.0
    %1567 = vmatprep.subr.mxu0 0.0
    %1568 = vmatpush1.msra.mxu0 0.0
    %1569 = vmatprep.subr.mxu0 0.0
    %1570 = vmatpush1.msra.mxu0 0.0
    %1571 = vmatprep.subr.mxu0 0.0
    %1572 = vmatpush1.msra.mxu0 0.0
    %1573 = vmatprep.subr.mxu0 0.0
    %1574 = vmatpush1.msra.mxu0 0.0
    %1575 = vmatprep.subr.mxu0 0.0
    %1576 = vmatpush1.msra.mxu0 0.0
    %1577 = vmatprep.subr.mxu0 0.0
    %1578 = vmatpush1.msra.mxu0 0.0
    %1579 = vmatprep.subr.mxu0 0.0
    %1580 = vmatpush1.msra.mxu0 0.0
    %1581 = vmatprep.subr.mxu0 0.0
    %1582 = vmatpush1.msra.mxu0 0.0
    %1583 = vmatprep.subr.mxu0 0.0
    %1584 = vmatpush1.msra.mxu0 0.0
    %1585 = vmatprep.subr.mxu0 0.0
    %1586 = vmatpush1.msra.mxu0 0.0
    %1587 = vmatprep.subr.mxu0 0.0
    %1588 = vmatpush1.msra.mxu0 0.0
    %1589 = vmatprep.subr.mxu0 0.0
    %1590 = vmatpush1.msra.mxu0 0.0
    %1591 = vmatprep.mubr.f32.mxu0 0.0
    %1592 = vmatmul.mubr.f32.gmra.mrb[0].mxu0 %v1525
    %v1593 = vpop.f32.mrb[0].mxu0
    %v1594 = vadd.f32 0.0, %v1593
    %v1595 = vpop.f32.mrb[0].mxu0
    %v1596 = vadd.f32 0.0, %v1595
    %1597 = vdwg.mxu0
    %1598 = vmatprep.subr.mxu0 %v371
    %1599 = vmatpush1.msra.mxu0 %v370
    %1600 = vmatprep.subr.mxu0 %v375
    %1601 = vmatpush1.msra.mxu0 %v374
    %1602 = vmatprep.subr.mxu0 %v379
    %1603 = vmatpush1.msra.mxu0 %v378
    %1604 = vmatprep.subr.mxu0 %v383
    %1605 = vmatpush1.msra.mxu0 %v382
    %1606 = vmatprep.subr.mxu0 %v387
    %1607 = vmatpush1.msra.mxu0 %v386
    %1608 = vmatprep.subr.mxu0 %v391
    %1609 = vmatpush1.msra.mxu0 %v390
    %1610 = vmatprep.subr.mxu0 %v395
    %1611 = vmatpush1.msra.mxu0 %v394
    %1612 = vmatprep.subr.mxu0 %v399
    %1613 = vmatpush1.msra.mxu0 %v398
    %1614 = vmatprep.subr.mxu0 %v403
    %1615 = vmatpush1.msra.mxu0 %v402
    %1616 = vmatprep.subr.mxu0 %v407
    %1617 = vmatpush1.msra.mxu0 %v406
    %1618 = vmatprep.subr.mxu0 %v411
    %1619 = vmatpush1.msra.mxu0 %v410
    %1620 = vmatprep.subr.mxu0 %v415
    %1621 = vmatpush1.msra.mxu0 %v414
    %1622 = vmatprep.subr.mxu0 %v419
    %1623 = vmatpush1.msra.mxu0 %v418
    %1624 = vmatprep.subr.mxu0 %v423
    %1625 = vmatpush1.msra.mxu0 %v422
    %1626 = vmatprep.subr.mxu0 %v427
    %1627 = vmatpush1.msra.mxu0 %v426
    %1628 = vmatprep.subr.mxu0 %v431
    %1629 = vmatpush1.msra.mxu0 %v430
    %1630 = vmatprep.subr.mxu0 0.0
    %1631 = vmatpush1.msra.mxu0 0.0
    %1632 = vmatprep.subr.mxu0 0.0
    %1633 = vmatpush1.msra.mxu0 0.0
    %1634 = vmatprep.subr.mxu0 0.0
    %1635 = vmatpush1.msra.mxu0 0.0
    %1636 = vmatprep.subr.mxu0 0.0
    %1637 = vmatpush1.msra.mxu0 0.0
    %1638 = vmatprep.subr.mxu0 0.0
    %1639 = vmatpush1.msra.mxu0 0.0
    %1640 = vmatprep.subr.mxu0 0.0
    %1641 = vmatpush1.msra.mxu0 0.0
    %1642 = vmatprep.subr.mxu0 0.0
    %1643 = vmatpush1.msra.mxu0 0.0
    %1644 = vmatprep.subr.mxu0 0.0
    %1645 = vmatpush1.msra.mxu0 0.0
    %1646 = vmatprep.subr.mxu0 0.0
    %1647 = vmatpush1.msra.mxu0 0.0
    %1648 = vmatprep.subr.mxu0 0.0
    %1649 = vmatpush1.msra.mxu0 0.0
    %1650 = vmatprep.subr.mxu0 0.0
    %1651 = vmatpush1.msra.mxu0 0.0
    %1652 = vmatprep.subr.mxu0 0.0
    %1653 = vmatpush1.msra.mxu0 0.0
    %1654 = vmatprep.subr.mxu0 0.0
    %1655 = vmatpush1.msra.mxu0 0.0
    %1656 = vmatprep.subr.mxu0 0.0
    %1657 = vmatpush1.msra.mxu0 0.0
    %1658 = vmatprep.subr.mxu0 0.0
    %1659 = vmatpush1.msra.mxu0 0.0
    %1660 = vmatprep.subr.mxu0 0.0
    %1661 = vmatpush1.msra.mxu0 0.0
    %1662 = vmatprep.mubr.f32.mxu0 0.0
    %1663 = vmatmul.mubr.f32.gmra.mrb[0].mxu0 %v1525
    %v1664 = vpop.f32.mrb[0].mxu0
    %v1665 = vadd.f32 0.0, %v1664
    %v1666 = vpop.f32.mrb[0].mxu0
    %v1667 = vadd.f32 0.0, %v1666
    %1668 = vdwg.mxu0
    %v1673 = vrot.slane %v1594, 4
    %v1674 = vrot.slane %v1596, 4
    %v1675 = vrot.slane %v1665, 4
    %v1676 = vrot.slane %v1667, 4
    %v1681 = vadd.f32 %v287, %v1673
    %v1682 = vadd.f32 %v289, %v1674
    %v1683 = vadd.f32 %v364, %v1675
    %v1684 = vadd.f32 %v366, %v1676
    %v1685 = vxor.u32 %v1681, 2147483648
    %v1686 = vmul.f32 %v1685, 1.442695
    %v1687 = vpow.pop %v1686
    %v1688 = vadd.f32 %v1687, 1.0
    %v1689 = vrcp.pop %v1688
    %v1690 = vmul.f32 1.0, %v1689
    %v1691 = vxor.u32 %v1682, 2147483648
    %v1692 = vmul.f32 %v1691, 1.442695
    %v1693 = vpow.pop %v1692
    %v1694 = vadd.f32 %v1693, 1.0
    %v1695 = vrcp.pop %v1694
    %v1696 = vmul.f32 1.0, %v1695
    %v1697 = vtanh.pop %v1683
    %v1698 = vxor.u32 %v1684, 2147483648
    %v1699 = vmul.f32 %v1698, 1.442695
    %v1700 = vpow.pop %v1699
    %v1701 = vadd.f32 %v1700, 1.0
    %v1702 = vrcp.pop %v1701
    %v1703 = vmul.f32 1.0, %v1702
    %v1705 = vrot.slane %v1521, 6
    %v1707 = vmul.f32 %v1696, %v1705
    %v1708 = vmul.f32 %v1690, %v1697
    %v1709 = vadd.f32 %v1707, %v1708
    %v1710 = vtanh.pop %v1709
    %v1711 = vmul.f32 %v1703, %v1710
    %v1713 = vrot.slane %v1711, 4
    %1715 = vmatprep.subr.mxu0 %v369
    %1716 = vmatpush1.msra.mxu0 %v368
    %1717 = vmatprep.subr.mxu0 %v373
    %1718 = vmatpush1.msra.mxu0 %v372
    %1719 = vmatprep.subr.mxu0 %v377
    %1720 = vmatpush1.msra.mxu0 %v376
    %1721 = vmatprep.subr.mxu0 %v381
    %1722 = vmatpush1.msra.mxu0 %v380
    %1723 = vmatprep.subr.mxu0 %v385
    %1724 = vmatpush1.msra.mxu0 %v384
    %1725 = vmatprep.subr.mxu0 %v389
    %1726 = vmatpush1.msra.mxu0 %v388
    %1727 = vmatprep.subr.mxu0 %v393
    %1728 = vmatpush1.msra.mxu0 %v392
    %1729 = vmatprep.subr.mxu0 %v397
    %1730 = vmatpush1.msra.mxu0 %v396
    %1731 = vmatprep.subr.mxu0 %v401
    %1732 = vmatpush1.msra.mxu0 %v400
    %1733 = vmatprep.subr.mxu0 %v405
    %1734 = vmatpush1.msra.mxu0 %v404
    %1735 = vmatprep.subr.mxu0 %v409
    %1736 = vmatpush1.msra.mxu0 %v408
    %1737 = vmatprep.subr.mxu0 %v413
    %1738 = vmatpush1.msra.mxu0 %v412
    %1739 = vmatprep.subr.mxu0 %v417
    %1740 = vmatpush1.msra.mxu0 %v416
    %1741 = vmatprep.subr.mxu0 %v421
    %1742 = vmatpush1.msra.mxu0 %v420
    %1743 = vmatprep.subr.mxu0 %v425
    %1744 = vmatpush1.msra.mxu0 %v424
    %1745 = vmatprep.subr.mxu0 %v429
    %1746 = vmatpush1.msra.mxu0 %v428
    %1747 = vmatprep.subr.mxu0 0.0
    %1748 = vmatpush1.msra.mxu0 0.0
    %1749 = vmatprep.subr.mxu0 0.0
    %1750 = vmatpush1.msra.mxu0 0.0
    %1751 = vmatprep.subr.mxu0 0.0
    %1752 = vmatpush1.msra.mxu0 0.0
    %1753 = vmatprep.subr.mxu0 0.0
    %1754 = vmatpush1.msra.mxu0 0.0
    %1755 = vmatprep.subr.mxu0 0.0
    %1756 = vmatpush1.msra.mxu0 0.0
    %1757 = vmatprep.subr.mxu0 0.0
    %1758 = vmatpush1.msra.mxu0 0.0
    %1759 = vmatprep.subr.mxu0 0.0
    %1760 = vmatpush1.msra.mxu0 0.0
    %1761 = vmatprep.subr.mxu0 0.0
    %1762 = vmatpush1.msra.mxu0 0.0
    %1763 = vmatprep.subr.mxu0 0.0
    %1764 = vmatpush1.msra.mxu0 0.0
    %1765 = vmatprep.subr.mxu0 0.0
    %1766 = vmatpush1.msra.mxu0 0.0
    %1767 = vmatprep.subr.mxu0 0.0
    %1768 = vmatpush1.msra.mxu0 0.0
    %1769 = vmatprep.subr.mxu0 0.0
    %1770 = vmatpush1.msra.mxu0 0.0
    %1771 = vmatprep.subr.mxu0 0.0
    %1772 = vmatpush1.msra.mxu0 0.0
    %1773 = vmatprep.subr.mxu0 0.0
    %1774 = vmatpush1.msra.mxu0 0.0
    %1775 = vmatprep.subr.mxu0 0.0
    %1776 = vmatpush1.msra.mxu0 0.0
    %1777 = vmatprep.subr.mxu0 0.0
    %1778 = vmatpush1.msra.mxu0 0.0
    %1779 = vmatprep.mubr.f32.mxu0 0.0
    %1780 = vmatmul.mubr.f32.gmra.mrb[0].mxu0 %v1713
    %v1781 = vpop.f32.mrb[0].mxu0
    %v1782 = vadd.f32 0.0, %v1781
    %v1783 = vpop.f32.mrb[0].mxu0
    %v1784 = vadd.f32 0.0, %v1783
    %1785 = vdwg.mxu0
    %1786 = vmatprep.subr.mxu0 %v371
    %1787 = vmatpush1.msra.mxu0 %v370
    %1788 = vmatprep.subr.mxu0 %v375
    %1789 = vmatpush1.msra.mxu0 %v374
    %1790 = vmatprep.subr.mxu0 %v379
    %1791 = vmatpush1.msra.mxu0 %v378
    %1792 = vmatprep.subr.mxu0 %v383
    %1793 = vmatpush1.msra.mxu0 %v382
    %1794 = vmatprep.subr.mxu0 %v387
    %1795 = vmatpush1.msra.mxu0 %v386
    %1796 = vmatprep.subr.mxu0 %v391
    %1797 = vmatpush1.msra.mxu0 %v390
    %1798 = vmatprep.subr.mxu0 %v395
    %1799 = vmatpush1.msra.mxu0 %v394
    %1800 = vmatprep.subr.mxu0 %v399
    %1801 = vmatpush1.msra.mxu0 %v398
    %1802 = vmatprep.subr.mxu0 %v403
    %1803 = vmatpush1.msra.mxu0 %v402
    %1804 = vmatprep.subr.mxu0 %v407
    %1805 = vmatpush1.msra.mxu0 %v406
    %1806 = vmatprep.subr.mxu0 %v411
    %1807 = vmatpush1.msra.mxu0 %v410
    %1808 = vmatprep.subr.mxu0 %v415
    %1809 = vmatpush1.msra.mxu0 %v414
    %1810 = vmatprep.subr.mxu0 %v419
    %1811 = vmatpush1.msra.mxu0 %v418
    %1812 = vmatprep.subr.mxu0 %v423
    %1813 = vmatpush1.msra.mxu0 %v422
    %1814 = vmatprep.subr.mxu0 %v427
    %1815 = vmatpush1.msra.mxu0 %v426
    %1816 = vmatprep.subr.mxu0 %v431
    %1817 = vmatpush1.msra.mxu0 %v430
    %1818 = vmatprep.subr.mxu0 0.0
    %1819 = vmatpush1.msra.mxu0 0.0
    %1820 = vmatprep.subr.mxu0 0.0
    %1821 = vmatpush1.msra.mxu0 0.0
    %1822 = vmatprep.subr.mxu0 0.0
    %1823 = vmatpush1.msra.mxu0 0.0
    %1824 = vmatprep.subr.mxu0 0.0
    %1825 = vmatpush1.msra.mxu0 0.0
    %1826 = vmatprep.subr.mxu0 0.0
    %1827 = vmatpush1.msra.mxu0 0.0
    %1828 = vmatprep.subr.mxu0 0.0
    %1829 = vmatpush1.msra.mxu0 0.0
    %1830 = vmatprep.subr.mxu0 0.0
    %1831 = vmatpush1.msra.mxu0 0.0
    %1832 = vmatprep.subr.mxu0 0.0
    %1833 = vmatpush1.msra.mxu0 0.0
    %1834 = vmatprep.subr.mxu0 0.0
    %1835 = vmatpush1.msra.mxu0 0.0
    %1836 = vmatprep.subr.mxu0 0.0
    %1837 = vmatpush1.msra.mxu0 0.0
    %1838 = vmatprep.subr.mxu0 0.0
    %1839 = vmatpush1.msra.mxu0 0.0
    %1840 = vmatprep.subr.mxu0 0.0
    %1841 = vmatpush1.msra.mxu0 0.0
    %1842 = vmatprep.subr.mxu0 0.0
    %1843 = vmatpush1.msra.mxu0 0.0
    %1844 = vmatprep.subr.mxu0 0.0
    %1845 = vmatpush1.msra.mxu0 0.0
    %1846 = vmatprep.subr.mxu0 0.0
    %1847 = vmatpush1.msra.mxu0 0.0
    %1848 = vmatprep.subr.mxu0 0.0
    %1849 = vmatpush1.msra.mxu0 0.0
    %1850 = vmatprep.mubr.f32.mxu0 0.0
    %1851 = vmatmul.mubr.f32.gmra.mrb[0].mxu0 %v1713
    %v1852 = vpop.f32.mrb[0].mxu0
    %v1853 = vadd.f32 0.0, %v1852
    %v1854 = vpop.f32.mrb[0].mxu0
    %v1855 = vadd.f32 0.0, %v1854
    %1856 = vdwg.mxu0
    %v1861 = vrot.slane %v1782, 2
    %v1862 = vrot.slane %v1784, 2
    %v1863 = vrot.slane %v1853, 2
    %v1864 = vrot.slane %v1855, 2
    %v1869 = vadd.f32 %v287, %v1861
    %v1870 = vadd.f32 %v289, %v1862
    %v1871 = vadd.f32 %v364, %v1863
    %v1872 = vadd.f32 %v366, %v1864
    %v1873 = vxor.u32 %v1869, 2147483648
    %v1874 = vmul.f32 %v1873, 1.442695
    %v1875 = vpow.pop %v1874
    %v1876 = vadd.f32 %v1875, 1.0
    %v1877 = vrcp.pop %v1876
    %v1878 = vmul.f32 1.0, %v1877
    %v1879 = vxor.u32 %v1870, 2147483648
    %v1880 = vmul.f32 %v1879, 1.442695
    %v1881 = vpow.pop %v1880
    %v1882 = vadd.f32 %v1881, 1.0
    %v1883 = vrcp.pop %v1882
    %v1884 = vmul.f32 1.0, %v1883
    %v1885 = vtanh.pop %v1871
    %v1886 = vxor.u32 %v1872, 2147483648
    %v1887 = vmul.f32 %v1886, 1.442695
    %v1888 = vpow.pop %v1887
    %v1889 = vadd.f32 %v1888, 1.0
    %v1890 = vrcp.pop %v1889
    %v1891 = vmul.f32 1.0, %v1890
    %v1893 = vrot.slane %v1709, 6
    %v1895 = vmul.f32 %v1884, %v1893
    %v1896 = vmul.f32 %v1878, %v1885
    %v1897 = vadd.f32 %v1895, %v1896
    %v1898 = vtanh.pop %v1897
    %v1899 = vmul.f32 %v1891, %v1898
    %v1900 = vld [vmem:[%s1] sm:$0xff]
    %v1901 = vld [vmem:[%s1 + $0x8] sm:$0xff]
    %v1902 = vld [vmem:[#allocation7] sm:$0xff]
    %v1903 = vld [vmem:[#allocation7 + $0x8] sm:$0xff]
    %v1904 = vld [vmem:[#allocation7 + $0x10] sm:$0xff]
    %v1905 = vld [vmem:[#allocation7 + $0x18] sm:$0xff]
    %v1906 = vld [vmem:[#allocation7 + $0x20] sm:$0xff]
    %v1907 = vld [vmem:[#allocation7 + $0x28] sm:$0xff]
    %v1908 = vld [vmem:[#allocation7 + $0x30] sm:$0xff]
    %v1909 = vld [vmem:[#allocation7 + $0x38] sm:$0xff]
    %v1910 = vld [vmem:[#allocation7 + $0x40] sm:$0xff]
    %v1911 = vld [vmem:[#allocation7 + $0x48] sm:$0xff]
    %v1912 = vld [vmem:[#allocation7 + $0x50] sm:$0xff]
    %v1913 = vld [vmem:[#allocation7 + $0x58] sm:$0xff]
    %v1914 = vld [vmem:[#allocation7 + $0x60] sm:$0xff]
    %v1915 = vld [vmem:[#allocation7 + $0x68] sm:$0xff]
    %v1916 = vld [vmem:[#allocation7 + $0x70] sm:$0xff]
    %v1917 = vld [vmem:[#allocation7 + $0x78] sm:$0xff]
    %v1918 = vld [vmem:[#allocation7 + $0x80] sm:$0xff]
    %v1919 = vld [vmem:[#allocation7 + $0x88] sm:$0xff]
    %v1920 = vld [vmem:[#allocation7 + $0x90] sm:$0xff]
    %v1921 = vld [vmem:[#allocation7 + $0x98] sm:$0xff]
    %v1922 = vld [vmem:[#allocation7 + $0xa0] sm:$0xff]
    %v1923 = vld [vmem:[#allocation7 + $0xa8] sm:$0xff]
    %v1924 = vld [vmem:[#allocation7 + $0xb0] sm:$0xff]
    %v1925 = vld [vmem:[#allocation7 + $0xb8] sm:$0xff]
    %v1926 = vld [vmem:[#allocation7 + $0xc0] sm:$0xff]
    %v1927 = vld [vmem:[#allocation7 + $0xc8] sm:$0xff]
    %v1928 = vld [vmem:[#allocation7 + $0xd0] sm:$0xff]
    %v1929 = vld [vmem:[#allocation7 + $0xd8] sm:$0xff]
    %v1930 = vld [vmem:[#allocation7 + $0xe0] sm:$0xff]
    %v1931 = vld [vmem:[#allocation7 + $0xe8] sm:$0xff]
    %v1932 = vld [vmem:[#allocation7 + $0xf0] sm:$0xff]
    %v1933 = vld [vmem:[#allocation7 + $0xf8] sm:$0xff]
    %v1934 = vld [vmem:[#allocation7 + $0x100] sm:$0xff]
    %v1935 = vld [vmem:[#allocation7 + $0x108] sm:$0xff]
    %v1936 = vld [vmem:[#allocation7 + $0x110] sm:$0xff]
    %v1937 = vld [vmem:[#allocation7 + $0x118] sm:$0xff]
    %v1938 = vld [vmem:[#allocation7 + $0x120] sm:$0xff]
    %v1939 = vld [vmem:[#allocation7 + $0x128] sm:$0xff]
    %v1940 = vld [vmem:[#allocation7 + $0x130] sm:$0xff]
    %v1941 = vld [vmem:[#allocation7 + $0x138] sm:$0xff]
    %v1942 = vld [vmem:[#allocation7 + $0x140] sm:$0xff]
    %v1943 = vld [vmem:[#allocation7 + $0x148] sm:$0xff]
    %v1944 = vld [vmem:[#allocation7 + $0x150] sm:$0xff]
    %v1945 = vld [vmem:[#allocation7 + $0x158] sm:$0xff]
    %v1946 = vld [vmem:[#allocation7 + $0x160] sm:$0xff]
    %v1947 = vld [vmem:[#allocation7 + $0x168] sm:$0xff]
    %v1948 = vld [vmem:[#allocation7 + $0x170] sm:$0xff]
    %v1949 = vld [vmem:[#allocation7 + $0x178] sm:$0xff]
    %v1950 = vld [vmem:[#allocation7 + $0x180] sm:$0xff]
    %v1951 = vld [vmem:[#allocation7 + $0x188] sm:$0xff]
    %v1952 = vld [vmem:[#allocation7 + $0x190] sm:$0xff]
    %v1953 = vld [vmem:[#allocation7 + $0x198] sm:$0xff]
    %v1954 = vld [vmem:[#allocation7 + $0x1a0] sm:$0xff]
    %v1955 = vld [vmem:[#allocation7 + $0x1a8] sm:$0xff]
    %v1956 = vld [vmem:[#allocation7 + $0x1b0] sm:$0xff]
    %v1957 = vld [vmem:[#allocation7 + $0x1b8] sm:$0xff]
    %v1958 = vld [vmem:[#allocation7 + $0x1c0] sm:$0xff]
    %v1959 = vld [vmem:[#allocation7 + $0x1c8] sm:$0xff]
    %v1960 = vld [vmem:[#allocation7 + $0x1d0] sm:$0xff]
    %v1961 = vld [vmem:[#allocation7 + $0x1d8] sm:$0xff]
    %v1962 = vld [vmem:[#allocation7 + $0x1e0] sm:$0xff]
    %v1963 = vld [vmem:[#allocation7 + $0x1e8] sm:$0xff]
    %v1964 = vld [vmem:[#allocation7 + $0x1f0] sm:$0xff]
    %v1965 = vld [vmem:[#allocation7 + $0x1f8] sm:$0xff]
    %v1966 = vld [vmem:[%s8] sm:$0xf]
    %v1968 = vlaneseq
    %v1969 = vshrl.u32 %v1968, 7
    %v1970 = vsub.s32 0, %v1969
    %v1971 = vrot.slane %v1966, %v1970
    %v1972 = vlaneseq
    %v1973 = vshrl.u32 %v1972, 7
    %v1974 = vsub.s32 1, %v1973
    %v1975 = vrot.slane %v1966, %v1974
    %v1976 = vlaneseq
    %v1977 = vshrl.u32 %v1976, 7
    %v1978 = vsub.s32 2, %v1977
    %v1979 = vrot.slane %v1966, %v1978
    %v1980 = vlaneseq
    %v1981 = vshrl.u32 %v1980, 7
    %v1982 = vsub.s32 3, %v1981
    %v1983 = vrot.slane %v1966, %v1982
    %1988 = vmatprep.subr.mxu0 %v1903
    %1989 = vmatpush1.msra.mxu0 %v1902
    %1990 = vmatprep.subr.mxu0 %v1907
    %1991 = vmatpush1.msra.mxu0 %v1906
    %1992 = vmatprep.subr.mxu0 %v1911
    %1993 = vmatpush1.msra.mxu0 %v1910
    %1994 = vmatprep.subr.mxu0 %v1915
    %1995 = vmatpush1.msra.mxu0 %v1914
    %1996 = vmatprep.subr.mxu0 %v1919
    %1997 = vmatpush1.msra.mxu0 %v1918
    %1998 = vmatprep.subr.mxu0 %v1923
    %1999 = vmatpush1.msra.mxu0 %v1922
    %2000 = vmatprep.subr.mxu0 %v1927
    %2001 = vmatpush1.msra.mxu0 %v1926
    %2002 = vmatprep.subr.mxu0 %v1931
    %2003 = vmatpush1.msra.mxu0 %v1930
    %2004 = vmatprep.subr.mxu0 %v1935
    %2005 = vmatpush1.msra.mxu0 %v1934
    %2006 = vmatprep.subr.mxu0 %v1939
    %2007 = vmatpush1.msra.mxu0 %v1938
    %2008 = vmatprep.subr.mxu0 %v1943
    %2009 = vmatpush1.msra.mxu0 %v1942
    %2010 = vmatprep.subr.mxu0 %v1947
    %2011 = vmatpush1.msra.mxu0 %v1946
    %2012 = vmatprep.subr.mxu0 %v1951
    %2013 = vmatpush1.msra.mxu0 %v1950
    %2014 = vmatprep.subr.mxu0 %v1955
    %2015 = vmatpush1.msra.mxu0 %v1954
    %2016 = vmatprep.subr.mxu0 %v1959
    %2017 = vmatpush1.msra.mxu0 %v1958
    %2018 = vmatprep.subr.mxu0 %v1963
    %2019 = vmatpush1.msra.mxu0 %v1962
    %2020 = vmatprep.subr.mxu0 0.0
    %2021 = vmatpush1.msra.mxu0 0.0
    %2022 = vmatprep.subr.mxu0 0.0
    %2023 = vmatpush1.msra.mxu0 0.0
    %2024 = vmatprep.subr.mxu0 0.0
    %2025 = vmatpush1.msra.mxu0 0.0
    %2026 = vmatprep.subr.mxu0 0.0
    %2027 = vmatpush1.msra.mxu0 0.0
    %2028 = vmatprep.subr.mxu0 0.0
    %2029 = vmatpush1.msra.mxu0 0.0
    %2030 = vmatprep.subr.mxu0 0.0
    %2031 = vmatpush1.msra.mxu0 0.0
    %2032 = vmatprep.subr.mxu0 0.0
    %2033 = vmatpush1.msra.mxu0 0.0
    %2034 = vmatprep.subr.mxu0 0.0
    %2035 = vmatpush1.msra.mxu0 0.0
    %2036 = vmatprep.subr.mxu0 0.0
    %2037 = vmatpush1.msra.mxu0 0.0
    %2038 = vmatprep.subr.mxu0 0.0
    %2039 = vmatpush1.msra.mxu0 0.0
    %2040 = vmatprep.subr.mxu0 0.0
    %2041 = vmatpush1.msra.mxu0 0.0
    %2042 = vmatprep.subr.mxu0 0.0
    %2043 = vmatpush1.msra.mxu0 0.0
    %2044 = vmatprep.subr.mxu0 0.0
    %2045 = vmatpush1.msra.mxu0 0.0
    %2046 = vmatprep.subr.mxu0 0.0
    %2047 = vmatpush1.msra.mxu0 0.0
    %2048 = vmatprep.subr.mxu0 0.0
    %2049 = vmatpush1.msra.mxu0 0.0
    %2050 = vmatprep.subr.mxu0 0.0
    %2051 = vmatpush1.msra.mxu0 0.0
    %2052 = vmatprep.mubr.f32.mxu0 0.0
    %2053 = vmatmul.mubr.f32.gmra.mrb[0].mxu0 %v1900
    %v2054 = vpop.f32.mrb[0].mxu0
    %v2055 = vadd.f32 %v1971, %v2054
    %v2056 = vpop.f32.mrb[0].mxu0
    %v2057 = vadd.f32 %v1975, %v2056
    %2058 = vmatprep.mubr.f32.mxu0 0.0
    %2059 = vmatmul.mubr.f32.gmra.mrb[0].mxu0 %v1901
    %v2060 = vpop.f32.mrb[0].mxu0
    %v2061 = vadd.f32 %v1971, %v2060
    %v2062 = vpop.f32.mrb[0].mxu0
    %v2063 = vadd.f32 %v1975, %v2062
    %2064 = vdwg.mxu0
    %2065 = vmatprep.subr.mxu0 %v1905
    %2066 = vmatpush1.msra.mxu0 %v1904
    %2067 = vmatprep.subr.mxu0 %v1909
    %2068 = vmatpush1.msra.mxu0 %v1908
    %2069 = vmatprep.subr.mxu0 %v1913
    %2070 = vmatpush1.msra.mxu0 %v1912
    %2071 = vmatprep.subr.mxu0 %v1917
    %2072 = vmatpush1.msra.mxu0 %v1916
    %2073 = vmatprep.subr.mxu0 %v1921
    %2074 = vmatpush1.msra.mxu0 %v1920
    %2075 = vmatprep.subr.mxu0 %v1925
    %2076 = vmatpush1.msra.mxu0 %v1924
    %2077 = vmatprep.subr.mxu0 %v1929
    %2078 = vmatpush1.msra.mxu0 %v1928
    %2079 = vmatprep.subr.mxu0 %v1933
    %2080 = vmatpush1.msra.mxu0 %v1932
    %2081 = vmatprep.subr.mxu0 %v1937
    %2082 = vmatpush1.msra.mxu0 %v1936
    %2083 = vmatprep.subr.mxu0 %v1941
    %2084 = vmatpush1.msra.mxu0 %v1940
    %2085 = vmatprep.subr.mxu0 %v1945
    %2086 = vmatpush1.msra.mxu0 %v1944
    %2087 = vmatprep.subr.mxu0 %v1949
    %2088 = vmatpush1.msra.mxu0 %v1948
    %2089 = vmatprep.subr.mxu0 %v1953
    %2090 = vmatpush1.msra.mxu0 %v1952
    %2091 = vmatprep.subr.mxu0 %v1957
    %2092 = vmatpush1.msra.mxu0 %v1956
    %2093 = vmatprep.subr.mxu0 %v1961
    %2094 = vmatpush1.msra.mxu0 %v1960
    %2095 = vmatprep.subr.mxu0 %v1965
    %2096 = vmatpush1.msra.mxu0 %v1964
    %2097 = vmatprep.subr.mxu0 0.0
    %2098 = vmatpush1.msra.mxu0 0.0
    %2099 = vmatprep.subr.mxu0 0.0
    %2100 = vmatpush1.msra.mxu0 0.0
    %2101 = vmatprep.subr.mxu0 0.0
    %2102 = vmatpush1.msra.mxu0 0.0
    %2103 = vmatprep.subr.mxu0 0.0
    %2104 = vmatpush1.msra.mxu0 0.0
    %2105 = vmatprep.subr.mxu0 0.0
    %2106 = vmatpush1.msra.mxu0 0.0
    %2107 = vmatprep.subr.mxu0 0.0
    %2108 = vmatpush1.msra.mxu0 0.0
    %2109 = vmatprep.subr.mxu0 0.0
    %2110 = vmatpush1.msra.mxu0 0.0
    %2111 = vmatprep.subr.mxu0 0.0
    %2112 = vmatpush1.msra.mxu0 0.0
    %2113 = vmatprep.subr.mxu0 0.0
    %2114 = vmatpush1.msra.mxu0 0.0
    %2115 = vmatprep.subr.mxu0 0.0
    %2116 = vmatpush1.msra.mxu0 0.0
    %2117 = vmatprep.subr.mxu0 0.0
    %2118 = vmatpush1.msra.mxu0 0.0
    %2119 = vmatprep.subr.mxu0 0.0
    %2120 = vmatpush1.msra.mxu0 0.0
    %2121 = vmatprep.subr.mxu0 0.0
    %2122 = vmatpush1.msra.mxu0 0.0
    %2123 = vmatprep.subr.mxu0 0.0
    %2124 = vmatpush1.msra.mxu0 0.0
    %2125 = vmatprep.subr.mxu0 0.0
    %2126 = vmatpush1.msra.mxu0 0.0
    %2127 = vmatprep.subr.mxu0 0.0
    %2128 = vmatpush1.msra.mxu0 0.0
    %2129 = vmatprep.mubr.f32.mxu0 0.0
    %2130 = vmatmul.mubr.f32.gmra.mrb[0].mxu0 %v1900
    %v2131 = vpop.f32.mrb[0].mxu0
    %v2132 = vadd.f32 %v1979, %v2131
    %v2133 = vpop.f32.mrb[0].mxu0
    %v2134 = vadd.f32 %v1983, %v2133
    %2135 = vmatprep.mubr.f32.mxu0 0.0
    %2136 = vmatmul.mubr.f32.gmra.mrb[0].mxu0 %v1901
    %v2137 = vpop.f32.mrb[0].mxu0
    %v2138 = vadd.f32 %v1979, %v2137
    %v2139 = vpop.f32.mrb[0].mxu0
    %v2140 = vadd.f32 %v1983, %v2139
    %2141 = vdwg.mxu0
    %v2142 = vld [vmem:[#allocation9] sm:$0xff]
    %v2143 = vld [vmem:[#allocation9 + $0x8] sm:$0xff]
    %v2144 = vld [vmem:[#allocation9 + $0x10] sm:$0xff]
    %v2145 = vld [vmem:[#allocation9 + $0x18] sm:$0xff]
    %v2146 = vld [vmem:[#allocation9 + $0x20] sm:$0xff]
    %v2147 = vld [vmem:[#allocation9 + $0x28] sm:$0xff]
    %v2148 = vld [vmem:[#allocation9 + $0x30] sm:$0xff]
    %v2149 = vld [vmem:[#allocation9 + $0x38] sm:$0xff]
    %v2150 = vld [vmem:[#allocation9 + $0x40] sm:$0xff]
    %v2151 = vld [vmem:[#allocation9 + $0x48] sm:$0xff]
    %v2152 = vld [vmem:[#allocation9 + $0x50] sm:$0xff]
    %v2153 = vld [vmem:[#allocation9 + $0x58] sm:$0xff]
    %v2154 = vld [vmem:[#allocation9 + $0x60] sm:$0xff]
    %v2155 = vld [vmem:[#allocation9 + $0x68] sm:$0xff]
    %v2156 = vld [vmem:[#allocation9 + $0x70] sm:$0xff]
    %v2157 = vld [vmem:[#allocation9 + $0x78] sm:$0xff]
    %v2158 = vld [vmem:[#allocation9 + $0x80] sm:$0xff]
    %v2159 = vld [vmem:[#allocation9 + $0x88] sm:$0xff]
    %v2160 = vld [vmem:[#allocation9 + $0x90] sm:$0xff]
    %v2161 = vld [vmem:[#allocation9 + $0x98] sm:$0xff]
    %v2162 = vld [vmem:[#allocation9 + $0xa0] sm:$0xff]
    %v2163 = vld [vmem:[#allocation9 + $0xa8] sm:$0xff]
    %v2164 = vld [vmem:[#allocation9 + $0xb0] sm:$0xff]
    %v2165 = vld [vmem:[#allocation9 + $0xb8] sm:$0xff]
    %v2166 = vld [vmem:[#allocation9 + $0xc0] sm:$0xff]
    %v2167 = vld [vmem:[#allocation9 + $0xc8] sm:$0xff]
    %v2168 = vld [vmem:[#allocation9 + $0xd0] sm:$0xff]
    %v2169 = vld [vmem:[#allocation9 + $0xd8] sm:$0xff]
    %v2170 = vld [vmem:[#allocation9 + $0xe0] sm:$0xff]
    %v2171 = vld [vmem:[#allocation9 + $0xe8] sm:$0xff]
    %v2172 = vld [vmem:[#allocation9 + $0xf0] sm:$0xff]
    %v2173 = vld [vmem:[#allocation9 + $0xf8] sm:$0xff]
    %v2174 = vld [vmem:[#allocation9 + $0x100] sm:$0xff]
    %v2175 = vld [vmem:[#allocation9 + $0x108] sm:$0xff]
    %v2176 = vld [vmem:[#allocation9 + $0x110] sm:$0xff]
    %v2177 = vld [vmem:[#allocation9 + $0x118] sm:$0xff]
    %v2178 = vld [vmem:[#allocation9 + $0x120] sm:$0xff]
    %v2179 = vld [vmem:[#allocation9 + $0x128] sm:$0xff]
    %v2180 = vld [vmem:[#allocation9 + $0x130] sm:$0xff]
    %v2181 = vld [vmem:[#allocation9 + $0x138] sm:$0xff]
    %v2182 = vld [vmem:[#allocation9 + $0x140] sm:$0xff]
    %v2183 = vld [vmem:[#allocation9 + $0x148] sm:$0xff]
    %v2184 = vld [vmem:[#allocation9 + $0x150] sm:$0xff]
    %v2185 = vld [vmem:[#allocation9 + $0x158] sm:$0xff]
    %v2186 = vld [vmem:[#allocation9 + $0x160] sm:$0xff]
    %v2187 = vld [vmem:[#allocation9 + $0x168] sm:$0xff]
    %v2188 = vld [vmem:[#allocation9 + $0x170] sm:$0xff]
    %v2189 = vld [vmem:[#allocation9 + $0x178] sm:$0xff]
    %v2190 = vld [vmem:[#allocation9 + $0x180] sm:$0xff]
    %v2191 = vld [vmem:[#allocation9 + $0x188] sm:$0xff]
    %v2192 = vld [vmem:[#allocation9 + $0x190] sm:$0xff]
    %v2193 = vld [vmem:[#allocation9 + $0x198] sm:$0xff]
    %v2194 = vld [vmem:[#allocation9 + $0x1a0] sm:$0xff]
    %v2195 = vld [vmem:[#allocation9 + $0x1a8] sm:$0xff]
    %v2196 = vld [vmem:[#allocation9 + $0x1b0] sm:$0xff]
    %v2197 = vld [vmem:[#allocation9 + $0x1b8] sm:$0xff]
    %v2198 = vld [vmem:[#allocation9 + $0x1c0] sm:$0xff]
    %v2199 = vld [vmem:[#allocation9 + $0x1c8] sm:$0xff]
    %v2200 = vld [vmem:[#allocation9 + $0x1d0] sm:$0xff]
    %v2201 = vld [vmem:[#allocation9 + $0x1d8] sm:$0xff]
    %v2202 = vld [vmem:[#allocation9 + $0x1e0] sm:$0xff]
    %v2203 = vld [vmem:[#allocation9 + $0x1e8] sm:$0xff]
    %v2204 = vld [vmem:[#allocation9 + $0x1f0] sm:$0xff]
    %v2205 = vld [vmem:[#allocation9 + $0x1f8] sm:$0xff]
    %v2207 = vrot.slane %v1899, 6
    %2209 = vmatprep.subr.mxu0 %v2143
    %2210 = vmatpush1.msra.mxu0 %v2142
    %2211 = vmatprep.subr.mxu0 %v2147
    %2212 = vmatpush1.msra.mxu0 %v2146
    %2213 = vmatprep.subr.mxu0 %v2151
    %2214 = vmatpush1.msra.mxu0 %v2150
    %2215 = vmatprep.subr.mxu0 %v2155
    %2216 = vmatpush1.msra.mxu0 %v2154
    %2217 = vmatprep.subr.mxu0 %v2159
    %2218 = vmatpush1.msra.mxu0 %v2158
    %2219 = vmatprep.subr.mxu0 %v2163
    %2220 = vmatpush1.msra.mxu0 %v2162
    %2221 = vmatprep.subr.mxu0 %v2167
    %2222 = vmatpush1.msra.mxu0 %v2166
    %2223 = vmatprep.subr.mxu0 %v2171
    %2224 = vmatpush1.msra.mxu0 %v2170
    %2225 = vmatprep.subr.mxu0 %v2175
    %2226 = vmatpush1.msra.mxu0 %v2174
    %2227 = vmatprep.subr.mxu0 %v2179
    %2228 = vmatpush1.msra.mxu0 %v2178
    %2229 = vmatprep.subr.mxu0 %v2183
    %2230 = vmatpush1.msra.mxu0 %v2182
    %2231 = vmatprep.subr.mxu0 %v2187
    %2232 = vmatpush1.msra.mxu0 %v2186
    %2233 = vmatprep.subr.mxu0 %v2191
    %2234 = vmatpush1.msra.mxu0 %v2190
    %2235 = vmatprep.subr.mxu0 %v2195
    %2236 = vmatpush1.msra.mxu0 %v2194
    %2237 = vmatprep.subr.mxu0 %v2199
    %2238 = vmatpush1.msra.mxu0 %v2198
    %2239 = vmatprep.subr.mxu0 %v2203
    %2240 = vmatpush1.msra.mxu0 %v2202
    %2241 = vmatprep.subr.mxu0 0.0
    %2242 = vmatpush1.msra.mxu0 0.0
    %2243 = vmatprep.subr.mxu0 0.0
    %2244 = vmatpush1.msra.mxu0 0.0
    %2245 = vmatprep.subr.mxu0 0.0
    %2246 = vmatpush1.msra.mxu0 0.0
    %2247 = vmatprep.subr.mxu0 0.0
    %2248 = vmatpush1.msra.mxu0 0.0
    %2249 = vmatprep.subr.mxu0 0.0
    %2250 = vmatpush1.msra.mxu0 0.0
    %2251 = vmatprep.subr.mxu0 0.0
    %2252 = vmatpush1.msra.mxu0 0.0
    %2253 = vmatprep.subr.mxu0 0.0
    %2254 = vmatpush1.msra.mxu0 0.0
    %2255 = vmatprep.subr.mxu0 0.0
    %2256 = vmatpush1.msra.mxu0 0.0
    %2257 = vmatprep.subr.mxu0 0.0
    %2258 = vmatpush1.msra.mxu0 0.0
    %2259 = vmatprep.subr.mxu0 0.0
    %2260 = vmatpush1.msra.mxu0 0.0
    %2261 = vmatprep.subr.mxu0 0.0
    %2262 = vmatpush1.msra.mxu0 0.0
    %2263 = vmatprep.subr.mxu0 0.0
    %2264 = vmatpush1.msra.mxu0 0.0
    %2265 = vmatprep.subr.mxu0 0.0
    %2266 = vmatpush1.msra.mxu0 0.0
    %2267 = vmatprep.subr.mxu0 0.0
    %2268 = vmatpush1.msra.mxu0 0.0
    %2269 = vmatprep.subr.mxu0 0.0
    %2270 = vmatpush1.msra.mxu0 0.0
    %2271 = vmatprep.subr.mxu0 0.0
    %2272 = vmatpush1.msra.mxu0 0.0
    %2273 = vmatprep.mubr.f32.mxu0 0.0
    %2274 = vmatmul.mubr.f32.gmra.mrb[0].mxu0 %v2207
    %v2275 = vpop.f32.mrb[0].mxu0
    %v2276 = vadd.f32 0.0, %v2275
    %v2277 = vpop.f32.mrb[0].mxu0
    %v2278 = vadd.f32 0.0, %v2277
    %2279 = vdwg.mxu0
    %2280 = vmatprep.subr.mxu0 %v2145
    %2281 = vmatpush1.msra.mxu0 %v2144
    %2282 = vmatprep.subr.mxu0 %v2149
    %2283 = vmatpush1.msra.mxu0 %v2148
    %2284 = vmatprep.subr.mxu0 %v2153
    %2285 = vmatpush1.msra.mxu0 %v2152
    %2286 = vmatprep.subr.mxu0 %v2157
    %2287 = vmatpush1.msra.mxu0 %v2156
    %2288 = vmatprep.subr.mxu0 %v2161
    %2289 = vmatpush1.msra.mxu0 %v2160
    %2290 = vmatprep.subr.mxu0 %v2165
    %2291 = vmatpush1.msra.mxu0 %v2164
    %2292 = vmatprep.subr.mxu0 %v2169
    %2293 = vmatpush1.msra.mxu0 %v2168
    %2294 = vmatprep.subr.mxu0 %v2173
    %2295 = vmatpush1.msra.mxu0 %v2172
    %2296 = vmatprep.subr.mxu0 %v2177
    %2297 = vmatpush1.msra.mxu0 %v2176
    %2298 = vmatprep.subr.mxu0 %v2181
    %2299 = vmatpush1.msra.mxu0 %v2180
    %2300 = vmatprep.subr.mxu0 %v2185
    %2301 = vmatpush1.msra.mxu0 %v2184
    %2302 = vmatprep.subr.mxu0 %v2189
    %2303 = vmatpush1.msra.mxu0 %v2188
    %2304 = vmatprep.subr.mxu0 %v2193
    %2305 = vmatpush1.msra.mxu0 %v2192
    %2306 = vmatprep.subr.mxu0 %v2197
    %2307 = vmatpush1.msra.mxu0 %v2196
    %2308 = vmatprep.subr.mxu0 %v2201
    %2309 = vmatpush1.msra.mxu0 %v2200
    %2310 = vmatprep.subr.mxu0 %v2205
    %2311 = vmatpush1.msra.mxu0 %v2204
    %2312 = vmatprep.subr.mxu0 0.0
    %2313 = vmatpush1.msra.mxu0 0.0
    %2314 = vmatprep.subr.mxu0 0.0
    %2315 = vmatpush1.msra.mxu0 0.0
    %2316 = vmatprep.subr.mxu0 0.0
    %2317 = vmatpush1.msra.mxu0 0.0
    %2318 = vmatprep.subr.mxu0 0.0
    %2319 = vmatpush1.msra.mxu0 0.0
    %2320 = vmatprep.subr.mxu0 0.0
    %2321 = vmatpush1.msra.mxu0 0.0
    %2322 = vmatprep.subr.mxu0 0.0
    %2323 = vmatpush1.msra.mxu0 0.0
    %2324 = vmatprep.subr.mxu0 0.0
    %2325 = vmatpush1.msra.mxu0 0.0
    %2326 = vmatprep.subr.mxu0 0.0
    %2327 = vmatpush1.msra.mxu0 0.0
    %2328 = vmatprep.subr.mxu0 0.0
    %2329 = vmatpush1.msra.mxu0 0.0
    %2330 = vmatprep.subr.mxu0 0.0
    %2331 = vmatpush1.msra.mxu0 0.0
    %2332 = vmatprep.subr.mxu0 0.0
    %2333 = vmatpush1.msra.mxu0 0.0
    %2334 = vmatprep.subr.mxu0 0.0
    %2335 = vmatpush1.msra.mxu0 0.0
    %2336 = vmatprep.subr.mxu0 0.0
    %2337 = vmatpush1.msra.mxu0 0.0
    %2338 = vmatprep.subr.mxu0 0.0
    %2339 = vmatpush1.msra.mxu0 0.0
    %2340 = vmatprep.subr.mxu0 0.0
    %2341 = vmatpush1.msra.mxu0 0.0
    %2342 = vmatprep.subr.mxu0 0.0
    %2343 = vmatpush1.msra.mxu0 0.0
    %2344 = vmatprep.mubr.f32.mxu0 0.0
    %2345 = vmatmul.mubr.f32.gmra.mrb[0].mxu0 %v2207
    %v2346 = vpop.f32.mrb[0].mxu0
    %v2347 = vadd.f32 0.0, %v2346
    %v2348 = vpop.f32.mrb[0].mxu0
    %v2349 = vadd.f32 0.0, %v2348
    %2350 = vdwg.mxu0
    %v2351 = vadd.f32 %v2055, %v2276
    %v2352 = vadd.f32 %v2057, %v2278
    %v2353 = vadd.f32 %v2132, %v2347
    %v2354 = vadd.f32 %v2134, %v2349
    %v2355 = vxor.u32 %v2351, 2147483648
    %v2356 = vmul.f32 %v2355, 1.442695
    %v2357 = vpow.pop %v2356
    %v2358 = vadd.f32 %v2357, 1.0
    %v2359 = vrcp.pop %v2358
    %v2360 = vmul.f32 1.0, %v2359
    %v2361 = vxor.u32 %v2352, 2147483648
    %v2362 = vmul.f32 %v2361, 1.442695
    %v2363 = vpow.pop %v2362
    %v2364 = vadd.f32 %v2363, 1.0
    %v2365 = vrcp.pop %v2364
    %v2366 = vmul.f32 1.0, %v2365
    %v2367 = vtanh.pop %v2353
    %v2368 = vxor.u32 %v2354, 2147483648
    %v2369 = vmul.f32 %v2368, 1.442695
    %v2370 = vpow.pop %v2369
    %v2371 = vadd.f32 %v2370, 1.0
    %v2372 = vrcp.pop %v2371
    %v2373 = vmul.f32 1.0, %v2372
    %v2375 = vrot.slane %v1897, 6
    %v2377 = vmul.f32 %v2366, %v2375
    %v2378 = vmul.f32 %v2360, %v2367
    %v2379 = vadd.f32 %v2377, %v2378
    %v2380 = vtanh.pop %v2379
    %v2381 = vmul.f32 %v2373, %v2380
    %2382 = vst [vmem:[#allocation2] sm:$0x3] %v2381
    %2383 = vmatprep.subr.mxu0 %v2143
    %2384 = vmatpush1.msra.mxu0 %v2142
    %2385 = vmatprep.subr.mxu0 %v2147
    %2386 = vmatpush1.msra.mxu0 %v2146
    %2387 = vmatprep.subr.mxu0 %v2151
    %2388 = vmatpush1.msra.mxu0 %v2150
    %2389 = vmatprep.subr.mxu0 %v2155
    %2390 = vmatpush1.msra.mxu0 %v2154
    %2391 = vmatprep.subr.mxu0 %v2159
    %2392 = vmatpush1.msra.mxu0 %v2158
    %2393 = vmatprep.subr.mxu0 %v2163
    %2394 = vmatpush1.msra.mxu0 %v2162
    %2395 = vmatprep.subr.mxu0 %v2167
    %2396 = vmatpush1.msra.mxu0 %v2166
    %2397 = vmatprep.subr.mxu0 %v2171
    %2398 = vmatpush1.msra.mxu0 %v2170
    %2399 = vmatprep.subr.mxu0 %v2175
    %2400 = vmatpush1.msra.mxu0 %v2174
    %2401 = vmatprep.subr.mxu0 %v2179
    %2402 = vmatpush1.msra.mxu0 %v2178
    %2403 = vmatprep.subr.mxu0 %v2183
    %2404 = vmatpush1.msra.mxu0 %v2182
    %2405 = vmatprep.subr.mxu0 %v2187
    %2406 = vmatpush1.msra.mxu0 %v2186
    %2407 = vmatprep.subr.mxu0 %v2191
    %2408 = vmatpush1.msra.mxu0 %v2190
    %2409 = vmatprep.subr.mxu0 %v2195
    %2410 = vmatpush1.msra.mxu0 %v2194
    %2411 = vmatprep.subr.mxu0 %v2199
    %2412 = vmatpush1.msra.mxu0 %v2198
    %2413 = vmatprep.subr.mxu0 %v2203
    %2414 = vmatpush1.msra.mxu0 %v2202
    %2415 = vmatprep.subr.mxu0 0.0
    %2416 = vmatpush1.msra.mxu0 0.0
    %2417 = vmatprep.subr.mxu0 0.0
    %2418 = vmatpush1.msra.mxu0 0.0
    %2419 = vmatprep.subr.mxu0 0.0
    %2420 = vmatpush1.msra.mxu0 0.0
    %2421 = vmatprep.subr.mxu0 0.0
    %2422 = vmatpush1.msra.mxu0 0.0
    %2423 = vmatprep.subr.mxu0 0.0
    %2424 = vmatpush1.msra.mxu0 0.0
    %2425 = vmatprep.subr.mxu0 0.0
    %2426 = vmatpush1.msra.mxu0 0.0
    %2427 = vmatprep.subr.mxu0 0.0
    %2428 = vmatpush1.msra.mxu0 0.0
    %2429 = vmatprep.subr.mxu0 0.0
    %2430 = vmatpush1.msra.mxu0 0.0
    %2431 = vmatprep.subr.mxu0 0.0
    %2432 = vmatpush1.msra.mxu0 0.0
    %2433 = vmatprep.subr.mxu0 0.0
    %2434 = vmatpush1.msra.mxu0 0.0
    %2435 = vmatprep.subr.mxu0 0.0
    %2436 = vmatpush1.msra.mxu0 0.0
    %2437 = vmatprep.subr.mxu0 0.0
    %2438 = vmatpush1.msra.mxu0 0.0
    %2439 = vmatprep.subr.mxu0 0.0
    %2440 = vmatpush1.msra.mxu0 0.0
    %2441 = vmatprep.subr.mxu0 0.0
    %2442 = vmatpush1.msra.mxu0 0.0
    %2443 = vmatprep.subr.mxu0 0.0
    %2444 = vmatpush1.msra.mxu0 0.0
    %2445 = vmatprep.subr.mxu0 0.0
    %2446 = vmatpush1.msra.mxu0 0.0
    %2447 = vmatprep.mubr.f32.mxu0 0.0
    %2448 = vmatmul.mubr.f32.gmra.mrb[0].mxu0 %v2381
    %v2449 = vpop.f32.mrb[0].mxu0
    %v2450 = vadd.f32 0.0, %v2449
    %v2451 = vpop.f32.mrb[0].mxu0
    %v2452 = vadd.f32 0.0, %v2451
    %2453 = vdwg.mxu0
    %2454 = vmatprep.subr.mxu0 %v2145
    %2455 = vmatpush1.msra.mxu0 %v2144
    %2456 = vmatprep.subr.mxu0 %v2149
    %2457 = vmatpush1.msra.mxu0 %v2148
    %2458 = vmatprep.subr.mxu0 %v2153
    %2459 = vmatpush1.msra.mxu0 %v2152
    %2460 = vmatprep.subr.mxu0 %v2157
    %2461 = vmatpush1.msra.mxu0 %v2156
    %2462 = vmatprep.subr.mxu0 %v2161
    %2463 = vmatpush1.msra.mxu0 %v2160
    %2464 = vmatprep.subr.mxu0 %v2165
    %2465 = vmatpush1.msra.mxu0 %v2164
    %2466 = vmatprep.subr.mxu0 %v2169
    %2467 = vmatpush1.msra.mxu0 %v2168
    %2468 = vmatprep.subr.mxu0 %v2173
    %2469 = vmatpush1.msra.mxu0 %v2172
    %2470 = vmatprep.subr.mxu0 %v2177
    %2471 = vmatpush1.msra.mxu0 %v2176
    %2472 = vmatprep.subr.mxu0 %v2181
    %2473 = vmatpush1.msra.mxu0 %v2180
    %2474 = vmatprep.subr.mxu0 %v2185
    %2475 = vmatpush1.msra.mxu0 %v2184
    %2476 = vmatprep.subr.mxu0 %v2189
    %2477 = vmatpush1.msra.mxu0 %v2188
    %2478 = vmatprep.subr.mxu0 %v2193
    %2479 = vmatpush1.msra.mxu0 %v2192
    %2480 = vmatprep.subr.mxu0 %v2197
    %2481 = vmatpush1.msra.mxu0 %v2196
    %2482 = vmatprep.subr.mxu0 %v2201
    %2483 = vmatpush1.msra.mxu0 %v2200
    %2484 = vmatprep.subr.mxu0 %v2205
    %2485 = vmatpush1.msra.mxu0 %v2204
    %2486 = vmatprep.subr.mxu0 0.0
    %2487 = vmatpush1.msra.mxu0 0.0
    %2488 = vmatprep.subr.mxu0 0.0
    %2489 = vmatpush1.msra.mxu0 0.0
    %2490 = vmatprep.subr.mxu0 0.0
    %2491 = vmatpush1.msra.mxu0 0.0
    %2492 = vmatprep.subr.mxu0 0.0
    %2493 = vmatpush1.msra.mxu0 0.0
    %2494 = vmatprep.subr.mxu0 0.0
    %2495 = vmatpush1.msra.mxu0 0.0
    %2496 = vmatprep.subr.mxu0 0.0
    %2497 = vmatpush1.msra.mxu0 0.0
    %2498 = vmatprep.subr.mxu0 0.0
    %2499 = vmatpush1.msra.mxu0 0.0
    %2500 = vmatprep.subr.mxu0 0.0
    %2501 = vmatpush1.msra.mxu0 0.0
    %2502 = vmatprep.subr.mxu0 0.0
    %2503 = vmatpush1.msra.mxu0 0.0
    %2504 = vmatprep.subr.mxu0 0.0
    %2505 = vmatpush1.msra.mxu0 0.0
    %2506 = vmatprep.subr.mxu0 0.0
    %2507 = vmatpush1.msra.mxu0 0.0
    %2508 = vmatprep.subr.mxu0 0.0
    %2509 = vmatpush1.msra.mxu0 0.0
    %2510 = vmatprep.subr.mxu0 0.0
    %2511 = vmatpush1.msra.mxu0 0.0
    %2512 = vmatprep.subr.mxu0 0.0
    %2513 = vmatpush1.msra.mxu0 0.0
    %2514 = vmatprep.subr.mxu0 0.0
    %2515 = vmatpush1.msra.mxu0 0.0
    %2516 = vmatprep.subr.mxu0 0.0
    %2517 = vmatpush1.msra.mxu0 0.0
    %2518 = vmatprep.mubr.f32.mxu0 0.0
    %2519 = vmatmul.mubr.f32.gmra.mrb[0].mxu0 %v2381
    %v2520 = vpop.f32.mrb[0].mxu0
    %v2521 = vadd.f32 0.0, %v2520
    %v2522 = vpop.f32.mrb[0].mxu0
    %v2523 = vadd.f32 0.0, %v2522
    %2524 = vdwg.mxu0
    %v2529 = vrot.slane %v2450, 6
    %v2530 = vrot.slane %v2452, 6
    %v2531 = vrot.slane %v2521, 6
    %v2532 = vrot.slane %v2523, 6
    %v2537 = vadd.f32 %v2055, %v2529
    %v2538 = vadd.f32 %v2057, %v2530
    %v2539 = vadd.f32 %v2132, %v2531
    %v2540 = vadd.f32 %v2134, %v2532
    %v2541 = vxor.u32 %v2537, 2147483648
    %v2542 = vmul.f32 %v2541, 1.442695
    %v2543 = vpow.pop %v2542
    %v2544 = vadd.f32 %v2543, 1.0
    %v2545 = vrcp.pop %v2544
    %v2546 = vmul.f32 1.0, %v2545
    %v2547 = vxor.u32 %v2538, 2147483648
    %v2548 = vmul.f32 %v2547, 1.442695
    %v2549 = vpow.pop %v2548
    %v2550 = vadd.f32 %v2549, 1.0
    %v2551 = vrcp.pop %v2550
    %v2552 = vmul.f32 1.0, %v2551
    %v2553 = vtanh.pop %v2539
    %v2554 = vxor.u32 %v2540, 2147483648
    %v2555 = vmul.f32 %v2554, 1.442695
    %v2556 = vpow.pop %v2555
    %v2557 = vadd.f32 %v2556, 1.0
    %v2558 = vrcp.pop %v2557
    %v2559 = vmul.f32 1.0, %v2558
    %v2561 = vrot.slane %v2379, 6
    %v2563 = vmul.f32 %v2552, %v2561
    %v2564 = vmul.f32 %v2546, %v2553
    %v2565 = vadd.f32 %v2563, %v2564
    %v2566 = vtanh.pop %v2565
    %v2567 = vmul.f32 %v2559, %v2566
    %s2568 = scalar_lea.vmem [#allocation2], 2
    %2569 = vst [vmem:[%s2568 - $0x2] sm:$0xc] %v2567
    %v2571 = vrot.slane %v2567, 2
    %2573 = vmatprep.subr.mxu0 %v2143
    %2574 = vmatpush1.msra.mxu0 %v2142
    %2575 = vmatprep.subr.mxu0 %v2147
    %2576 = vmatpush1.msra.mxu0 %v2146
    %2577 = vmatprep.subr.mxu0 %v2151
    %2578 = vmatpush1.msra.mxu0 %v2150
    %2579 = vmatprep.subr.mxu0 %v2155
    %2580 = vmatpush1.msra.mxu0 %v2154
    %2581 = vmatprep.subr.mxu0 %v2159
    %2582 = vmatpush1.msra.mxu0 %v2158
    %2583 = vmatprep.subr.mxu0 %v2163
    %2584 = vmatpush1.msra.mxu0 %v2162
    %2585 = vmatprep.subr.mxu0 %v2167
    %2586 = vmatpush1.msra.mxu0 %v2166
    %2587 = vmatprep.subr.mxu0 %v2171
    %2588 = vmatpush1.msra.mxu0 %v2170
    %2589 = vmatprep.subr.mxu0 %v2175
    %2590 = vmatpush1.msra.mxu0 %v2174
    %2591 = vmatprep.subr.mxu0 %v2179
    %2592 = vmatpush1.msra.mxu0 %v2178
    %2593 = vmatprep.subr.mxu0 %v2183
    %2594 = vmatpush1.msra.mxu0 %v2182
    %2595 = vmatprep.subr.mxu0 %v2187
    %2596 = vmatpush1.msra.mxu0 %v2186
    %2597 = vmatprep.subr.mxu0 %v2191
    %2598 = vmatpush1.msra.mxu0 %v2190
    %2599 = vmatprep.subr.mxu0 %v2195
    %2600 = vmatpush1.msra.mxu0 %v2194
    %2601 = vmatprep.subr.mxu0 %v2199
    %2602 = vmatpush1.msra.mxu0 %v2198
    %2603 = vmatprep.subr.mxu0 %v2203
    %2604 = vmatpush1.msra.mxu0 %v2202
    %2605 = vmatprep.subr.mxu0 0.0
    %2606 = vmatpush1.msra.mxu0 0.0
    %2607 = vmatprep.subr.mxu0 0.0
    %2608 = vmatpush1.msra.mxu0 0.0
    %2609 = vmatprep.subr.mxu0 0.0
    %2610 = vmatpush1.msra.mxu0 0.0
    %2611 = vmatprep.subr.mxu0 0.0
    %2612 = vmatpush1.msra.mxu0 0.0
    %2613 = vmatprep.subr.mxu0 0.0
    %2614 = vmatpush1.msra.mxu0 0.0
    %2615 = vmatprep.subr.mxu0 0.0
    %2616 = vmatpush1.msra.mxu0 0.0
    %2617 = vmatprep.subr.mxu0 0.0
    %2618 = vmatpush1.msra.mxu0 0.0
    %2619 = vmatprep.subr.mxu0 0.0
    %2620 = vmatpush1.msra.mxu0 0.0
    %2621 = vmatprep.subr.mxu0 0.0
    %2622 = vmatpush1.msra.mxu0 0.0
    %2623 = vmatprep.subr.mxu0 0.0
    %2624 = vmatpush1.msra.mxu0 0.0
    %2625 = vmatprep.subr.mxu0 0.0
    %2626 = vmatpush1.msra.mxu0 0.0
    %2627 = vmatprep.subr.mxu0 0.0
    %2628 = vmatpush1.msra.mxu0 0.0
    %2629 = vmatprep.subr.mxu0 0.0
    %2630 = vmatpush1.msra.mxu0 0.0
    %2631 = vmatprep.subr.mxu0 0.0
    %2632 = vmatpush1.msra.mxu0 0.0
    %2633 = vmatprep.subr.mxu0 0.0
    %2634 = vmatpush1.msra.mxu0 0.0
    %2635 = vmatprep.subr.mxu0 0.0
    %2636 = vmatpush1.msra.mxu0 0.0
    %2637 = vmatprep.mubr.f32.mxu0 0.0
    %2638 = vmatmul.mubr.f32.gmra.mrb[0].mxu0 %v2571
    %v2639 = vpop.f32.mrb[0].mxu0
    %v2640 = vadd.f32 0.0, %v2639
    %v2641 = vpop.f32.mrb[0].mxu0
    %v2642 = vadd.f32 0.0, %v2641
    %2643 = vdwg.mxu0
    %2644 = vmatprep.subr.mxu0 %v2145
    %2645 = vmatpush1.msra.mxu0 %v2144
    %2646 = vmatprep.subr.mxu0 %v2149
    %2647 = vmatpush1.msra.mxu0 %v2148
    %2648 = vmatprep.subr.mxu0 %v2153
    %2649 = vmatpush1.msra.mxu0 %v2152
    %2650 = vmatprep.subr.mxu0 %v2157
    %2651 = vmatpush1.msra.mxu0 %v2156
    %2652 = vmatprep.subr.mxu0 %v2161
    %2653 = vmatpush1.msra.mxu0 %v2160
    %2654 = vmatprep.subr.mxu0 %v2165
    %2655 = vmatpush1.msra.mxu0 %v2164
    %2656 = vmatprep.subr.mxu0 %v2169
    %2657 = vmatpush1.msra.mxu0 %v2168
    %2658 = vmatprep.subr.mxu0 %v2173
    %2659 = vmatpush1.msra.mxu0 %v2172
    %2660 = vmatprep.subr.mxu0 %v2177
    %2661 = vmatpush1.msra.mxu0 %v2176
    %2662 = vmatprep.subr.mxu0 %v2181
    %2663 = vmatpush1.msra.mxu0 %v2180
    %2664 = vmatprep.subr.mxu0 %v2185
    %2665 = vmatpush1.msra.mxu0 %v2184
    %2666 = vmatprep.subr.mxu0 %v2189
    %2667 = vmatpush1.msra.mxu0 %v2188
    %2668 = vmatprep.subr.mxu0 %v2193
    %2669 = vmatpush1.msra.mxu0 %v2192
    %2670 = vmatprep.subr.mxu0 %v2197
    %2671 = vmatpush1.msra.mxu0 %v2196
    %2672 = vmatprep.subr.mxu0 %v2201
    %2673 = vmatpush1.msra.mxu0 %v2200
    %2674 = vmatprep.subr.mxu0 %v2205
    %2675 = vmatpush1.msra.mxu0 %v2204
    %2676 = vmatprep.subr.mxu0 0.0
    %2677 = vmatpush1.msra.mxu0 0.0
    %2678 = vmatprep.subr.mxu0 0.0
    %2679 = vmatpush1.msra.mxu0 0.0
    %2680 = vmatprep.subr.mxu0 0.0
    %2681 = vmatpush1.msra.mxu0 0.0
    %2682 = vmatprep.subr.mxu0 0.0
    %2683 = vmatpush1.msra.mxu0 0.0
    %2684 = vmatprep.subr.mxu0 0.0
    %2685 = vmatpush1.msra.mxu0 0.0
    %2686 = vmatprep.subr.mxu0 0.0
    %2687 = vmatpush1.msra.mxu0 0.0
    %2688 = vmatprep.subr.mxu0 0.0
    %2689 = vmatpush1.msra.mxu0 0.0
    %2690 = vmatprep.subr.mxu0 0.0
    %2691 = vmatpush1.msra.mxu0 0.0
    %2692 = vmatprep.subr.mxu0 0.0
    %2693 = vmatpush1.msra.mxu0 0.0
    %2694 = vmatprep.subr.mxu0 0.0
    %2695 = vmatpush1.msra.mxu0 0.0
    %2696 = vmatprep.subr.mxu0 0.0
    %2697 = vmatpush1.msra.mxu0 0.0
    %2698 = vmatprep.subr.mxu0 0.0
    %2699 = vmatpush1.msra.mxu0 0.0
    %2700 = vmatprep.subr.mxu0 0.0
    %2701 = vmatpush1.msra.mxu0 0.0
    %2702 = vmatprep.subr.mxu0 0.0
    %2703 = vmatpush1.msra.mxu0 0.0
    %2704 = vmatprep.subr.mxu0 0.0
    %2705 = vmatpush1.msra.mxu0 0.0
    %2706 = vmatprep.subr.mxu0 0.0
    %2707 = vmatpush1.msra.mxu0 0.0
    %2708 = vmatprep.mubr.f32.mxu0 0.0
    %2709 = vmatmul.mubr.f32.gmra.mrb[0].mxu0 %v2571
    %v2710 = vpop.f32.mrb[0].mxu0
    %v2711 = vadd.f32 0.0, %v2710
    %v2712 = vpop.f32.mrb[0].mxu0
    %v2713 = vadd.f32 0.0, %v2712
    %2714 = vdwg.mxu0
    %v2719 = vrot.slane %v2640, 4
    %v2720 = vrot.slane %v2642, 4
    %v2721 = vrot.slane %v2711, 4
    %v2722 = vrot.slane %v2713, 4
    %v2727 = vadd.f32 %v2055, %v2719
    %v2728 = vadd.f32 %v2057, %v2720
    %v2729 = vadd.f32 %v2132, %v2721
    %v2730 = vadd.f32 %v2134, %v2722
    %v2731 = vxor.u32 %v2727, 2147483648
    %v2732 = vmul.f32 %v2731, 1.442695
    %v2733 = vpow.pop %v2732
    %v2734 = vadd.f32 %v2733, 1.0
    %v2735 = vrcp.pop %v2734
    %v2736 = vmul.f32 1.0, %v2735
    %v2737 = vxor.u32 %v2728, 2147483648
    %v2738 = vmul.f32 %v2737, 1.442695
    %v2739 = vpow.pop %v2738
    %v2740 = vadd.f32 %v2739, 1.0
    %v2741 = vrcp.pop %v2740
    %v2742 = vmul.f32 1.0, %v2741
    %v2743 = vtanh.pop %v2729
    %v2744 = vxor.u32 %v2730, 2147483648
    %v2745 = vmul.f32 %v2744, 1.442695
    %v2746 = vpow.pop %v2745
    %v2747 = vadd.f32 %v2746, 1.0
    %v2748 = vrcp.pop %v2747
    %v2749 = vmul.f32 1.0, %v2748
    %v2751 = vrot.slane %v2565, 6
    %v2753 = vmul.f32 %v2742, %v2751
    %v2754 = vmul.f32 %v2736, %v2743
    %v2755 = vadd.f32 %v2753, %v2754
    %v2756 = vtanh.pop %v2755
    %v2757 = vmul.f32 %v2749, %v2756
    %s2758 = scalar_lea.vmem [#allocation2], 4
    %2759 = vst [vmem:[%s2758 - $0x4] sm:$0x30] %v2757
    %v2761 = vrot.slane %v2757, 4
    %2763 = vmatprep.subr.mxu0 %v2143
    %2764 = vmatpush1.msra.mxu0 %v2142
    %2765 = vmatprep.subr.mxu0 %v2147
    %2766 = vmatpush1.msra.mxu0 %v2146
    %2767 = vmatprep.subr.mxu0 %v2151
    %2768 = vmatpush1.msra.mxu0 %v2150
    %2769 = vmatprep.subr.mxu0 %v2155
    %2770 = vmatpush1.msra.mxu0 %v2154
    %2771 = vmatprep.subr.mxu0 %v2159
    %2772 = vmatpush1.msra.mxu0 %v2158
    %2773 = vmatprep.subr.mxu0 %v2163
    %2774 = vmatpush1.msra.mxu0 %v2162
    %2775 = vmatprep.subr.mxu0 %v2167
    %2776 = vmatpush1.msra.mxu0 %v2166
    %2777 = vmatprep.subr.mxu0 %v2171
    %2778 = vmatpush1.msra.mxu0 %v2170
    %2779 = vmatprep.subr.mxu0 %v2175
    %2780 = vmatpush1.msra.mxu0 %v2174
    %2781 = vmatprep.subr.mxu0 %v2179
    %2782 = vmatpush1.msra.mxu0 %v2178
    %2783 = vmatprep.subr.mxu0 %v2183
    %2784 = vmatpush1.msra.mxu0 %v2182
    %2785 = vmatprep.subr.mxu0 %v2187
    %2786 = vmatpush1.msra.mxu0 %v2186
    %2787 = vmatprep.subr.mxu0 %v2191
    %2788 = vmatpush1.msra.mxu0 %v2190
    %2789 = vmatprep.subr.mxu0 %v2195
    %2790 = vmatpush1.msra.mxu0 %v2194
    %2791 = vmatprep.subr.mxu0 %v2199
    %2792 = vmatpush1.msra.mxu0 %v2198
    %2793 = vmatprep.subr.mxu0 %v2203
    %2794 = vmatpush1.msra.mxu0 %v2202
    %2795 = vmatprep.subr.mxu0 0.0
    %2796 = vmatpush1.msra.mxu0 0.0
    %2797 = vmatprep.subr.mxu0 0.0
    %2798 = vmatpush1.msra.mxu0 0.0
    %2799 = vmatprep.subr.mxu0 0.0
    %2800 = vmatpush1.msra.mxu0 0.0
    %2801 = vmatprep.subr.mxu0 0.0
    %2802 = vmatpush1.msra.mxu0 0.0
    %2803 = vmatprep.subr.mxu0 0.0
    %2804 = vmatpush1.msra.mxu0 0.0
    %2805 = vmatprep.subr.mxu0 0.0
    %2806 = vmatpush1.msra.mxu0 0.0
    %2807 = vmatprep.subr.mxu0 0.0
    %2808 = vmatpush1.msra.mxu0 0.0
    %2809 = vmatprep.subr.mxu0 0.0
    %2810 = vmatpush1.msra.mxu0 0.0
    %2811 = vmatprep.subr.mxu0 0.0
    %2812 = vmatpush1.msra.mxu0 0.0
    %2813 = vmatprep.subr.mxu0 0.0
    %2814 = vmatpush1.msra.mxu0 0.0
    %2815 = vmatprep.subr.mxu0 0.0
    %2816 = vmatpush1.msra.mxu0 0.0
    %2817 = vmatprep.subr.mxu0 0.0
    %2818 = vmatpush1.msra.mxu0 0.0
    %2819 = vmatprep.subr.mxu0 0.0
    %2820 = vmatpush1.msra.mxu0 0.0
    %2821 = vmatprep.subr.mxu0 0.0
    %2822 = vmatpush1.msra.mxu0 0.0
    %2823 = vmatprep.subr.mxu0 0.0
    %2824 = vmatpush1.msra.mxu0 0.0
    %2825 = vmatprep.subr.mxu0 0.0
    %2826 = vmatpush1.msra.mxu0 0.0
    %2827 = vmatprep.mubr.f32.mxu0 0.0
    %2828 = vmatmul.mubr.f32.gmra.mrb[0].mxu0 %v2761
    %v2829 = vpop.f32.mrb[0].mxu0
    %v2830 = vadd.f32 0.0, %v2829
    %v2831 = vpop.f32.mrb[0].mxu0
    %v2832 = vadd.f32 0.0, %v2831
    %2833 = vdwg.mxu0
    %2834 = vmatprep.subr.mxu0 %v2145
    %2835 = vmatpush1.msra.mxu0 %v2144
    %2836 = vmatprep.subr.mxu0 %v2149
    %2837 = vmatpush1.msra.mxu0 %v2148
    %2838 = vmatprep.subr.mxu0 %v2153
    %2839 = vmatpush1.msra.mxu0 %v2152
    %2840 = vmatprep.subr.mxu0 %v2157
    %2841 = vmatpush1.msra.mxu0 %v2156
    %2842 = vmatprep.subr.mxu0 %v2161
    %2843 = vmatpush1.msra.mxu0 %v2160
    %2844 = vmatprep.subr.mxu0 %v2165
    %2845 = vmatpush1.msra.mxu0 %v2164
    %2846 = vmatprep.subr.mxu0 %v2169
    %2847 = vmatpush1.msra.mxu0 %v2168
    %2848 = vmatprep.subr.mxu0 %v2173
    %2849 = vmatpush1.msra.mxu0 %v2172
    %2850 = vmatprep.subr.mxu0 %v2177
    %2851 = vmatpush1.msra.mxu0 %v2176
    %2852 = vmatprep.subr.mxu0 %v2181
    %2853 = vmatpush1.msra.mxu0 %v2180
    %2854 = vmatprep.subr.mxu0 %v2185
    %2855 = vmatpush1.msra.mxu0 %v2184
    %2856 = vmatprep.subr.mxu0 %v2189
    %2857 = vmatpush1.msra.mxu0 %v2188
    %2858 = vmatprep.subr.mxu0 %v2193
    %2859 = vmatpush1.msra.mxu0 %v2192
    %2860 = vmatprep.subr.mxu0 %v2197
    %2861 = vmatpush1.msra.mxu0 %v2196
    %2862 = vmatprep.subr.mxu0 %v2201
    %2863 = vmatpush1.msra.mxu0 %v2200
    %2864 = vmatprep.subr.mxu0 %v2205
    %2865 = vmatpush1.msra.mxu0 %v2204
    %2866 = vmatprep.subr.mxu0 0.0
    %2867 = vmatpush1.msra.mxu0 0.0
    %2868 = vmatprep.subr.mxu0 0.0
    %2869 = vmatpush1.msra.mxu0 0.0
    %2870 = vmatprep.subr.mxu0 0.0
    %2871 = vmatpush1.msra.mxu0 0.0
    %2872 = vmatprep.subr.mxu0 0.0
    %2873 = vmatpush1.msra.mxu0 0.0
    %2874 = vmatprep.subr.mxu0 0.0
    %2875 = vmatpush1.msra.mxu0 0.0
    %2876 = vmatprep.subr.mxu0 0.0
    %2877 = vmatpush1.msra.mxu0 0.0
    %2878 = vmatprep.subr.mxu0 0.0
    %2879 = vmatpush1.msra.mxu0 0.0
    %2880 = vmatprep.subr.mxu0 0.0
    %2881 = vmatpush1.msra.mxu0 0.0
    %2882 = vmatprep.subr.mxu0 0.0
    %2883 = vmatpush1.msra.mxu0 0.0
    %2884 = vmatprep.subr.mxu0 0.0
    %2885 = vmatpush1.msra.mxu0 0.0
    %2886 = vmatprep.subr.mxu0 0.0
    %2887 = vmatpush1.msra.mxu0 0.0
    %2888 = vmatprep.subr.mxu0 0.0
    %2889 = vmatpush1.msra.mxu0 0.0
    %2890 = vmatprep.subr.mxu0 0.0
    %2891 = vmatpush1.msra.mxu0 0.0
    %2892 = vmatprep.subr.mxu0 0.0
    %2893 = vmatpush1.msra.mxu0 0.0
    %2894 = vmatprep.subr.mxu0 0.0
    %2895 = vmatpush1.msra.mxu0 0.0
    %2896 = vmatprep.subr.mxu0 0.0
    %2897 = vmatpush1.msra.mxu0 0.0
    %2898 = vmatprep.mubr.f32.mxu0 0.0
    %2899 = vmatmul.mubr.f32.gmra.mrb[0].mxu0 %v2761
    %v2900 = vpop.f32.mrb[0].mxu0
    %v2901 = vadd.f32 0.0, %v2900
    %v2902 = vpop.f32.mrb[0].mxu0
    %v2903 = vadd.f32 0.0, %v2902
    %2904 = vdwg.mxu0
    %v2909 = vrot.slane %v2830, 2
    %v2910 = vrot.slane %v2832, 2
    %v2911 = vrot.slane %v2901, 2
    %v2912 = vrot.slane %v2903, 2
    %v2917 = vadd.f32 %v2055, %v2909
    %v2918 = vadd.f32 %v2057, %v2910
    %v2919 = vadd.f32 %v2132, %v2911
    %v2920 = vadd.f32 %v2134, %v2912
    %v2921 = vxor.u32 %v2917, 2147483648
    %v2922 = vmul.f32 %v2921, 1.442695
    %v2923 = vpow.pop %v2922
    %v2924 = vadd.f32 %v2923, 1.0
    %v2925 = vrcp.pop %v2924
    %v2926 = vmul.f32 1.0, %v2925
    %v2927 = vxor.u32 %v2918, 2147483648
    %v2928 = vmul.f32 %v2927, 1.442695
    %v2929 = vpow.pop %v2928
    %v2930 = vadd.f32 %v2929, 1.0
    %v2931 = vrcp.pop %v2930
    %v2932 = vmul.f32 1.0, %v2931
    %v2933 = vtanh.pop %v2919
    %v2934 = vxor.u32 %v2920, 2147483648
    %v2935 = vmul.f32 %v2934, 1.442695
    %v2936 = vpow.pop %v2935
    %v2937 = vadd.f32 %v2936, 1.0
    %v2938 = vrcp.pop %v2937
    %v2939 = vmul.f32 1.0, %v2938
    %v2941 = vrot.slane %v2755, 6
    %v2943 = vmul.f32 %v2932, %v2941
    %v2944 = vmul.f32 %v2926, %v2933
    %v2945 = vadd.f32 %v2943, %v2944
    %v2946 = vtanh.pop %v2945
    %v2947 = vmul.f32 %v2939, %v2946
    %s2948 = scalar_lea.vmem [#allocation2], 6
    %2949 = vst [vmem:[%s2948 - $0x6] sm:$0xc0] %v2947
    %v2951 = vrot.slane %v2947, 6
    %2953 = vmatprep.subr.mxu0 %v2143
    %2954 = vmatpush1.msra.mxu0 %v2142
    %2955 = vmatprep.subr.mxu0 %v2147
    %2956 = vmatpush1.msra.mxu0 %v2146
    %2957 = vmatprep.subr.mxu0 %v2151
    %2958 = vmatpush1.msra.mxu0 %v2150
    %2959 = vmatprep.subr.mxu0 %v2155
    %2960 = vmatpush1.msra.mxu0 %v2154
    %2961 = vmatprep.subr.mxu0 %v2159
    %2962 = vmatpush1.msra.mxu0 %v2158
    %2963 = vmatprep.subr.mxu0 %v2163
    %2964 = vmatpush1.msra.mxu0 %v2162
    %2965 = vmatprep.subr.mxu0 %v2167
    %2966 = vmatpush1.msra.mxu0 %v2166
    %2967 = vmatprep.subr.mxu0 %v2171
    %2968 = vmatpush1.msra.mxu0 %v2170
    %2969 = vmatprep.subr.mxu0 %v2175
    %2970 = vmatpush1.msra.mxu0 %v2174
    %2971 = vmatprep.subr.mxu0 %v2179
    %2972 = vmatpush1.msra.mxu0 %v2178
    %2973 = vmatprep.subr.mxu0 %v2183
    %2974 = vmatpush1.msra.mxu0 %v2182
    %2975 = vmatprep.subr.mxu0 %v2187
    %2976 = vmatpush1.msra.mxu0 %v2186
    %2977 = vmatprep.subr.mxu0 %v2191
    %2978 = vmatpush1.msra.mxu0 %v2190
    %2979 = vmatprep.subr.mxu0 %v2195
    %2980 = vmatpush1.msra.mxu0 %v2194
    %2981 = vmatprep.subr.mxu0 %v2199
    %2982 = vmatpush1.msra.mxu0 %v2198
    %2983 = vmatprep.subr.mxu0 %v2203
    %2984 = vmatpush1.msra.mxu0 %v2202
    %2985 = vmatprep.subr.mxu0 0.0
    %2986 = vmatpush1.msra.mxu0 0.0
    %2987 = vmatprep.subr.mxu0 0.0
    %2988 = vmatpush1.msra.mxu0 0.0
    %2989 = vmatprep.subr.mxu0 0.0
    %2990 = vmatpush1.msra.mxu0 0.0
    %2991 = vmatprep.subr.mxu0 0.0
    %2992 = vmatpush1.msra.mxu0 0.0
    %2993 = vmatprep.subr.mxu0 0.0
    %2994 = vmatpush1.msra.mxu0 0.0
    %2995 = vmatprep.subr.mxu0 0.0
    %2996 = vmatpush1.msra.mxu0 0.0
    %2997 = vmatprep.subr.mxu0 0.0
    %2998 = vmatpush1.msra.mxu0 0.0
    %2999 = vmatprep.subr.mxu0 0.0
    %3000 = vmatpush1.msra.mxu0 0.0
    %3001 = vmatprep.subr.mxu0 0.0
    %3002 = vmatpush1.msra.mxu0 0.0
    %3003 = vmatprep.subr.mxu0 0.0
    %3004 = vmatpush1.msra.mxu0 0.0
    %3005 = vmatprep.subr.mxu0 0.0
    %3006 = vmatpush1.msra.mxu0 0.0
    %3007 = vmatprep.subr.mxu0 0.0
    %3008 = vmatpush1.msra.mxu0 0.0
    %3009 = vmatprep.subr.mxu0 0.0
    %3010 = vmatpush1.msra.mxu0 0.0
    %3011 = vmatprep.subr.mxu0 0.0
    %3012 = vmatpush1.msra.mxu0 0.0
    %3013 = vmatprep.subr.mxu0 0.0
    %3014 = vmatpush1.msra.mxu0 0.0
    %3015 = vmatprep.subr.mxu0 0.0
    %3016 = vmatpush1.msra.mxu0 0.0
    %3017 = vmatprep.mubr.f32.mxu0 0.0
    %3018 = vmatmul.mubr.f32.gmra.mrb[0].mxu0 %v2951
    %v3019 = vpop.f32.mrb[0].mxu0
    %v3020 = vadd.f32 0.0, %v3019
    %v3021 = vpop.f32.mrb[0].mxu0
    %v3022 = vadd.f32 0.0, %v3021
    %3023 = vdwg.mxu0
    %3024 = vmatprep.subr.mxu0 %v2145
    %3025 = vmatpush1.msra.mxu0 %v2144
    %3026 = vmatprep.subr.mxu0 %v2149
    %3027 = vmatpush1.msra.mxu0 %v2148
    %3028 = vmatprep.subr.mxu0 %v2153
    %3029 = vmatpush1.msra.mxu0 %v2152
    %3030 = vmatprep.subr.mxu0 %v2157
    %3031 = vmatpush1.msra.mxu0 %v2156
    %3032 = vmatprep.subr.mxu0 %v2161
    %3033 = vmatpush1.msra.mxu0 %v2160
    %3034 = vmatprep.subr.mxu0 %v2165
    %3035 = vmatpush1.msra.mxu0 %v2164
    %3036 = vmatprep.subr.mxu0 %v2169
    %3037 = vmatpush1.msra.mxu0 %v2168
    %3038 = vmatprep.subr.mxu0 %v2173
    %3039 = vmatpush1.msra.mxu0 %v2172
    %3040 = vmatprep.subr.mxu0 %v2177
    %3041 = vmatpush1.msra.mxu0 %v2176
    %3042 = vmatprep.subr.mxu0 %v2181
    %3043 = vmatpush1.msra.mxu0 %v2180
    %3044 = vmatprep.subr.mxu0 %v2185
    %3045 = vmatpush1.msra.mxu0 %v2184
    %3046 = vmatprep.subr.mxu0 %v2189
    %3047 = vmatpush1.msra.mxu0 %v2188
    %3048 = vmatprep.subr.mxu0 %v2193
    %3049 = vmatpush1.msra.mxu0 %v2192
    %3050 = vmatprep.subr.mxu0 %v2197
    %3051 = vmatpush1.msra.mxu0 %v2196
    %3052 = vmatprep.subr.mxu0 %v2201
    %3053 = vmatpush1.msra.mxu0 %v2200
    %3054 = vmatprep.subr.mxu0 %v2205
    %3055 = vmatpush1.msra.mxu0 %v2204
    %3056 = vmatprep.subr.mxu0 0.0
    %3057 = vmatpush1.msra.mxu0 0.0
    %3058 = vmatprep.subr.mxu0 0.0
    %3059 = vmatpush1.msra.mxu0 0.0
    %3060 = vmatprep.subr.mxu0 0.0
    %3061 = vmatpush1.msra.mxu0 0.0
    %3062 = vmatprep.subr.mxu0 0.0
    %3063 = vmatpush1.msra.mxu0 0.0
    %3064 = vmatprep.subr.mxu0 0.0
    %3065 = vmatpush1.msra.mxu0 0.0
    %3066 = vmatprep.subr.mxu0 0.0
    %3067 = vmatpush1.msra.mxu0 0.0
    %3068 = vmatprep.subr.mxu0 0.0
    %3069 = vmatpush1.msra.mxu0 0.0
    %3070 = vmatprep.subr.mxu0 0.0
    %3071 = vmatpush1.msra.mxu0 0.0
    %3072 = vmatprep.subr.mxu0 0.0
    %3073 = vmatpush1.msra.mxu0 0.0
    %3074 = vmatprep.subr.mxu0 0.0
    %3075 = vmatpush1.msra.mxu0 0.0
    %3076 = vmatprep.subr.mxu0 0.0
    %3077 = vmatpush1.msra.mxu0 0.0
    %3078 = vmatprep.subr.mxu0 0.0
    %3079 = vmatpush1.msra.mxu0 0.0
    %3080 = vmatprep.subr.mxu0 0.0
    %3081 = vmatpush1.msra.mxu0 0.0
    %3082 = vmatprep.subr.mxu0 0.0
    %3083 = vmatpush1.msra.mxu0 0.0
    %3084 = vmatprep.subr.mxu0 0.0
    %3085 = vmatpush1.msra.mxu0 0.0
    %3086 = vmatprep.subr.mxu0 0.0
    %3087 = vmatpush1.msra.mxu0 0.0
    %3088 = vmatprep.mubr.f32.mxu0 0.0
    %3089 = vmatmul.mubr.f32.gmra.mrb[0].mxu0 %v2951
    %v3090 = vpop.f32.mrb[0].mxu0
    %v3091 = vadd.f32 0.0, %v3090
    %v3092 = vpop.f32.mrb[0].mxu0
    %v3093 = vadd.f32 0.0, %v3092
    %3094 = vdwg.mxu0
    %v3095 = vadd.f32 %v2061, %v3020
    %v3096 = vadd.f32 %v2063, %v3022
    %v3097 = vadd.f32 %v2138, %v3091
    %v3098 = vadd.f32 %v2140, %v3093
    %v3099 = vxor.u32 %v3095, 2147483648
    %v3100 = vmul.f32 %v3099, 1.442695
    %v3101 = vpow.pop %v3100
    %v3102 = vadd.f32 %v3101, 1.0
    %v3103 = vrcp.pop %v3102
    %v3104 = vmul.f32 1.0, %v3103
    %v3105 = vxor.u32 %v3096, 2147483648
    %v3106 = vmul.f32 %v3105, 1.442695
    %v3107 = vpow.pop %v3106
    %v3108 = vadd.f32 %v3107, 1.0
    %v3109 = vrcp.pop %v3108
    %v3110 = vmul.f32 1.0, %v3109
    %v3111 = vtanh.pop %v3097
    %v3112 = vxor.u32 %v3098, 2147483648
    %v3113 = vmul.f32 %v3112, 1.442695
    %v3114 = vpow.pop %v3113
    %v3115 = vadd.f32 %v3114, 1.0
    %v3116 = vrcp.pop %v3115
    %v3117 = vmul.f32 1.0, %v3116
    %v3119 = vrot.slane %v2945, 6
    %v3121 = vmul.f32 %v3110, %v3119
    %v3122 = vmul.f32 %v3104, %v3111
    %v3123 = vadd.f32 %v3121, %v3122
    %v3124 = vtanh.pop %v3123
    %v3125 = vmul.f32 %v3117, %v3124
    %s3126 = scalar_lea.vmem [#allocation2], 8
    %3127 = vst [vmem:[%s3126] sm:$0x3] %v3125
    %3128 = vmatprep.subr.mxu0 %v2143
    %3129 = vmatpush1.msra.mxu0 %v2142
    %3130 = vmatprep.subr.mxu0 %v2147
    %3131 = vmatpush1.msra.mxu0 %v2146
    %3132 = vmatprep.subr.mxu0 %v2151
    %3133 = vmatpush1.msra.mxu0 %v2150
    %3134 = vmatprep.subr.mxu0 %v2155
    %3135 = vmatpush1.msra.mxu0 %v2154
    %3136 = vmatprep.subr.mxu0 %v2159
    %3137 = vmatpush1.msra.mxu0 %v2158
    %3138 = vmatprep.subr.mxu0 %v2163
    %3139 = vmatpush1.msra.mxu0 %v2162
    %3140 = vmatprep.subr.mxu0 %v2167
    %3141 = vmatpush1.msra.mxu0 %v2166
    %3142 = vmatprep.subr.mxu0 %v2171
    %3143 = vmatpush1.msra.mxu0 %v2170
    %3144 = vmatprep.subr.mxu0 %v2175
    %3145 = vmatpush1.msra.mxu0 %v2174
    %3146 = vmatprep.subr.mxu0 %v2179
    %3147 = vmatpush1.msra.mxu0 %v2178
    %3148 = vmatprep.subr.mxu0 %v2183
    %3149 = vmatpush1.msra.mxu0 %v2182
    %3150 = vmatprep.subr.mxu0 %v2187
    %3151 = vmatpush1.msra.mxu0 %v2186
    %3152 = vmatprep.subr.mxu0 %v2191
    %3153 = vmatpush1.msra.mxu0 %v2190
    %3154 = vmatprep.subr.mxu0 %v2195
    %3155 = vmatpush1.msra.mxu0 %v2194
    %3156 = vmatprep.subr.mxu0 %v2199
    %3157 = vmatpush1.msra.mxu0 %v2198
    %3158 = vmatprep.subr.mxu0 %v2203
    %3159 = vmatpush1.msra.mxu0 %v2202
    %3160 = vmatprep.subr.mxu0 0.0
    %3161 = vmatpush1.msra.mxu0 0.0
    %3162 = vmatprep.subr.mxu0 0.0
    %3163 = vmatpush1.msra.mxu0 0.0
    %3164 = vmatprep.subr.mxu0 0.0
    %3165 = vmatpush1.msra.mxu0 0.0
    %3166 = vmatprep.subr.mxu0 0.0
    %3167 = vmatpush1.msra.mxu0 0.0
    %3168 = vmatprep.subr.mxu0 0.0
    %3169 = vmatpush1.msra.mxu0 0.0
    %3170 = vmatprep.subr.mxu0 0.0
    %3171 = vmatpush1.msra.mxu0 0.0
    %3172 = vmatprep.subr.mxu0 0.0
    %3173 = vmatpush1.msra.mxu0 0.0
    %3174 = vmatprep.subr.mxu0 0.0
    %3175 = vmatpush1.msra.mxu0 0.0
    %3176 = vmatprep.subr.mxu0 0.0
    %3177 = vmatpush1.msra.mxu0 0.0
    %3178 = vmatprep.subr.mxu0 0.0
    %3179 = vmatpush1.msra.mxu0 0.0
    %3180 = vmatprep.subr.mxu0 0.0
    %3181 = vmatpush1.msra.mxu0 0.0
    %3182 = vmatprep.subr.mxu0 0.0
    %3183 = vmatpush1.msra.mxu0 0.0
    %3184 = vmatprep.subr.mxu0 0.0
    %3185 = vmatpush1.msra.mxu0 0.0
    %3186 = vmatprep.subr.mxu0 0.0
    %3187 = vmatpush1.msra.mxu0 0.0
    %3188 = vmatprep.subr.mxu0 0.0
    %3189 = vmatpush1.msra.mxu0 0.0
    %3190 = vmatprep.subr.mxu0 0.0
    %3191 = vmatpush1.msra.mxu0 0.0
    %3192 = vmatprep.mubr.f32.mxu0 0.0
    %3193 = vmatmul.mubr.f32.gmra.mrb[0].mxu0 %v3125
    %v3194 = vpop.f32.mrb[0].mxu0
    %v3195 = vadd.f32 0.0, %v3194
    %v3196 = vpop.f32.mrb[0].mxu0
    %v3197 = vadd.f32 0.0, %v3196
    %3198 = vdwg.mxu0
    %3199 = vmatprep.subr.mxu0 %v2145
    %3200 = vmatpush1.msra.mxu0 %v2144
    %3201 = vmatprep.subr.mxu0 %v2149
    %3202 = vmatpush1.msra.mxu0 %v2148
    %3203 = vmatprep.subr.mxu0 %v2153
    %3204 = vmatpush1.msra.mxu0 %v2152
    %3205 = vmatprep.subr.mxu0 %v2157
    %3206 = vmatpush1.msra.mxu0 %v2156
    %3207 = vmatprep.subr.mxu0 %v2161
    %3208 = vmatpush1.msra.mxu0 %v2160
    %3209 = vmatprep.subr.mxu0 %v2165
    %3210 = vmatpush1.msra.mxu0 %v2164
    %3211 = vmatprep.subr.mxu0 %v2169
    %3212 = vmatpush1.msra.mxu0 %v2168
    %3213 = vmatprep.subr.mxu0 %v2173
    %3214 = vmatpush1.msra.mxu0 %v2172
    %3215 = vmatprep.subr.mxu0 %v2177
    %3216 = vmatpush1.msra.mxu0 %v2176
    %3217 = vmatprep.subr.mxu0 %v2181
    %3218 = vmatpush1.msra.mxu0 %v2180
    %3219 = vmatprep.subr.mxu0 %v2185
    %3220 = vmatpush1.msra.mxu0 %v2184
    %3221 = vmatprep.subr.mxu0 %v2189
    %3222 = vmatpush1.msra.mxu0 %v2188
    %3223 = vmatprep.subr.mxu0 %v2193
    %3224 = vmatpush1.msra.mxu0 %v2192
    %3225 = vmatprep.subr.mxu0 %v2197
    %3226 = vmatpush1.msra.mxu0 %v2196
    %3227 = vmatprep.subr.mxu0 %v2201
    %3228 = vmatpush1.msra.mxu0 %v2200
    %3229 = vmatprep.subr.mxu0 %v2205
    %3230 = vmatpush1.msra.mxu0 %v2204
    %3231 = vmatprep.subr.mxu0 0.0
    %3232 = vmatpush1.msra.mxu0 0.0
    %3233 = vmatprep.subr.mxu0 0.0
    %3234 = vmatpush1.msra.mxu0 0.0
    %3235 = vmatprep.subr.mxu0 0.0
    %3236 = vmatpush1.msra.mxu0 0.0
    %3237 = vmatprep.subr.mxu0 0.0
    %3238 = vmatpush1.msra.mxu0 0.0
    %3239 = vmatprep.subr.mxu0 0.0
    %3240 = vmatpush1.msra.mxu0 0.0
    %3241 = vmatprep.subr.mxu0 0.0
    %3242 = vmatpush1.msra.mxu0 0.0
    %3243 = vmatprep.subr.mxu0 0.0
    %3244 = vmatpush1.msra.mxu0 0.0
    %3245 = vmatprep.subr.mxu0 0.0
    %3246 = vmatpush1.msra.mxu0 0.0
    %3247 = vmatprep.subr.mxu0 0.0
    %3248 = vmatpush1.msra.mxu0 0.0
    %3249 = vmatprep.subr.mxu0 0.0
    %3250 = vmatpush1.msra.mxu0 0.0
    %3251 = vmatprep.subr.mxu0 0.0
    %3252 = vmatpush1.msra.mxu0 0.0
    %3253 = vmatprep.subr.mxu0 0.0
    %3254 = vmatpush1.msra.mxu0 0.0
    %3255 = vmatprep.subr.mxu0 0.0
    %3256 = vmatpush1.msra.mxu0 0.0
    %3257 = vmatprep.subr.mxu0 0.0
    %3258 = vmatpush1.msra.mxu0 0.0
    %3259 = vmatprep.subr.mxu0 0.0
    %3260 = vmatpush1.msra.mxu0 0.0
    %3261 = vmatprep.subr.mxu0 0.0
    %3262 = vmatpush1.msra.mxu0 0.0
    %3263 = vmatprep.mubr.f32.mxu0 0.0
    %3264 = vmatmul.mubr.f32.gmra.mrb[0].mxu0 %v3125
    %v3265 = vpop.f32.mrb[0].mxu0
    %v3266 = vadd.f32 0.0, %v3265
    %v3267 = vpop.f32.mrb[0].mxu0
    %v3268 = vadd.f32 0.0, %v3267
    %3269 = vdwg.mxu0
    %v3274 = vrot.slane %v3195, 6
    %v3275 = vrot.slane %v3197, 6
    %v3276 = vrot.slane %v3266, 6
    %v3277 = vrot.slane %v3268, 6
    %v3282 = vadd.f32 %v2061, %v3274
    %v3283 = vadd.f32 %v2063, %v3275
    %v3284 = vadd.f32 %v2138, %v3276
    %v3285 = vadd.f32 %v2140, %v3277
    %v3286 = vxor.u32 %v3282, 2147483648
    %v3287 = vmul.f32 %v3286, 1.442695
    %v3288 = vpow.pop %v3287
    %v3289 = vadd.f32 %v3288, 1.0
    %v3290 = vrcp.pop %v3289
    %v3291 = vmul.f32 1.0, %v3290
    %v3292 = vxor.u32 %v3283, 2147483648
    %v3293 = vmul.f32 %v3292, 1.442695
    %v3294 = vpow.pop %v3293
    %v3295 = vadd.f32 %v3294, 1.0
    %v3296 = vrcp.pop %v3295
    %v3297 = vmul.f32 1.0, %v3296
    %v3298 = vtanh.pop %v3284
    %v3299 = vxor.u32 %v3285, 2147483648
    %v3300 = vmul.f32 %v3299, 1.442695
    %v3301 = vpow.pop %v3300
    %v3302 = vadd.f32 %v3301, 1.0
    %v3303 = vrcp.pop %v3302
    %v3304 = vmul.f32 1.0, %v3303
    %v3306 = vrot.slane %v3123, 6
    %v3308 = vmul.f32 %v3297, %v3306
    %v3309 = vmul.f32 %v3291, %v3298
    %v3310 = vadd.f32 %v3308, %v3309
    %v3311 = vtanh.pop %v3310
    %v3312 = vmul.f32 %v3304, %v3311
    %s3313 = scalar_lea.vmem [#allocation2], 10
    %3314 = vst [vmem:[%s3313 - $0x2] sm:$0xc] %v3312
    %v3316 = vrot.slane %v3312, 2
    %3318 = vmatprep.subr.mxu0 %v2143
    %3319 = vmatpush1.msra.mxu0 %v2142
    %3320 = vmatprep.subr.mxu0 %v2147
    %3321 = vmatpush1.msra.mxu0 %v2146
    %3322 = vmatprep.subr.mxu0 %v2151
    %3323 = vmatpush1.msra.mxu0 %v2150
    %3324 = vmatprep.subr.mxu0 %v2155
    %3325 = vmatpush1.msra.mxu0 %v2154
    %3326 = vmatprep.subr.mxu0 %v2159
    %3327 = vmatpush1.msra.mxu0 %v2158
    %3328 = vmatprep.subr.mxu0 %v2163
    %3329 = vmatpush1.msra.mxu0 %v2162
    %3330 = vmatprep.subr.mxu0 %v2167
    %3331 = vmatpush1.msra.mxu0 %v2166
    %3332 = vmatprep.subr.mxu0 %v2171
    %3333 = vmatpush1.msra.mxu0 %v2170
    %3334 = vmatprep.subr.mxu0 %v2175
    %3335 = vmatpush1.msra.mxu0 %v2174
    %3336 = vmatprep.subr.mxu0 %v2179
    %3337 = vmatpush1.msra.mxu0 %v2178
    %3338 = vmatprep.subr.mxu0 %v2183
    %3339 = vmatpush1.msra.mxu0 %v2182
    %3340 = vmatprep.subr.mxu0 %v2187
    %3341 = vmatpush1.msra.mxu0 %v2186
    %3342 = vmatprep.subr.mxu0 %v2191
    %3343 = vmatpush1.msra.mxu0 %v2190
    %3344 = vmatprep.subr.mxu0 %v2195
    %3345 = vmatpush1.msra.mxu0 %v2194
    %3346 = vmatprep.subr.mxu0 %v2199
    %3347 = vmatpush1.msra.mxu0 %v2198
    %3348 = vmatprep.subr.mxu0 %v2203
    %3349 = vmatpush1.msra.mxu0 %v2202
    %3350 = vmatprep.subr.mxu0 0.0
    %3351 = vmatpush1.msra.mxu0 0.0
    %3352 = vmatprep.subr.mxu0 0.0
    %3353 = vmatpush1.msra.mxu0 0.0
    %3354 = vmatprep.subr.mxu0 0.0
    %3355 = vmatpush1.msra.mxu0 0.0
    %3356 = vmatprep.subr.mxu0 0.0
    %3357 = vmatpush1.msra.mxu0 0.0
    %3358 = vmatprep.subr.mxu0 0.0
    %3359 = vmatpush1.msra.mxu0 0.0
    %3360 = vmatprep.subr.mxu0 0.0
    %3361 = vmatpush1.msra.mxu0 0.0
    %3362 = vmatprep.subr.mxu0 0.0
    %3363 = vmatpush1.msra.mxu0 0.0
    %3364 = vmatprep.subr.mxu0 0.0
    %3365 = vmatpush1.msra.mxu0 0.0
    %3366 = vmatprep.subr.mxu0 0.0
    %3367 = vmatpush1.msra.mxu0 0.0
    %3368 = vmatprep.subr.mxu0 0.0
    %3369 = vmatpush1.msra.mxu0 0.0
    %3370 = vmatprep.subr.mxu0 0.0
    %3371 = vmatpush1.msra.mxu0 0.0
    %3372 = vmatprep.subr.mxu0 0.0
    %3373 = vmatpush1.msra.mxu0 0.0
    %3374 = vmatprep.subr.mxu0 0.0
    %3375 = vmatpush1.msra.mxu0 0.0
    %3376 = vmatprep.subr.mxu0 0.0
    %3377 = vmatpush1.msra.mxu0 0.0
    %3378 = vmatprep.subr.mxu0 0.0
    %3379 = vmatpush1.msra.mxu0 0.0
    %3380 = vmatprep.subr.mxu0 0.0
    %3381 = vmatpush1.msra.mxu0 0.0
    %3382 = vmatprep.mubr.f32.mxu0 0.0
    %3383 = vmatmul.mubr.f32.gmra.mrb[0].mxu0 %v3316
    %v3384 = vpop.f32.mrb[0].mxu0
    %v3385 = vadd.f32 0.0, %v3384
    %v3386 = vpop.f32.mrb[0].mxu0
    %v3387 = vadd.f32 0.0, %v3386
    %3388 = vdwg.mxu0
    %3389 = vmatprep.subr.mxu0 %v2145
    %3390 = vmatpush1.msra.mxu0 %v2144
    %3391 = vmatprep.subr.mxu0 %v2149
    %3392 = vmatpush1.msra.mxu0 %v2148
    %3393 = vmatprep.subr.mxu0 %v2153
    %3394 = vmatpush1.msra.mxu0 %v2152
    %3395 = vmatprep.subr.mxu0 %v2157
    %3396 = vmatpush1.msra.mxu0 %v2156
    %3397 = vmatprep.subr.mxu0 %v2161
    %3398 = vmatpush1.msra.mxu0 %v2160
    %3399 = vmatprep.subr.mxu0 %v2165
    %3400 = vmatpush1.msra.mxu0 %v2164
    %3401 = vmatprep.subr.mxu0 %v2169
    %3402 = vmatpush1.msra.mxu0 %v2168
    %3403 = vmatprep.subr.mxu0 %v2173
    %3404 = vmatpush1.msra.mxu0 %v2172
    %3405 = vmatprep.subr.mxu0 %v2177
    %3406 = vmatpush1.msra.mxu0 %v2176
    %3407 = vmatprep.subr.mxu0 %v2181
    %3408 = vmatpush1.msra.mxu0 %v2180
    %3409 = vmatprep.subr.mxu0 %v2185
    %3410 = vmatpush1.msra.mxu0 %v2184
    %3411 = vmatprep.subr.mxu0 %v2189
    %3412 = vmatpush1.msra.mxu0 %v2188
    %3413 = vmatprep.subr.mxu0 %v2193
    %3414 = vmatpush1.msra.mxu0 %v2192
    %3415 = vmatprep.subr.mxu0 %v2197
    %3416 = vmatpush1.msra.mxu0 %v2196
    %3417 = vmatprep.subr.mxu0 %v2201
    %3418 = vmatpush1.msra.mxu0 %v2200
    %3419 = vmatprep.subr.mxu0 %v2205
    %3420 = vmatpush1.msra.mxu0 %v2204
    %3421 = vmatprep.subr.mxu0 0.0
    %3422 = vmatpush1.msra.mxu0 0.0
    %3423 = vmatprep.subr.mxu0 0.0
    %3424 = vmatpush1.msra.mxu0 0.0
    %3425 = vmatprep.subr.mxu0 0.0
    %3426 = vmatpush1.msra.mxu0 0.0
    %3427 = vmatprep.subr.mxu0 0.0
    %3428 = vmatpush1.msra.mxu0 0.0
    %3429 = vmatprep.subr.mxu0 0.0
    %3430 = vmatpush1.msra.mxu0 0.0
    %3431 = vmatprep.subr.mxu0 0.0
    %3432 = vmatpush1.msra.mxu0 0.0
    %3433 = vmatprep.subr.mxu0 0.0
    %3434 = vmatpush1.msra.mxu0 0.0
    %3435 = vmatprep.subr.mxu0 0.0
    %3436 = vmatpush1.msra.mxu0 0.0
    %3437 = vmatprep.subr.mxu0 0.0
    %3438 = vmatpush1.msra.mxu0 0.0
    %3439 = vmatprep.subr.mxu0 0.0
    %3440 = vmatpush1.msra.mxu0 0.0
    %3441 = vmatprep.subr.mxu0 0.0
    %3442 = vmatpush1.msra.mxu0 0.0
    %3443 = vmatprep.subr.mxu0 0.0
    %3444 = vmatpush1.msra.mxu0 0.0
    %3445 = vmatprep.subr.mxu0 0.0
    %3446 = vmatpush1.msra.mxu0 0.0
    %3447 = vmatprep.subr.mxu0 0.0
    %3448 = vmatpush1.msra.mxu0 0.0
    %3449 = vmatprep.subr.mxu0 0.0
    %3450 = vmatpush1.msra.mxu0 0.0
    %3451 = vmatprep.subr.mxu0 0.0
    %3452 = vmatpush1.msra.mxu0 0.0
    %3453 = vmatprep.mubr.f32.mxu0 0.0
    %3454 = vmatmul.mubr.f32.gmra.mrb[0].mxu0 %v3316
    %v3455 = vpop.f32.mrb[0].mxu0
    %v3456 = vadd.f32 0.0, %v3455
    %v3457 = vpop.f32.mrb[0].mxu0
    %v3458 = vadd.f32 0.0, %v3457
    %3459 = vdwg.mxu0
    %v3464 = vrot.slane %v3385, 4
    %v3465 = vrot.slane %v3387, 4
    %v3466 = vrot.slane %v3456, 4
    %v3467 = vrot.slane %v3458, 4
    %v3472 = vadd.f32 %v2061, %v3464
    %v3473 = vadd.f32 %v2063, %v3465
    %v3474 = vadd.f32 %v2138, %v3466
    %v3475 = vadd.f32 %v2140, %v3467
    %v3476 = vxor.u32 %v3472, 2147483648
    %v3477 = vmul.f32 %v3476, 1.442695
    %v3478 = vpow.pop %v3477
    %v3479 = vadd.f32 %v3478, 1.0
    %v3480 = vrcp.pop %v3479
    %v3481 = vmul.f32 1.0, %v3480
    %v3482 = vxor.u32 %v3473, 2147483648
    %v3483 = vmul.f32 %v3482, 1.442695
    %v3484 = vpow.pop %v3483
    %v3485 = vadd.f32 %v3484, 1.0
    %v3486 = vrcp.pop %v3485
    %v3487 = vmul.f32 1.0, %v3486
    %v3488 = vtanh.pop %v3474
    %v3489 = vxor.u32 %v3475, 2147483648
    %v3490 = vmul.f32 %v3489, 1.442695
    %v3491 = vpow.pop %v3490
    %v3492 = vadd.f32 %v3491, 1.0
    %v3493 = vrcp.pop %v3492
    %v3494 = vmul.f32 1.0, %v3493
    %v3496 = vrot.slane %v3310, 6
    %v3498 = vmul.f32 %v3487, %v3496
    %v3499 = vmul.f32 %v3481, %v3488
    %v3500 = vadd.f32 %v3498, %v3499
    %v3501 = vtanh.pop %v3500
    %v3502 = vmul.f32 %v3494, %v3501
    %s3503 = scalar_lea.vmem [#allocation2], 12
    %3504 = vst [vmem:[%s3503 - $0x4] sm:$0x30] %v3502
    %v3506 = vrot.slane %v3502, 4
    %3508 = vmatprep.subr.mxu0 %v2143
    %3509 = vmatpush1.msra.mxu0 %v2142
    %3510 = vmatprep.subr.mxu0 %v2147
    %3511 = vmatpush1.msra.mxu0 %v2146
    %3512 = vmatprep.subr.mxu0 %v2151
    %3513 = vmatpush1.msra.mxu0 %v2150
    %3514 = vmatprep.subr.mxu0 %v2155
    %3515 = vmatpush1.msra.mxu0 %v2154
    %3516 = vmatprep.subr.mxu0 %v2159
    %3517 = vmatpush1.msra.mxu0 %v2158
    %3518 = vmatprep.subr.mxu0 %v2163
    %3519 = vmatpush1.msra.mxu0 %v2162
    %3520 = vmatprep.subr.mxu0 %v2167
    %3521 = vmatpush1.msra.mxu0 %v2166
    %3522 = vmatprep.subr.mxu0 %v2171
    %3523 = vmatpush1.msra.mxu0 %v2170
    %3524 = vmatprep.subr.mxu0 %v2175
    %3525 = vmatpush1.msra.mxu0 %v2174
    %3526 = vmatprep.subr.mxu0 %v2179
    %3527 = vmatpush1.msra.mxu0 %v2178
    %3528 = vmatprep.subr.mxu0 %v2183
    %3529 = vmatpush1.msra.mxu0 %v2182
    %3530 = vmatprep.subr.mxu0 %v2187
    %3531 = vmatpush1.msra.mxu0 %v2186
    %3532 = vmatprep.subr.mxu0 %v2191
    %3533 = vmatpush1.msra.mxu0 %v2190
    %3534 = vmatprep.subr.mxu0 %v2195
    %3535 = vmatpush1.msra.mxu0 %v2194
    %3536 = vmatprep.subr.mxu0 %v2199
    %3537 = vmatpush1.msra.mxu0 %v2198
    %3538 = vmatprep.subr.mxu0 %v2203
    %3539 = vmatpush1.msra.mxu0 %v2202
    %3540 = vmatprep.subr.mxu0 0.0
    %3541 = vmatpush1.msra.mxu0 0.0
    %3542 = vmatprep.subr.mxu0 0.0
    %3543 = vmatpush1.msra.mxu0 0.0
    %3544 = vmatprep.subr.mxu0 0.0
    %3545 = vmatpush1.msra.mxu0 0.0
    %3546 = vmatprep.subr.mxu0 0.0
    %3547 = vmatpush1.msra.mxu0 0.0
    %3548 = vmatprep.subr.mxu0 0.0
    %3549 = vmatpush1.msra.mxu0 0.0
    %3550 = vmatprep.subr.mxu0 0.0
    %3551 = vmatpush1.msra.mxu0 0.0
    %3552 = vmatprep.subr.mxu0 0.0
    %3553 = vmatpush1.msra.mxu0 0.0
    %3554 = vmatprep.subr.mxu0 0.0
    %3555 = vmatpush1.msra.mxu0 0.0
    %3556 = vmatprep.subr.mxu0 0.0
    %3557 = vmatpush1.msra.mxu0 0.0
    %3558 = vmatprep.subr.mxu0 0.0
    %3559 = vmatpush1.msra.mxu0 0.0
    %3560 = vmatprep.subr.mxu0 0.0
    %3561 = vmatpush1.msra.mxu0 0.0
    %3562 = vmatprep.subr.mxu0 0.0
    %3563 = vmatpush1.msra.mxu0 0.0
    %3564 = vmatprep.subr.mxu0 0.0
    %3565 = vmatpush1.msra.mxu0 0.0
    %3566 = vmatprep.subr.mxu0 0.0
    %3567 = vmatpush1.msra.mxu0 0.0
    %3568 = vmatprep.subr.mxu0 0.0
    %3569 = vmatpush1.msra.mxu0 0.0
    %3570 = vmatprep.subr.mxu0 0.0
    %3571 = vmatpush1.msra.mxu0 0.0
    %3572 = vmatprep.mubr.f32.mxu0 0.0
    %3573 = vmatmul.mubr.f32.gmra.mrb[0].mxu0 %v3506
    %v3574 = vpop.f32.mrb[0].mxu0
    %v3575 = vadd.f32 0.0, %v3574
    %v3576 = vpop.f32.mrb[0].mxu0
    %v3577 = vadd.f32 0.0, %v3576
    %3578 = vdwg.mxu0
    %3579 = vmatprep.subr.mxu0 %v2145
    %3580 = vmatpush1.msra.mxu0 %v2144
    %3581 = vmatprep.subr.mxu0 %v2149
    %3582 = vmatpush1.msra.mxu0 %v2148
    %3583 = vmatprep.subr.mxu0 %v2153
    %3584 = vmatpush1.msra.mxu0 %v2152
    %3585 = vmatprep.subr.mxu0 %v2157
    %3586 = vmatpush1.msra.mxu0 %v2156
    %3587 = vmatprep.subr.mxu0 %v2161
    %3588 = vmatpush1.msra.mxu0 %v2160
    %3589 = vmatprep.subr.mxu0 %v2165
    %3590 = vmatpush1.msra.mxu0 %v2164
    %3591 = vmatprep.subr.mxu0 %v2169
    %3592 = vmatpush1.msra.mxu0 %v2168
    %3593 = vmatprep.subr.mxu0 %v2173
    %3594 = vmatpush1.msra.mxu0 %v2172
    %3595 = vmatprep.subr.mxu0 %v2177
    %3596 = vmatpush1.msra.mxu0 %v2176
    %3597 = vmatprep.subr.mxu0 %v2181
    %3598 = vmatpush1.msra.mxu0 %v2180
    %3599 = vmatprep.subr.mxu0 %v2185
    %3600 = vmatpush1.msra.mxu0 %v2184
    %3601 = vmatprep.subr.mxu0 %v2189
    %3602 = vmatpush1.msra.mxu0 %v2188
    %3603 = vmatprep.subr.mxu0 %v2193
    %3604 = vmatpush1.msra.mxu0 %v2192
    %3605 = vmatprep.subr.mxu0 %v2197
    %3606 = vmatpush1.msra.mxu0 %v2196
    %3607 = vmatprep.subr.mxu0 %v2201
    %3608 = vmatpush1.msra.mxu0 %v2200
    %3609 = vmatprep.subr.mxu0 %v2205
    %3610 = vmatpush1.msra.mxu0 %v2204
    %3611 = vmatprep.subr.mxu0 0.0
    %3612 = vmatpush1.msra.mxu0 0.0
    %3613 = vmatprep.subr.mxu0 0.0
    %3614 = vmatpush1.msra.mxu0 0.0
    %3615 = vmatprep.subr.mxu0 0.0
    %3616 = vmatpush1.msra.mxu0 0.0
    %3617 = vmatprep.subr.mxu0 0.0
    %3618 = vmatpush1.msra.mxu0 0.0
    %3619 = vmatprep.subr.mxu0 0.0
    %3620 = vmatpush1.msra.mxu0 0.0
    %3621 = vmatprep.subr.mxu0 0.0
    %3622 = vmatpush1.msra.mxu0 0.0
    %3623 = vmatprep.subr.mxu0 0.0
    %3624 = vmatpush1.msra.mxu0 0.0
    %3625 = vmatprep.subr.mxu0 0.0
    %3626 = vmatpush1.msra.mxu0 0.0
    %3627 = vmatprep.subr.mxu0 0.0
    %3628 = vmatpush1.msra.mxu0 0.0
    %3629 = vmatprep.subr.mxu0 0.0
    %3630 = vmatpush1.msra.mxu0 0.0
    %3631 = vmatprep.subr.mxu0 0.0
    %3632 = vmatpush1.msra.mxu0 0.0
    %3633 = vmatprep.subr.mxu0 0.0
    %3634 = vmatpush1.msra.mxu0 0.0
    %3635 = vmatprep.subr.mxu0 0.0
    %3636 = vmatpush1.msra.mxu0 0.0
    %3637 = vmatprep.subr.mxu0 0.0
    %3638 = vmatpush1.msra.mxu0 0.0
    %3639 = vmatprep.subr.mxu0 0.0
    %3640 = vmatpush1.msra.mxu0 0.0
    %3641 = vmatprep.subr.mxu0 0.0
    %3642 = vmatpush1.msra.mxu0 0.0
    %3643 = vmatprep.mubr.f32.mxu0 0.0
    %3644 = vmatmul.mubr.f32.gmra.mrb[0].mxu0 %v3506
    %v3645 = vpop.f32.mrb[0].mxu0
    %v3646 = vadd.f32 0.0, %v3645
    %v3647 = vpop.f32.mrb[0].mxu0
    %v3648 = vadd.f32 0.0, %v3647
    %3649 = vdwg.mxu0
    %v3654 = vrot.slane %v3575, 2
    %v3655 = vrot.slane %v3577, 2
    %v3656 = vrot.slane %v3646, 2
    %v3657 = vrot.slane %v3648, 2
    %v3662 = vadd.f32 %v2061, %v3654
    %v3663 = vadd.f32 %v2063, %v3655
    %v3664 = vadd.f32 %v2138, %v3656
    %v3665 = vadd.f32 %v2140, %v3657
    %v3666 = vxor.u32 %v3662, 2147483648
    %v3667 = vmul.f32 %v3666, 1.442695
    %v3668 = vpow.pop %v3667
    %v3669 = vadd.f32 %v3668, 1.0
    %v3670 = vrcp.pop %v3669
    %v3671 = vmul.f32 1.0, %v3670
    %v3672 = vxor.u32 %v3663, 2147483648
    %v3673 = vmul.f32 %v3672, 1.442695
    %v3674 = vpow.pop %v3673
    %v3675 = vadd.f32 %v3674, 1.0
    %v3676 = vrcp.pop %v3675
    %v3677 = vmul.f32 1.0, %v3676
    %v3678 = vtanh.pop %v3664
    %v3679 = vxor.u32 %v3665, 2147483648
    %v3680 = vmul.f32 %v3679, 1.442695
    %v3681 = vpow.pop %v3680
    %v3682 = vadd.f32 %v3681, 1.0
    %v3683 = vrcp.pop %v3682
    %v3684 = vmul.f32 1.0, %v3683
    %v3686 = vrot.slane %v3500, 6
    %v3688 = vmul.f32 %v3677, %v3686
    %v3689 = vmul.f32 %v3671, %v3678
    %v3690 = vadd.f32 %v3688, %v3689
    %v3691 = vtanh.pop %v3690
    %v3692 = vmul.f32 %v3684, %v3691
    %s3693 = scalar_lea.vmem [#allocation2], 14
    %3694 = vst [vmem:[%s3693 - $0x6] sm:$0xc0] %v3692
    %v3695 = vld [vmem:[%s2] sm:$0xff]
    %v3696 = vld [vmem:[%s2 + $0x8] sm:$0xff]
    %v3697 = vld [vmem:[#allocation10] sm:$0xff]
    %v3698 = vld [vmem:[#allocation10 + $0x8] sm:$0xff]
    %v3699 = vld [vmem:[#allocation10 + $0x10] sm:$0xff]
    %v3700 = vld [vmem:[#allocation10 + $0x18] sm:$0xff]
    %v3701 = vld [vmem:[#allocation10 + $0x20] sm:$0xff]
    %v3702 = vld [vmem:[#allocation10 + $0x28] sm:$0xff]
    %v3703 = vld [vmem:[#allocation10 + $0x30] sm:$0xff]
    %v3704 = vld [vmem:[#allocation10 + $0x38] sm:$0xff]
    %v3705 = vld [vmem:[#allocation10 + $0x40] sm:$0xff]
    %v3706 = vld [vmem:[#allocation10 + $0x48] sm:$0xff]
    %v3707 = vld [vmem:[#allocation10 + $0x50] sm:$0xff]
    %v3708 = vld [vmem:[#allocation10 + $0x58] sm:$0xff]
    %v3709 = vld [vmem:[#allocation10 + $0x60] sm:$0xff]
    %v3710 = vld [vmem:[#allocation10 + $0x68] sm:$0xff]
    %v3711 = vld [vmem:[#allocation10 + $0x70] sm:$0xff]
    %v3712 = vld [vmem:[#allocation10 + $0x78] sm:$0xff]
    %v3713 = vld [vmem:[#allocation10 + $0x80] sm:$0xff]
    %v3714 = vld [vmem:[#allocation10 + $0x88] sm:$0xff]
    %v3715 = vld [vmem:[#allocation10 + $0x90] sm:$0xff]
    %v3716 = vld [vmem:[#allocation10 + $0x98] sm:$0xff]
    %v3717 = vld [vmem:[#allocation10 + $0xa0] sm:$0xff]
    %v3718 = vld [vmem:[#allocation10 + $0xa8] sm:$0xff]
    %v3719 = vld [vmem:[#allocation10 + $0xb0] sm:$0xff]
    %v3720 = vld [vmem:[#allocation10 + $0xb8] sm:$0xff]
    %v3721 = vld [vmem:[#allocation10 + $0xc0] sm:$0xff]
    %v3722 = vld [vmem:[#allocation10 + $0xc8] sm:$0xff]
    %v3723 = vld [vmem:[#allocation10 + $0xd0] sm:$0xff]
    %v3724 = vld [vmem:[#allocation10 + $0xd8] sm:$0xff]
    %v3725 = vld [vmem:[#allocation10 + $0xe0] sm:$0xff]
    %v3726 = vld [vmem:[#allocation10 + $0xe8] sm:$0xff]
    %v3727 = vld [vmem:[#allocation10 + $0xf0] sm:$0xff]
    %v3728 = vld [vmem:[#allocation10 + $0xf8] sm:$0xff]
    %v3729 = vld [vmem:[#allocation10 + $0x100] sm:$0xff]
    %v3730 = vld [vmem:[#allocation10 + $0x108] sm:$0xff]
    %v3731 = vld [vmem:[#allocation10 + $0x110] sm:$0xff]
    %v3732 = vld [vmem:[#allocation10 + $0x118] sm:$0xff]
    %v3733 = vld [vmem:[#allocation10 + $0x120] sm:$0xff]
    %v3734 = vld [vmem:[#allocation10 + $0x128] sm:$0xff]
    %v3735 = vld [vmem:[#allocation10 + $0x130] sm:$0xff]
    %v3736 = vld [vmem:[#allocation10 + $0x138] sm:$0xff]
    %v3737 = vld [vmem:[#allocation10 + $0x140] sm:$0xff]
    %v3738 = vld [vmem:[#allocation10 + $0x148] sm:$0xff]
    %v3739 = vld [vmem:[#allocation10 + $0x150] sm:$0xff]
    %v3740 = vld [vmem:[#allocation10 + $0x158] sm:$0xff]
    %v3741 = vld [vmem:[#allocation10 + $0x160] sm:$0xff]
    %v3742 = vld [vmem:[#allocation10 + $0x168] sm:$0xff]
    %v3743 = vld [vmem:[#allocation10 + $0x170] sm:$0xff]
    %v3744 = vld [vmem:[#allocation10 + $0x178] sm:$0xff]
    %v3745 = vld [vmem:[#allocation10 + $0x180] sm:$0xff]
    %v3746 = vld [vmem:[#allocation10 + $0x188] sm:$0xff]
    %v3747 = vld [vmem:[#allocation10 + $0x190] sm:$0xff]
    %v3748 = vld [vmem:[#allocation10 + $0x198] sm:$0xff]
    %v3749 = vld [vmem:[#allocation10 + $0x1a0] sm:$0xff]
    %v3750 = vld [vmem:[#allocation10 + $0x1a8] sm:$0xff]
    %v3751 = vld [vmem:[#allocation10 + $0x1b0] sm:$0xff]
    %v3752 = vld [vmem:[#allocation10 + $0x1b8] sm:$0xff]
    %v3753 = vld [vmem:[#allocation10 + $0x1c0] sm:$0xff]
    %v3754 = vld [vmem:[#allocation10 + $0x1c8] sm:$0xff]
    %v3755 = vld [vmem:[#allocation10 + $0x1d0] sm:$0xff]
    %v3756 = vld [vmem:[#allocation10 + $0x1d8] sm:$0xff]
    %v3757 = vld [vmem:[#allocation10 + $0x1e0] sm:$0xff]
    %v3758 = vld [vmem:[#allocation10 + $0x1e8] sm:$0xff]
    %v3759 = vld [vmem:[#allocation10 + $0x1f0] sm:$0xff]
    %v3760 = vld [vmem:[#allocation10 + $0x1f8] sm:$0xff]
    %v3761 = vld [vmem:[%s11] sm:$0xf]
    %v3763 = vlaneseq
    %v3764 = vshrl.u32 %v3763, 7
    %v3765 = vsub.s32 0, %v3764
    %v3766 = vrot.slane %v3761, %v3765
    %v3767 = vlaneseq
    %v3768 = vshrl.u32 %v3767, 7
    %v3769 = vsub.s32 1, %v3768
    %v3770 = vrot.slane %v3761, %v3769
    %v3771 = vlaneseq
    %v3772 = vshrl.u32 %v3771, 7
    %v3773 = vsub.s32 2, %v3772
    %v3774 = vrot.slane %v3761, %v3773
    %v3775 = vlaneseq
    %v3776 = vshrl.u32 %v3775, 7
    %v3777 = vsub.s32 3, %v3776
    %v3778 = vrot.slane %v3761, %v3777
    %3783 = vmatprep.subr.mxu0 %v3698
    %3784 = vmatpush1.msra.mxu0 %v3697
    %3785 = vmatprep.subr.mxu0 %v3702
    %3786 = vmatpush1.msra.mxu0 %v3701
    %3787 = vmatprep.subr.mxu0 %v3706
    %3788 = vmatpush1.msra.mxu0 %v3705
    %3789 = vmatprep.subr.mxu0 %v3710
    %3790 = vmatpush1.msra.mxu0 %v3709
    %3791 = vmatprep.subr.mxu0 %v3714
    %3792 = vmatpush1.msra.mxu0 %v3713
    %3793 = vmatprep.subr.mxu0 %v3718
    %3794 = vmatpush1.msra.mxu0 %v3717
    %3795 = vmatprep.subr.mxu0 %v3722
    %3796 = vmatpush1.msra.mxu0 %v3721
    %3797 = vmatprep.subr.mxu0 %v3726
    %3798 = vmatpush1.msra.mxu0 %v3725
    %3799 = vmatprep.subr.mxu0 %v3730
    %3800 = vmatpush1.msra.mxu0 %v3729
    %3801 = vmatprep.subr.mxu0 %v3734
    %3802 = vmatpush1.msra.mxu0 %v3733
    %3803 = vmatprep.subr.mxu0 %v3738
    %3804 = vmatpush1.msra.mxu0 %v3737
    %3805 = vmatprep.subr.mxu0 %v3742
    %3806 = vmatpush1.msra.mxu0 %v3741
    %3807 = vmatprep.subr.mxu0 %v3746
    %3808 = vmatpush1.msra.mxu0 %v3745
    %3809 = vmatprep.subr.mxu0 %v3750
    %3810 = vmatpush1.msra.mxu0 %v3749
    %3811 = vmatprep.subr.mxu0 %v3754
    %3812 = vmatpush1.msra.mxu0 %v3753
    %3813 = vmatprep.subr.mxu0 %v3758
    %3814 = vmatpush1.msra.mxu0 %v3757
    %3815 = vmatprep.subr.mxu0 0.0
    %3816 = vmatpush1.msra.mxu0 0.0
    %3817 = vmatprep.subr.mxu0 0.0
    %3818 = vmatpush1.msra.mxu0 0.0
    %3819 = vmatprep.subr.mxu0 0.0
    %3820 = vmatpush1.msra.mxu0 0.0
    %3821 = vmatprep.subr.mxu0 0.0
    %3822 = vmatpush1.msra.mxu0 0.0
    %3823 = vmatprep.subr.mxu0 0.0
    %3824 = vmatpush1.msra.mxu0 0.0
    %3825 = vmatprep.subr.mxu0 0.0
    %3826 = vmatpush1.msra.mxu0 0.0
    %3827 = vmatprep.subr.mxu0 0.0
    %3828 = vmatpush1.msra.mxu0 0.0
    %3829 = vmatprep.subr.mxu0 0.0
    %3830 = vmatpush1.msra.mxu0 0.0
    %3831 = vmatprep.subr.mxu0 0.0
    %3832 = vmatpush1.msra.mxu0 0.0
    %3833 = vmatprep.subr.mxu0 0.0
    %3834 = vmatpush1.msra.mxu0 0.0
    %3835 = vmatprep.subr.mxu0 0.0
    %3836 = vmatpush1.msra.mxu0 0.0
    %3837 = vmatprep.subr.mxu0 0.0
    %3838 = vmatpush1.msra.mxu0 0.0
    %3839 = vmatprep.subr.mxu0 0.0
    %3840 = vmatpush1.msra.mxu0 0.0
    %3841 = vmatprep.subr.mxu0 0.0
    %3842 = vmatpush1.msra.mxu0 0.0
    %3843 = vmatprep.subr.mxu0 0.0
    %3844 = vmatpush1.msra.mxu0 0.0
    %3845 = vmatprep.subr.mxu0 0.0
    %3846 = vmatpush1.msra.mxu0 0.0
    %3847 = vmatprep.mubr.f32.mxu0 0.0
    %3848 = vmatmul.mubr.f32.gmra.mrb[0].mxu0 %v3695
    %v3849 = vpop.f32.mrb[0].mxu0
    %v3850 = vadd.f32 %v3766, %v3849
    %v3851 = vpop.f32.mrb[0].mxu0
    %v3852 = vadd.f32 %v3770, %v3851
    %3853 = vmatprep.mubr.f32.mxu0 0.0
    %3854 = vmatmul.mubr.f32.gmra.mrb[0].mxu0 %v3696
    %v3855 = vpop.f32.mrb[0].mxu0
    %v3856 = vadd.f32 %v3766, %v3855
    %v3857 = vpop.f32.mrb[0].mxu0
    %v3858 = vadd.f32 %v3770, %v3857
    %3859 = vdwg.mxu0
    %3860 = vmatprep.subr.mxu0 %v3700
    %3861 = vmatpush1.msra.mxu0 %v3699
    %3862 = vmatprep.subr.mxu0 %v3704
    %3863 = vmatpush1.msra.mxu0 %v3703
    %3864 = vmatprep.subr.mxu0 %v3708
    %3865 = vmatpush1.msra.mxu0 %v3707
    %3866 = vmatprep.subr.mxu0 %v3712
    %3867 = vmatpush1.msra.mxu0 %v3711
    %3868 = vmatprep.subr.mxu0 %v3716
    %3869 = vmatpush1.msra.mxu0 %v3715
    %3870 = vmatprep.subr.mxu0 %v3720
    %3871 = vmatpush1.msra.mxu0 %v3719
    %3872 = vmatprep.subr.mxu0 %v3724
    %3873 = vmatpush1.msra.mxu0 %v3723
    %3874 = vmatprep.subr.mxu0 %v3728
    %3875 = vmatpush1.msra.mxu0 %v3727
    %3876 = vmatprep.subr.mxu0 %v3732
    %3877 = vmatpush1.msra.mxu0 %v3731
    %3878 = vmatprep.subr.mxu0 %v3736
    %3879 = vmatpush1.msra.mxu0 %v3735
    %3880 = vmatprep.subr.mxu0 %v3740
    %3881 = vmatpush1.msra.mxu0 %v3739
    %3882 = vmatprep.subr.mxu0 %v3744
    %3883 = vmatpush1.msra.mxu0 %v3743
    %3884 = vmatprep.subr.mxu0 %v3748
    %3885 = vmatpush1.msra.mxu0 %v3747
    %3886 = vmatprep.subr.mxu0 %v3752
    %3887 = vmatpush1.msra.mxu0 %v3751
    %3888 = vmatprep.subr.mxu0 %v3756
    %3889 = vmatpush1.msra.mxu0 %v3755
    %3890 = vmatprep.subr.mxu0 %v3760
    %3891 = vmatpush1.msra.mxu0 %v3759
    %3892 = vmatprep.subr.mxu0 0.0
    %3893 = vmatpush1.msra.mxu0 0.0
    %3894 = vmatprep.subr.mxu0 0.0
    %3895 = vmatpush1.msra.mxu0 0.0
    %3896 = vmatprep.subr.mxu0 0.0
    %3897 = vmatpush1.msra.mxu0 0.0
    %3898 = vmatprep.subr.mxu0 0.0
    %3899 = vmatpush1.msra.mxu0 0.0
    %3900 = vmatprep.subr.mxu0 0.0
    %3901 = vmatpush1.msra.mxu0 0.0
    %3902 = vmatprep.subr.mxu0 0.0
    %3903 = vmatpush1.msra.mxu0 0.0
    %3904 = vmatprep.subr.mxu0 0.0
    %3905 = vmatpush1.msra.mxu0 0.0
    %3906 = vmatprep.subr.mxu0 0.0
    %3907 = vmatpush1.msra.mxu0 0.0
    %3908 = vmatprep.subr.mxu0 0.0
    %3909 = vmatpush1.msra.mxu0 0.0
    %3910 = vmatprep.subr.mxu0 0.0
    %3911 = vmatpush1.msra.mxu0 0.0
    %3912 = vmatprep.subr.mxu0 0.0
    %3913 = vmatpush1.msra.mxu0 0.0
    %3914 = vmatprep.subr.mxu0 0.0
    %3915 = vmatpush1.msra.mxu0 0.0
    %3916 = vmatprep.subr.mxu0 0.0
    %3917 = vmatpush1.msra.mxu0 0.0
    %3918 = vmatprep.subr.mxu0 0.0
    %3919 = vmatpush1.msra.mxu0 0.0
    %3920 = vmatprep.subr.mxu0 0.0
    %3921 = vmatpush1.msra.mxu0 0.0
    %3922 = vmatprep.subr.mxu0 0.0
    %3923 = vmatpush1.msra.mxu0 0.0
    %3924 = vmatprep.mubr.f32.mxu0 0.0
    %3925 = vmatmul.mubr.f32.gmra.mrb[0].mxu0 %v3695
    %v3926 = vpop.f32.mrb[0].mxu0
    %v3927 = vadd.f32 %v3774, %v3926
    %v3928 = vpop.f32.mrb[0].mxu0
    %v3929 = vadd.f32 %v3778, %v3928
    %3930 = vmatprep.mubr.f32.mxu0 0.0
    %3931 = vmatmul.mubr.f32.gmra.mrb[0].mxu0 %v3696
    %v3932 = vpop.f32.mrb[0].mxu0
    %v3933 = vadd.f32 %v3774, %v3932
    %v3934 = vpop.f32.mrb[0].mxu0
    %v3935 = vadd.f32 %v3778, %v3934
    %3936 = vdwg.mxu0
    %v3937 = vld [vmem:[#allocation12] sm:$0xff]
    %v3938 = vld [vmem:[#allocation12 + $0x8] sm:$0xff]
    %v3939 = vld [vmem:[#allocation12 + $0x10] sm:$0xff]
    %v3940 = vld [vmem:[#allocation12 + $0x18] sm:$0xff]
    %v3941 = vld [vmem:[#allocation12 + $0x20] sm:$0xff]
    %v3942 = vld [vmem:[#allocation12 + $0x28] sm:$0xff]
    %v3943 = vld [vmem:[#allocation12 + $0x30] sm:$0xff]
    %v3944 = vld [vmem:[#allocation12 + $0x38] sm:$0xff]
    %v3945 = vld [vmem:[#allocation12 + $0x40] sm:$0xff]
    %v3946 = vld [vmem:[#allocation12 + $0x48] sm:$0xff]
    %v3947 = vld [vmem:[#allocation12 + $0x50] sm:$0xff]
    %v3948 = vld [vmem:[#allocation12 + $0x58] sm:$0xff]
    %v3949 = vld [vmem:[#allocation12 + $0x60] sm:$0xff]
    %v3950 = vld [vmem:[#allocation12 + $0x68] sm:$0xff]
    %v3951 = vld [vmem:[#allocation12 + $0x70] sm:$0xff]
    %v3952 = vld [vmem:[#allocation12 + $0x78] sm:$0xff]
    %v3953 = vld [vmem:[#allocation12 + $0x80] sm:$0xff]
    %v3954 = vld [vmem:[#allocation12 + $0x88] sm:$0xff]
    %v3955 = vld [vmem:[#allocation12 + $0x90] sm:$0xff]
    %v3956 = vld [vmem:[#allocation12 + $0x98] sm:$0xff]
    %v3957 = vld [vmem:[#allocation12 + $0xa0] sm:$0xff]
    %v3958 = vld [vmem:[#allocation12 + $0xa8] sm:$0xff]
    %v3959 = vld [vmem:[#allocation12 + $0xb0] sm:$0xff]
    %v3960 = vld [vmem:[#allocation12 + $0xb8] sm:$0xff]
    %v3961 = vld [vmem:[#allocation12 + $0xc0] sm:$0xff]
    %v3962 = vld [vmem:[#allocation12 + $0xc8] sm:$0xff]
    %v3963 = vld [vmem:[#allocation12 + $0xd0] sm:$0xff]
    %v3964 = vld [vmem:[#allocation12 + $0xd8] sm:$0xff]
    %v3965 = vld [vmem:[#allocation12 + $0xe0] sm:$0xff]
    %v3966 = vld [vmem:[#allocation12 + $0xe8] sm:$0xff]
    %v3967 = vld [vmem:[#allocation12 + $0xf0] sm:$0xff]
    %v3968 = vld [vmem:[#allocation12 + $0xf8] sm:$0xff]
    %v3969 = vld [vmem:[#allocation12 + $0x100] sm:$0xff]
    %v3970 = vld [vmem:[#allocation12 + $0x108] sm:$0xff]
    %v3971 = vld [vmem:[#allocation12 + $0x110] sm:$0xff]
    %v3972 = vld [vmem:[#allocation12 + $0x118] sm:$0xff]
    %v3973 = vld [vmem:[#allocation12 + $0x120] sm:$0xff]
    %v3974 = vld [vmem:[#allocation12 + $0x128] sm:$0xff]
    %v3975 = vld [vmem:[#allocation12 + $0x130] sm:$0xff]
    %v3976 = vld [vmem:[#allocation12 + $0x138] sm:$0xff]
    %v3977 = vld [vmem:[#allocation12 + $0x140] sm:$0xff]
    %v3978 = vld [vmem:[#allocation12 + $0x148] sm:$0xff]
    %v3979 = vld [vmem:[#allocation12 + $0x150] sm:$0xff]
    %v3980 = vld [vmem:[#allocation12 + $0x158] sm:$0xff]
    %v3981 = vld [vmem:[#allocation12 + $0x160] sm:$0xff]
    %v3982 = vld [vmem:[#allocation12 + $0x168] sm:$0xff]
    %v3983 = vld [vmem:[#allocation12 + $0x170] sm:$0xff]
    %v3984 = vld [vmem:[#allocation12 + $0x178] sm:$0xff]
    %v3985 = vld [vmem:[#allocation12 + $0x180] sm:$0xff]
    %v3986 = vld [vmem:[#allocation12 + $0x188] sm:$0xff]
    %v3987 = vld [vmem:[#allocation12 + $0x190] sm:$0xff]
    %v3988 = vld [vmem:[#allocation12 + $0x198] sm:$0xff]
    %v3989 = vld [vmem:[#allocation12 + $0x1a0] sm:$0xff]
    %v3990 = vld [vmem:[#allocation12 + $0x1a8] sm:$0xff]
    %v3991 = vld [vmem:[#allocation12 + $0x1b0] sm:$0xff]
    %v3992 = vld [vmem:[#allocation12 + $0x1b8] sm:$0xff]
    %v3993 = vld [vmem:[#allocation12 + $0x1c0] sm:$0xff]
    %v3994 = vld [vmem:[#allocation12 + $0x1c8] sm:$0xff]
    %v3995 = vld [vmem:[#allocation12 + $0x1d0] sm:$0xff]
    %v3996 = vld [vmem:[#allocation12 + $0x1d8] sm:$0xff]
    %v3997 = vld [vmem:[#allocation12 + $0x1e0] sm:$0xff]
    %v3998 = vld [vmem:[#allocation12 + $0x1e8] sm:$0xff]
    %v3999 = vld [vmem:[#allocation12 + $0x1f0] sm:$0xff]
    %v4000 = vld [vmem:[#allocation12 + $0x1f8] sm:$0xff]
    %v4002 = vrot.slane %v3692, 6
    %4004 = vmatprep.subr.mxu0 %v3938
    %4005 = vmatpush1.msra.mxu0 %v3937
    %4006 = vmatprep.subr.mxu0 %v3942
    %4007 = vmatpush1.msra.mxu0 %v3941
    %4008 = vmatprep.subr.mxu0 %v3946
    %4009 = vmatpush1.msra.mxu0 %v3945
    %4010 = vmatprep.subr.mxu0 %v3950
    %4011 = vmatpush1.msra.mxu0 %v3949
    %4012 = vmatprep.subr.mxu0 %v3954
    %4013 = vmatpush1.msra.mxu0 %v3953
    %4014 = vmatprep.subr.mxu0 %v3958
    %4015 = vmatpush1.msra.mxu0 %v3957
    %4016 = vmatprep.subr.mxu0 %v3962
    %4017 = vmatpush1.msra.mxu0 %v3961
    %4018 = vmatprep.subr.mxu0 %v3966
    %4019 = vmatpush1.msra.mxu0 %v3965
    %4020 = vmatprep.subr.mxu0 %v3970
    %4021 = vmatpush1.msra.mxu0 %v3969
    %4022 = vmatprep.subr.mxu0 %v3974
    %4023 = vmatpush1.msra.mxu0 %v3973
    %4024 = vmatprep.subr.mxu0 %v3978
    %4025 = vmatpush1.msra.mxu0 %v3977
    %4026 = vmatprep.subr.mxu0 %v3982
    %4027 = vmatpush1.msra.mxu0 %v3981
    %4028 = vmatprep.subr.mxu0 %v3986
    %4029 = vmatpush1.msra.mxu0 %v3985
    %4030 = vmatprep.subr.mxu0 %v3990
    %4031 = vmatpush1.msra.mxu0 %v3989
    %4032 = vmatprep.subr.mxu0 %v3994
    %4033 = vmatpush1.msra.mxu0 %v3993
    %4034 = vmatprep.subr.mxu0 %v3998
    %4035 = vmatpush1.msra.mxu0 %v3997
    %4036 = vmatprep.subr.mxu0 0.0
    %4037 = vmatpush1.msra.mxu0 0.0
    %4038 = vmatprep.subr.mxu0 0.0
    %4039 = vmatpush1.msra.mxu0 0.0
    %4040 = vmatprep.subr.mxu0 0.0
    %4041 = vmatpush1.msra.mxu0 0.0
    %4042 = vmatprep.subr.mxu0 0.0
    %4043 = vmatpush1.msra.mxu0 0.0
    %4044 = vmatprep.subr.mxu0 0.0
    %4045 = vmatpush1.msra.mxu0 0.0
    %4046 = vmatprep.subr.mxu0 0.0
    %4047 = vmatpush1.msra.mxu0 0.0
    %4048 = vmatprep.subr.mxu0 0.0
    %4049 = vmatpush1.msra.mxu0 0.0
    %4050 = vmatprep.subr.mxu0 0.0
    %4051 = vmatpush1.msra.mxu0 0.0
    %4052 = vmatprep.subr.mxu0 0.0
    %4053 = vmatpush1.msra.mxu0 0.0
    %4054 = vmatprep.subr.mxu0 0.0
    %4055 = vmatpush1.msra.mxu0 0.0
    %4056 = vmatprep.subr.mxu0 0.0
    %4057 = vmatpush1.msra.mxu0 0.0
    %4058 = vmatprep.subr.mxu0 0.0
    %4059 = vmatpush1.msra.mxu0 0.0
    %4060 = vmatprep.subr.mxu0 0.0
    %4061 = vmatpush1.msra.mxu0 0.0
    %4062 = vmatprep.subr.mxu0 0.0
    %4063 = vmatpush1.msra.mxu0 0.0
    %4064 = vmatprep.subr.mxu0 0.0
    %4065 = vmatpush1.msra.mxu0 0.0
    %4066 = vmatprep.subr.mxu0 0.0
    %4067 = vmatpush1.msra.mxu0 0.0
    %4068 = vmatprep.mubr.f32.mxu0 0.0
    %4069 = vmatmul.mubr.f32.gmra.mrb[0].mxu0 %v4002
    %v4070 = vpop.f32.mrb[0].mxu0
    %v4071 = vadd.f32 0.0, %v4070
    %v4072 = vpop.f32.mrb[0].mxu0
    %v4073 = vadd.f32 0.0, %v4072
    %4074 = vdwg.mxu0
    %4075 = vmatprep.subr.mxu0 %v3940
    %4076 = vmatpush1.msra.mxu0 %v3939
    %4077 = vmatprep.subr.mxu0 %v3944
    %4078 = vmatpush1.msra.mxu0 %v3943
    %4079 = vmatprep.subr.mxu0 %v3948
    %4080 = vmatpush1.msra.mxu0 %v3947
    %4081 = vmatprep.subr.mxu0 %v3952
    %4082 = vmatpush1.msra.mxu0 %v3951
    %4083 = vmatprep.subr.mxu0 %v3956
    %4084 = vmatpush1.msra.mxu0 %v3955
    %4085 = vmatprep.subr.mxu0 %v3960
    %4086 = vmatpush1.msra.mxu0 %v3959
    %4087 = vmatprep.subr.mxu0 %v3964
    %4088 = vmatpush1.msra.mxu0 %v3963
    %4089 = vmatprep.subr.mxu0 %v3968
    %4090 = vmatpush1.msra.mxu0 %v3967
    %4091 = vmatprep.subr.mxu0 %v3972
    %4092 = vmatpush1.msra.mxu0 %v3971
    %4093 = vmatprep.subr.mxu0 %v3976
    %4094 = vmatpush1.msra.mxu0 %v3975
    %4095 = vmatprep.subr.mxu0 %v3980
    %4096 = vmatpush1.msra.mxu0 %v3979
    %4097 = vmatprep.subr.mxu0 %v3984
    %4098 = vmatpush1.msra.mxu0 %v3983
    %4099 = vmatprep.subr.mxu0 %v3988
    %4100 = vmatpush1.msra.mxu0 %v3987
    %4101 = vmatprep.subr.mxu0 %v3992
    %4102 = vmatpush1.msra.mxu0 %v3991
    %4103 = vmatprep.subr.mxu0 %v3996
    %4104 = vmatpush1.msra.mxu0 %v3995
    %4105 = vmatprep.subr.mxu0 %v4000
    %4106 = vmatpush1.msra.mxu0 %v3999
    %4107 = vmatprep.subr.mxu0 0.0
    %4108 = vmatpush1.msra.mxu0 0.0
    %4109 = vmatprep.subr.mxu0 0.0
    %4110 = vmatpush1.msra.mxu0 0.0
    %4111 = vmatprep.subr.mxu0 0.0
    %4112 = vmatpush1.msra.mxu0 0.0
    %4113 = vmatprep.subr.mxu0 0.0
    %4114 = vmatpush1.msra.mxu0 0.0
    %4115 = vmatprep.subr.mxu0 0.0
    %4116 = vmatpush1.msra.mxu0 0.0
    %4117 = vmatprep.subr.mxu0 0.0
    %4118 = vmatpush1.msra.mxu0 0.0
    %4119 = vmatprep.subr.mxu0 0.0
    %4120 = vmatpush1.msra.mxu0 0.0
    %4121 = vmatprep.subr.mxu0 0.0
    %4122 = vmatpush1.msra.mxu0 0.0
    %4123 = vmatprep.subr.mxu0 0.0
    %4124 = vmatpush1.msra.mxu0 0.0
    %4125 = vmatprep.subr.mxu0 0.0
    %4126 = vmatpush1.msra.mxu0 0.0
    %4127 = vmatprep.subr.mxu0 0.0
    %4128 = vmatpush1.msra.mxu0 0.0
    %4129 = vmatprep.subr.mxu0 0.0
    %4130 = vmatpush1.msra.mxu0 0.0
    %4131 = vmatprep.subr.mxu0 0.0
    %4132 = vmatpush1.msra.mxu0 0.0
    %4133 = vmatprep.subr.mxu0 0.0
    %4134 = vmatpush1.msra.mxu0 0.0
    %4135 = vmatprep.subr.mxu0 0.0
    %4136 = vmatpush1.msra.mxu0 0.0
    %4137 = vmatprep.subr.mxu0 0.0
    %4138 = vmatpush1.msra.mxu0 0.0
    %4139 = vmatprep.mubr.f32.mxu0 0.0
    %4140 = vmatmul.mubr.f32.gmra.mrb[0].mxu0 %v4002
    %v4141 = vpop.f32.mrb[0].mxu0
    %v4142 = vadd.f32 0.0, %v4141
    %v4143 = vpop.f32.mrb[0].mxu0
    %v4144 = vadd.f32 0.0, %v4143
    %4145 = vdwg.mxu0
    %v4146 = vadd.f32 %v3850, %v4071
    %v4147 = vadd.f32 %v3852, %v4073
    %v4148 = vadd.f32 %v3927, %v4142
    %v4149 = vadd.f32 %v3929, %v4144
    %v4150 = vxor.u32 %v4146, 2147483648
    %v4151 = vmul.f32 %v4150, 1.442695
    %v4152 = vpow.pop %v4151
    %v4153 = vadd.f32 %v4152, 1.0
    %v4154 = vrcp.pop %v4153
    %v4155 = vmul.f32 1.0, %v4154
    %v4156 = vxor.u32 %v4147, 2147483648
    %v4157 = vmul.f32 %v4156, 1.442695
    %v4158 = vpow.pop %v4157
    %v4159 = vadd.f32 %v4158, 1.0
    %v4160 = vrcp.pop %v4159
    %v4161 = vmul.f32 1.0, %v4160
    %v4162 = vtanh.pop %v4148
    %v4163 = vxor.u32 %v4149, 2147483648
    %v4164 = vmul.f32 %v4163, 1.442695
    %v4165 = vpow.pop %v4164
    %v4166 = vadd.f32 %v4165, 1.0
    %v4167 = vrcp.pop %v4166
    %v4168 = vmul.f32 1.0, %v4167
    %v4170 = vrot.slane %v3690, 6
    %v4172 = vmul.f32 %v4161, %v4170
    %v4173 = vmul.f32 %v4155, %v4162
    %v4174 = vadd.f32 %v4172, %v4173
    %v4175 = vtanh.pop %v4174
    %v4176 = vmul.f32 %v4168, %v4175
    %4177 = vst [vmem:[#allocation3] sm:$0x3] %v4176
    %4178 = vmatprep.subr.mxu0 %v3938
    %4179 = vmatpush1.msra.mxu0 %v3937
    %4180 = vmatprep.subr.mxu0 %v3942
    %4181 = vmatpush1.msra.mxu0 %v3941
    %4182 = vmatprep.subr.mxu0 %v3946
    %4183 = vmatpush1.msra.mxu0 %v3945
    %4184 = vmatprep.subr.mxu0 %v3950
    %4185 = vmatpush1.msra.mxu0 %v3949
    %4186 = vmatprep.subr.mxu0 %v3954
    %4187 = vmatpush1.msra.mxu0 %v3953
    %4188 = vmatprep.subr.mxu0 %v3958
    %4189 = vmatpush1.msra.mxu0 %v3957
    %4190 = vmatprep.subr.mxu0 %v3962
    %4191 = vmatpush1.msra.mxu0 %v3961
    %4192 = vmatprep.subr.mxu0 %v3966
    %4193 = vmatpush1.msra.mxu0 %v3965
    %4194 = vmatprep.subr.mxu0 %v3970
    %4195 = vmatpush1.msra.mxu0 %v3969
    %4196 = vmatprep.subr.mxu0 %v3974
    %4197 = vmatpush1.msra.mxu0 %v3973
    %4198 = vmatprep.subr.mxu0 %v3978
    %4199 = vmatpush1.msra.mxu0 %v3977
    %4200 = vmatprep.subr.mxu0 %v3982
    %4201 = vmatpush1.msra.mxu0 %v3981
    %4202 = vmatprep.subr.mxu0 %v3986
    %4203 = vmatpush1.msra.mxu0 %v3985
    %4204 = vmatprep.subr.mxu0 %v3990
    %4205 = vmatpush1.msra.mxu0 %v3989
    %4206 = vmatprep.subr.mxu0 %v3994
    %4207 = vmatpush1.msra.mxu0 %v3993
    %4208 = vmatprep.subr.mxu0 %v3998
    %4209 = vmatpush1.msra.mxu0 %v3997
    %4210 = vmatprep.subr.mxu0 0.0
    %4211 = vmatpush1.msra.mxu0 0.0
    %4212 = vmatprep.subr.mxu0 0.0
    %4213 = vmatpush1.msra.mxu0 0.0
    %4214 = vmatprep.subr.mxu0 0.0
    %4215 = vmatpush1.msra.mxu0 0.0
    %4216 = vmatprep.subr.mxu0 0.0
    %4217 = vmatpush1.msra.mxu0 0.0
    %4218 = vmatprep.subr.mxu0 0.0
    %4219 = vmatpush1.msra.mxu0 0.0
    %4220 = vmatprep.subr.mxu0 0.0
    %4221 = vmatpush1.msra.mxu0 0.0
    %4222 = vmatprep.subr.mxu0 0.0
    %4223 = vmatpush1.msra.mxu0 0.0
    %4224 = vmatprep.subr.mxu0 0.0
    %4225 = vmatpush1.msra.mxu0 0.0
    %4226 = vmatprep.subr.mxu0 0.0
    %4227 = vmatpush1.msra.mxu0 0.0
    %4228 = vmatprep.subr.mxu0 0.0
    %4229 = vmatpush1.msra.mxu0 0.0
    %4230 = vmatprep.subr.mxu0 0.0
    %4231 = vmatpush1.msra.mxu0 0.0
    %4232 = vmatprep.subr.mxu0 0.0
    %4233 = vmatpush1.msra.mxu0 0.0
    %4234 = vmatprep.subr.mxu0 0.0
    %4235 = vmatpush1.msra.mxu0 0.0
    %4236 = vmatprep.subr.mxu0 0.0
    %4237 = vmatpush1.msra.mxu0 0.0
    %4238 = vmatprep.subr.mxu0 0.0
    %4239 = vmatpush1.msra.mxu0 0.0
    %4240 = vmatprep.subr.mxu0 0.0
    %4241 = vmatpush1.msra.mxu0 0.0
    %4242 = vmatprep.mubr.f32.mxu0 0.0
    %4243 = vmatmul.mubr.f32.gmra.mrb[0].mxu0 %v4176
    %v4244 = vpop.f32.mrb[0].mxu0
    %v4245 = vadd.f32 0.0, %v4244
    %v4246 = vpop.f32.mrb[0].mxu0
    %v4247 = vadd.f32 0.0, %v4246
    %4248 = vdwg.mxu0
    %4249 = vmatprep.subr.mxu0 %v3940
    %4250 = vmatpush1.msra.mxu0 %v3939
    %4251 = vmatprep.subr.mxu0 %v3944
    %4252 = vmatpush1.msra.mxu0 %v3943
    %4253 = vmatprep.subr.mxu0 %v3948
    %4254 = vmatpush1.msra.mxu0 %v3947
    %4255 = vmatprep.subr.mxu0 %v3952
    %4256 = vmatpush1.msra.mxu0 %v3951
    %4257 = vmatprep.subr.mxu0 %v3956
    %4258 = vmatpush1.msra.mxu0 %v3955
    %4259 = vmatprep.subr.mxu0 %v3960
    %4260 = vmatpush1.msra.mxu0 %v3959
    %4261 = vmatprep.subr.mxu0 %v3964
    %4262 = vmatpush1.msra.mxu0 %v3963
    %4263 = vmatprep.subr.mxu0 %v3968
    %4264 = vmatpush1.msra.mxu0 %v3967
    %4265 = vmatprep.subr.mxu0 %v3972
    %4266 = vmatpush1.msra.mxu0 %v3971
    %4267 = vmatprep.subr.mxu0 %v3976
    %4268 = vmatpush1.msra.mxu0 %v3975
    %4269 = vmatprep.subr.mxu0 %v3980
    %4270 = vmatpush1.msra.mxu0 %v3979
    %4271 = vmatprep.subr.mxu0 %v3984
    %4272 = vmatpush1.msra.mxu0 %v3983
    %4273 = vmatprep.subr.mxu0 %v3988
    %4274 = vmatpush1.msra.mxu0 %v3987
    %4275 = vmatprep.subr.mxu0 %v3992
    %4276 = vmatpush1.msra.mxu0 %v3991
    %4277 = vmatprep.subr.mxu0 %v3996
    %4278 = vmatpush1.msra.mxu0 %v3995
    %4279 = vmatprep.subr.mxu0 %v4000
    %4280 = vmatpush1.msra.mxu0 %v3999
    %4281 = vmatprep.subr.mxu0 0.0
    %4282 = vmatpush1.msra.mxu0 0.0
    %4283 = vmatprep.subr.mxu0 0.0
    %4284 = vmatpush1.msra.mxu0 0.0
    %4285 = vmatprep.subr.mxu0 0.0
    %4286 = vmatpush1.msra.mxu0 0.0
    %4287 = vmatprep.subr.mxu0 0.0
    %4288 = vmatpush1.msra.mxu0 0.0
    %4289 = vmatprep.subr.mxu0 0.0
    %4290 = vmatpush1.msra.mxu0 0.0
    %4291 = vmatprep.subr.mxu0 0.0
    %4292 = vmatpush1.msra.mxu0 0.0
    %4293 = vmatprep.subr.mxu0 0.0
    %4294 = vmatpush1.msra.mxu0 0.0
    %4295 = vmatprep.subr.mxu0 0.0
    %4296 = vmatpush1.msra.mxu0 0.0
    %4297 = vmatprep.subr.mxu0 0.0
    %4298 = vmatpush1.msra.mxu0 0.0
    %4299 = vmatprep.subr.mxu0 0.0
    %4300 = vmatpush1.msra.mxu0 0.0
    %4301 = vmatprep.subr.mxu0 0.0
    %4302 = vmatpush1.msra.mxu0 0.0
    %4303 = vmatprep.subr.mxu0 0.0
    %4304 = vmatpush1.msra.mxu0 0.0
    %4305 = vmatprep.subr.mxu0 0.0
    %4306 = vmatpush1.msra.mxu0 0.0
    %4307 = vmatprep.subr.mxu0 0.0
    %4308 = vmatpush1.msra.mxu0 0.0
    %4309 = vmatprep.subr.mxu0 0.0
    %4310 = vmatpush1.msra.mxu0 0.0
    %4311 = vmatprep.subr.mxu0 0.0
    %4312 = vmatpush1.msra.mxu0 0.0
    %4313 = vmatprep.mubr.f32.mxu0 0.0
    %4314 = vmatmul.mubr.f32.gmra.mrb[0].mxu0 %v4176
    %v4315 = vpop.f32.mrb[0].mxu0
    %v4316 = vadd.f32 0.0, %v4315
    %v4317 = vpop.f32.mrb[0].mxu0
    %v4318 = vadd.f32 0.0, %v4317
    %4319 = vdwg.mxu0
    %v4324 = vrot.slane %v4245, 6
    %v4325 = vrot.slane %v4247, 6
    %v4326 = vrot.slane %v4316, 6
    %v4327 = vrot.slane %v4318, 6
    %v4332 = vadd.f32 %v3850, %v4324
    %v4333 = vadd.f32 %v3852, %v4325
    %v4334 = vadd.f32 %v3927, %v4326
    %v4335 = vadd.f32 %v3929, %v4327
    %v4336 = vxor.u32 %v4332, 2147483648
    %v4337 = vmul.f32 %v4336, 1.442695
    %v4338 = vpow.pop %v4337
    %v4339 = vadd.f32 %v4338, 1.0
    %v4340 = vrcp.pop %v4339
    %v4341 = vmul.f32 1.0, %v4340
    %v4342 = vxor.u32 %v4333, 2147483648
    %v4343 = vmul.f32 %v4342, 1.442695
    %v4344 = vpow.pop %v4343
    %v4345 = vadd.f32 %v4344, 1.0
    %v4346 = vrcp.pop %v4345
    %v4347 = vmul.f32 1.0, %v4346
    %v4348 = vtanh.pop %v4334
    %v4349 = vxor.u32 %v4335, 2147483648
    %v4350 = vmul.f32 %v4349, 1.442695
    %v4351 = vpow.pop %v4350
    %v4352 = vadd.f32 %v4351, 1.0
    %v4353 = vrcp.pop %v4352
    %v4354 = vmul.f32 1.0, %v4353
    %v4356 = vrot.slane %v4174, 6
    %v4358 = vmul.f32 %v4347, %v4356
    %v4359 = vmul.f32 %v4341, %v4348
    %v4360 = vadd.f32 %v4358, %v4359
    %v4361 = vtanh.pop %v4360
    %v4362 = vmul.f32 %v4354, %v4361
    %s4363 = scalar_lea.vmem [#allocation3], 2
    %4364 = vst [vmem:[%s4363 - $0x2] sm:$0xc] %v4362
    %v4366 = vrot.slane %v4362, 2
    %4368 = vmatprep.subr.mxu0 %v3938
    %4369 = vmatpush1.msra.mxu0 %v3937
    %4370 = vmatprep.subr.mxu0 %v3942
    %4371 = vmatpush1.msra.mxu0 %v3941
    %4372 = vmatprep.subr.mxu0 %v3946
    %4373 = vmatpush1.msra.mxu0 %v3945
    %4374 = vmatprep.subr.mxu0 %v3950
    %4375 = vmatpush1.msra.mxu0 %v3949
    %4376 = vmatprep.subr.mxu0 %v3954
    %4377 = vmatpush1.msra.mxu0 %v3953
    %4378 = vmatprep.subr.mxu0 %v3958
    %4379 = vmatpush1.msra.mxu0 %v3957
    %4380 = vmatprep.subr.mxu0 %v3962
    %4381 = vmatpush1.msra.mxu0 %v3961
    %4382 = vmatprep.subr.mxu0 %v3966
    %4383 = vmatpush1.msra.mxu0 %v3965
    %4384 = vmatprep.subr.mxu0 %v3970
    %4385 = vmatpush1.msra.mxu0 %v3969
    %4386 = vmatprep.subr.mxu0 %v3974
    %4387 = vmatpush1.msra.mxu0 %v3973
    %4388 = vmatprep.subr.mxu0 %v3978
    %4389 = vmatpush1.msra.mxu0 %v3977
    %4390 = vmatprep.subr.mxu0 %v3982
    %4391 = vmatpush1.msra.mxu0 %v3981
    %4392 = vmatprep.subr.mxu0 %v3986
    %4393 = vmatpush1.msra.mxu0 %v3985
    %4394 = vmatprep.subr.mxu0 %v3990
    %4395 = vmatpush1.msra.mxu0 %v3989
    %4396 = vmatprep.subr.mxu0 %v3994
    %4397 = vmatpush1.msra.mxu0 %v3993
    %4398 = vmatprep.subr.mxu0 %v3998
    %4399 = vmatpush1.msra.mxu0 %v3997
    %4400 = vmatprep.subr.mxu0 0.0
    %4401 = vmatpush1.msra.mxu0 0.0
    %4402 = vmatprep.subr.mxu0 0.0
    %4403 = vmatpush1.msra.mxu0 0.0
    %4404 = vmatprep.subr.mxu0 0.0
    %4405 = vmatpush1.msra.mxu0 0.0
    %4406 = vmatprep.subr.mxu0 0.0
    %4407 = vmatpush1.msra.mxu0 0.0
    %4408 = vmatprep.subr.mxu0 0.0
    %4409 = vmatpush1.msra.mxu0 0.0
    %4410 = vmatprep.subr.mxu0 0.0
    %4411 = vmatpush1.msra.mxu0 0.0
    %4412 = vmatprep.subr.mxu0 0.0
    %4413 = vmatpush1.msra.mxu0 0.0
    %4414 = vmatprep.subr.mxu0 0.0
    %4415 = vmatpush1.msra.mxu0 0.0
    %4416 = vmatprep.subr.mxu0 0.0
    %4417 = vmatpush1.msra.mxu0 0.0
    %4418 = vmatprep.subr.mxu0 0.0
    %4419 = vmatpush1.msra.mxu0 0.0
    %4420 = vmatprep.subr.mxu0 0.0
    %4421 = vmatpush1.msra.mxu0 0.0
    %4422 = vmatprep.subr.mxu0 0.0
    %4423 = vmatpush1.msra.mxu0 0.0
    %4424 = vmatprep.subr.mxu0 0.0
    %4425 = vmatpush1.msra.mxu0 0.0
    %4426 = vmatprep.subr.mxu0 0.0
    %4427 = vmatpush1.msra.mxu0 0.0
    %4428 = vmatprep.subr.mxu0 0.0
    %4429 = vmatpush1.msra.mxu0 0.0
    %4430 = vmatprep.subr.mxu0 0.0
    %4431 = vmatpush1.msra.mxu0 0.0
    %4432 = vmatprep.mubr.f32.mxu0 0.0
    %4433 = vmatmul.mubr.f32.gmra.mrb[0].mxu0 %v4366
    %v4434 = vpop.f32.mrb[0].mxu0
    %v4435 = vadd.f32 0.0, %v4434
    %v4436 = vpop.f32.mrb[0].mxu0
    %v4437 = vadd.f32 0.0, %v4436
    %4438 = vdwg.mxu0
    %4439 = vmatprep.subr.mxu0 %v3940
    %4440 = vmatpush1.msra.mxu0 %v3939
    %4441 = vmatprep.subr.mxu0 %v3944
    %4442 = vmatpush1.msra.mxu0 %v3943
    %4443 = vmatprep.subr.mxu0 %v3948
    %4444 = vmatpush1.msra.mxu0 %v3947
    %4445 = vmatprep.subr.mxu0 %v3952
    %4446 = vmatpush1.msra.mxu0 %v3951
    %4447 = vmatprep.subr.mxu0 %v3956
    %4448 = vmatpush1.msra.mxu0 %v3955
    %4449 = vmatprep.subr.mxu0 %v3960
    %4450 = vmatpush1.msra.mxu0 %v3959
    %4451 = vmatprep.subr.mxu0 %v3964
    %4452 = vmatpush1.msra.mxu0 %v3963
    %4453 = vmatprep.subr.mxu0 %v3968
    %4454 = vmatpush1.msra.mxu0 %v3967
    %4455 = vmatprep.subr.mxu0 %v3972
    %4456 = vmatpush1.msra.mxu0 %v3971
    %4457 = vmatprep.subr.mxu0 %v3976
    %4458 = vmatpush1.msra.mxu0 %v3975
    %4459 = vmatprep.subr.mxu0 %v3980
    %4460 = vmatpush1.msra.mxu0 %v3979
    %4461 = vmatprep.subr.mxu0 %v3984
    %4462 = vmatpush1.msra.mxu0 %v3983
    %4463 = vmatprep.subr.mxu0 %v3988
    %4464 = vmatpush1.msra.mxu0 %v3987
    %4465 = vmatprep.subr.mxu0 %v3992
    %4466 = vmatpush1.msra.mxu0 %v3991
    %4467 = vmatprep.subr.mxu0 %v3996
    %4468 = vmatpush1.msra.mxu0 %v3995
    %4469 = vmatprep.subr.mxu0 %v4000
    %4470 = vmatpush1.msra.mxu0 %v3999
    %4471 = vmatprep.subr.mxu0 0.0
    %4472 = vmatpush1.msra.mxu0 0.0
    %4473 = vmatprep.subr.mxu0 0.0
    %4474 = vmatpush1.msra.mxu0 0.0
    %4475 = vmatprep.subr.mxu0 0.0
    %4476 = vmatpush1.msra.mxu0 0.0
    %4477 = vmatprep.subr.mxu0 0.0
    %4478 = vmatpush1.msra.mxu0 0.0
    %4479 = vmatprep.subr.mxu0 0.0
    %4480 = vmatpush1.msra.mxu0 0.0
    %4481 = vmatprep.subr.mxu0 0.0
    %4482 = vmatpush1.msra.mxu0 0.0
    %4483 = vmatprep.subr.mxu0 0.0
    %4484 = vmatpush1.msra.mxu0 0.0
    %4485 = vmatprep.subr.mxu0 0.0
    %4486 = vmatpush1.msra.mxu0 0.0
    %4487 = vmatprep.subr.mxu0 0.0
    %4488 = vmatpush1.msra.mxu0 0.0
    %4489 = vmatprep.subr.mxu0 0.0
    %4490 = vmatpush1.msra.mxu0 0.0
    %4491 = vmatprep.subr.mxu0 0.0
    %4492 = vmatpush1.msra.mxu0 0.0
    %4493 = vmatprep.subr.mxu0 0.0
    %4494 = vmatpush1.msra.mxu0 0.0
    %4495 = vmatprep.subr.mxu0 0.0
    %4496 = vmatpush1.msra.mxu0 0.0
    %4497 = vmatprep.subr.mxu0 0.0
    %4498 = vmatpush1.msra.mxu0 0.0
    %4499 = vmatprep.subr.mxu0 0.0
    %4500 = vmatpush1.msra.mxu0 0.0
    %4501 = vmatprep.subr.mxu0 0.0
    %4502 = vmatpush1.msra.mxu0 0.0
    %4503 = vmatprep.mubr.f32.mxu0 0.0
    %4504 = vmatmul.mubr.f32.gmra.mrb[0].mxu0 %v4366
    %v4505 = vpop.f32.mrb[0].mxu0
    %v4506 = vadd.f32 0.0, %v4505
    %v4507 = vpop.f32.mrb[0].mxu0
    %v4508 = vadd.f32 0.0, %v4507
    %4509 = vdwg.mxu0
    %v4514 = vrot.slane %v4435, 4
    %v4515 = vrot.slane %v4437, 4
    %v4516 = vrot.slane %v4506, 4
    %v4517 = vrot.slane %v4508, 4
    %v4522 = vadd.f32 %v3850, %v4514
    %v4523 = vadd.f32 %v3852, %v4515
    %v4524 = vadd.f32 %v3927, %v4516
    %v4525 = vadd.f32 %v3929, %v4517
    %v4526 = vxor.u32 %v4522, 2147483648
    %v4527 = vmul.f32 %v4526, 1.442695
    %v4528 = vpow.pop %v4527
    %v4529 = vadd.f32 %v4528, 1.0
    %v4530 = vrcp.pop %v4529
    %v4531 = vmul.f32 1.0, %v4530
    %v4532 = vxor.u32 %v4523, 2147483648
    %v4533 = vmul.f32 %v4532, 1.442695
    %v4534 = vpow.pop %v4533
    %v4535 = vadd.f32 %v4534, 1.0
    %v4536 = vrcp.pop %v4535
    %v4537 = vmul.f32 1.0, %v4536
    %v4538 = vtanh.pop %v4524
    %v4539 = vxor.u32 %v4525, 2147483648
    %v4540 = vmul.f32 %v4539, 1.442695
    %v4541 = vpow.pop %v4540
    %v4542 = vadd.f32 %v4541, 1.0
    %v4543 = vrcp.pop %v4542
    %v4544 = vmul.f32 1.0, %v4543
    %v4546 = vrot.slane %v4360, 6
    %v4548 = vmul.f32 %v4537, %v4546
    %v4549 = vmul.f32 %v4531, %v4538
    %v4550 = vadd.f32 %v4548, %v4549
    %v4551 = vtanh.pop %v4550
    %v4552 = vmul.f32 %v4544, %v4551
    %s4553 = scalar_lea.vmem [#allocation3], 4
    %4554 = vst [vmem:[%s4553 - $0x4] sm:$0x30] %v4552
    %v4556 = vrot.slane %v4552, 4
    %4558 = vmatprep.subr.mxu0 %v3938
    %4559 = vmatpush1.msra.mxu0 %v3937
    %4560 = vmatprep.subr.mxu0 %v3942
    %4561 = vmatpush1.msra.mxu0 %v3941
    %4562 = vmatprep.subr.mxu0 %v3946
    %4563 = vmatpush1.msra.mxu0 %v3945
    %4564 = vmatprep.subr.mxu0 %v3950
    %4565 = vmatpush1.msra.mxu0 %v3949
    %4566 = vmatprep.subr.mxu0 %v3954
    %4567 = vmatpush1.msra.mxu0 %v3953
    %4568 = vmatprep.subr.mxu0 %v3958
    %4569 = vmatpush1.msra.mxu0 %v3957
    %4570 = vmatprep.subr.mxu0 %v3962
    %4571 = vmatpush1.msra.mxu0 %v3961
    %4572 = vmatprep.subr.mxu0 %v3966
    %4573 = vmatpush1.msra.mxu0 %v3965
    %4574 = vmatprep.subr.mxu0 %v3970
    %4575 = vmatpush1.msra.mxu0 %v3969
    %4576 = vmatprep.subr.mxu0 %v3974
    %4577 = vmatpush1.msra.mxu0 %v3973
    %4578 = vmatprep.subr.mxu0 %v3978
    %4579 = vmatpush1.msra.mxu0 %v3977
    %4580 = vmatprep.subr.mxu0 %v3982
    %4581 = vmatpush1.msra.mxu0 %v3981
    %4582 = vmatprep.subr.mxu0 %v3986
    %4583 = vmatpush1.msra.mxu0 %v3985
    %4584 = vmatprep.subr.mxu0 %v3990
    %4585 = vmatpush1.msra.mxu0 %v3989
    %4586 = vmatprep.subr.mxu0 %v3994
    %4587 = vmatpush1.msra.mxu0 %v3993
    %4588 = vmatprep.subr.mxu0 %v3998
    %4589 = vmatpush1.msra.mxu0 %v3997
    %4590 = vmatprep.subr.mxu0 0.0
    %4591 = vmatpush1.msra.mxu0 0.0
    %4592 = vmatprep.subr.mxu0 0.0
    %4593 = vmatpush1.msra.mxu0 0.0
    %4594 = vmatprep.subr.mxu0 0.0
    %4595 = vmatpush1.msra.mxu0 0.0
    %4596 = vmatprep.subr.mxu0 0.0
    %4597 = vmatpush1.msra.mxu0 0.0
    %4598 = vmatprep.subr.mxu0 0.0
    %4599 = vmatpush1.msra.mxu0 0.0
    %4600 = vmatprep.subr.mxu0 0.0
    %4601 = vmatpush1.msra.mxu0 0.0
    %4602 = vmatprep.subr.mxu0 0.0
    %4603 = vmatpush1.msra.mxu0 0.0
    %4604 = vmatprep.subr.mxu0 0.0
    %4605 = vmatpush1.msra.mxu0 0.0
    %4606 = vmatprep.subr.mxu0 0.0
    %4607 = vmatpush1.msra.mxu0 0.0
    %4608 = vmatprep.subr.mxu0 0.0
    %4609 = vmatpush1.msra.mxu0 0.0
    %4610 = vmatprep.subr.mxu0 0.0
    %4611 = vmatpush1.msra.mxu0 0.0
    %4612 = vmatprep.subr.mxu0 0.0
    %4613 = vmatpush1.msra.mxu0 0.0
    %4614 = vmatprep.subr.mxu0 0.0
    %4615 = vmatpush1.msra.mxu0 0.0
    %4616 = vmatprep.subr.mxu0 0.0
    %4617 = vmatpush1.msra.mxu0 0.0
    %4618 = vmatprep.subr.mxu0 0.0
    %4619 = vmatpush1.msra.mxu0 0.0
    %4620 = vmatprep.subr.mxu0 0.0
    %4621 = vmatpush1.msra.mxu0 0.0
    %4622 = vmatprep.mubr.f32.mxu0 0.0
    %4623 = vmatmul.mubr.f32.gmra.mrb[0].mxu0 %v4556
    %v4624 = vpop.f32.mrb[0].mxu0
    %v4625 = vadd.f32 0.0, %v4624
    %v4626 = vpop.f32.mrb[0].mxu0
    %v4627 = vadd.f32 0.0, %v4626
    %4628 = vdwg.mxu0
    %4629 = vmatprep.subr.mxu0 %v3940
    %4630 = vmatpush1.msra.mxu0 %v3939
    %4631 = vmatprep.subr.mxu0 %v3944
    %4632 = vmatpush1.msra.mxu0 %v3943
    %4633 = vmatprep.subr.mxu0 %v3948
    %4634 = vmatpush1.msra.mxu0 %v3947
    %4635 = vmatprep.subr.mxu0 %v3952
    %4636 = vmatpush1.msra.mxu0 %v3951
    %4637 = vmatprep.subr.mxu0 %v3956
    %4638 = vmatpush1.msra.mxu0 %v3955
    %4639 = vmatprep.subr.mxu0 %v3960
    %4640 = vmatpush1.msra.mxu0 %v3959
    %4641 = vmatprep.subr.mxu0 %v3964
    %4642 = vmatpush1.msra.mxu0 %v3963
    %4643 = vmatprep.subr.mxu0 %v3968
    %4644 = vmatpush1.msra.mxu0 %v3967
    %4645 = vmatprep.subr.mxu0 %v3972
    %4646 = vmatpush1.msra.mxu0 %v3971
    %4647 = vmatprep.subr.mxu0 %v3976
    %4648 = vmatpush1.msra.mxu0 %v3975
    %4649 = vmatprep.subr.mxu0 %v3980
    %4650 = vmatpush1.msra.mxu0 %v3979
    %4651 = vmatprep.subr.mxu0 %v3984
    %4652 = vmatpush1.msra.mxu0 %v3983
    %4653 = vmatprep.subr.mxu0 %v3988
    %4654 = vmatpush1.msra.mxu0 %v3987
    %4655 = vmatprep.subr.mxu0 %v3992
    %4656 = vmatpush1.msra.mxu0 %v3991
    %4657 = vmatprep.subr.mxu0 %v3996
    %4658 = vmatpush1.msra.mxu0 %v3995
    %4659 = vmatprep.subr.mxu0 %v4000
    %4660 = vmatpush1.msra.mxu0 %v3999
    %4661 = vmatprep.subr.mxu0 0.0
    %4662 = vmatpush1.msra.mxu0 0.0
    %4663 = vmatprep.subr.mxu0 0.0
    %4664 = vmatpush1.msra.mxu0 0.0
    %4665 = vmatprep.subr.mxu0 0.0
    %4666 = vmatpush1.msra.mxu0 0.0
    %4667 = vmatprep.subr.mxu0 0.0
    %4668 = vmatpush1.msra.mxu0 0.0
    %4669 = vmatprep.subr.mxu0 0.0
    %4670 = vmatpush1.msra.mxu0 0.0
    %4671 = vmatprep.subr.mxu0 0.0
    %4672 = vmatpush1.msra.mxu0 0.0
    %4673 = vmatprep.subr.mxu0 0.0
    %4674 = vmatpush1.msra.mxu0 0.0
    %4675 = vmatprep.subr.mxu0 0.0
    %4676 = vmatpush1.msra.mxu0 0.0
    %4677 = vmatprep.subr.mxu0 0.0
    %4678 = vmatpush1.msra.mxu0 0.0
    %4679 = vmatprep.subr.mxu0 0.0
    %4680 = vmatpush1.msra.mxu0 0.0
    %4681 = vmatprep.subr.mxu0 0.0
    %4682 = vmatpush1.msra.mxu0 0.0
    %4683 = vmatprep.subr.mxu0 0.0
    %4684 = vmatpush1.msra.mxu0 0.0
    %4685 = vmatprep.subr.mxu0 0.0
    %4686 = vmatpush1.msra.mxu0 0.0
    %4687 = vmatprep.subr.mxu0 0.0
    %4688 = vmatpush1.msra.mxu0 0.0
    %4689 = vmatprep.subr.mxu0 0.0
    %4690 = vmatpush1.msra.mxu0 0.0
    %4691 = vmatprep.subr.mxu0 0.0
    %4692 = vmatpush1.msra.mxu0 0.0
    %4693 = vmatprep.mubr.f32.mxu0 0.0
    %4694 = vmatmul.mubr.f32.gmra.mrb[0].mxu0 %v4556
    %v4695 = vpop.f32.mrb[0].mxu0
    %v4696 = vadd.f32 0.0, %v4695
    %v4697 = vpop.f32.mrb[0].mxu0
    %v4698 = vadd.f32 0.0, %v4697
    %4699 = vdwg.mxu0
    %v4704 = vrot.slane %v4625, 2
    %v4705 = vrot.slane %v4627, 2
    %v4706 = vrot.slane %v4696, 2
    %v4707 = vrot.slane %v4698, 2
    %v4712 = vadd.f32 %v3850, %v4704
    %v4713 = vadd.f32 %v3852, %v4705
    %v4714 = vadd.f32 %v3927, %v4706
    %v4715 = vadd.f32 %v3929, %v4707
    %v4716 = vxor.u32 %v4712, 2147483648
    %v4717 = vmul.f32 %v4716, 1.442695
    %v4718 = vpow.pop %v4717
    %v4719 = vadd.f32 %v4718, 1.0
    %v4720 = vrcp.pop %v4719
    %v4721 = vmul.f32 1.0, %v4720
    %v4722 = vxor.u32 %v4713, 2147483648
    %v4723 = vmul.f32 %v4722, 1.442695
    %v4724 = vpow.pop %v4723
    %v4725 = vadd.f32 %v4724, 1.0
    %v4726 = vrcp.pop %v4725
    %v4727 = vmul.f32 1.0, %v4726
    %v4728 = vtanh.pop %v4714
    %v4729 = vxor.u32 %v4715, 2147483648
    %v4730 = vmul.f32 %v4729, 1.442695
    %v4731 = vpow.pop %v4730
    %v4732 = vadd.f32 %v4731, 1.0
    %v4733 = vrcp.pop %v4732
    %v4734 = vmul.f32 1.0, %v4733
    %v4736 = vrot.slane %v4550, 6
    %v4738 = vmul.f32 %v4727, %v4736
    %v4739 = vmul.f32 %v4721, %v4728
    %v4740 = vadd.f32 %v4738, %v4739
    %v4741 = vtanh.pop %v4740
    %v4742 = vmul.f32 %v4734, %v4741
    %s4743 = scalar_lea.vmem [#allocation3], 6
    %4744 = vst [vmem:[%s4743 - $0x6] sm:$0xc0] %v4742
    %v4746 = vrot.slane %v4742, 6
    %4748 = vmatprep.subr.mxu0 %v3938
    %4749 = vmatpush1.msra.mxu0 %v3937
    %4750 = vmatprep.subr.mxu0 %v3942
    %4751 = vmatpush1.msra.mxu0 %v3941
    %4752 = vmatprep.subr.mxu0 %v3946
    %4753 = vmatpush1.msra.mxu0 %v3945
    %4754 = vmatprep.subr.mxu0 %v3950
    %4755 = vmatpush1.msra.mxu0 %v3949
    %4756 = vmatprep.subr.mxu0 %v3954
    %4757 = vmatpush1.msra.mxu0 %v3953
    %4758 = vmatprep.subr.mxu0 %v3958
    %4759 = vmatpush1.msra.mxu0 %v3957
    %4760 = vmatprep.subr.mxu0 %v3962
    %4761 = vmatpush1.msra.mxu0 %v3961
    %4762 = vmatprep.subr.mxu0 %v3966
    %4763 = vmatpush1.msra.mxu0 %v3965
    %4764 = vmatprep.subr.mxu0 %v3970
    %4765 = vmatpush1.msra.mxu0 %v3969
    %4766 = vmatprep.subr.mxu0 %v3974
    %4767 = vmatpush1.msra.mxu0 %v3973
    %4768 = vmatprep.subr.mxu0 %v3978
    %4769 = vmatpush1.msra.mxu0 %v3977
    %4770 = vmatprep.subr.mxu0 %v3982
    %4771 = vmatpush1.msra.mxu0 %v3981
    %4772 = vmatprep.subr.mxu0 %v3986
    %4773 = vmatpush1.msra.mxu0 %v3985
    %4774 = vmatprep.subr.mxu0 %v3990
    %4775 = vmatpush1.msra.mxu0 %v3989
    %4776 = vmatprep.subr.mxu0 %v3994
    %4777 = vmatpush1.msra.mxu0 %v3993
    %4778 = vmatprep.subr.mxu0 %v3998
    %4779 = vmatpush1.msra.mxu0 %v3997
    %4780 = vmatprep.subr.mxu0 0.0
    %4781 = vmatpush1.msra.mxu0 0.0
    %4782 = vmatprep.subr.mxu0 0.0
    %4783 = vmatpush1.msra.mxu0 0.0
    %4784 = vmatprep.subr.mxu0 0.0
    %4785 = vmatpush1.msra.mxu0 0.0
    %4786 = vmatprep.subr.mxu0 0.0
    %4787 = vmatpush1.msra.mxu0 0.0
    %4788 = vmatprep.subr.mxu0 0.0
    %4789 = vmatpush1.msra.mxu0 0.0
    %4790 = vmatprep.subr.mxu0 0.0
    %4791 = vmatpush1.msra.mxu0 0.0
    %4792 = vmatprep.subr.mxu0 0.0
    %4793 = vmatpush1.msra.mxu0 0.0
    %4794 = vmatprep.subr.mxu0 0.0
    %4795 = vmatpush1.msra.mxu0 0.0
    %4796 = vmatprep.subr.mxu0 0.0
    %4797 = vmatpush1.msra.mxu0 0.0
    %4798 = vmatprep.subr.mxu0 0.0
    %4799 = vmatpush1.msra.mxu0 0.0
    %4800 = vmatprep.subr.mxu0 0.0
    %4801 = vmatpush1.msra.mxu0 0.0
    %4802 = vmatprep.subr.mxu0 0.0
    %4803 = vmatpush1.msra.mxu0 0.0
    %4804 = vmatprep.subr.mxu0 0.0
    %4805 = vmatpush1.msra.mxu0 0.0
    %4806 = vmatprep.subr.mxu0 0.0
    %4807 = vmatpush1.msra.mxu0 0.0
    %4808 = vmatprep.subr.mxu0 0.0
    %4809 = vmatpush1.msra.mxu0 0.0
    %4810 = vmatprep.subr.mxu0 0.0
    %4811 = vmatpush1.msra.mxu0 0.0
    %4812 = vmatprep.mubr.f32.mxu0 0.0
    %4813 = vmatmul.mubr.f32.gmra.mrb[0].mxu0 %v4746
    %v4814 = vpop.f32.mrb[0].mxu0
    %v4815 = vadd.f32 0.0, %v4814
    %v4816 = vpop.f32.mrb[0].mxu0
    %v4817 = vadd.f32 0.0, %v4816
    %4818 = vdwg.mxu0
    %4819 = vmatprep.subr.mxu0 %v3940
    %4820 = vmatpush1.msra.mxu0 %v3939
    %4821 = vmatprep.subr.mxu0 %v3944
    %4822 = vmatpush1.msra.mxu0 %v3943
    %4823 = vmatprep.subr.mxu0 %v3948
    %4824 = vmatpush1.msra.mxu0 %v3947
    %4825 = vmatprep.subr.mxu0 %v3952
    %4826 = vmatpush1.msra.mxu0 %v3951
    %4827 = vmatprep.subr.mxu0 %v3956
    %4828 = vmatpush1.msra.mxu0 %v3955
    %4829 = vmatprep.subr.mxu0 %v3960
    %4830 = vmatpush1.msra.mxu0 %v3959
    %4831 = vmatprep.subr.mxu0 %v3964
    %4832 = vmatpush1.msra.mxu0 %v3963
    %4833 = vmatprep.subr.mxu0 %v3968
    %4834 = vmatpush1.msra.mxu0 %v3967
    %4835 = vmatprep.subr.mxu0 %v3972
    %4836 = vmatpush1.msra.mxu0 %v3971
    %4837 = vmatprep.subr.mxu0 %v3976
    %4838 = vmatpush1.msra.mxu0 %v3975
    %4839 = vmatprep.subr.mxu0 %v3980
    %4840 = vmatpush1.msra.mxu0 %v3979
    %4841 = vmatprep.subr.mxu0 %v3984
    %4842 = vmatpush1.msra.mxu0 %v3983
    %4843 = vmatprep.subr.mxu0 %v3988
    %4844 = vmatpush1.msra.mxu0 %v3987
    %4845 = vmatprep.subr.mxu0 %v3992
    %4846 = vmatpush1.msra.mxu0 %v3991
    %4847 = vmatprep.subr.mxu0 %v3996
    %4848 = vmatpush1.msra.mxu0 %v3995
    %4849 = vmatprep.subr.mxu0 %v4000
    %4850 = vmatpush1.msra.mxu0 %v3999
    %4851 = vmatprep.subr.mxu0 0.0
    %4852 = vmatpush1.msra.mxu0 0.0
    %4853 = vmatprep.subr.mxu0 0.0
    %4854 = vmatpush1.msra.mxu0 0.0
    %4855 = vmatprep.subr.mxu0 0.0
    %4856 = vmatpush1.msra.mxu0 0.0
    %4857 = vmatprep.subr.mxu0 0.0
    %4858 = vmatpush1.msra.mxu0 0.0
    %4859 = vmatprep.subr.mxu0 0.0
    %4860 = vmatpush1.msra.mxu0 0.0
    %4861 = vmatprep.subr.mxu0 0.0
    %4862 = vmatpush1.msra.mxu0 0.0
    %4863 = vmatprep.subr.mxu0 0.0
    %4864 = vmatpush1.msra.mxu0 0.0
    %4865 = vmatprep.subr.mxu0 0.0
    %4866 = vmatpush1.msra.mxu0 0.0
    %4867 = vmatprep.subr.mxu0 0.0
    %4868 = vmatpush1.msra.mxu0 0.0
    %4869 = vmatprep.subr.mxu0 0.0
    %4870 = vmatpush1.msra.mxu0 0.0
    %4871 = vmatprep.subr.mxu0 0.0
    %4872 = vmatpush1.msra.mxu0 0.0
    %4873 = vmatprep.subr.mxu0 0.0
    %4874 = vmatpush1.msra.mxu0 0.0
    %4875 = vmatprep.subr.mxu0 0.0
    %4876 = vmatpush1.msra.mxu0 0.0
    %4877 = vmatprep.subr.mxu0 0.0
    %4878 = vmatpush1.msra.mxu0 0.0
    %4879 = vmatprep.subr.mxu0 0.0
    %4880 = vmatpush1.msra.mxu0 0.0
    %4881 = vmatprep.subr.mxu0 0.0
    %4882 = vmatpush1.msra.mxu0 0.0
    %4883 = vmatprep.mubr.f32.mxu0 0.0
    %4884 = vmatmul.mubr.f32.gmra.mrb[0].mxu0 %v4746
    %v4885 = vpop.f32.mrb[0].mxu0
    %v4886 = vadd.f32 0.0, %v4885
    %v4887 = vpop.f32.mrb[0].mxu0
    %v4888 = vadd.f32 0.0, %v4887
    %4889 = vdwg.mxu0
    %v4890 = vadd.f32 %v3856, %v4815
    %v4891 = vadd.f32 %v3858, %v4817
    %v4892 = vadd.f32 %v3933, %v4886
    %v4893 = vadd.f32 %v3935, %v4888
    %v4894 = vxor.u32 %v4890, 2147483648
    %v4895 = vmul.f32 %v4894, 1.442695
    %v4896 = vpow.pop %v4895
    %v4897 = vadd.f32 %v4896, 1.0
    %v4898 = vrcp.pop %v4897
    %v4899 = vmul.f32 1.0, %v4898
    %v4900 = vxor.u32 %v4891, 2147483648
    %v4901 = vmul.f32 %v4900, 1.442695
    %v4902 = vpow.pop %v4901
    %v4903 = vadd.f32 %v4902, 1.0
    %v4904 = vrcp.pop %v4903
    %v4905 = vmul.f32 1.0, %v4904
    %v4906 = vtanh.pop %v4892
    %v4907 = vxor.u32 %v4893, 2147483648
    %v4908 = vmul.f32 %v4907, 1.442695
    %v4909 = vpow.pop %v4908
    %v4910 = vadd.f32 %v4909, 1.0
    %v4911 = vrcp.pop %v4910
    %v4912 = vmul.f32 1.0, %v4911
    %v4914 = vrot.slane %v4740, 6
    %v4916 = vmul.f32 %v4905, %v4914
    %v4917 = vmul.f32 %v4899, %v4906
    %v4918 = vadd.f32 %v4916, %v4917
    %v4919 = vtanh.pop %v4918
    %v4920 = vmul.f32 %v4912, %v4919
    %s4921 = scalar_lea.vmem [#allocation3], 8
    %4922 = vst [vmem:[%s4921] sm:$0x3] %v4920
    %4923 = vmatprep.subr.mxu0 %v3938
    %4924 = vmatpush1.msra.mxu0 %v3937
    %4925 = vmatprep.subr.mxu0 %v3942
    %4926 = vmatpush1.msra.mxu0 %v3941
    %4927 = vmatprep.subr.mxu0 %v3946
    %4928 = vmatpush1.msra.mxu0 %v3945
    %4929 = vmatprep.subr.mxu0 %v3950
    %4930 = vmatpush1.msra.mxu0 %v3949
    %4931 = vmatprep.subr.mxu0 %v3954
    %4932 = vmatpush1.msra.mxu0 %v3953
    %4933 = vmatprep.subr.mxu0 %v3958
    %4934 = vmatpush1.msra.mxu0 %v3957
    %4935 = vmatprep.subr.mxu0 %v3962
    %4936 = vmatpush1.msra.mxu0 %v3961
    %4937 = vmatprep.subr.mxu0 %v3966
    %4938 = vmatpush1.msra.mxu0 %v3965
    %4939 = vmatprep.subr.mxu0 %v3970
    %4940 = vmatpush1.msra.mxu0 %v3969
    %4941 = vmatprep.subr.mxu0 %v3974
    %4942 = vmatpush1.msra.mxu0 %v3973
    %4943 = vmatprep.subr.mxu0 %v3978
    %4944 = vmatpush1.msra.mxu0 %v3977
    %4945 = vmatprep.subr.mxu0 %v3982
    %4946 = vmatpush1.msra.mxu0 %v3981
    %4947 = vmatprep.subr.mxu0 %v3986
    %4948 = vmatpush1.msra.mxu0 %v3985
    %4949 = vmatprep.subr.mxu0 %v3990
    %4950 = vmatpush1.msra.mxu0 %v3989
    %4951 = vmatprep.subr.mxu0 %v3994
    %4952 = vmatpush1.msra.mxu0 %v3993
    %4953 = vmatprep.subr.mxu0 %v3998
    %4954 = vmatpush1.msra.mxu0 %v3997
    %4955 = vmatprep.subr.mxu0 0.0
    %4956 = vmatpush1.msra.mxu0 0.0
    %4957 = vmatprep.subr.mxu0 0.0
    %4958 = vmatpush1.msra.mxu0 0.0
    %4959 = vmatprep.subr.mxu0 0.0
    %4960 = vmatpush1.msra.mxu0 0.0
    %4961 = vmatprep.subr.mxu0 0.0
    %4962 = vmatpush1.msra.mxu0 0.0
    %4963 = vmatprep.subr.mxu0 0.0
    %4964 = vmatpush1.msra.mxu0 0.0
    %4965 = vmatprep.subr.mxu0 0.0
    %4966 = vmatpush1.msra.mxu0 0.0
    %4967 = vmatprep.subr.mxu0 0.0
    %4968 = vmatpush1.msra.mxu0 0.0
    %4969 = vmatprep.subr.mxu0 0.0
    %4970 = vmatpush1.msra.mxu0 0.0
    %4971 = vmatprep.subr.mxu0 0.0
    %4972 = vmatpush1.msra.mxu0 0.0
    %4973 = vmatprep.subr.mxu0 0.0
    %4974 = vmatpush1.msra.mxu0 0.0
    %4975 = vmatprep.subr.mxu0 0.0
    %4976 = vmatpush1.msra.mxu0 0.0
    %4977 = vmatprep.subr.mxu0 0.0
    %4978 = vmatpush1.msra.mxu0 0.0
    %4979 = vmatprep.subr.mxu0 0.0
    %4980 = vmatpush1.msra.mxu0 0.0
    %4981 = vmatprep.subr.mxu0 0.0
    %4982 = vmatpush1.msra.mxu0 0.0
    %4983 = vmatprep.subr.mxu0 0.0
    %4984 = vmatpush1.msra.mxu0 0.0
    %4985 = vmatprep.subr.mxu0 0.0
    %4986 = vmatpush1.msra.mxu0 0.0
    %4987 = vmatprep.mubr.f32.mxu0 0.0
    %4988 = vmatmul.mubr.f32.gmra.mrb[0].mxu0 %v4920
    %v4989 = vpop.f32.mrb[0].mxu0
    %v4990 = vadd.f32 0.0, %v4989
    %v4991 = vpop.f32.mrb[0].mxu0
    %v4992 = vadd.f32 0.0, %v4991
    %4993 = vdwg.mxu0
    %4994 = vmatprep.subr.mxu0 %v3940
    %4995 = vmatpush1.msra.mxu0 %v3939
    %4996 = vmatprep.subr.mxu0 %v3944
    %4997 = vmatpush1.msra.mxu0 %v3943
    %4998 = vmatprep.subr.mxu0 %v3948
    %4999 = vmatpush1.msra.mxu0 %v3947
    %5000 = vmatprep.subr.mxu0 %v3952
    %5001 = vmatpush1.msra.mxu0 %v3951
    %5002 = vmatprep.subr.mxu0 %v3956
    %5003 = vmatpush1.msra.mxu0 %v3955
    %5004 = vmatprep.subr.mxu0 %v3960
    %5005 = vmatpush1.msra.mxu0 %v3959
    %5006 = vmatprep.subr.mxu0 %v3964
    %5007 = vmatpush1.msra.mxu0 %v3963
    %5008 = vmatprep.subr.mxu0 %v3968
    %5009 = vmatpush1.msra.mxu0 %v3967
    %5010 = vmatprep.subr.mxu0 %v3972
    %5011 = vmatpush1.msra.mxu0 %v3971
    %5012 = vmatprep.subr.mxu0 %v3976
    %5013 = vmatpush1.msra.mxu0 %v3975
    %5014 = vmatprep.subr.mxu0 %v3980
    %5015 = vmatpush1.msra.mxu0 %v3979
    %5016 = vmatprep.subr.mxu0 %v3984
    %5017 = vmatpush1.msra.mxu0 %v3983
    %5018 = vmatprep.subr.mxu0 %v3988
    %5019 = vmatpush1.msra.mxu0 %v3987
    %5020 = vmatprep.subr.mxu0 %v3992
    %5021 = vmatpush1.msra.mxu0 %v3991
    %5022 = vmatprep.subr.mxu0 %v3996
    %5023 = vmatpush1.msra.mxu0 %v3995
    %5024 = vmatprep.subr.mxu0 %v4000
    %5025 = vmatpush1.msra.mxu0 %v3999
    %5026 = vmatprep.subr.mxu0 0.0
    %5027 = vmatpush1.msra.mxu0 0.0
    %5028 = vmatprep.subr.mxu0 0.0
    %5029 = vmatpush1.msra.mxu0 0.0
    %5030 = vmatprep.subr.mxu0 0.0
    %5031 = vmatpush1.msra.mxu0 0.0
    %5032 = vmatprep.subr.mxu0 0.0
    %5033 = vmatpush1.msra.mxu0 0.0
    %5034 = vmatprep.subr.mxu0 0.0
    %5035 = vmatpush1.msra.mxu0 0.0
    %5036 = vmatprep.subr.mxu0 0.0
    %5037 = vmatpush1.msra.mxu0 0.0
    %5038 = vmatprep.subr.mxu0 0.0
    %5039 = vmatpush1.msra.mxu0 0.0
    %5040 = vmatprep.subr.mxu0 0.0
    %5041 = vmatpush1.msra.mxu0 0.0
    %5042 = vmatprep.subr.mxu0 0.0
    %5043 = vmatpush1.msra.mxu0 0.0
    %5044 = vmatprep.subr.mxu0 0.0
    %5045 = vmatpush1.msra.mxu0 0.0
    %5046 = vmatprep.subr.mxu0 0.0
    %5047 = vmatpush1.msra.mxu0 0.0
    %5048 = vmatprep.subr.mxu0 0.0
    %5049 = vmatpush1.msra.mxu0 0.0
    %5050 = vmatprep.subr.mxu0 0.0
    %5051 = vmatpush1.msra.mxu0 0.0
    %5052 = vmatprep.subr.mxu0 0.0
    %5053 = vmatpush1.msra.mxu0 0.0
    %5054 = vmatprep.subr.mxu0 0.0
    %5055 = vmatpush1.msra.mxu0 0.0
    %5056 = vmatprep.subr.mxu0 0.0
    %5057 = vmatpush1.msra.mxu0 0.0
    %5058 = vmatprep.mubr.f32.mxu0 0.0
    %5059 = vmatmul.mubr.f32.gmra.mrb[0].mxu0 %v4920
    %v5060 = vpop.f32.mrb[0].mxu0
    %v5061 = vadd.f32 0.0, %v5060
    %v5062 = vpop.f32.mrb[0].mxu0
    %v5063 = vadd.f32 0.0, %v5062
    %5064 = vdwg.mxu0
    %v5069 = vrot.slane %v4990, 6
    %v5070 = vrot.slane %v4992, 6
    %v5071 = vrot.slane %v5061, 6
    %v5072 = vrot.slane %v5063, 6
    %v5077 = vadd.f32 %v3856, %v5069
    %v5078 = vadd.f32 %v3858, %v5070
    %v5079 = vadd.f32 %v3933, %v5071
    %v5080 = vadd.f32 %v3935, %v5072
    %v5081 = vxor.u32 %v5077, 2147483648
    %v5082 = vmul.f32 %v5081, 1.442695
    %v5083 = vpow.pop %v5082
    %v5084 = vadd.f32 %v5083, 1.0
    %v5085 = vrcp.pop %v5084
    %v5086 = vmul.f32 1.0, %v5085
    %v5087 = vxor.u32 %v5078, 2147483648
    %v5088 = vmul.f32 %v5087, 1.442695
    %v5089 = vpow.pop %v5088
    %v5090 = vadd.f32 %v5089, 1.0
    %v5091 = vrcp.pop %v5090
    %v5092 = vmul.f32 1.0, %v5091
    %v5093 = vtanh.pop %v5079
    %v5094 = vxor.u32 %v5080, 2147483648
    %v5095 = vmul.f32 %v5094, 1.442695
    %v5096 = vpow.pop %v5095
    %v5097 = vadd.f32 %v5096, 1.0
    %v5098 = vrcp.pop %v5097
    %v5099 = vmul.f32 1.0, %v5098
    %v5101 = vrot.slane %v4918, 6
    %v5103 = vmul.f32 %v5092, %v5101
    %v5104 = vmul.f32 %v5086, %v5093
    %v5105 = vadd.f32 %v5103, %v5104
    %v5106 = vtanh.pop %v5105
    %v5107 = vmul.f32 %v5099, %v5106
    %s5108 = scalar_lea.vmem [#allocation3], 10
    %5109 = vst [vmem:[%s5108 - $0x2] sm:$0xc] %v5107
    %v5111 = vrot.slane %v5107, 2
    %5113 = vmatprep.subr.mxu0 %v3938
    %5114 = vmatpush1.msra.mxu0 %v3937
    %5115 = vmatprep.subr.mxu0 %v3942
    %5116 = vmatpush1.msra.mxu0 %v3941
    %5117 = vmatprep.subr.mxu0 %v3946
    %5118 = vmatpush1.msra.mxu0 %v3945
    %5119 = vmatprep.subr.mxu0 %v3950
    %5120 = vmatpush1.msra.mxu0 %v3949
    %5121 = vmatprep.subr.mxu0 %v3954
    %5122 = vmatpush1.msra.mxu0 %v3953
    %5123 = vmatprep.subr.mxu0 %v3958
    %5124 = vmatpush1.msra.mxu0 %v3957
    %5125 = vmatprep.subr.mxu0 %v3962
    %5126 = vmatpush1.msra.mxu0 %v3961
    %5127 = vmatprep.subr.mxu0 %v3966
    %5128 = vmatpush1.msra.mxu0 %v3965
    %5129 = vmatprep.subr.mxu0 %v3970
    %5130 = vmatpush1.msra.mxu0 %v3969
    %5131 = vmatprep.subr.mxu0 %v3974
    %5132 = vmatpush1.msra.mxu0 %v3973
    %5133 = vmatprep.subr.mxu0 %v3978
    %5134 = vmatpush1.msra.mxu0 %v3977
    %5135 = vmatprep.subr.mxu0 %v3982
    %5136 = vmatpush1.msra.mxu0 %v3981
    %5137 = vmatprep.subr.mxu0 %v3986
    %5138 = vmatpush1.msra.mxu0 %v3985
    %5139 = vmatprep.subr.mxu0 %v3990
    %5140 = vmatpush1.msra.mxu0 %v3989
    %5141 = vmatprep.subr.mxu0 %v3994
    %5142 = vmatpush1.msra.mxu0 %v3993
    %5143 = vmatprep.subr.mxu0 %v3998
    %5144 = vmatpush1.msra.mxu0 %v3997
    %5145 = vmatprep.subr.mxu0 0.0
    %5146 = vmatpush1.msra.mxu0 0.0
    %5147 = vmatprep.subr.mxu0 0.0
    %5148 = vmatpush1.msra.mxu0 0.0
    %5149 = vmatprep.subr.mxu0 0.0
    %5150 = vmatpush1.msra.mxu0 0.0
    %5151 = vmatprep.subr.mxu0 0.0
    %5152 = vmatpush1.msra.mxu0 0.0
    %5153 = vmatprep.subr.mxu0 0.0
    %5154 = vmatpush1.msra.mxu0 0.0
    %5155 = vmatprep.subr.mxu0 0.0
    %5156 = vmatpush1.msra.mxu0 0.0
    %5157 = vmatprep.subr.mxu0 0.0
    %5158 = vmatpush1.msra.mxu0 0.0
    %5159 = vmatprep.subr.mxu0 0.0
    %5160 = vmatpush1.msra.mxu0 0.0
    %5161 = vmatprep.subr.mxu0 0.0
    %5162 = vmatpush1.msra.mxu0 0.0
    %5163 = vmatprep.subr.mxu0 0.0
    %5164 = vmatpush1.msra.mxu0 0.0
    %5165 = vmatprep.subr.mxu0 0.0
    %5166 = vmatpush1.msra.mxu0 0.0
    %5167 = vmatprep.subr.mxu0 0.0
    %5168 = vmatpush1.msra.mxu0 0.0
    %5169 = vmatprep.subr.mxu0 0.0
    %5170 = vmatpush1.msra.mxu0 0.0
    %5171 = vmatprep.subr.mxu0 0.0
    %5172 = vmatpush1.msra.mxu0 0.0
    %5173 = vmatprep.subr.mxu0 0.0
    %5174 = vmatpush1.msra.mxu0 0.0
    %5175 = vmatprep.subr.mxu0 0.0
    %5176 = vmatpush1.msra.mxu0 0.0
    %5177 = vmatprep.mubr.f32.mxu0 0.0
    %5178 = vmatmul.mubr.f32.gmra.mrb[0].mxu0 %v5111
    %v5179 = vpop.f32.mrb[0].mxu0
    %v5180 = vadd.f32 0.0, %v5179
    %v5181 = vpop.f32.mrb[0].mxu0
    %v5182 = vadd.f32 0.0, %v5181
    %5183 = vdwg.mxu0
    %5184 = vmatprep.subr.mxu0 %v3940
    %5185 = vmatpush1.msra.mxu0 %v3939
    %5186 = vmatprep.subr.mxu0 %v3944
    %5187 = vmatpush1.msra.mxu0 %v3943
    %5188 = vmatprep.subr.mxu0 %v3948
    %5189 = vmatpush1.msra.mxu0 %v3947
    %5190 = vmatprep.subr.mxu0 %v3952
    %5191 = vmatpush1.msra.mxu0 %v3951
    %5192 = vmatprep.subr.mxu0 %v3956
    %5193 = vmatpush1.msra.mxu0 %v3955
    %5194 = vmatprep.subr.mxu0 %v3960
    %5195 = vmatpush1.msra.mxu0 %v3959
    %5196 = vmatprep.subr.mxu0 %v3964
    %5197 = vmatpush1.msra.mxu0 %v3963
    %5198 = vmatprep.subr.mxu0 %v3968
    %5199 = vmatpush1.msra.mxu0 %v3967
    %5200 = vmatprep.subr.mxu0 %v3972
    %5201 = vmatpush1.msra.mxu0 %v3971
    %5202 = vmatprep.subr.mxu0 %v3976
    %5203 = vmatpush1.msra.mxu0 %v3975
    %5204 = vmatprep.subr.mxu0 %v3980
    %5205 = vmatpush1.msra.mxu0 %v3979
    %5206 = vmatprep.subr.mxu0 %v3984
    %5207 = vmatpush1.msra.mxu0 %v3983
    %5208 = vmatprep.subr.mxu0 %v3988
    %5209 = vmatpush1.msra.mxu0 %v3987
    %5210 = vmatprep.subr.mxu0 %v3992
    %5211 = vmatpush1.msra.mxu0 %v3991
    %5212 = vmatprep.subr.mxu0 %v3996
    %5213 = vmatpush1.msra.mxu0 %v3995
    %5214 = vmatprep.subr.mxu0 %v4000
    %5215 = vmatpush1.msra.mxu0 %v3999
    %5216 = vmatprep.subr.mxu0 0.0
    %5217 = vmatpush1.msra.mxu0 0.0
    %5218 = vmatprep.subr.mxu0 0.0
    %5219 = vmatpush1.msra.mxu0 0.0
    %5220 = vmatprep.subr.mxu0 0.0
    %5221 = vmatpush1.msra.mxu0 0.0
    %5222 = vmatprep.subr.mxu0 0.0
    %5223 = vmatpush1.msra.mxu0 0.0
    %5224 = vmatprep.subr.mxu0 0.0
    %5225 = vmatpush1.msra.mxu0 0.0
    %5226 = vmatprep.subr.mxu0 0.0
    %5227 = vmatpush1.msra.mxu0 0.0
    %5228 = vmatprep.subr.mxu0 0.0
    %5229 = vmatpush1.msra.mxu0 0.0
    %5230 = vmatprep.subr.mxu0 0.0
    %5231 = vmatpush1.msra.mxu0 0.0
    %5232 = vmatprep.subr.mxu0 0.0
    %5233 = vmatpush1.msra.mxu0 0.0
    %5234 = vmatprep.subr.mxu0 0.0
    %5235 = vmatpush1.msra.mxu0 0.0
    %5236 = vmatprep.subr.mxu0 0.0
    %5237 = vmatpush1.msra.mxu0 0.0
    %5238 = vmatprep.subr.mxu0 0.0
    %5239 = vmatpush1.msra.mxu0 0.0
    %5240 = vmatprep.subr.mxu0 0.0
    %5241 = vmatpush1.msra.mxu0 0.0
    %5242 = vmatprep.subr.mxu0 0.0
    %5243 = vmatpush1.msra.mxu0 0.0
    %5244 = vmatprep.subr.mxu0 0.0
    %5245 = vmatpush1.msra.mxu0 0.0
    %5246 = vmatprep.subr.mxu0 0.0
    %5247 = vmatpush1.msra.mxu0 0.0
    %5248 = vmatprep.mubr.f32.mxu0 0.0
    %5249 = vmatmul.mubr.f32.gmra.mrb[0].mxu0 %v5111
    %v5250 = vpop.f32.mrb[0].mxu0
    %v5251 = vadd.f32 0.0, %v5250
    %v5252 = vpop.f32.mrb[0].mxu0
    %v5253 = vadd.f32 0.0, %v5252
    %5254 = vdwg.mxu0
    %v5259 = vrot.slane %v5180, 4
    %v5260 = vrot.slane %v5182, 4
    %v5261 = vrot.slane %v5251, 4
    %v5262 = vrot.slane %v5253, 4
    %v5267 = vadd.f32 %v3856, %v5259
    %v5268 = vadd.f32 %v3858, %v5260
    %v5269 = vadd.f32 %v3933, %v5261
    %v5270 = vadd.f32 %v3935, %v5262
    %v5271 = vxor.u32 %v5267, 2147483648
    %v5272 = vmul.f32 %v5271, 1.442695
    %v5273 = vpow.pop %v5272
    %v5274 = vadd.f32 %v5273, 1.0
    %v5275 = vrcp.pop %v5274
    %v5276 = vmul.f32 1.0, %v5275
    %v5277 = vxor.u32 %v5268, 2147483648
    %v5278 = vmul.f32 %v5277, 1.442695
    %v5279 = vpow.pop %v5278
    %v5280 = vadd.f32 %v5279, 1.0
    %v5281 = vrcp.pop %v5280
    %v5282 = vmul.f32 1.0, %v5281
    %v5283 = vtanh.pop %v5269
    %v5284 = vxor.u32 %v5270, 2147483648
    %v5285 = vmul.f32 %v5284, 1.442695
    %v5286 = vpow.pop %v5285
    %v5287 = vadd.f32 %v5286, 1.0
    %v5288 = vrcp.pop %v5287
    %v5289 = vmul.f32 1.0, %v5288
    %v5291 = vrot.slane %v5105, 6
    %v5293 = vmul.f32 %v5282, %v5291
    %v5294 = vmul.f32 %v5276, %v5283
    %v5295 = vadd.f32 %v5293, %v5294
    %v5296 = vtanh.pop %v5295
    %v5297 = vmul.f32 %v5289, %v5296
    %s5298 = scalar_lea.vmem [#allocation3], 12
    %5299 = vst [vmem:[%s5298 - $0x4] sm:$0x30] %v5297
    %v5301 = vrot.slane %v5297, 4
    %5303 = vmatprep.subr.mxu0 %v3938
    %5304 = vmatpush1.msra.mxu0 %v3937
    %5305 = vmatprep.subr.mxu0 %v3942
    %5306 = vmatpush1.msra.mxu0 %v3941
    %5307 = vmatprep.subr.mxu0 %v3946
    %5308 = vmatpush1.msra.mxu0 %v3945
    %5309 = vmatprep.subr.mxu0 %v3950
    %5310 = vmatpush1.msra.mxu0 %v3949
    %5311 = vmatprep.subr.mxu0 %v3954
    %5312 = vmatpush1.msra.mxu0 %v3953
    %5313 = vmatprep.subr.mxu0 %v3958
    %5314 = vmatpush1.msra.mxu0 %v3957
    %5315 = vmatprep.subr.mxu0 %v3962
    %5316 = vmatpush1.msra.mxu0 %v3961
    %5317 = vmatprep.subr.mxu0 %v3966
    %5318 = vmatpush1.msra.mxu0 %v3965
    %5319 = vmatprep.subr.mxu0 %v3970
    %5320 = vmatpush1.msra.mxu0 %v3969
    %5321 = vmatprep.subr.mxu0 %v3974
    %5322 = vmatpush1.msra.mxu0 %v3973
    %5323 = vmatprep.subr.mxu0 %v3978
    %5324 = vmatpush1.msra.mxu0 %v3977
    %5325 = vmatprep.subr.mxu0 %v3982
    %5326 = vmatpush1.msra.mxu0 %v3981
    %5327 = vmatprep.subr.mxu0 %v3986
    %5328 = vmatpush1.msra.mxu0 %v3985
    %5329 = vmatprep.subr.mxu0 %v3990
    %5330 = vmatpush1.msra.mxu0 %v3989
    %5331 = vmatprep.subr.mxu0 %v3994
    %5332 = vmatpush1.msra.mxu0 %v3993
    %5333 = vmatprep.subr.mxu0 %v3998
    %5334 = vmatpush1.msra.mxu0 %v3997
    %5335 = vmatprep.subr.mxu0 0.0
    %5336 = vmatpush1.msra.mxu0 0.0
    %5337 = vmatprep.subr.mxu0 0.0
    %5338 = vmatpush1.msra.mxu0 0.0
    %5339 = vmatprep.subr.mxu0 0.0
    %5340 = vmatpush1.msra.mxu0 0.0
    %5341 = vmatprep.subr.mxu0 0.0
    %5342 = vmatpush1.msra.mxu0 0.0
    %5343 = vmatprep.subr.mxu0 0.0
    %5344 = vmatpush1.msra.mxu0 0.0
    %5345 = vmatprep.subr.mxu0 0.0
    %5346 = vmatpush1.msra.mxu0 0.0
    %5347 = vmatprep.subr.mxu0 0.0
    %5348 = vmatpush1.msra.mxu0 0.0
    %5349 = vmatprep.subr.mxu0 0.0
    %5350 = vmatpush1.msra.mxu0 0.0
    %5351 = vmatprep.subr.mxu0 0.0
    %5352 = vmatpush1.msra.mxu0 0.0
    %5353 = vmatprep.subr.mxu0 0.0
    %5354 = vmatpush1.msra.mxu0 0.0
    %5355 = vmatprep.subr.mxu0 0.0
    %5356 = vmatpush1.msra.mxu0 0.0
    %5357 = vmatprep.subr.mxu0 0.0
    %5358 = vmatpush1.msra.mxu0 0.0
    %5359 = vmatprep.subr.mxu0 0.0
    %5360 = vmatpush1.msra.mxu0 0.0
    %5361 = vmatprep.subr.mxu0 0.0
    %5362 = vmatpush1.msra.mxu0 0.0
    %5363 = vmatprep.subr.mxu0 0.0
    %5364 = vmatpush1.msra.mxu0 0.0
    %5365 = vmatprep.subr.mxu0 0.0
    %5366 = vmatpush1.msra.mxu0 0.0
    %5367 = vmatprep.mubr.f32.mxu0 0.0
    %5368 = vmatmul.mubr.f32.gmra.mrb[0].mxu0 %v5301
    %v5369 = vpop.f32.mrb[0].mxu0
    %v5370 = vadd.f32 0.0, %v5369
    %v5371 = vpop.f32.mrb[0].mxu0
    %v5372 = vadd.f32 0.0, %v5371
    %5373 = vdwg.mxu0
    %5374 = vmatprep.subr.mxu0 %v3940
    %5375 = vmatpush1.msra.mxu0 %v3939
    %5376 = vmatprep.subr.mxu0 %v3944
    %5377 = vmatpush1.msra.mxu0 %v3943
    %5378 = vmatprep.subr.mxu0 %v3948
    %5379 = vmatpush1.msra.mxu0 %v3947
    %5380 = vmatprep.subr.mxu0 %v3952
    %5381 = vmatpush1.msra.mxu0 %v3951
    %5382 = vmatprep.subr.mxu0 %v3956
    %5383 = vmatpush1.msra.mxu0 %v3955
    %5384 = vmatprep.subr.mxu0 %v3960
    %5385 = vmatpush1.msra.mxu0 %v3959
    %5386 = vmatprep.subr.mxu0 %v3964
    %5387 = vmatpush1.msra.mxu0 %v3963
    %5388 = vmatprep.subr.mxu0 %v3968
    %5389 = vmatpush1.msra.mxu0 %v3967
    %5390 = vmatprep.subr.mxu0 %v3972
    %5391 = vmatpush1.msra.mxu0 %v3971
    %5392 = vmatprep.subr.mxu0 %v3976
    %5393 = vmatpush1.msra.mxu0 %v3975
    %5394 = vmatprep.subr.mxu0 %v3980
    %5395 = vmatpush1.msra.mxu0 %v3979
    %5396 = vmatprep.subr.mxu0 %v3984
    %5397 = vmatpush1.msra.mxu0 %v3983
    %5398 = vmatprep.subr.mxu0 %v3988
    %5399 = vmatpush1.msra.mxu0 %v3987
    %5400 = vmatprep.subr.mxu0 %v3992
    %5401 = vmatpush1.msra.mxu0 %v3991
    %5402 = vmatprep.subr.mxu0 %v3996
    %5403 = vmatpush1.msra.mxu0 %v3995
    %5404 = vmatprep.subr.mxu0 %v4000
    %5405 = vmatpush1.msra.mxu0 %v3999
    %5406 = vmatprep.subr.mxu0 0.0
    %5407 = vmatpush1.msra.mxu0 0.0
    %5408 = vmatprep.subr.mxu0 0.0
    %5409 = vmatpush1.msra.mxu0 0.0
    %5410 = vmatprep.subr.mxu0 0.0
    %5411 = vmatpush1.msra.mxu0 0.0
    %5412 = vmatprep.subr.mxu0 0.0
    %5413 = vmatpush1.msra.mxu0 0.0
    %5414 = vmatprep.subr.mxu0 0.0
    %5415 = vmatpush1.msra.mxu0 0.0
    %5416 = vmatprep.subr.mxu0 0.0
    %5417 = vmatpush1.msra.mxu0 0.0
    %5418 = vmatprep.subr.mxu0 0.0
    %5419 = vmatpush1.msra.mxu0 0.0
    %5420 = vmatprep.subr.mxu0 0.0
    %5421 = vmatpush1.msra.mxu0 0.0
    %5422 = vmatprep.subr.mxu0 0.0
    %5423 = vmatpush1.msra.mxu0 0.0
    %5424 = vmatprep.subr.mxu0 0.0
    %5425 = vmatpush1.msra.mxu0 0.0
    %5426 = vmatprep.subr.mxu0 0.0
    %5427 = vmatpush1.msra.mxu0 0.0
    %5428 = vmatprep.subr.mxu0 0.0
    %5429 = vmatpush1.msra.mxu0 0.0
    %5430 = vmatprep.subr.mxu0 0.0
    %5431 = vmatpush1.msra.mxu0 0.0
    %5432 = vmatprep.subr.mxu0 0.0
    %5433 = vmatpush1.msra.mxu0 0.0
    %5434 = vmatprep.subr.mxu0 0.0
    %5435 = vmatpush1.msra.mxu0 0.0
    %5436 = vmatprep.subr.mxu0 0.0
    %5437 = vmatpush1.msra.mxu0 0.0
    %5438 = vmatprep.mubr.f32.mxu0 0.0
    %5439 = vmatmul.mubr.f32.gmra.mrb[0].mxu0 %v5301
    %v5440 = vpop.f32.mrb[0].mxu0
    %v5441 = vadd.f32 0.0, %v5440
    %v5442 = vpop.f32.mrb[0].mxu0
    %v5443 = vadd.f32 0.0, %v5442
    %5444 = vdwg.mxu0
    %v5449 = vrot.slane %v5370, 2
    %v5450 = vrot.slane %v5372, 2
    %v5451 = vrot.slane %v5441, 2
    %v5452 = vrot.slane %v5443, 2
    %v5457 = vadd.f32 %v3856, %v5449
    %v5458 = vadd.f32 %v3858, %v5450
    %v5459 = vadd.f32 %v3933, %v5451
    %v5460 = vadd.f32 %v3935, %v5452
    %v5461 = vxor.u32 %v5457, 2147483648
    %v5462 = vmul.f32 %v5461, 1.442695
    %v5463 = vpow.pop %v5462
    %v5464 = vadd.f32 %v5463, 1.0
    %v5465 = vrcp.pop %v5464
    %v5466 = vmul.f32 1.0, %v5465
    %v5467 = vxor.u32 %v5458, 2147483648
    %v5468 = vmul.f32 %v5467, 1.442695
    %v5469 = vpow.pop %v5468
    %v5470 = vadd.f32 %v5469, 1.0
    %v5471 = vrcp.pop %v5470
    %v5472 = vmul.f32 1.0, %v5471
    %v5473 = vtanh.pop %v5459
    %v5474 = vxor.u32 %v5460, 2147483648
    %v5475 = vmul.f32 %v5474, 1.442695
    %v5476 = vpow.pop %v5475
    %v5477 = vadd.f32 %v5476, 1.0
    %v5478 = vrcp.pop %v5477
    %v5479 = vmul.f32 1.0, %v5478
    %v5481 = vrot.slane %v5295, 6
    %v5483 = vmul.f32 %v5472, %v5481
    %v5484 = vmul.f32 %v5466, %v5473
    %v5485 = vadd.f32 %v5483, %v5484
    %v5486 = vtanh.pop %v5485
    %v5487 = vmul.f32 %v5479, %v5486
    %s5488 = scalar_lea.vmem [#allocation3], 14
    %5489 = vst [vmem:[%s5488 - $0x6] sm:$0xc0] %v5487
    %5490 = vst [vmem:[#allocation14 - $0x6] sm:$0xc0] %v5487
    %5491 = vst [vmem:[#allocation16 - $0x6] sm:$0xc0] %v5485
    %v5492 = vld [vmem:[#allocation2] sm:$0x3]
    %v5493 = vld [vmem:[#allocation2 + $0x2] sm:$0x3]
    %v5494 = vld [vmem:[#allocation2 + $0x4] sm:$0x3]
    %v5495 = vld [vmem:[#allocation2 + $0x6] sm:$0x3]
    %v5496 = vld [vmem:[#allocation2 + $0x8] sm:$0x3]
    %v5497 = vld [vmem:[#allocation2 + $0xa] sm:$0x3]
    %v5498 = vld [vmem:[#allocation2 + $0xc] sm:$0x3]
    %v5499 = vld [vmem:[#allocation2 + $0xe] sm:$0x3]
    %v5500 = vld [vmem:[#allocation3] sm:$0x3]
    %v5501 = vld [vmem:[#allocation3 + $0x2] sm:$0x3]
    %v5502 = vld [vmem:[#allocation3 + $0x4] sm:$0x3]
    %v5503 = vld [vmem:[#allocation3 + $0x6] sm:$0x3]
    %v5504 = vld [vmem:[#allocation3 + $0x8] sm:$0x3]
    %v5505 = vld [vmem:[#allocation3 + $0xa] sm:$0x3]
    %v5506 = vld [vmem:[#allocation3 + $0xc] sm:$0x3]
    %v5507 = vld [vmem:[#allocation3 + $0xe] sm:$0x3]
    %v5508 = vld [vmem:[%s12] sm:$0xff]
    %v5509 = vld [vmem:[%s12 + $0x8] sm:$0xff]
    %v5510 = vld [vmem:[%s12 + $0x10] sm:$0xff]
    %v5511 = vld [vmem:[%s12 + $0x18] sm:$0xff]
    %v5512 = vld [vmem:[%s12 + $0x20] sm:$0xff]
    %v5513 = vld [vmem:[%s12 + $0x28] sm:$0xff]
    %v5514 = vld [vmem:[%s12 + $0x30] sm:$0xff]
    %v5515 = vld [vmem:[%s12 + $0x38] sm:$0xff]
    %v5516 = vld [vmem:[%s12 + $0x40] sm:$0xff]
    %v5517 = vld [vmem:[%s12 + $0x48] sm:$0xff]
    %v5518 = vld [vmem:[%s12 + $0x50] sm:$0xff]
    %v5519 = vld [vmem:[%s12 + $0x58] sm:$0xff]
    %v5520 = vld [vmem:[%s12 + $0x60] sm:$0xff]
    %v5521 = vld [vmem:[%s12 + $0x68] sm:$0xff]
    %v5522 = vld [vmem:[%s12 + $0x70] sm:$0xff]
    %v5523 = vld [vmem:[%s12 + $0x78] sm:$0xff]
    %v5524 = vld [vmem:[%s13] sm:$0xff]
    %v5525 = vld [vmem:[%s13 + $0x8] sm:$0xff]
    %v5526 = vld [vmem:[%s13 + $0x10] sm:$0xff]
    %v5527 = vld [vmem:[%s13 + $0x18] sm:$0xff]
    %v5528 = vld [vmem:[%s13 + $0x20] sm:$0xff]
    %v5529 = vld [vmem:[%s13 + $0x28] sm:$0xff]
    %v5530 = vld [vmem:[%s13 + $0x30] sm:$0xff]
    %v5531 = vld [vmem:[%s13 + $0x38] sm:$0xff]
    %v5532 = vld [vmem:[%s13 + $0x40] sm:$0xff]
    %v5533 = vld [vmem:[%s13 + $0x48] sm:$0xff]
    %v5534 = vld [vmem:[%s13 + $0x50] sm:$0xff]
    %v5535 = vld [vmem:[%s13 + $0x58] sm:$0xff]
    %v5536 = vld [vmem:[%s13 + $0x60] sm:$0xff]
    %v5537 = vld [vmem:[%s13 + $0x68] sm:$0xff]
    %v5538 = vld [vmem:[%s13 + $0x70] sm:$0xff]
    %v5539 = vld [vmem:[%s13 + $0x78] sm:$0xff]
    %v5540 = vld [vmem:[%s14] sm:$0xff]
    %v5541 = vld [vmem:[%s14 + $0x8] sm:$0xff]
    %v5542 = vld [vmem:[%s14 + $0x10] sm:$0xff]
    %v5543 = vld [vmem:[%s14 + $0x18] sm:$0xff]
    %v5544 = vld [vmem:[%s14 + $0x20] sm:$0xff]
    %v5545 = vld [vmem:[%s14 + $0x28] sm:$0xff]
    %v5546 = vld [vmem:[%s14 + $0x30] sm:$0xff]
    %v5547 = vld [vmem:[%s14 + $0x38] sm:$0xff]
    %v5548 = vld [vmem:[%s14 + $0x40] sm:$0xff]
    %v5549 = vld [vmem:[%s14 + $0x48] sm:$0xff]
    %v5550 = vld [vmem:[%s14 + $0x50] sm:$0xff]
    %v5551 = vld [vmem:[%s14 + $0x58] sm:$0xff]
    %v5552 = vld [vmem:[%s14 + $0x60] sm:$0xff]
    %v5553 = vld [vmem:[%s14 + $0x68] sm:$0xff]
    %v5554 = vld [vmem:[%s14 + $0x70] sm:$0xff]
    %v5555 = vld [vmem:[%s14 + $0x78] sm:$0xff]
    %v5556 = vld [vmem:[%s15] sm:$0x1]
    %v5565 = vrot.slane %v5501, 7
    %vm5566 = vcmask 1041409
    %v5567 = vsel %vm5566, %v5565, %v5500
    %v5568 = vrot.slane %v5502, 6
    %vm5569 = vcmask 1042434
    %v5570 = vsel %vm5569, %v5568, %v5567
    %v5571 = vrot.slane %v5503, 5
    %vm5572 = vcmask 1043459
    %v5573 = vsel %vm5572, %v5571, %v5570
    %v5574 = vrot.slane %v5504, 4
    %vm5575 = vcmask 1044484
    %v5576 = vsel %vm5575, %v5574, %v5573
    %v5577 = vrot.slane %v5505, 3
    %vm5578 = vcmask 1045509
    %v5579 = vsel %vm5578, %v5577, %v5576
    %v5580 = vrot.slane %v5506, 2
    %vm5581 = vcmask 1046534
    %v5582 = vsel %vm5581, %v5580, %v5579
    %v5583 = vrot.slane %v5507, 1
    %vm5584 = vcmask 1047559
    %v5585 = vsel %vm5584, %v5583, %v5582
    %v5595 = vrot.slane %v5493, 7
    %v5596 = vsel %vm5566, %v5595, %v5492
    %v5597 = vrot.slane %v5494, 6
    %v5598 = vsel %vm5569, %v5597, %v5596
    %v5599 = vrot.slane %v5495, 5
    %v5600 = vsel %vm5572, %v5599, %v5598
    %v5601 = vrot.slane %v5496, 4
    %v5602 = vsel %vm5575, %v5601, %v5600
    %v5603 = vrot.slane %v5497, 3
    %v5604 = vsel %vm5578, %v5603, %v5602
    %v5605 = vrot.slane %v5498, 2
    %v5606 = vsel %vm5581, %v5605, %v5604
    %v5607 = vrot.slane %v5499, 1
    %v5608 = vsel %vm5584, %v5607, %v5606
    %5610 = vmatprep.subr.mxu0 0.0
    %5611 = vmatpush1.xpose.msra.mxu0 %v5608
    %5612 = vmatprep.subr.mxu0 0.0
    %5613 = vmatpush1.xpose.msra.mxu0 0.0
    %5614 = vmatprep.subr.mxu0 0.0
    %5615 = vmatpush1.xpose.msra.mxu0 0.0
    %5616 = vmatprep.subr.mxu0 0.0
    %5617 = vmatpush1.xpose.msra.mxu0 0.0
    %5618 = vmatprep.subr.mxu0 0.0
    %5619 = vmatpush1.xpose.msra.mxu0 0.0
    %5620 = vmatprep.subr.mxu0 0.0
    %5621 = vmatpush1.xpose.msra.mxu0 0.0
    %5622 = vmatprep.subr.mxu0 0.0
    %5623 = vmatpush1.xpose.msra.mxu0 0.0
    %5624 = vmatprep.subr.mxu0 0.0
    %5625 = vmatpush1.xpose.msra.mxu0 0.0
    %5626 = vmatprep.subr.mxu0 0.0
    %5627 = vmatpush1.xpose.msra.mxu0 0.0
    %5628 = vmatprep.subr.mxu0 0.0
    %5629 = vmatpush1.xpose.msra.mxu0 0.0
    %5630 = vmatprep.subr.mxu0 0.0
    %5631 = vmatpush1.xpose.msra.mxu0 0.0
    %5632 = vmatprep.subr.mxu0 0.0
    %5633 = vmatpush1.xpose.msra.mxu0 0.0
    %5634 = vmatprep.subr.mxu0 0.0
    %5635 = vmatpush1.xpose.msra.mxu0 0.0
    %5636 = vmatprep.subr.mxu0 0.0
    %5637 = vmatpush1.xpose.msra.mxu0 0.0
    %5638 = vmatprep.subr.mxu0 0.0
    %5639 = vmatpush1.xpose.msra.mxu0 0.0
    %5640 = vmatprep.subr.mxu0 0.0
    %5641 = vmatpush1.xpose.msra.mxu0 0.0
    %5642 = vmatprep.subr.mxu0 0.0
    %5643 = vmatpush1.xpose.msra.mxu0 0.0
    %5644 = vmatprep.subr.mxu0 0.0
    %5645 = vmatpush1.xpose.msra.mxu0 0.0
    %5646 = vmatprep.subr.mxu0 0.0
    %5647 = vmatpush1.xpose.msra.mxu0 0.0
    %5648 = vmatprep.subr.mxu0 0.0
    %5649 = vmatpush1.xpose.msra.mxu0 0.0
    %5650 = vmatprep.subr.mxu0 0.0
    %5651 = vmatpush1.xpose.msra.mxu0 0.0
    %5652 = vmatprep.subr.mxu0 0.0
    %5653 = vmatpush1.xpose.msra.mxu0 0.0
    %5654 = vmatprep.subr.mxu0 0.0
    %5655 = vmatpush1.xpose.msra.mxu0 0.0
    %5656 = vmatprep.subr.mxu0 0.0
    %5657 = vmatpush1.xpose.msra.mxu0 0.0
    %5658 = vmatprep.subr.mxu0 0.0
    %5659 = vmatpush1.xpose.msra.mxu0 0.0
    %5660 = vmatprep.subr.mxu0 0.0
    %5661 = vmatpush1.xpose.msra.mxu0 0.0
    %5662 = vmatprep.subr.mxu0 0.0
    %5663 = vmatpush1.xpose.msra.mxu0 0.0
    %5664 = vmatprep.subr.mxu0 0.0
    %5665 = vmatpush1.xpose.msra.mxu0 0.0
    %5666 = vmatprep.subr.mxu0 0.0
    %5667 = vmatpush1.xpose.msra.mxu0 0.0
    %5668 = vmatprep.subr.mxu0 0.0
    %5669 = vmatpush1.xpose.msra.mxu0 0.0
    %5670 = vmatprep.subr.mxu0 0.0
    %5671 = vmatpush1.xpose.msra.mxu0 0.0
    %5672 = vmatprep.subr.mxu0 0.0
    %5673 = vmatpush1.xpose.msra.mxu0 0.0
    %5674 = vmatprep.mubr.f32.mxu0 0.0
    %5675 = vmatmul.mubr.f32.gmra.mrb[0].mxu0 %v5585
    %v5676 = vpop.f32.mrb[0].mxu0
    %v5677 = vadd.f32 0.0, %v5676
    %v5678 = vpop.f32.mrb[0].mxu0
    %5679 = vdwg.mxu0
    %vm5680 = vcmask 64512
    %v5681 = vsel %vm5680, %v5677, -inf
    %5682 = vmax.xlane.f32.xlu0 %v5681
    %v5683 = vpop.xlane.xlu0 %5682
    %v5684 = vsub.f32 %v5677, %v5683
    %v5685 = vmul.f32 %v5684, 1.442695
    %v5686 = vpow.pop %v5685
    %v5687 = vsel %vm5680, %v5686, 0.0
    %5688 = vadd.xlane.f32.xlu0 %v5687
    %v5689 = vpop.xlane.xlu0 %5688
    %v5690 = vrcp.pop %v5689
    %v5691 = vmul.f32 %v5686, %v5690
    %v5693 = vsel %vm5680, %v5691, 0
    %5695 = vmatprep.subr.mxu0 0.0
    %5696 = vmatpush1.msra.mxu0 %v5608
    %5697 = vmatprep.subr.mxu0 0.0
    %5698 = vmatpush1.msra.mxu0 0.0
    %5699 = vmatprep.subr.mxu0 0.0
    %5700 = vmatpush1.msra.mxu0 0.0
    %5701 = vmatprep.subr.mxu0 0.0
    %5702 = vmatpush1.msra.mxu0 0.0
    %5703 = vmatprep.subr.mxu0 0.0
    %5704 = vmatpush1.msra.mxu0 0.0
    %5705 = vmatprep.subr.mxu0 0.0
    %5706 = vmatpush1.msra.mxu0 0.0
    %5707 = vmatprep.subr.mxu0 0.0
    %5708 = vmatpush1.msra.mxu0 0.0
    %5709 = vmatprep.subr.mxu0 0.0
    %5710 = vmatpush1.msra.mxu0 0.0
    %5711 = vmatprep.subr.mxu0 0.0
    %5712 = vmatpush1.msra.mxu0 0.0
    %5713 = vmatprep.subr.mxu0 0.0
    %5714 = vmatpush1.msra.mxu0 0.0
    %5715 = vmatprep.subr.mxu0 0.0
    %5716 = vmatpush1.msra.mxu0 0.0
    %5717 = vmatprep.subr.mxu0 0.0
    %5718 = vmatpush1.msra.mxu0 0.0
    %5719 = vmatprep.subr.mxu0 0.0
    %5720 = vmatpush1.msra.mxu0 0.0
    %5721 = vmatprep.subr.mxu0 0.0
    %5722 = vmatpush1.msra.mxu0 0.0
    %5723 = vmatprep.subr.mxu0 0.0
    %5724 = vmatpush1.msra.mxu0 0.0
    %5725 = vmatprep.subr.mxu0 0.0
    %5726 = vmatpush1.msra.mxu0 0.0
    %5727 = vmatprep.subr.mxu0 0.0
    %5728 = vmatpush1.msra.mxu0 0.0
    %5729 = vmatprep.subr.mxu0 0.0
    %5730 = vmatpush1.msra.mxu0 0.0
    %5731 = vmatprep.subr.mxu0 0.0
    %5732 = vmatpush1.msra.mxu0 0.0
    %5733 = vmatprep.subr.mxu0 0.0
    %5734 = vmatpush1.msra.mxu0 0.0
    %5735 = vmatprep.subr.mxu0 0.0
    %5736 = vmatpush1.msra.mxu0 0.0
    %5737 = vmatprep.subr.mxu0 0.0
    %5738 = vmatpush1.msra.mxu0 0.0
    %5739 = vmatprep.subr.mxu0 0.0
    %5740 = vmatpush1.msra.mxu0 0.0
    %5741 = vmatprep.subr.mxu0 0.0
    %5742 = vmatpush1.msra.mxu0 0.0
    %5743 = vmatprep.subr.mxu0 0.0
    %5744 = vmatpush1.msra.mxu0 0.0
    %5745 = vmatprep.subr.mxu0 0.0
    %5746 = vmatpush1.msra.mxu0 0.0
    %5747 = vmatprep.subr.mxu0 0.0
    %5748 = vmatpush1.msra.mxu0 0.0
    %5749 = vmatprep.subr.mxu0 0.0
    %5750 = vmatpush1.msra.mxu0 0.0
    %5751 = vmatprep.subr.mxu0 0.0
    %5752 = vmatpush1.msra.mxu0 0.0
    %5753 = vmatprep.subr.mxu0 0.0
    %5754 = vmatpush1.msra.mxu0 0.0
    %5755 = vmatprep.subr.mxu0 0.0
    %5756 = vmatpush1.msra.mxu0 0.0
    %5757 = vmatprep.subr.mxu0 0.0
    %5758 = vmatpush1.msra.mxu0 0.0
    %5759 = vmatprep.mubr.f32.mxu0 0.0
    %5760 = vmatmul.mubr.f32.gmra.mrb[0].mxu0 %v5693
    %v5761 = vpop.f32.mrb[0].mxu0
    %v5762 = vadd.f32 0.0, %v5761
    %v5763 = vpop.f32.mrb[0].mxu0
    %5764 = vdwg.mxu0
    %5765 = vmatprep.subr.mxu0 0.0
    %5766 = vmatpush1.msra.mxu0 %v5524
    %5767 = vmatprep.subr.mxu0 0.0
    %5768 = vmatpush1.msra.mxu0 %v5525
    %5769 = vmatprep.subr.mxu0 0.0
    %5770 = vmatpush1.msra.mxu0 %v5526
    %5771 = vmatprep.subr.mxu0 0.0
    %5772 = vmatpush1.msra.mxu0 %v5527
    %5773 = vmatprep.subr.mxu0 0.0
    %5774 = vmatpush1.msra.mxu0 %v5528
    %5775 = vmatprep.subr.mxu0 0.0
    %5776 = vmatpush1.msra.mxu0 %v5529
    %5777 = vmatprep.subr.mxu0 0.0
    %5778 = vmatpush1.msra.mxu0 %v5530
    %5779 = vmatprep.subr.mxu0 0.0
    %5780 = vmatpush1.msra.mxu0 %v5531
    %5781 = vmatprep.subr.mxu0 0.0
    %5782 = vmatpush1.msra.mxu0 %v5532
    %5783 = vmatprep.subr.mxu0 0.0
    %5784 = vmatpush1.msra.mxu0 %v5533
    %5785 = vmatprep.subr.mxu0 0.0
    %5786 = vmatpush1.msra.mxu0 %v5534
    %5787 = vmatprep.subr.mxu0 0.0
    %5788 = vmatpush1.msra.mxu0 %v5535
    %5789 = vmatprep.subr.mxu0 0.0
    %5790 = vmatpush1.msra.mxu0 %v5536
    %5791 = vmatprep.subr.mxu0 0.0
    %5792 = vmatpush1.msra.mxu0 %v5537
    %5793 = vmatprep.subr.mxu0 0.0
    %5794 = vmatpush1.msra.mxu0 %v5538
    %5795 = vmatprep.subr.mxu0 0.0
    %5796 = vmatpush1.msra.mxu0 %v5539
    %5797 = vmatprep.subr.mxu0 0.0
    %5798 = vmatpush1.msra.mxu0 0.0
    %5799 = vmatprep.subr.mxu0 0.0
    %5800 = vmatpush1.msra.mxu0 0.0
    %5801 = vmatprep.subr.mxu0 0.0
    %5802 = vmatpush1.msra.mxu0 0.0
    %5803 = vmatprep.subr.mxu0 0.0
    %5804 = vmatpush1.msra.mxu0 0.0
    %5805 = vmatprep.subr.mxu0 0.0
    %5806 = vmatpush1.msra.mxu0 0.0
    %5807 = vmatprep.subr.mxu0 0.0
    %5808 = vmatpush1.msra.mxu0 0.0
    %5809 = vmatprep.subr.mxu0 0.0
    %5810 = vmatpush1.msra.mxu0 0.0
    %5811 = vmatprep.subr.mxu0 0.0
    %5812 = vmatpush1.msra.mxu0 0.0
    %5813 = vmatprep.subr.mxu0 0.0
    %5814 = vmatpush1.msra.mxu0 0.0
    %5815 = vmatprep.subr.mxu0 0.0
    %5816 = vmatpush1.msra.mxu0 0.0
    %5817 = vmatprep.subr.mxu0 0.0
    %5818 = vmatpush1.msra.mxu0 0.0
    %5819 = vmatprep.subr.mxu0 0.0
    %5820 = vmatpush1.msra.mxu0 0.0
    %5821 = vmatprep.subr.mxu0 0.0
    %5822 = vmatpush1.msra.mxu0 0.0
    %5823 = vmatprep.subr.mxu0 0.0
    %5824 = vmatpush1.msra.mxu0 0.0
    %5825 = vmatprep.subr.mxu0 0.0
    %5826 = vmatpush1.msra.mxu0 0.0
    %5827 = vmatprep.subr.mxu0 0.0
    %5828 = vmatpush1.msra.mxu0 0.0
    %5829 = vmatprep.mubr.f32.mxu0 0.0
    %5830 = vmatmul.mubr.f32.gmra.mrb[0].mxu0 %v5762
    %v5831 = vpop.f32.mrb[0].mxu0
    %v5832 = vadd.f32 0.0, %v5831
    %v5833 = vpop.f32.mrb[0].mxu0
    %5834 = vdwg.mxu0
    %5835 = vmatprep.subr.mxu0 0.0
    %5836 = vmatpush1.msra.mxu0 %v5508
    %5837 = vmatprep.subr.mxu0 0.0
    %5838 = vmatpush1.msra.mxu0 %v5509
    %5839 = vmatprep.subr.mxu0 0.0
    %5840 = vmatpush1.msra.mxu0 %v5510
    %5841 = vmatprep.subr.mxu0 0.0
    %5842 = vmatpush1.msra.mxu0 %v5511
    %5843 = vmatprep.subr.mxu0 0.0
    %5844 = vmatpush1.msra.mxu0 %v5512
    %5845 = vmatprep.subr.mxu0 0.0
    %5846 = vmatpush1.msra.mxu0 %v5513
    %5847 = vmatprep.subr.mxu0 0.0
    %5848 = vmatpush1.msra.mxu0 %v5514
    %5849 = vmatprep.subr.mxu0 0.0
    %5850 = vmatpush1.msra.mxu0 %v5515
    %5851 = vmatprep.subr.mxu0 0.0
    %5852 = vmatpush1.msra.mxu0 %v5516
    %5853 = vmatprep.subr.mxu0 0.0
    %5854 = vmatpush1.msra.mxu0 %v5517
    %5855 = vmatprep.subr.mxu0 0.0
    %5856 = vmatpush1.msra.mxu0 %v5518
    %5857 = vmatprep.subr.mxu0 0.0
    %5858 = vmatpush1.msra.mxu0 %v5519
    %5859 = vmatprep.subr.mxu0 0.0
    %5860 = vmatpush1.msra.mxu0 %v5520
    %5861 = vmatprep.subr.mxu0 0.0
    %5862 = vmatpush1.msra.mxu0 %v5521
    %5863 = vmatprep.subr.mxu0 0.0
    %5864 = vmatpush1.msra.mxu0 %v5522
    %5865 = vmatprep.subr.mxu0 0.0
    %5866 = vmatpush1.msra.mxu0 %v5523
    %5867 = vmatprep.subr.mxu0 0.0
    %5868 = vmatpush1.msra.mxu0 0.0
    %5869 = vmatprep.subr.mxu0 0.0
    %5870 = vmatpush1.msra.mxu0 0.0
    %5871 = vmatprep.subr.mxu0 0.0
    %5872 = vmatpush1.msra.mxu0 0.0
    %5873 = vmatprep.subr.mxu0 0.0
    %5874 = vmatpush1.msra.mxu0 0.0
    %5875 = vmatprep.subr.mxu0 0.0
    %5876 = vmatpush1.msra.mxu0 0.0
    %5877 = vmatprep.subr.mxu0 0.0
    %5878 = vmatpush1.msra.mxu0 0.0
    %5879 = vmatprep.subr.mxu0 0.0
    %5880 = vmatpush1.msra.mxu0 0.0
    %5881 = vmatprep.subr.mxu0 0.0
    %5882 = vmatpush1.msra.mxu0 0.0
    %5883 = vmatprep.subr.mxu0 0.0
    %5884 = vmatpush1.msra.mxu0 0.0
    %5885 = vmatprep.subr.mxu0 0.0
    %5886 = vmatpush1.msra.mxu0 0.0
    %5887 = vmatprep.subr.mxu0 0.0
    %5888 = vmatpush1.msra.mxu0 0.0
    %5889 = vmatprep.subr.mxu0 0.0
    %5890 = vmatpush1.msra.mxu0 0.0
    %5891 = vmatprep.subr.mxu0 0.0
    %5892 = vmatpush1.msra.mxu0 0.0
    %5893 = vmatprep.subr.mxu0 0.0
    %5894 = vmatpush1.msra.mxu0 0.0
    %5895 = vmatprep.subr.mxu0 0.0
    %5896 = vmatpush1.msra.mxu0 0.0
    %5897 = vmatprep.subr.mxu0 0.0
    %5898 = vmatpush1.msra.mxu0 0.0
    %5899 = vmatprep.mubr.f32.mxu0 0.0
    %5900 = vmatmul.mubr.f32.gmra.mrb[0].mxu0 %v5585
    %v5901 = vpop.f32.mrb[0].mxu0
    %v5902 = vadd.f32 %v5832, %v5901
    %v5903 = vpop.f32.mrb[0].mxu0
    %5904 = vdwg.mxu0
    %v5905 = vtanh.pop %v5902
    %v5907 = vlaneseq
    %v5908 = vshrl.u32 %v5907, 7
    %v5909 = vsub.s32 0, %v5908
    %v5910 = vrot.slane %v5556, %v5909
    %5912 = vmatprep.subr.mxu0 0.0
    %5913 = vmatpush1.msra.mxu0 %v5540
    %5914 = vmatprep.subr.mxu0 0.0
    %5915 = vmatpush1.msra.mxu0 %v5541
    %5916 = vmatprep.subr.mxu0 0.0
    %5917 = vmatpush1.msra.mxu0 %v5542
    %5918 = vmatprep.subr.mxu0 0.0
    %5919 = vmatpush1.msra.mxu0 %v5543
    %5920 = vmatprep.subr.mxu0 0.0
    %5921 = vmatpush1.msra.mxu0 %v5544
    %5922 = vmatprep.subr.mxu0 0.0
    %5923 = vmatpush1.msra.mxu0 %v5545
    %5924 = vmatprep.subr.mxu0 0.0
    %5925 = vmatpush1.msra.mxu0 %v5546
    %5926 = vmatprep.subr.mxu0 0.0
    %5927 = vmatpush1.msra.mxu0 %v5547
    %5928 = vmatprep.subr.mxu0 0.0
    %5929 = vmatpush1.msra.mxu0 %v5548
    %5930 = vmatprep.subr.mxu0 0.0
    %5931 = vmatpush1.msra.mxu0 %v5549
    %5932 = vmatprep.subr.mxu0 0.0
    %5933 = vmatpush1.msra.mxu0 %v5550
    %5934 = vmatprep.subr.mxu0 0.0
    %5935 = vmatpush1.msra.mxu0 %v5551
    %5936 = vmatprep.subr.mxu0 0.0
    %5937 = vmatpush1.msra.mxu0 %v5552
    %5938 = vmatprep.subr.mxu0 0.0
    %5939 = vmatpush1.msra.mxu0 %v5553
    %5940 = vmatprep.subr.mxu0 0.0
    %5941 = vmatpush1.msra.mxu0 %v5554
    %5942 = vmatprep.subr.mxu0 0.0
    %5943 = vmatpush1.msra.mxu0 %v5555
    %5944 = vmatprep.subr.mxu0 0.0
    %5945 = vmatpush1.msra.mxu0 0.0
    %5946 = vmatprep.subr.mxu0 0.0
    %5947 = vmatpush1.msra.mxu0 0.0
    %5948 = vmatprep.subr.mxu0 0.0
    %5949 = vmatpush1.msra.mxu0 0.0
    %5950 = vmatprep.subr.mxu0 0.0
    %5951 = vmatpush1.msra.mxu0 0.0
    %5952 = vmatprep.subr.mxu0 0.0
    %5953 = vmatpush1.msra.mxu0 0.0
    %5954 = vmatprep.subr.mxu0 0.0
    %5955 = vmatpush1.msra.mxu0 0.0
    %5956 = vmatprep.subr.mxu0 0.0
    %5957 = vmatpush1.msra.mxu0 0.0
    %5958 = vmatprep.subr.mxu0 0.0
    %5959 = vmatpush1.msra.mxu0 0.0
    %5960 = vmatprep.subr.mxu0 0.0
    %5961 = vmatpush1.msra.mxu0 0.0
    %5962 = vmatprep.subr.mxu0 0.0
    %5963 = vmatpush1.msra.mxu0 0.0
    %5964 = vmatprep.subr.mxu0 0.0
    %5965 = vmatpush1.msra.mxu0 0.0
    %5966 = vmatprep.subr.mxu0 0.0
    %5967 = vmatpush1.msra.mxu0 0.0
    %5968 = vmatprep.subr.mxu0 0.0
    %5969 = vmatpush1.msra.mxu0 0.0
    %5970 = vmatprep.subr.mxu0 0.0
    %5971 = vmatpush1.msra.mxu0 0.0
    %5972 = vmatprep.subr.mxu0 0.0
    %5973 = vmatpush1.msra.mxu0 0.0
    %5974 = vmatprep.subr.mxu0 0.0
    %5975 = vmatpush1.msra.mxu0 0.0
    %5976 = vmatprep.mubr.f32.mxu0 0.0
    %5977 = vmatmul.mubr.f32.gmra.mrb[0].mxu0 %v5905
    %v5978 = vpop.f32.mrb[0].mxu0
    %v5979 = vadd.f32 %v5910, %v5978
    %v5980 = vpop.f32.mrb[0].mxu0
    %5981 = vdwg.mxu0
    %5982 = vmax.xlane.f32.xlu0 %v5979
    %v5983 = vpop.xlane.xlu0 %5982
    %v5984 = vsub.f32 %v5979, %v5983
    %v5985 = vmul.f32 %v5984, 1.442695
    %v5986 = vpow.pop %v5985
    %5987 = vadd.xlane.f32.xlu0 %v5986
    %v5988 = vpop.xlane.xlu0 %5987
    %v5989 = vrcp.pop %v5988
    %v5990 = vmul.f32 %v5986, %v5989
    %5991 = vst [vmem:[#allocation13] sm:$0xff] %v5990
    %v5992 = vrot.slane %v5500, 1
    %v5993 = vsel %vm5566, %v5501, %v5992
    %v5994 = vrot.slane %v5502, 7
    %v5995 = vsel %vm5569, %v5994, %v5993
    %v5996 = vrot.slane %v5503, 6
    %v5997 = vsel %vm5572, %v5996, %v5995
    %v5998 = vrot.slane %v5504, 5
    %v5999 = vsel %vm5575, %v5998, %v5997
    %v6000 = vrot.slane %v5505, 4
    %v6001 = vsel %vm5578, %v6000, %v5999
    %v6002 = vrot.slane %v5506, 3
    %v6003 = vsel %vm5581, %v6002, %v6001
    %v6004 = vrot.slane %v5507, 2
    %v6005 = vsel %vm5584, %v6004, %v6003
    %v6007 = vrot.slane %v5492, 1
    %v6008 = vsel %vm5566, %v5493, %v6007
    %v6009 = vrot.slane %v5494, 7
    %v6010 = vsel %vm5569, %v6009, %v6008
    %v6011 = vrot.slane %v5495, 6
    %v6012 = vsel %vm5572, %v6011, %v6010
    %v6013 = vrot.slane %v5496, 5
    %v6014 = vsel %vm5575, %v6013, %v6012
    %v6015 = vrot.slane %v5497, 4
    %v6016 = vsel %vm5578, %v6015, %v6014
    %v6017 = vrot.slane %v5498, 3
    %v6018 = vsel %vm5581, %v6017, %v6016
    %v6019 = vrot.slane %v5499, 2
    %v6020 = vsel %vm5584, %v6019, %v6018
    %6022 = vmatprep.subr.mxu0 0.0
    %6023 = vmatpush1.xpose.msra.mxu0 %v6020
    %6024 = vmatprep.subr.mxu0 0.0
    %6025 = vmatpush1.xpose.msra.mxu0 0.0
    %6026 = vmatprep.subr.mxu0 0.0
    %6027 = vmatpush1.xpose.msra.mxu0 0.0
    %6028 = vmatprep.subr.mxu0 0.0
    %6029 = vmatpush1.xpose.msra.mxu0 0.0
    %6030 = vmatprep.subr.mxu0 0.0
    %6031 = vmatpush1.xpose.msra.mxu0 0.0
    %6032 = vmatprep.subr.mxu0 0.0
    %6033 = vmatpush1.xpose.msra.mxu0 0.0
    %6034 = vmatprep.subr.mxu0 0.0
    %6035 = vmatpush1.xpose.msra.mxu0 0.0
    %6036 = vmatprep.subr.mxu0 0.0
    %6037 = vmatpush1.xpose.msra.mxu0 0.0
    %6038 = vmatprep.subr.mxu0 0.0
    %6039 = vmatpush1.xpose.msra.mxu0 0.0
    %6040 = vmatprep.subr.mxu0 0.0
    %6041 = vmatpush1.xpose.msra.mxu0 0.0
    %6042 = vmatprep.subr.mxu0 0.0
    %6043 = vmatpush1.xpose.msra.mxu0 0.0
    %6044 = vmatprep.subr.mxu0 0.0
    %6045 = vmatpush1.xpose.msra.mxu0 0.0
    %6046 = vmatprep.subr.mxu0 0.0
    %6047 = vmatpush1.xpose.msra.mxu0 0.0
    %6048 = vmatprep.subr.mxu0 0.0
    %6049 = vmatpush1.xpose.msra.mxu0 0.0
    %6050 = vmatprep.subr.mxu0 0.0
    %6051 = vmatpush1.xpose.msra.mxu0 0.0
    %6052 = vmatprep.subr.mxu0 0.0
    %6053 = vmatpush1.xpose.msra.mxu0 0.0
    %6054 = vmatprep.subr.mxu0 0.0
    %6055 = vmatpush1.xpose.msra.mxu0 0.0
    %6056 = vmatprep.subr.mxu0 0.0
    %6057 = vmatpush1.xpose.msra.mxu0 0.0
    %6058 = vmatprep.subr.mxu0 0.0
    %6059 = vmatpush1.xpose.msra.mxu0 0.0
    %6060 = vmatprep.subr.mxu0 0.0
    %6061 = vmatpush1.xpose.msra.mxu0 0.0
    %6062 = vmatprep.subr.mxu0 0.0
    %6063 = vmatpush1.xpose.msra.mxu0 0.0
    %6064 = vmatprep.subr.mxu0 0.0
    %6065 = vmatpush1.xpose.msra.mxu0 0.0
    %6066 = vmatprep.subr.mxu0 0.0
    %6067 = vmatpush1.xpose.msra.mxu0 0.0
    %6068 = vmatprep.subr.mxu0 0.0
    %6069 = vmatpush1.xpose.msra.mxu0 0.0
    %6070 = vmatprep.subr.mxu0 0.0
    %6071 = vmatpush1.xpose.msra.mxu0 0.0
    %6072 = vmatprep.subr.mxu0 0.0
    %6073 = vmatpush1.xpose.msra.mxu0 0.0
    %6074 = vmatprep.subr.mxu0 0.0
    %6075 = vmatpush1.xpose.msra.mxu0 0.0
    %6076 = vmatprep.subr.mxu0 0.0
    %6077 = vmatpush1.xpose.msra.mxu0 0.0
    %6078 = vmatprep.subr.mxu0 0.0
    %6079 = vmatpush1.xpose.msra.mxu0 0.0
    %6080 = vmatprep.subr.mxu0 0.0
    %6081 = vmatpush1.xpose.msra.mxu0 0.0
    %6082 = vmatprep.subr.mxu0 0.0
    %6083 = vmatpush1.xpose.msra.mxu0 0.0
    %6084 = vmatprep.subr.mxu0 0.0
    %6085 = vmatpush1.xpose.msra.mxu0 0.0
    %6086 = vmatprep.mubr.f32.mxu0 0.0
    %6087 = vmatmul.mubr.f32.gmra.mrb[0].mxu0 %v6005
    %v6088 = vpop.f32.mrb[0].mxu0
    %v6089 = vadd.f32 0.0, %v6088
    %v6090 = vpop.f32.mrb[0].mxu0
    %6091 = vdwg.mxu0
    %v6092 = vsel %vm5680, %v6089, -inf
    %6093 = vmax.xlane.f32.xlu0 %v6092
    %v6094 = vpop.xlane.xlu0 %6093
    %v6095 = vsub.f32 %v6089, %v6094
    %v6096 = vmul.f32 %v6095, 1.442695
    %v6097 = vpow.pop %v6096
    %v6098 = vsel %vm5680, %v6097, 0.0
    %6099 = vadd.xlane.f32.xlu0 %v6098
    %v6100 = vpop.xlane.xlu0 %6099
    %v6101 = vrcp.pop %v6100
    %v6102 = vmul.f32 %v6097, %v6101
    %v6104 = vsel %vm5680, %v6102, 0
    %6106 = vmatprep.subr.mxu0 0.0
    %6107 = vmatpush1.msra.mxu0 %v6020
    %6108 = vmatprep.subr.mxu0 0.0
    %6109 = vmatpush1.msra.mxu0 0.0
    %6110 = vmatprep.subr.mxu0 0.0
    %6111 = vmatpush1.msra.mxu0 0.0
    %6112 = vmatprep.subr.mxu0 0.0
    %6113 = vmatpush1.msra.mxu0 0.0
    %6114 = vmatprep.subr.mxu0 0.0
    %6115 = vmatpush1.msra.mxu0 0.0
    %6116 = vmatprep.subr.mxu0 0.0
    %6117 = vmatpush1.msra.mxu0 0.0
    %6118 = vmatprep.subr.mxu0 0.0
    %6119 = vmatpush1.msra.mxu0 0.0
    %6120 = vmatprep.subr.mxu0 0.0
    %6121 = vmatpush1.msra.mxu0 0.0
    %6122 = vmatprep.subr.mxu0 0.0
    %6123 = vmatpush1.msra.mxu0 0.0
    %6124 = vmatprep.subr.mxu0 0.0
    %6125 = vmatpush1.msra.mxu0 0.0
    %6126 = vmatprep.subr.mxu0 0.0
    %6127 = vmatpush1.msra.mxu0 0.0
    %6128 = vmatprep.subr.mxu0 0.0
    %6129 = vmatpush1.msra.mxu0 0.0
    %6130 = vmatprep.subr.mxu0 0.0
    %6131 = vmatpush1.msra.mxu0 0.0
    %6132 = vmatprep.subr.mxu0 0.0
    %6133 = vmatpush1.msra.mxu0 0.0
    %6134 = vmatprep.subr.mxu0 0.0
    %6135 = vmatpush1.msra.mxu0 0.0
    %6136 = vmatprep.subr.mxu0 0.0
    %6137 = vmatpush1.msra.mxu0 0.0
    %6138 = vmatprep.subr.mxu0 0.0
    %6139 = vmatpush1.msra.mxu0 0.0
    %6140 = vmatprep.subr.mxu0 0.0
    %6141 = vmatpush1.msra.mxu0 0.0
    %6142 = vmatprep.subr.mxu0 0.0
    %6143 = vmatpush1.msra.mxu0 0.0
    %6144 = vmatprep.subr.mxu0 0.0
    %6145 = vmatpush1.msra.mxu0 0.0
    %6146 = vmatprep.subr.mxu0 0.0
    %6147 = vmatpush1.msra.mxu0 0.0
    %6148 = vmatprep.subr.mxu0 0.0
    %6149 = vmatpush1.msra.mxu0 0.0
    %6150 = vmatprep.subr.mxu0 0.0
    %6151 = vmatpush1.msra.mxu0 0.0
    %6152 = vmatprep.subr.mxu0 0.0
    %6153 = vmatpush1.msra.mxu0 0.0
    %6154 = vmatprep.subr.mxu0 0.0
    %6155 = vmatpush1.msra.mxu0 0.0
    %6156 = vmatprep.subr.mxu0 0.0
    %6157 = vmatpush1.msra.mxu0 0.0
    %6158 = vmatprep.subr.mxu0 0.0
    %6159 = vmatpush1.msra.mxu0 0.0
    %6160 = vmatprep.subr.mxu0 0.0
    %6161 = vmatpush1.msra.mxu0 0.0
    %6162 = vmatprep.subr.mxu0 0.0
    %6163 = vmatpush1.msra.mxu0 0.0
    %6164 = vmatprep.subr.mxu0 0.0
    %6165 = vmatpush1.msra.mxu0 0.0
    %6166 = vmatprep.subr.mxu0 0.0
    %6167 = vmatpush1.msra.mxu0 0.0
    %6168 = vmatprep.subr.mxu0 0.0
    %6169 = vmatpush1.msra.mxu0 0.0
    %6170 = vmatprep.mubr.f32.mxu0 0.0
    %6171 = vmatmul.mubr.f32.gmra.mrb[0].mxu0 %v6104
    %v6172 = vpop.f32.mrb[0].mxu0
    %v6173 = vadd.f32 0.0, %v6172
    %v6174 = vpop.f32.mrb[0].mxu0
    %6175 = vdwg.mxu0
    %6176 = vmatprep.subr.mxu0 0.0
    %6177 = vmatpush1.msra.mxu0 %v5524
    %6178 = vmatprep.subr.mxu0 0.0
    %6179 = vmatpush1.msra.mxu0 %v5525
    %6180 = vmatprep.subr.mxu0 0.0
    %6181 = vmatpush1.msra.mxu0 %v5526
    %6182 = vmatprep.subr.mxu0 0.0
    %6183 = vmatpush1.msra.mxu0 %v5527
    %6184 = vmatprep.subr.mxu0 0.0
    %6185 = vmatpush1.msra.mxu0 %v5528
    %6186 = vmatprep.subr.mxu0 0.0
    %6187 = vmatpush1.msra.mxu0 %v5529
    %6188 = vmatprep.subr.mxu0 0.0
    %6189 = vmatpush1.msra.mxu0 %v5530
    %6190 = vmatprep.subr.mxu0 0.0
    %6191 = vmatpush1.msra.mxu0 %v5531
    %6192 = vmatprep.subr.mxu0 0.0
    %6193 = vmatpush1.msra.mxu0 %v5532
    %6194 = vmatprep.subr.mxu0 0.0
    %6195 = vmatpush1.msra.mxu0 %v5533
    %6196 = vmatprep.subr.mxu0 0.0
    %6197 = vmatpush1.msra.mxu0 %v5534
    %6198 = vmatprep.subr.mxu0 0.0
    %6199 = vmatpush1.msra.mxu0 %v5535
    %6200 = vmatprep.subr.mxu0 0.0
    %6201 = vmatpush1.msra.mxu0 %v5536
    %6202 = vmatprep.subr.mxu0 0.0
    %6203 = vmatpush1.msra.mxu0 %v5537
    %6204 = vmatprep.subr.mxu0 0.0
    %6205 = vmatpush1.msra.mxu0 %v5538
    %6206 = vmatprep.subr.mxu0 0.0
    %6207 = vmatpush1.msra.mxu0 %v5539
    %6208 = vmatprep.subr.mxu0 0.0
    %6209 = vmatpush1.msra.mxu0 0.0
    %6210 = vmatprep.subr.mxu0 0.0
    %6211 = vmatpush1.msra.mxu0 0.0
    %6212 = vmatprep.subr.mxu0 0.0
    %6213 = vmatpush1.msra.mxu0 0.0
    %6214 = vmatprep.subr.mxu0 0.0
    %6215 = vmatpush1.msra.mxu0 0.0
    %6216 = vmatprep.subr.mxu0 0.0
    %6217 = vmatpush1.msra.mxu0 0.0
    %6218 = vmatprep.subr.mxu0 0.0
    %6219 = vmatpush1.msra.mxu0 0.0
    %6220 = vmatprep.subr.mxu0 0.0
    %6221 = vmatpush1.msra.mxu0 0.0
    %6222 = vmatprep.subr.mxu0 0.0
    %6223 = vmatpush1.msra.mxu0 0.0
    %6224 = vmatprep.subr.mxu0 0.0
    %6225 = vmatpush1.msra.mxu0 0.0
    %6226 = vmatprep.subr.mxu0 0.0
    %6227 = vmatpush1.msra.mxu0 0.0
    %6228 = vmatprep.subr.mxu0 0.0
    %6229 = vmatpush1.msra.mxu0 0.0
    %6230 = vmatprep.subr.mxu0 0.0
    %6231 = vmatpush1.msra.mxu0 0.0
    %6232 = vmatprep.subr.mxu0 0.0
    %6233 = vmatpush1.msra.mxu0 0.0
    %6234 = vmatprep.subr.mxu0 0.0
    %6235 = vmatpush1.msra.mxu0 0.0
    %6236 = vmatprep.subr.mxu0 0.0
    %6237 = vmatpush1.msra.mxu0 0.0
    %6238 = vmatprep.subr.mxu0 0.0
    %6239 = vmatpush1.msra.mxu0 0.0
    %6240 = vmatprep.mubr.f32.mxu0 0.0
    %6241 = vmatmul.mubr.f32.gmra.mrb[0].mxu0 %v6173
    %v6242 = vpop.f32.mrb[0].mxu0
    %v6243 = vadd.f32 0.0, %v6242
    %v6244 = vpop.f32.mrb[0].mxu0
    %6245 = vdwg.mxu0
    %6246 = vmatprep.subr.mxu0 0.0
    %6247 = vmatpush1.msra.mxu0 %v5508
    %6248 = vmatprep.subr.mxu0 0.0
    %6249 = vmatpush1.msra.mxu0 %v5509
    %6250 = vmatprep.subr.mxu0 0.0
    %6251 = vmatpush1.msra.mxu0 %v5510
    %6252 = vmatprep.subr.mxu0 0.0
    %6253 = vmatpush1.msra.mxu0 %v5511
    %6254 = vmatprep.subr.mxu0 0.0
    %6255 = vmatpush1.msra.mxu0 %v5512
    %6256 = vmatprep.subr.mxu0 0.0
    %6257 = vmatpush1.msra.mxu0 %v5513
    %6258 = vmatprep.subr.mxu0 0.0
    %6259 = vmatpush1.msra.mxu0 %v5514
    %6260 = vmatprep.subr.mxu0 0.0
    %6261 = vmatpush1.msra.mxu0 %v5515
    %6262 = vmatprep.subr.mxu0 0.0
    %6263 = vmatpush1.msra.mxu0 %v5516
    %6264 = vmatprep.subr.mxu0 0.0
    %6265 = vmatpush1.msra.mxu0 %v5517
    %6266 = vmatprep.subr.mxu0 0.0
    %6267 = vmatpush1.msra.mxu0 %v5518
    %6268 = vmatprep.subr.mxu0 0.0
    %6269 = vmatpush1.msra.mxu0 %v5519
    %6270 = vmatprep.subr.mxu0 0.0
    %6271 = vmatpush1.msra.mxu0 %v5520
    %6272 = vmatprep.subr.mxu0 0.0
    %6273 = vmatpush1.msra.mxu0 %v5521
    %6274 = vmatprep.subr.mxu0 0.0
    %6275 = vmatpush1.msra.mxu0 %v5522
    %6276 = vmatprep.subr.mxu0 0.0
    %6277 = vmatpush1.msra.mxu0 %v5523
    %6278 = vmatprep.subr.mxu0 0.0
    %6279 = vmatpush1.msra.mxu0 0.0
    %6280 = vmatprep.subr.mxu0 0.0
    %6281 = vmatpush1.msra.mxu0 0.0
    %6282 = vmatprep.subr.mxu0 0.0
    %6283 = vmatpush1.msra.mxu0 0.0
    %6284 = vmatprep.subr.mxu0 0.0
    %6285 = vmatpush1.msra.mxu0 0.0
    %6286 = vmatprep.subr.mxu0 0.0
    %6287 = vmatpush1.msra.mxu0 0.0
    %6288 = vmatprep.subr.mxu0 0.0
    %6289 = vmatpush1.msra.mxu0 0.0
    %6290 = vmatprep.subr.mxu0 0.0
    %6291 = vmatpush1.msra.mxu0 0.0
    %6292 = vmatprep.subr.mxu0 0.0
    %6293 = vmatpush1.msra.mxu0 0.0
    %6294 = vmatprep.subr.mxu0 0.0
    %6295 = vmatpush1.msra.mxu0 0.0
    %6296 = vmatprep.subr.mxu0 0.0
    %6297 = vmatpush1.msra.mxu0 0.0
    %6298 = vmatprep.subr.mxu0 0.0
    %6299 = vmatpush1.msra.mxu0 0.0
    %6300 = vmatprep.subr.mxu0 0.0
    %6301 = vmatpush1.msra.mxu0 0.0
    %6302 = vmatprep.subr.mxu0 0.0
    %6303 = vmatpush1.msra.mxu0 0.0
    %6304 = vmatprep.subr.mxu0 0.0
    %6305 = vmatpush1.msra.mxu0 0.0
    %6306 = vmatprep.subr.mxu0 0.0
    %6307 = vmatpush1.msra.mxu0 0.0
    %6308 = vmatprep.subr.mxu0 0.0
    %6309 = vmatpush1.msra.mxu0 0.0
    %6310 = vmatprep.mubr.f32.mxu0 0.0
    %6311 = vmatmul.mubr.f32.gmra.mrb[0].mxu0 %v6005
    %v6312 = vpop.f32.mrb[0].mxu0
    %v6313 = vadd.f32 %v6243, %v6312
    %v6314 = vpop.f32.mrb[0].mxu0
    %6315 = vdwg.mxu0
    %v6316 = vtanh.pop %v6313
    %6317 = vmatprep.subr.mxu0 0.0
    %6318 = vmatpush1.msra.mxu0 %v5540
    %6319 = vmatprep.subr.mxu0 0.0
    %6320 = vmatpush1.msra.mxu0 %v5541
    %6321 = vmatprep.subr.mxu0 0.0
    %6322 = vmatpush1.msra.mxu0 %v5542
    %6323 = vmatprep.subr.mxu0 0.0
    %6324 = vmatpush1.msra.mxu0 %v5543
    %6325 = vmatprep.subr.mxu0 0.0
    %6326 = vmatpush1.msra.mxu0 %v5544
    %6327 = vmatprep.subr.mxu0 0.0
    %6328 = vmatpush1.msra.mxu0 %v5545
    %6329 = vmatprep.subr.mxu0 0.0
    %6330 = vmatpush1.msra.mxu0 %v5546
    %6331 = vmatprep.subr.mxu0 0.0
    %6332 = vmatpush1.msra.mxu0 %v5547
    %6333 = vmatprep.subr.mxu0 0.0
    %6334 = vmatpush1.msra.mxu0 %v5548
    %6335 = vmatprep.subr.mxu0 0.0
    %6336 = vmatpush1.msra.mxu0 %v5549
    %6337 = vmatprep.subr.mxu0 0.0
    %6338 = vmatpush1.msra.mxu0 %v5550
    %6339 = vmatprep.subr.mxu0 0.0
    %6340 = vmatpush1.msra.mxu0 %v5551
    %6341 = vmatprep.subr.mxu0 0.0
    %6342 = vmatpush1.msra.mxu0 %v5552
    %6343 = vmatprep.subr.mxu0 0.0
    %6344 = vmatpush1.msra.mxu0 %v5553
    %6345 = vmatprep.subr.mxu0 0.0
    %6346 = vmatpush1.msra.mxu0 %v5554
    %6347 = vmatprep.subr.mxu0 0.0
    %6348 = vmatpush1.msra.mxu0 %v5555
    %6349 = vmatprep.subr.mxu0 0.0
    %6350 = vmatpush1.msra.mxu0 0.0
    %6351 = vmatprep.subr.mxu0 0.0
    %6352 = vmatpush1.msra.mxu0 0.0
    %6353 = vmatprep.subr.mxu0 0.0
    %6354 = vmatpush1.msra.mxu0 0.0
    %6355 = vmatprep.subr.mxu0 0.0
    %6356 = vmatpush1.msra.mxu0 0.0
    %6357 = vmatprep.subr.mxu0 0.0
    %6358 = vmatpush1.msra.mxu0 0.0
    %6359 = vmatprep.subr.mxu0 0.0
    %6360 = vmatpush1.msra.mxu0 0.0
    %6361 = vmatprep.subr.mxu0 0.0
    %6362 = vmatpush1.msra.mxu0 0.0
    %6363 = vmatprep.subr.mxu0 0.0
    %6364 = vmatpush1.msra.mxu0 0.0
    %6365 = vmatprep.subr.mxu0 0.0
    %6366 = vmatpush1.msra.mxu0 0.0
    %6367 = vmatprep.subr.mxu0 0.0
    %6368 = vmatpush1.msra.mxu0 0.0
    %6369 = vmatprep.subr.mxu0 0.0
    %6370 = vmatpush1.msra.mxu0 0.0
    %6371 = vmatprep.subr.mxu0 0.0
    %6372 = vmatpush1.msra.mxu0 0.0
    %6373 = vmatprep.subr.mxu0 0.0
    %6374 = vmatpush1.msra.mxu0 0.0
    %6375 = vmatprep.subr.mxu0 0.0
    %6376 = vmatpush1.msra.mxu0 0.0
    %6377 = vmatprep.subr.mxu0 0.0
    %6378 = vmatpush1.msra.mxu0 0.0
    %6379 = vmatprep.subr.mxu0 0.0
    %6380 = vmatpush1.msra.mxu0 0.0
    %6381 = vmatprep.mubr.f32.mxu0 0.0
    %6382 = vmatmul.mubr.f32.gmra.mrb[0].mxu0 %v6316
    %v6383 = vpop.f32.mrb[0].mxu0
    %v6384 = vadd.f32 %v5910, %v6383
    %v6385 = vpop.f32.mrb[0].mxu0
    %6386 = vdwg.mxu0
    %6387 = vmax.xlane.f32.xlu0 %v6384
    %v6388 = vpop.xlane.xlu0 %6387
    %v6389 = vsub.f32 %v6384, %v6388
    %v6390 = vmul.f32 %v6389, 1.442695
    %v6391 = vpow.pop %v6390
    %6392 = vadd.xlane.f32.xlu0 %v6391
    %v6393 = vpop.xlane.xlu0 %6392
    %v6394 = vrcp.pop %v6393
    %v6395 = vmul.f32 %v6391, %v6394
    %s6396 = scalar_lea.vmem [#allocation13], 8
    %6397 = vst [vmem:[%s6396] sm:$0xff] %v6395
    // Predicated region
    $region86: #{seq_to_seq_q_forward.1} parent=1 // pred_check
      _
    $region87: #{seq_to_seq_q_forward.1} parent=1 // pred_check_branch
      %6399 = sbr.rel (0) target = $region89
    $region88: #{seq_to_seq_q_forward.1} parent=1 // pred_region
      %s6401 = ssub.s32 256, 256
      %6402 = vsyncadd [#allocation6], %s6401
      %s6403 = sshll.u32 [#allocation13], 4
      %s6404 = int_to_ptr.vmem [resolvable:$true] %s6403
      %6409 = dma.vmem_to_hbm [thread:$0]  %s6404, 256, %s16, [#allocation6], 128, 128, 8
    $region89: #{seq_to_seq_q_forward.1} parent=1 // pred_fallthru
      _
    // Predicated region
    $region90: #{seq_to_seq_q_forward.1} parent=1 // pred_check
      _
    $region91: #{seq_to_seq_q_forward.1} parent=1 // pred_check_branch
      %6411 = sbr.rel (0) target = $region93
    $region92: #{seq_to_seq_q_forward.1} parent=1 // pred_region
      %s6413 = ssub.s32 32, 32
      %6414 = vsyncadd [#allocation15], %s6413
      %s6416 = sshll.u32 [#allocation14], 4
      %s6417 = int_to_ptr.vmem [resolvable:$true] %s6416
      %6419 = dma.vmem_to_hbm [thread:$0]  %s6417, 32, %s17, [#allocation15]
    $region93: #{seq_to_seq_q_forward.1} parent=1 // pred_fallthru
      _
    // Predicated region
    $region94: #{seq_to_seq_q_forward.1} parent=1 // pred_check
      _
    $region95: #{seq_to_seq_q_forward.1} parent=1 // pred_check_branch
      %6421 = sbr.rel (0) target = $region97
    $region96: #{seq_to_seq_q_forward.1} parent=1 // pred_region
      %s6423 = ssub.s32 32, 32
      %6424 = vsyncadd [#allocation15], %s6423
      %s6426 = sshll.u32 [#allocation16], 4
      %s6427 = int_to_ptr.vmem [resolvable:$true] %s6426
      %6429 = dma.vmem_to_hbm [thread:$0]  %s6427, 32, %s18, [#allocation15]
    $region97: #{seq_to_seq_q_forward.1} parent=1 // pred_fallthru
      _
    // Predicated region
    $region98: #{seq_to_seq_q_forward.1} parent=1 // pred_check
      _
    $region99: #{seq_to_seq_q_forward.1} parent=1 // pred_check_branch
      %6431 = sbr.rel (0) target = $region101
    $region100: #{seq_to_seq_q_forward.1} parent=1 // pred_region
      %6432 = dma.done [#allocation6], 256
    $region101: #{seq_to_seq_q_forward.1} parent=1 // pred_fallthru
      _
    // Predicated region
    $region102: #{seq_to_seq_q_forward.1} parent=1 // pred_check
      _
    $region103: #{seq_to_seq_q_forward.1} parent=1 // pred_check_branch
      %6434 = sbr.rel (0) target = $region105
    $region104: #{seq_to_seq_q_forward.1} parent=1 // pred_region
      %6435 = dma.done [#allocation15], 32
    $region105: #{seq_to_seq_q_forward.1} parent=1 // pred_fallthru
      _
    // Predicated region
    $region106: #{seq_to_seq_q_forward.1} parent=1 // pred_check
      _
    $region107: #{seq_to_seq_q_forward.1} parent=1 // pred_check_branch
      %6437 = sbr.rel (0) target = $region109
    $region108: #{seq_to_seq_q_forward.1} parent=1 // pred_region
      %6438 = dma.done [#allocation15], 32
    $region109: #{seq_to_seq_q_forward.1} parent=1 // pred_fallthru
      _
    %6439 = vsyncpa [#allocation5], 1
    %6440 = vsyncpa [#allocation8], 1
    %6441 = vsyncpa [#allocation11], 1
    %6442 = vsyncpa [#allocation6], 1
    %6443 = vsyncpa [#allocation15], 1

</llo_original>
